<compile_context>
chip_gen: v7x
topology: tpu7x:2x2x1
jax: 0.10.0
libtpu: 0.0.40
codegen_flags: <defaults>
</compile_context>

<pallas_src>
import jax
import jax.numpy as jnp
from jax import lax
from jax.experimental import pallas as pl
from jax.experimental.pallas import tpu as pltpu


def _upsample_conv_kernel(x_ref, wt_ref, bt_ref, rh_ref, o_ref):
    # x_ref : (rows, w_block*Cin)               streaming input tile
    # wt_ref: (w_block*Cin, w_block*scale*Cout) conv weight, BN + W-upsample folded
    # bt_ref: (1, w_block*scale*Cout)           folded bias, tiled along W_out
    # rh_ref: (rows*scale, rows)                0/1 H-replication matrix
    # o_ref : (rows*scale, w_block*scale*Cout)  lane-dense output tile
    y = jnp.dot(x_ref[...], wt_ref[...],
                preferred_element_type=jnp.float32,
                precision=lax.Precision.HIGHEST)
    y = jnp.maximum(y + bt_ref[...], 0.0)              # conv + BN + ReLU (folded)
    o_ref[...] = jnp.dot(rh_ref[...], y,               # exact H replication
                         preferred_element_type=jnp.float32,
                         precision=lax.Precision.HIGHEST).astype(o_ref.dtype)


def upsampling_block(x_nhwc, w, b, gamma, beta, mean, var, *, scale,
                     eps=1e-5, rows_per_step=None, w_block=None,
                     out_dtype=jnp.float32):
    """x_nhwc: (N, H, W, Cin) f32.  Returns (N, H*scale, W*scale, Cout)."""
    n, h, w_in, cin = x_nhwc.shape
    cout = w.shape[1]
    h_out, w_out = h * scale, w_in * scale
    nrows = n * h
    if rows_per_step is None:
        rows_per_step = nrows
    if w_block is None:
        w_block = w_in

    assert nrows % rows_per_step == 0
    assert w_in % w_block == 0
    # TPU (8, 128) tiling rules for the block minor dims.
    assert rows_per_step % 8 == 0 or rows_per_step == nrows
    assert (w_block * cin) % 128 == 0 or w_block == w_in
    assert (w_block * scale * cout) % 128 == 0 or w_block == w_in

    # ---- host-side folding (eval-mode BN is a fixed per-channel affine) ----
    bn_scale = gamma * lax.rsqrt(var + eps)              # (Cout,)
    w_fold = w * bn_scale[None, :]                        # (Cin, Cout)
    b_fold = (b - mean) * bn_scale + beta                 # (Cout,)

    # Per-W-block weight with the W-direction nearest upsample folded in.
    # w_tile[wi*Cin+ci, (wo*scale+sw)*Cout+c] = w_fold[ci, c] * (wi == wo);
    # its size is independent of W (constant VMEM cost at real widths).
    eye_wb = jnp.eye(w_block, dtype=jnp.float32)
    w_tile = eye_wb[:, None, :, None, None] * w_fold[None, :, None, None, :]
    w_tile = jnp.broadcast_to(w_tile, (w_block, cin, w_block, scale, cout))
    w_tile = w_tile.reshape(w_block * cin, w_block * scale * cout)
    b_tile = jnp.tile(b_fold, w_block * scale).reshape(1, w_block * scale * cout)

    # Exact 0/1 H-replication matrix (resident constant, hoisted out of kernel).
    rh = (jnp.arange(rows_per_step * scale)[:, None] // scale ==
          jnp.arange(rows_per_step)[None, :]).astype(jnp.float32)

    # Lane-dense layouts: (n, h) folded into rows, (w, c) folded into lanes.
    x_flat = x_nhwc.reshape(nrows, w_in * cin)

    grid = (nrows // rows_per_step, w_in // w_block)
    resident = dict(pipeline_mode=pl.Buffered(1))      # constants: no double buffer
    out_flat = pl.pallas_call(
        _upsample_conv_kernel,
        out_shape=jax.ShapeDtypeStruct((nrows * scale, w_out * cout), out_dtype),
        grid=grid,
        in_specs=[
            pl.BlockSpec((rows_per_step, w_block * cin),
                         lambda r, wi: (r, wi)),
            pl.BlockSpec((w_block * cin, w_block * scale * cout),
                         lambda r, wi: (0, 0), **resident),
            pl.BlockSpec((1, w_block * scale * cout),
                         lambda r, wi: (0, 0), **resident),
            pl.BlockSpec((rows_per_step * scale, rows_per_step),
                         lambda r, wi: (0, 0), **resident),
        ],
        out_specs=pl.BlockSpec((rows_per_step * scale, w_block * scale * cout),
                               lambda r, wi: (r, wi)),
        compiler_params=pltpu.CompilerParams(
            dimension_semantics=("parallel", "parallel")),
    )(x_flat, w_tile, b_tile, rh)

    return out_flat.reshape(n, h_out, w_out, cout)


def reference(x_nhwc, w, b, gamma, beta, mean, var, *, scale, eps=1e-5):
    """Plain-JAX reference: upsample(nearest) -> 1x1 conv -> BN(eval) -> ReLU."""
    x_up = jnp.repeat(jnp.repeat(x_nhwc, scale, axis=1), scale, axis=2)
    y = jnp.einsum("nhwc,cd->nhwd", x_up, w,
                   precision=lax.Precision.HIGHEST) + b
    y = (y - mean) * lax.rsqrt(var + eps) * gamma + beta
    return jnp.maximum(y, 0.0)


if __name__ == "__main__":
    # Module config: UpSamplingBlock(ni=4, nout=8, n=0) -> scale = 2**(0+2) = 4
    ni, nout, n_blk = 4, 8, 0
    scale = 2 ** (n_blk + 2)
    N, H, W = 2, 16, 64          # NHWC here; PyTorch NCHW input would be (2, 4, 16, 64)

    key = jax.random.PRNGKey(0)
    kx, kw, kb, kg, kbeta, kmean, kvar = jax.random.split(key, 7)

    x = jax.random.normal(kx, (N, H, W, ni), dtype=jnp.float32)

    # Deterministic synthetic parameters.
    conv_w = jax.random.normal(kw, (ni, nout), dtype=jnp.float32) * 0.1
    conv_b = jax.random.normal(kb, (nout,), dtype=jnp.float32) * 0.1
    bn_gamma = 1.0 + 0.1 * jax.random.normal(kg, (nout,), dtype=jnp.float32)
    bn_beta = 0.1 * jax.random.normal(kbeta, (nout,), dtype=jnp.float32)
    bn_mean = 0.1 * jax.random.normal(kmean, (nout,), dtype=jnp.float32)
    bn_var = 1.0 + 0.1 * jax.random.uniform(kvar, (nout,), dtype=jnp.float32)

    # rows_per_step = N*H (one fat row tile, M=32) and w_block = 32
    # -> grid (1, 2): two ~512 KiB lane-dense output tiles, both axes
    # "parallel" so v7x's two TensorCores each take one step.
    out = upsampling_block(x, conv_w, conv_b, bn_gamma, bn_beta, bn_mean,
                           bn_var, scale=scale, rows_per_step=N * H,
                           w_block=32)
    out = jax.block_until_ready(out)

    ref = reference(x, conv_w, conv_b, bn_gamma, bn_beta, bn_mean, bn_var,
                    scale=scale)

    assert out.shape == (N, H * scale, W * scale, nout), out.shape
    max_err = float(jnp.max(jnp.abs(out - ref)))
    assert jnp.allclose(out, ref, atol=1e-4, rtol=1e-4), max_err

    print("KERNEL_OK")
</pallas_src>

<mosaic_0001>
module attributes {stable_mosaic.version = 11 : i64} {
  func.func @_upsample_conv_kernel(%arg0: i32, %arg1: i32, %arg2: memref<32x128xf32, #tpu.memory_space<vmem>>, %arg3: memref<128x1024xf32, #tpu.memory_space<vmem>>, %arg4: memref<1x1024xf32, #tpu.memory_space<vmem>>, %arg5: memref<128x32xf32, #tpu.memory_space<vmem>>, %arg6: memref<128x1024xf32, #tpu.memory_space<vmem>>) attributes {dimension_semantics = [#tpu.dimension_semantics<parallel>, #tpu.dimension_semantics<parallel>], iteration_bounds = array<i64: 1, 2>, scalar_prefetch = 0 : i64, scratch_operands = 0 : i64, tpu.core_type = #tpu.core_type<tc>, window_params = [{transform_indices = @transform_0, window_bounds = array<i64: 32, 128>}, {pipeline_mode = #tpu.pipeline_mode<synchronous>, transform_indices = @transform_1, window_bounds = array<i64: 128, 1024>}, {pipeline_mode = #tpu.pipeline_mode<synchronous>, transform_indices = @transform_2, window_bounds = array<i64: 1, 1024>}, {pipeline_mode = #tpu.pipeline_mode<synchronous>, transform_indices = @transform_3, window_bounds = array<i64: 128, 32>}, {transform_indices = @transform_4, window_bounds = array<i64: 128, 1024>}]} {
    %c0 = arith.constant 0 : index
    %c0_0 = arith.constant 0 : index
    %0 = vector.load %arg2[%c0, %c0_0] : memref<32x128xf32, #tpu.memory_space<vmem>>, vector<32x128xf32>
    %c0_1 = arith.constant 0 : index
    %c0_2 = arith.constant 0 : index
    %1 = vector.load %arg3[%c0_1, %c0_2] : memref<128x1024xf32, #tpu.memory_space<vmem>>, vector<128x1024xf32>
    %cst = arith.constant dense<0.000000e+00> : vector<32x1024xf32>
    %2 = tpu.matmul %0, %1, %cst {dimension_numbers = #tpu.dot_dimension_numbers<[1], [0], [0], [1], [0, 0, 1, 1], [], []>, precision = #tpu.contract_precision<fp32>} : vector<32x128xf32>, vector<128x1024xf32>, vector<32x1024xf32> -> vector<32x1024xf32>
    %c0_3 = arith.constant 0 : index
    %c0_4 = arith.constant 0 : index
    %3 = vector.load %arg4[%c0_3, %c0_4] : memref<1x1024xf32, #tpu.memory_space<vmem>>, vector<1x1024xf32>
    %4 = vector.broadcast %3 : vector<1x1024xf32> to vector<32x1024xf32>
    %5 = arith.addf %2, %4 : vector<32x1024xf32>
    %cst_5 = arith.constant 0.000000e+00 : f32
    %6 = vector.broadcast %cst_5 : f32 to vector<32x1024xf32>
    %7 = arith.maximumf %5, %6 : vector<32x1024xf32>
    %c0_6 = arith.constant 0 : index
    %c0_7 = arith.constant 0 : index
    %8 = vector.load %arg5[%c0_6, %c0_7] : memref<128x32xf32, #tpu.memory_space<vmem>>, vector<128x32xf32>
    %cst_8 = arith.constant dense<0.000000e+00> : vector<128x1024xf32>
    %9 = tpu.matmul %8, %7, %cst_8 {dimension_numbers = #tpu.dot_dimension_numbers<[1], [0], [0], [1], [0, 0, 1, 1], [], []>, precision = #tpu.contract_precision<fp32>} : vector<128x32xf32>, vector<32x1024xf32>, vector<128x1024xf32> -> vector<128x1024xf32>
    %c0_9 = arith.constant 0 : index
    %c0_10 = arith.constant 0 : index
    %10 = vector.load %arg6[%c0_9, %c0_10] : memref<128x1024xf32, #tpu.memory_space<vmem>>, vector<128x1024xf32>
    tpu.vector_store %arg6[%c0_9, %c0_10], %9 {strides = array<i32>} : memref<128x1024xf32, #tpu.memory_space<vmem>>, vector<128x1024xf32>,
    return
  }
  func.func @transform_0(%arg0: i32, %arg1: i32) -> (i32, i32) {
    %c0_i32 = arith.constant 0 : i32
    return %arg0, %arg1 : i32, i32
  }
  func.func @transform_1(%arg0: i32, %arg1: i32) -> (i32, i32) {
    %c0_i32 = arith.constant 0 : i32
    %c0_i32_0 = arith.constant 0 : i32
    %c0_i32_1 = arith.constant 0 : i32
    return %c0_i32, %c0_i32_0 : i32, i32
  }
  func.func @transform_2(%arg0: i32, %arg1: i32) -> (i32, i32) {
    %c0_i32 = arith.constant 0 : i32
    %c0_i32_0 = arith.constant 0 : i32
    %c0_i32_1 = arith.constant 0 : i32
    return %c0_i32, %c0_i32_0 : i32, i32
  }
  func.func @transform_3(%arg0: i32, %arg1: i32) -> (i32, i32) {
    %c0_i32 = arith.constant 0 : i32
    %c0_i32_0 = arith.constant 0 : i32
    %c0_i32_1 = arith.constant 0 : i32
    return %c0_i32, %c0_i32_0 : i32, i32
  }
  func.func @transform_4(%arg0: i32, %arg1: i32) -> (i32, i32) {
    %c0_i32 = arith.constant 0 : i32
    return %arg0, %arg1 : i32, i32
  }
}

</mosaic_0001>

<llo_original>
// kernel: tpu_custom_call.1
$region0: #{tpu_custom_call.1}
  #allocation0 [shape = 'u32[]', space=smem, size = 0x4, offset = 0x4, fixed_abs, tag = 'smem constant byte address 0x4 - core index']
  #allocation1 [shape = 'u32[144,128]{1,0:T(1,128)}', space=vmem, size = 0x12000, scoped, tag = 'internal scratch']
  %s0 = inlined_call_operand.vmem [shape: f32[32,256], index: 0, kind: input, shape index: {}]
  %s1 = inlined_call_operand.hbm [shape: f32[128,1024], index: 1, kind: input, shape index: {}]
  %s2 = inlined_call_operand.vmem [shape: f32[1,1024], index: 2, kind: input, shape index: {}]
  %s3 = inlined_call_operand.vmem [shape: f32[128,32], index: 3, kind: input, shape index: {}]
  %s4 = inlined_call_operand.hbm [shape: f32[128,2048], index: 4, kind: output, shape index: {}]
  %s5 = sld [smem:[#allocation0]]
  $region91: #{tpu_custom_call.1} parent=0
    _
  %s7 = ssub.s32 1, %s5
  %s8 = scalar_select 0, %s7, %s5
  $region1: #{tpu_custom_call.1} parent=0
    #allocation2 [shape = 'u8[32768]{0}', space=vmem, size = 0x8000, scoped, tag = 'input window, operand 0']
    #allocation3 [shape = 'u8[524288]{0}', space=vmem, size = 0x80000, scoped, tag = 'input window, operand 1, single buffered']
    #allocation4 [shape = 's32[2]{0}', space=sflag, size = 0x8, scoped, tag = 'scoped memory for tpu_custom_call.1']
    #allocation5 [shape = 's32[2]{0}', space=sflag, size = 0x8, scoped, tag = 'scoped memory for tpu_custom_call.1']
    #allocation6 [shape = 'u8[1048576]{0}', space=vmem, size = 0x100000, scoped, tag = 'output window, operand 0']
    %9 = vsyncpa [#allocation4], 0
    %10 = vsyncpa [#allocation5], 0
    %s11 = scalar_lea.sflag [#allocation5], 1
    %12 = vsyncpa %s11, 0
    loop: start=0, step=1, limit=4
    $region2: #{tpu_custom_call.1} parent=1 // loop_pre_header
      _
    $region3: #{tpu_custom_call.1} parent=1 // loop_header
      %s14 = sphi 0, %s18
      %p15 = scmp.ge.s32.totalorder %s14, 4
      %s21 = sphi 0, %s33
      %s22 = sphi 0, %s29
      %s23 = sphi 0, %s21
      %s24 = sphi 0, %s22
      %s25 = sphi 0, %s23
      %s26 = sphi 0, %s24
      %s38 = sphi 0, %s40
      %s41 = sphi 0, %s38
      %s42 = sphi 0, %s41
      %s58 = sphi 0, %s42
      %s62 = sphi 0, %s62
      %s64 = sphi 0, %s62
      %s65 = sphi 0, %s64
      %s79 = sphi 0, %s65
      %s83 = sphi 0, %s83
      %s85 = sphi 0, %s83
      %s86 = sphi 0, %s85
      %s100 = sphi 0, %s86
      %s104 = sphi 0, %s104
      %s106 = sphi 0, %s104
      %s107 = sphi 0, %s106
      %s121 = sphi 0, %s107
      %s129 = sphi 0, %s131
      %s132 = sphi 0, %s129
      %s133 = sphi 0, %s132
      %s149 = sphi 0, %s133
    $region4: #{tpu_custom_call.1} parent=1 // loop_header_branch
      %17 = sbr.rel (%p15) target = $region8
    $region5: #{tpu_custom_call.1} parent=1 // loop_body
      %s19 = ssub.s32 %s14, 1
      %s20 = ssub.s32 %s14, 2
      %s27 = sadd.s32 1, %s22
      %p28 = scmp.ge.s32.totalorder %s27, 2
      %s29 = scalar_select %p28, 0, %s27
      %s30 = sadd.s32 1, %s21
      %s31 = scalar_select %p28, %s30, %s21
      %p32 = scmp.ge.s32.totalorder %s31, 1
      %s33 = scalar_select %p32, 0, %s31
      %s34 = ssub.s32 %s21, %s33
      %s35 = ssub.s32 %s22, %s29
      %s36 = sor.u32 %s34, %s35
      %p37 = scmp.eq.s32.totalorder %s36, 0
      %s39 = sadd.s32 %s38, 1
      %s40 = scalar_select %p37, %s38, %s39
      %p43 = pneg %p37
      %p44 = scmp.eq.s32.totalorder %s14, 1
      %p45 = por %p43, %p44
      %p46 = scmp.ne.s32.totalorder %s38, %s41
      %p47 = scmp.eq.s32.totalorder %s14, 0
      %p48 = por %p46, %p47
      %p49 = scmp.ne.s32.totalorder %s38, %s41
      %p50 = scmp.eq.s32.totalorder %s19, 1
      %p51 = por %p49, %p50
      %p52 = scmp.ne.s32.totalorder %s41, %s42
      %p53 = scmp.eq.s32.totalorder %s19, 0
      %p54 = por %p52, %p53
      %p55 = scmp.ne.s32.totalorder %s41, %s42
      %p56 = scmp.eq.s32.totalorder %s20, 1
      %p57 = por %p55, %p56
      %p59 = scmp.ne.s32.totalorder %s42, %s58
      %p60 = scmp.eq.s32.totalorder %s20, 0
      %p61 = por %p59, %p60
      %s63 = sadd.s32 %s62, 1
      %p66 = scmp.eq.s32.totalorder %s14, 1
      %p67 = scmp.ne.s32.totalorder %s62, %s64
      %p68 = scmp.eq.s32.totalorder %s14, 0
      %p69 = por %p67, %p68
      %p70 = scmp.ne.s32.totalorder %s62, %s64
      %p71 = scmp.eq.s32.totalorder %s19, 1
      %p72 = por %p70, %p71
      %p73 = scmp.ne.s32.totalorder %s64, %s65
      %p74 = scmp.eq.s32.totalorder %s19, 0
      %p75 = por %p73, %p74
      %p76 = scmp.ne.s32.totalorder %s64, %s65
      %p77 = scmp.eq.s32.totalorder %s20, 1
      %p78 = por %p76, %p77
      %p80 = scmp.ne.s32.totalorder %s65, %s79
      %p81 = scmp.eq.s32.totalorder %s20, 0
      %p82 = por %p80, %p81
      %s84 = sadd.s32 %s83, 1
      %p87 = scmp.eq.s32.totalorder %s14, 1
      %p88 = scmp.ne.s32.totalorder %s83, %s85
      %p89 = scmp.eq.s32.totalorder %s14, 0
      %p90 = por %p88, %p89
      %p91 = scmp.ne.s32.totalorder %s83, %s85
      %p92 = scmp.eq.s32.totalorder %s19, 1
      %p93 = por %p91, %p92
      %p94 = scmp.ne.s32.totalorder %s85, %s86
      %p95 = scmp.eq.s32.totalorder %s19, 0
      %p96 = por %p94, %p95
      %p97 = scmp.ne.s32.totalorder %s85, %s86
      %p98 = scmp.eq.s32.totalorder %s20, 1
      %p99 = por %p97, %p98
      %p101 = scmp.ne.s32.totalorder %s86, %s100
      %p102 = scmp.eq.s32.totalorder %s20, 0
      %p103 = por %p101, %p102
      %s105 = sadd.s32 %s104, 1
      %p108 = scmp.eq.s32.totalorder %s14, 1
      %p109 = scmp.ne.s32.totalorder %s104, %s106
      %p110 = scmp.eq.s32.totalorder %s14, 0
      %p111 = por %p109, %p110
      %p112 = scmp.ne.s32.totalorder %s104, %s106
      %p113 = scmp.eq.s32.totalorder %s19, 1
      %p114 = por %p112, %p113
      %p115 = scmp.ne.s32.totalorder %s106, %s107
      %p116 = scmp.eq.s32.totalorder %s19, 0
      %p117 = por %p115, %p116
      %p118 = scmp.ne.s32.totalorder %s106, %s107
      %p119 = scmp.eq.s32.totalorder %s20, 1
      %p120 = por %p118, %p119
      %p122 = scmp.ne.s32.totalorder %s107, %s121
      %p123 = scmp.eq.s32.totalorder %s20, 0
      %p124 = por %p122, %p123
      %s125 = ssub.s32 %s21, %s33
      %s126 = ssub.s32 %s22, %s29
      %s127 = sor.u32 %s125, %s126
      %p128 = scmp.eq.s32.totalorder %s127, 0
      %s130 = sadd.s32 %s129, 1
      %s131 = scalar_select %p128, %s129, %s130
      %p134 = pneg %p128
      %p135 = scmp.eq.s32.totalorder %s14, 1
      %p136 = por %p134, %p135
      %p137 = scmp.ne.s32.totalorder %s129, %s132
      %p138 = scmp.eq.s32.totalorder %s14, 0
      %p139 = por %p137, %p138
      %p140 = scmp.ne.s32.totalorder %s129, %s132
      %p141 = scmp.eq.s32.totalorder %s19, 1
      %p142 = por %p140, %p141
      %p143 = scmp.ne.s32.totalorder %s132, %s133
      %p144 = scmp.eq.s32.totalorder %s19, 0
      %p145 = por %p143, %p144
      %p146 = scmp.ne.s32.totalorder %s132, %s133
      %p147 = scmp.eq.s32.totalorder %s20, 1
      %p148 = por %p146, %p147
      %p150 = scmp.ne.s32.totalorder %s133, %s149
      %p151 = scmp.eq.s32.totalorder %s20, 0
      %p152 = por %p150, %p151
      %p153 = scmp.le.s32.totalorder 1, %s14
      %p154 = scmp.lt.s32.totalorder %s14, 3
      %p155 = pnand %p153, %p154
      %p156 = pneg %p155
      // Predicated region
      $region9: #{tpu_custom_call.1} parent=5 // pred_check
        _
      $region10: #{tpu_custom_call.1} parent=5 // pred_check_branch
        %158 = sbr.rel (%p155) target = $region12
      $region11: #{tpu_custom_call.1} parent=5 // pred_region
        %s159 = ssub.s32 %s14, 1
        // Predicated region
        $region13: #{tpu_custom_call.1} parent=11 // pred_check
          %p160 = pneg %p75
        $region14: #{tpu_custom_call.1} parent=11 // pred_check_branch
          %162 = sbr.rel (%p160) target = $region16
        $region15: #{tpu_custom_call.1} parent=11 // pred_region
          %s164 = ssub.s32 16384, 16384
          %165 = vsyncadd [#allocation4], %s164
          %s166 = sshll.u32 [#allocation3], 4
          %s167 = int_to_ptr.vmem [resolvable:$true] %s166
          %172 = dma.hbm_to_vmem [thread:$0]  %s1, 16384, %s167, [#allocation4], 1024, 1024, 64
        $region16: #{tpu_custom_call.1} parent=11 // pred_fallthru
          _
        // Predicated region
        $region17: #{tpu_custom_call.1} parent=11 // pred_check
          %p173 = pneg %p96
        $region18: #{tpu_custom_call.1} parent=11 // pred_check_branch
          %175 = sbr.rel (%p173) target = $region20
        $region19: #{tpu_custom_call.1} parent=11 // pred_region
          _
        $region20: #{tpu_custom_call.1} parent=11 // pred_fallthru
          _
        // Predicated region
        $region21: #{tpu_custom_call.1} parent=11 // pred_check
          %p176 = pneg %p117
        $region22: #{tpu_custom_call.1} parent=11 // pred_check_branch
          %178 = sbr.rel (%p176) target = $region24
        $region23: #{tpu_custom_call.1} parent=11 // pred_region
          _
        $region24: #{tpu_custom_call.1} parent=11 // pred_fallthru
          _
      $region12: #{tpu_custom_call.1} parent=5 // pred_fallthru
        _
      %p179 = scmp.lt.s32.totalorder %s14, 2
      // Predicated region
      $region25: #{tpu_custom_call.1} parent=5 // pred_check
        %p180 = pneg %p179
      $region26: #{tpu_custom_call.1} parent=5 // pred_check_branch
        %182 = sbr.rel (%p180) target = $region28
      $region27: #{tpu_custom_call.1} parent=5 // pred_region
        // Predicated region
        $region29: #{tpu_custom_call.1} parent=27 // pred_check
          %p183 = pneg %p48
        $region30: #{tpu_custom_call.1} parent=27 // pred_check_branch
          %185 = sbr.rel (%p183) target = $region32
        $region31: #{tpu_custom_call.1} parent=27 // pred_region
          %s186 = sand.u32 %s38, 1
          %s187 = sand.u32 %s38, 1
          %s188 = smul.addr %s187, 32
          %s189 = scalar_lea.vmem [#allocation2], %s188
          %s190 = smul.u32 4, %s21
          %s191 = smul.addr %s190, 2
          %s192 = sadd.s32 %s22, %s191
          %s193 = smul.addr %s192, 8
          %s194 = scalar_lea.vmem %s0, %s193
          // Predicated region
          $region33: #{tpu_custom_call.1} parent=31 // pred_check
            _
          $region34: #{tpu_custom_call.1} parent=31 // pred_check_branch
            %196 = sbr.rel (0) target = $region36
          $region35: #{tpu_custom_call.1} parent=31 // pred_region
            // Predicated region
            $region37: #{tpu_custom_call.1} parent=35 // pred_check
              _
            $region38: #{tpu_custom_call.1} parent=35 // pred_check_branch
              %198 = sbr.rel (0) target = $region40
            $region39: #{tpu_custom_call.1} parent=35 // pred_region
              // Predicated region
              $region52: #{tpu_custom_call.1} parent=39 // pred_check
                _
              $region53: #{tpu_custom_call.1} parent=39 // pred_check_branch
                %219 = sbr.rel (0) target = $region55
              $region54: #{tpu_custom_call.1} parent=39 // pred_region
                loop: start=0, step=1, limit=1
                $region56: #{tpu_custom_call.1} parent=54 // loop_pre_header
                  _
                $region57: #{tpu_custom_call.1} parent=54 // loop_header
                  %s221 = sphi 0, %s225
                  %p222 = scmp.ge.s32.totalorder %s221, 1
                  %s226 = sphi %s194, %s194
                  %s227 = sphi %s189, %s189
                $region58: #{tpu_custom_call.1} parent=54 // loop_header_branch
                  %224 = sbr.rel (%p222) target = $region62
                $region59: #{tpu_custom_call.1} parent=54 // loop_body
                  %v228 = vld [vmem:[%s226] sm:$0xff]
                  %229 = vst [vmem:[%s227] sm:$0xff] %v228
                  %v230 = vld [vmem:[%s226 + $0x10] sm:$0xff]
                  %231 = vst [vmem:[%s227 + $0x8] sm:$0xff] %v230
                  %v232 = vld [vmem:[%s226 + $0x20] sm:$0xff]
                  %233 = vst [vmem:[%s227 + $0x10] sm:$0xff] %v232
                  %v234 = vld [vmem:[%s226 + $0x30] sm:$0xff]
                  %235 = vst [vmem:[%s227 + $0x18] sm:$0xff] %v234
                $region60: #{tpu_custom_call.1} parent=54 // loop_footer
                  %s225 = sadd.s32 1, %s221
                $region61: #{tpu_custom_call.1} parent=54 // loop_footer_branch
                  %220 = sbr.rel target = $region57
                $region62: #{tpu_custom_call.1} parent=54 // loop_exit
                  _
              $region55: #{tpu_custom_call.1} parent=39 // pred_fallthru
                _
              // Predicated region
              $region63: #{tpu_custom_call.1} parent=39 // pred_check
                _
              $region64: #{tpu_custom_call.1} parent=39 // pred_check_branch
                %237 = sbr.rel target = $region66
              $region65: #{tpu_custom_call.1} parent=39 // pred_region
                _
              $region66: #{tpu_custom_call.1} parent=39 // pred_fallthru
                _
            $region40: #{tpu_custom_call.1} parent=35 // pred_fallthru
              _
            // Predicated region
            $region41: #{tpu_custom_call.1} parent=35 // pred_check
              _
            $region42: #{tpu_custom_call.1} parent=35 // pred_check_branch
              %200 = sbr.rel target = $region44
            $region43: #{tpu_custom_call.1} parent=35 // pred_region
              loop: start=0, step=1, limit=1
              $region45: #{tpu_custom_call.1} parent=43 // loop_pre_header
                _
              $region46: #{tpu_custom_call.1} parent=43 // loop_header
                %s203 = sphi 0, %s207
                %p204 = scmp.ge.s32.totalorder %s203, 1
                %s208 = sphi %s194, %s194
                %s209 = sphi %s189, %s189
              $region47: #{tpu_custom_call.1} parent=43 // loop_header_branch
                %206 = sbr.rel (%p204) target = $region51
              $region48: #{tpu_custom_call.1} parent=43 // loop_body
                %v210 = vld [vmem:[%s208] sm:$0xff]
                %211 = vst [vmem:[%s209] sm:$0xff] %v210
                %v212 = vld [vmem:[%s208 + $0x10] sm:$0xff]
                %213 = vst [vmem:[%s209 + $0x8] sm:$0xff] %v212
                %v214 = vld [vmem:[%s208 + $0x20] sm:$0xff]
                %215 = vst [vmem:[%s209 + $0x10] sm:$0xff] %v214
                %v216 = vld [vmem:[%s208 + $0x30] sm:$0xff]
                %217 = vst [vmem:[%s209 + $0x18] sm:$0xff] %v216
              $region49: #{tpu_custom_call.1} parent=43 // loop_footer
                %s207 = sadd.s32 1, %s203
              $region50: #{tpu_custom_call.1} parent=43 // loop_footer_branch
                %202 = sbr.rel target = $region46
              $region51: #{tpu_custom_call.1} parent=43 // loop_exit
                _
            $region44: #{tpu_custom_call.1} parent=35 // pred_fallthru
              _
          $region36: #{tpu_custom_call.1} parent=31 // pred_fallthru
            _
          %238 = vnop
        $region32: #{tpu_custom_call.1} parent=27 // pred_fallthru
          _
      $region28: #{tpu_custom_call.1} parent=5 // pred_fallthru
        _
      %p239 = scmp.le.s32.totalorder 1, %s14
      %p240 = scmp.lt.s32.totalorder %s14, 3
      %p241 = pnand %p239, %p240
      %p242 = pneg %p241
      // Predicated region
      $region67: #{tpu_custom_call.1} parent=5 // pred_check
        _
      $region68: #{tpu_custom_call.1} parent=5 // pred_check_branch
        %244 = sbr.rel (%p241) target = $region70
      $region69: #{tpu_custom_call.1} parent=5 // pred_region
        %s245 = ssub.s32 %s14, 1
        %s246 = sand.u32 %s41, 1
        %s247 = sand.u32 %s41, 1
        %s248 = smul.addr %s247, 32
        %s249 = scalar_lea.vmem [#allocation2], %s248
        // Predicated region
        $region71: #{tpu_custom_call.1} parent=69 // pred_check
          %p250 = pneg %p54
        $region72: #{tpu_custom_call.1} parent=69 // pred_check_branch
          %252 = sbr.rel (%p250) target = $region74
        $region73: #{tpu_custom_call.1} parent=69 // pred_region
          _
        $region74: #{tpu_custom_call.1} parent=69 // pred_fallthru
          _
        // Predicated region
        $region75: #{tpu_custom_call.1} parent=69 // pred_check
          %p253 = pneg %p75
        $region76: #{tpu_custom_call.1} parent=69 // pred_check_branch
          %255 = sbr.rel (%p253) target = $region78
        $region77: #{tpu_custom_call.1} parent=69 // pred_region
          %256 = dma.done [#allocation4], 16384
        $region78: #{tpu_custom_call.1} parent=69 // pred_fallthru
          _
        %s257 = sand.u32 %s41, 1
        %s258 = sand.u32 %s41, 1
        %s259 = smul.addr %s258, 32
        %s260 = scalar_lea.vmem [#allocation2], %s259
        %p261 = pneg %p54
        %p262 = pneg %p51
        %p263 = pneg %p75
        %p264 = pneg %p72
        %p265 = pneg %p96
        %p266 = pneg %p93
        %p267 = pneg %p117
        %p268 = pneg %p114
        %p269 = pneg %p145
        %p270 = pneg %p142
        %s271 = sand.u32 %s132, 1
        %s272 = scalar_lea.sflag [#allocation5], %s271
        %s273 = sand.u32 %s132, 1
        %s274 = smul.addr %s273, 1024
        %s275 = scalar_lea.vmem [#allocation6], %s274
        %s276 = smul.u32 4, %s23
        %s277 = smul.u32 16, %s23
        %s278 = smul.u32 8, %s24
        %v279 = vld [vmem:[%s249] sm:$0xff]
        %v280 = vld [vmem:[%s249 + $0x8] sm:$0xff]
        %v281 = vld [vmem:[%s249 + $0x10] sm:$0xff]
        %v282 = vld [vmem:[%s249 + $0x18] sm:$0xff]
        %v283 = vld [vmem:[#allocation3] sm:$0xff]
        %v284 = vld [vmem:[#allocation3 + $0x8] sm:$0xff]
        %v285 = vld [vmem:[#allocation3 + $0x10] sm:$0xff]
        %v286 = vld [vmem:[#allocation3 + $0x18] sm:$0xff]
        %v287 = vld [vmem:[#allocation3 + $0x20] sm:$0xff]
        %v288 = vld [vmem:[#allocation3 + $0x28] sm:$0xff]
        %v289 = vld [vmem:[#allocation3 + $0x30] sm:$0xff]
        %v290 = vld [vmem:[#allocation3 + $0x38] sm:$0xff]
        %v291 = vld [vmem:[#allocation3 + $0x40] sm:$0xff]
        %v292 = vld [vmem:[#allocation3 + $0x48] sm:$0xff]
        %v293 = vld [vmem:[#allocation3 + $0x50] sm:$0xff]
        %v294 = vld [vmem:[#allocation3 + $0x58] sm:$0xff]
        %v295 = vld [vmem:[#allocation3 + $0x60] sm:$0xff]
        %v296 = vld [vmem:[#allocation3 + $0x68] sm:$0xff]
        %v297 = vld [vmem:[#allocation3 + $0x70] sm:$0xff]
        %v298 = vld [vmem:[#allocation3 + $0x78] sm:$0xff]
        %v299 = vld [vmem:[#allocation3 + $0x80] sm:$0xff]
        %v300 = vld [vmem:[#allocation3 + $0x88] sm:$0xff]
        %v301 = vld [vmem:[#allocation3 + $0x90] sm:$0xff]
        %v302 = vld [vmem:[#allocation3 + $0x98] sm:$0xff]
        %v303 = vld [vmem:[#allocation3 + $0xa0] sm:$0xff]
        %v304 = vld [vmem:[#allocation3 + $0xa8] sm:$0xff]
        %v305 = vld [vmem:[#allocation3 + $0xb0] sm:$0xff]
        %v306 = vld [vmem:[#allocation3 + $0xb8] sm:$0xff]
        %v307 = vld [vmem:[#allocation3 + $0xc0] sm:$0xff]
        %v308 = vld [vmem:[#allocation3 + $0xc8] sm:$0xff]
        %v309 = vld [vmem:[#allocation3 + $0xd0] sm:$0xff]
        %v310 = vld [vmem:[#allocation3 + $0xd8] sm:$0xff]
        %v311 = vld [vmem:[#allocation3 + $0xe0] sm:$0xff]
        %v312 = vld [vmem:[#allocation3 + $0xe8] sm:$0xff]
        %v313 = vld [vmem:[#allocation3 + $0xf0] sm:$0xff]
        %v314 = vld [vmem:[#allocation3 + $0xf8] sm:$0xff]
        %v315 = vld [vmem:[#allocation3 + $0x100] sm:$0xff]
        %v316 = vld [vmem:[#allocation3 + $0x108] sm:$0xff]
        %v317 = vld [vmem:[#allocation3 + $0x110] sm:$0xff]
        %v318 = vld [vmem:[#allocation3 + $0x118] sm:$0xff]
        %v319 = vld [vmem:[#allocation3 + $0x120] sm:$0xff]
        %v320 = vld [vmem:[#allocation3 + $0x128] sm:$0xff]
        %v321 = vld [vmem:[#allocation3 + $0x130] sm:$0xff]
        %v322 = vld [vmem:[#allocation3 + $0x138] sm:$0xff]
        %v323 = vld [vmem:[#allocation3 + $0x140] sm:$0xff]
        %v324 = vld [vmem:[#allocation3 + $0x148] sm:$0xff]
        %v325 = vld [vmem:[#allocation3 + $0x150] sm:$0xff]
        %v326 = vld [vmem:[#allocation3 + $0x158] sm:$0xff]
        %v327 = vld [vmem:[#allocation3 + $0x160] sm:$0xff]
        %v328 = vld [vmem:[#allocation3 + $0x168] sm:$0xff]
        %v329 = vld [vmem:[#allocation3 + $0x170] sm:$0xff]
        %v330 = vld [vmem:[#allocation3 + $0x178] sm:$0xff]
        %v331 = vld [vmem:[#allocation3 + $0x180] sm:$0xff]
        %v332 = vld [vmem:[#allocation3 + $0x188] sm:$0xff]
        %v333 = vld [vmem:[#allocation3 + $0x190] sm:$0xff]
        %v334 = vld [vmem:[#allocation3 + $0x198] sm:$0xff]
        %v335 = vld [vmem:[#allocation3 + $0x1a0] sm:$0xff]
        %v336 = vld [vmem:[#allocation3 + $0x1a8] sm:$0xff]
        %v337 = vld [vmem:[#allocation3 + $0x1b0] sm:$0xff]
        %v338 = vld [vmem:[#allocation3 + $0x1b8] sm:$0xff]
        %v339 = vld [vmem:[#allocation3 + $0x1c0] sm:$0xff]
        %v340 = vld [vmem:[#allocation3 + $0x1c8] sm:$0xff]
        %v341 = vld [vmem:[#allocation3 + $0x1d0] sm:$0xff]
        %v342 = vld [vmem:[#allocation3 + $0x1d8] sm:$0xff]
        %v343 = vld [vmem:[#allocation3 + $0x1e0] sm:$0xff]
        %v344 = vld [vmem:[#allocation3 + $0x1e8] sm:$0xff]
        %v345 = vld [vmem:[#allocation3 + $0x1f0] sm:$0xff]
        %v346 = vld [vmem:[#allocation3 + $0x1f8] sm:$0xff]
        %v347 = vld [vmem:[#allocation3 + $0x200] sm:$0xff]
        %v348 = vld [vmem:[#allocation3 + $0x208] sm:$0xff]
        %v349 = vld [vmem:[#allocation3 + $0x210] sm:$0xff]
        %v350 = vld [vmem:[#allocation3 + $0x218] sm:$0xff]
        %v351 = vld [vmem:[#allocation3 + $0x220] sm:$0xff]
        %v352 = vld [vmem:[#allocation3 + $0x228] sm:$0xff]
        %v353 = vld [vmem:[#allocation3 + $0x230] sm:$0xff]
        %v354 = vld [vmem:[#allocation3 + $0x238] sm:$0xff]
        %v355 = vld [vmem:[#allocation3 + $0x240] sm:$0xff]
        %v356 = vld [vmem:[#allocation3 + $0x248] sm:$0xff]
        %v357 = vld [vmem:[#allocation3 + $0x250] sm:$0xff]
        %v358 = vld [vmem:[#allocation3 + $0x258] sm:$0xff]
        %v359 = vld [vmem:[#allocation3 + $0x260] sm:$0xff]
        %v360 = vld [vmem:[#allocation3 + $0x268] sm:$0xff]
        %v361 = vld [vmem:[#allocation3 + $0x270] sm:$0xff]
        %v362 = vld [vmem:[#allocation3 + $0x278] sm:$0xff]
        %v363 = vld [vmem:[#allocation3 + $0x280] sm:$0xff]
        %v364 = vld [vmem:[#allocation3 + $0x288] sm:$0xff]
        %v365 = vld [vmem:[#allocation3 + $0x290] sm:$0xff]
        %v366 = vld [vmem:[#allocation3 + $0x298] sm:$0xff]
        %v367 = vld [vmem:[#allocation3 + $0x2a0] sm:$0xff]
        %v368 = vld [vmem:[#allocation3 + $0x2a8] sm:$0xff]
        %v369 = vld [vmem:[#allocation3 + $0x2b0] sm:$0xff]
        %v370 = vld [vmem:[#allocation3 + $0x2b8] sm:$0xff]
        %v371 = vld [vmem:[#allocation3 + $0x2c0] sm:$0xff]
        %v372 = vld [vmem:[#allocation3 + $0x2c8] sm:$0xff]
        %v373 = vld [vmem:[#allocation3 + $0x2d0] sm:$0xff]
        %v374 = vld [vmem:[#allocation3 + $0x2d8] sm:$0xff]
        %v375 = vld [vmem:[#allocation3 + $0x2e0] sm:$0xff]
        %v376 = vld [vmem:[#allocation3 + $0x2e8] sm:$0xff]
        %v377 = vld [vmem:[#allocation3 + $0x2f0] sm:$0xff]
        %v378 = vld [vmem:[#allocation3 + $0x2f8] sm:$0xff]
        %v379 = vld [vmem:[#allocation3 + $0x300] sm:$0xff]
        %v380 = vld [vmem:[#allocation3 + $0x308] sm:$0xff]
        %v381 = vld [vmem:[#allocation3 + $0x310] sm:$0xff]
        %v382 = vld [vmem:[#allocation3 + $0x318] sm:$0xff]
        %v383 = vld [vmem:[#allocation3 + $0x320] sm:$0xff]
        %v384 = vld [vmem:[#allocation3 + $0x328] sm:$0xff]
        %v385 = vld [vmem:[#allocation3 + $0x330] sm:$0xff]
        %v386 = vld [vmem:[#allocation3 + $0x338] sm:$0xff]
        %v387 = vld [vmem:[#allocation3 + $0x340] sm:$0xff]
        %v388 = vld [vmem:[#allocation3 + $0x348] sm:$0xff]
        %v389 = vld [vmem:[#allocation3 + $0x350] sm:$0xff]
        %v390 = vld [vmem:[#allocation3 + $0x358] sm:$0xff]
        %v391 = vld [vmem:[#allocation3 + $0x360] sm:$0xff]
        %v392 = vld [vmem:[#allocation3 + $0x368] sm:$0xff]
        %v393 = vld [vmem:[#allocation3 + $0x370] sm:$0xff]
        %v394 = vld [vmem:[#allocation3 + $0x378] sm:$0xff]
        %v395 = vld [vmem:[#allocation3 + $0x380] sm:$0xff]
        %v396 = vld [vmem:[#allocation3 + $0x388] sm:$0xff]
        %v397 = vld [vmem:[#allocation3 + $0x390] sm:$0xff]
        %v398 = vld [vmem:[#allocation3 + $0x398] sm:$0xff]
        %v399 = vld [vmem:[#allocation3 + $0x3a0] sm:$0xff]
        %v400 = vld [vmem:[#allocation3 + $0x3a8] sm:$0xff]
        %v401 = vld [vmem:[#allocation3 + $0x3b0] sm:$0xff]
        %v402 = vld [vmem:[#allocation3 + $0x3b8] sm:$0xff]
        %v403 = vld [vmem:[#allocation3 + $0x3c0] sm:$0xff]
        %v404 = vld [vmem:[#allocation3 + $0x3c8] sm:$0xff]
        %v405 = vld [vmem:[#allocation3 + $0x3d0] sm:$0xff]
        %v406 = vld [vmem:[#allocation3 + $0x3d8] sm:$0xff]
        %v407 = vld [vmem:[#allocation3 + $0x3e0] sm:$0xff]
        %v408 = vld [vmem:[#allocation3 + $0x3e8] sm:$0xff]
        %v409 = vld [vmem:[#allocation3 + $0x3f0] sm:$0xff]
        %v410 = vld [vmem:[#allocation3 + $0x3f8] sm:$0xff]
        %v411 = vld [vmem:[%s2] sm:$0xff]
        %v413 = vlaneseq
        %v414 = vshrl.u32 %v413, 7
        %v415 = vsub.s32 0, %v414
        %v416 = vrot.slane %v411, %v415
        %v417 = vlaneseq
        %v418 = vshrl.u32 %v417, 7
        %v419 = vsub.s32 1, %v418
        %v420 = vrot.slane %v411, %v419
        %v421 = vlaneseq
        %v422 = vshrl.u32 %v421, 7
        %v423 = vsub.s32 2, %v422
        %v424 = vrot.slane %v411, %v423
        %v425 = vlaneseq
        %v426 = vshrl.u32 %v425, 7
        %v427 = vsub.s32 3, %v426
        %v428 = vrot.slane %v411, %v427
        %v429 = vlaneseq
        %v430 = vshrl.u32 %v429, 7
        %v431 = vsub.s32 4, %v430
        %v432 = vrot.slane %v411, %v431
        %v433 = vlaneseq
        %v434 = vshrl.u32 %v433, 7
        %v435 = vsub.s32 5, %v434
        %v436 = vrot.slane %v411, %v435
        %v437 = vlaneseq
        %v438 = vshrl.u32 %v437, 7
        %v439 = vsub.s32 6, %v438
        %v440 = vrot.slane %v411, %v439
        %v441 = vlaneseq
        %v442 = vshrl.u32 %v441, 7
        %v443 = vsub.s32 7, %v442
        %v444 = vrot.slane %v411, %v443
        %v453 = vand.u32 %v284, 4294901760
        %454 = vmatprep.subr.mxu0 %v453
        %v455 = vand.u32 %v283, 4294901760
        %456 = vmatpush1.msra.mxu0 %v455
        %v457 = vand.u32 %v292, 4294901760
        %458 = vmatprep.subr.mxu0 %v457
        %v459 = vand.u32 %v291, 4294901760
        %460 = vmatpush1.msra.mxu0 %v459
        %v461 = vand.u32 %v300, 4294901760
        %462 = vmatprep.subr.mxu0 %v461
        %v463 = vand.u32 %v299, 4294901760
        %464 = vmatpush1.msra.mxu0 %v463
        %v465 = vand.u32 %v308, 4294901760
        %466 = vmatprep.subr.mxu0 %v465
        %v467 = vand.u32 %v307, 4294901760
        %468 = vmatpush1.msra.mxu0 %v467
        %v469 = vand.u32 %v316, 4294901760
        %470 = vmatprep.subr.mxu0 %v469
        %v471 = vand.u32 %v315, 4294901760
        %472 = vmatpush1.msra.mxu0 %v471
        %v473 = vand.u32 %v324, 4294901760
        %474 = vmatprep.subr.mxu0 %v473
        %v475 = vand.u32 %v323, 4294901760
        %476 = vmatpush1.msra.mxu0 %v475
        %v477 = vand.u32 %v332, 4294901760
        %478 = vmatprep.subr.mxu0 %v477
        %v479 = vand.u32 %v331, 4294901760
        %480 = vmatpush1.msra.mxu0 %v479
        %v481 = vand.u32 %v340, 4294901760
        %482 = vmatprep.subr.mxu0 %v481
        %v483 = vand.u32 %v339, 4294901760
        %484 = vmatpush1.msra.mxu0 %v483
        %v485 = vand.u32 %v348, 4294901760
        %486 = vmatprep.subr.mxu0 %v485
        %v487 = vand.u32 %v347, 4294901760
        %488 = vmatpush1.msra.mxu0 %v487
        %v489 = vand.u32 %v356, 4294901760
        %490 = vmatprep.subr.mxu0 %v489
        %v491 = vand.u32 %v355, 4294901760
        %492 = vmatpush1.msra.mxu0 %v491
        %v493 = vand.u32 %v364, 4294901760
        %494 = vmatprep.subr.mxu0 %v493
        %v495 = vand.u32 %v363, 4294901760
        %496 = vmatpush1.msra.mxu0 %v495
        %v497 = vand.u32 %v372, 4294901760
        %498 = vmatprep.subr.mxu0 %v497
        %v499 = vand.u32 %v371, 4294901760
        %500 = vmatpush1.msra.mxu0 %v499
        %v501 = vand.u32 %v380, 4294901760
        %502 = vmatprep.subr.mxu0 %v501
        %v503 = vand.u32 %v379, 4294901760
        %504 = vmatpush1.msra.mxu0 %v503
        %v505 = vand.u32 %v388, 4294901760
        %506 = vmatprep.subr.mxu0 %v505
        %v507 = vand.u32 %v387, 4294901760
        %508 = vmatpush1.msra.mxu0 %v507
        %v509 = vand.u32 %v396, 4294901760
        %510 = vmatprep.subr.mxu0 %v509
        %v511 = vand.u32 %v395, 4294901760
        %512 = vmatpush1.msra.mxu0 %v511
        %v513 = vand.u32 %v404, 4294901760
        %514 = vmatprep.subr.mxu0 %v513
        %v515 = vand.u32 %v403, 4294901760
        %516 = vmatpush1.msra.mxu0 %v515
        %517 = vmatprep.subr.mxu0 0.0
        %518 = vmatpush1.msra.mxu0 0.0
        %519 = vmatprep.subr.mxu0 0.0
        %520 = vmatpush1.msra.mxu0 0.0
        %521 = vmatprep.subr.mxu0 0.0
        %522 = vmatpush1.msra.mxu0 0.0
        %523 = vmatprep.subr.mxu0 0.0
        %524 = vmatpush1.msra.mxu0 0.0
        %525 = vmatprep.subr.mxu0 0.0
        %526 = vmatpush1.msra.mxu0 0.0
        %527 = vmatprep.subr.mxu0 0.0
        %528 = vmatpush1.msra.mxu0 0.0
        %529 = vmatprep.subr.mxu0 0.0
        %530 = vmatpush1.msra.mxu0 0.0
        %531 = vmatprep.subr.mxu0 0.0
        %532 = vmatpush1.msra.mxu0 0.0
        %533 = vmatprep.subr.mxu0 0.0
        %534 = vmatpush1.msra.mxu0 0.0
        %535 = vmatprep.subr.mxu0 0.0
        %536 = vmatpush1.msra.mxu0 0.0
        %537 = vmatprep.subr.mxu0 0.0
        %538 = vmatpush1.msra.mxu0 0.0
        %539 = vmatprep.subr.mxu0 0.0
        %540 = vmatpush1.msra.mxu0 0.0
        %541 = vmatprep.subr.mxu0 0.0
        %542 = vmatpush1.msra.mxu0 0.0
        %543 = vmatprep.subr.mxu0 0.0
        %544 = vmatpush1.msra.mxu0 0.0
        %545 = vmatprep.subr.mxu0 0.0
        %546 = vmatpush1.msra.mxu0 0.0
        %547 = vmatprep.subr.mxu0 0.0
        %548 = vmatpush1.msra.mxu0 0.0
        %549 = vmatprep.mubr.f32.mxu0 0.0
        %v550 = vand.u32 %v279, 4294901760
        %v551 = vsub.f32 %v279, %v550
        %v552 = vand.u32 %v551, 4294901760
        %v553 = vsub.f32 %v551, %v552
        %v554 = vand.u32 %v553, 4294901760
        %555 = vmatmul.mubr.f32.gmra.mrb[0].mxu0 %v554
        %v556 = vpop.f32.mrb[0].mxu0
        %v557 = vadd.f32 %v416, %v556
        %v558 = vpop.f32.mrb[0].mxu0
        %v559 = vadd.f32 %v420, %v558
        %560 = vmatprep.mubr.f32.mxu0 0.0
        %v561 = vand.u32 %v280, 4294901760
        %v562 = vsub.f32 %v280, %v561
        %v563 = vand.u32 %v562, 4294901760
        %v564 = vsub.f32 %v562, %v563
        %v565 = vand.u32 %v564, 4294901760
        %566 = vmatmul.mubr.f32.gmra.mrb[0].mxu0 %v565
        %v567 = vpop.f32.mrb[0].mxu0
        %v568 = vadd.f32 %v416, %v567
        %v569 = vpop.f32.mrb[0].mxu0
        %v570 = vadd.f32 %v420, %v569
        %571 = vmatprep.mubr.f32.mxu0 0.0
        %v572 = vand.u32 %v281, 4294901760
        %v573 = vsub.f32 %v281, %v572
        %v574 = vand.u32 %v573, 4294901760
        %v575 = vsub.f32 %v573, %v574
        %v576 = vand.u32 %v575, 4294901760
        %577 = vmatmul.mubr.f32.gmra.mrb[0].mxu0 %v576
        %v578 = vpop.f32.mrb[0].mxu0
        %v579 = vadd.f32 %v416, %v578
        %v580 = vpop.f32.mrb[0].mxu0
        %v581 = vadd.f32 %v420, %v580
        %582 = vmatprep.mubr.f32.mxu0 0.0
        %v583 = vand.u32 %v282, 4294901760
        %v584 = vsub.f32 %v282, %v583
        %v585 = vand.u32 %v584, 4294901760
        %v586 = vsub.f32 %v584, %v585
        %v587 = vand.u32 %v586, 4294901760
        %588 = vmatmul.mubr.f32.gmra.mrb[0].mxu0 %v587
        %v589 = vpop.f32.mrb[0].mxu0
        %v590 = vadd.f32 %v416, %v589
        %v591 = vpop.f32.mrb[0].mxu0
        %v592 = vadd.f32 %v420, %v591
        %593 = vdwg.mxu0
        %v594 = vand.u32 %v284, 4294901760
        %v595 = vsub.f32 %v284, %v594
        %v596 = vand.u32 %v595, 4294901760
        %v597 = vsub.f32 %v595, %v596
        %v598 = vand.u32 %v597, 4294901760
        %599 = vmatprep.subr.mxu0 %v598
        %v600 = vand.u32 %v283, 4294901760
        %v601 = vsub.f32 %v283, %v600
        %v602 = vand.u32 %v601, 4294901760
        %v603 = vsub.f32 %v601, %v602
        %v604 = vand.u32 %v603, 4294901760
        %605 = vmatpush1.msra.mxu0 %v604
        %v606 = vand.u32 %v292, 4294901760
        %v607 = vsub.f32 %v292, %v606
        %v608 = vand.u32 %v607, 4294901760
        %v609 = vsub.f32 %v607, %v608
        %v610 = vand.u32 %v609, 4294901760
        %611 = vmatprep.subr.mxu0 %v610
        %v612 = vand.u32 %v291, 4294901760
        %v613 = vsub.f32 %v291, %v612
        %v614 = vand.u32 %v613, 4294901760
        %v615 = vsub.f32 %v613, %v614
        %v616 = vand.u32 %v615, 4294901760
        %617 = vmatpush1.msra.mxu0 %v616
        %v618 = vand.u32 %v300, 4294901760
        %v619 = vsub.f32 %v300, %v618
        %v620 = vand.u32 %v619, 4294901760
        %v621 = vsub.f32 %v619, %v620
        %v622 = vand.u32 %v621, 4294901760
        %623 = vmatprep.subr.mxu0 %v622
        %v624 = vand.u32 %v299, 4294901760
        %v625 = vsub.f32 %v299, %v624
        %v626 = vand.u32 %v625, 4294901760
        %v627 = vsub.f32 %v625, %v626
        %v628 = vand.u32 %v627, 4294901760
        %629 = vmatpush1.msra.mxu0 %v628
        %v630 = vand.u32 %v308, 4294901760
        %v631 = vsub.f32 %v308, %v630
        %v632 = vand.u32 %v631, 4294901760
        %v633 = vsub.f32 %v631, %v632
        %v634 = vand.u32 %v633, 4294901760
        %635 = vmatprep.subr.mxu0 %v634
        %v636 = vand.u32 %v307, 4294901760
        %v637 = vsub.f32 %v307, %v636
        %v638 = vand.u32 %v637, 4294901760
        %v639 = vsub.f32 %v637, %v638
        %v640 = vand.u32 %v639, 4294901760
        %641 = vmatpush1.msra.mxu0 %v640
        %v642 = vand.u32 %v316, 4294901760
        %v643 = vsub.f32 %v316, %v642
        %v644 = vand.u32 %v643, 4294901760
        %v645 = vsub.f32 %v643, %v644
        %v646 = vand.u32 %v645, 4294901760
        %647 = vmatprep.subr.mxu0 %v646
        %v648 = vand.u32 %v315, 4294901760
        %v649 = vsub.f32 %v315, %v648
        %v650 = vand.u32 %v649, 4294901760
        %v651 = vsub.f32 %v649, %v650
        %v652 = vand.u32 %v651, 4294901760
        %653 = vmatpush1.msra.mxu0 %v652
        %v654 = vand.u32 %v324, 4294901760
        %v655 = vsub.f32 %v324, %v654
        %v656 = vand.u32 %v655, 4294901760
        %v657 = vsub.f32 %v655, %v656
        %v658 = vand.u32 %v657, 4294901760
        %659 = vmatprep.subr.mxu0 %v658
        %v660 = vand.u32 %v323, 4294901760
        %v661 = vsub.f32 %v323, %v660
        %v662 = vand.u32 %v661, 4294901760
        %v663 = vsub.f32 %v661, %v662
        %v664 = vand.u32 %v663, 4294901760
        %665 = vmatpush1.msra.mxu0 %v664
        %v666 = vand.u32 %v332, 4294901760
        %v667 = vsub.f32 %v332, %v666
        %v668 = vand.u32 %v667, 4294901760
        %v669 = vsub.f32 %v667, %v668
        %v670 = vand.u32 %v669, 4294901760
        %671 = vmatprep.subr.mxu0 %v670
        %v672 = vand.u32 %v331, 4294901760
        %v673 = vsub.f32 %v331, %v672
        %v674 = vand.u32 %v673, 4294901760
        %v675 = vsub.f32 %v673, %v674
        %v676 = vand.u32 %v675, 4294901760
        %677 = vmatpush1.msra.mxu0 %v676
        %v678 = vand.u32 %v340, 4294901760
        %v679 = vsub.f32 %v340, %v678
        %v680 = vand.u32 %v679, 4294901760
        %v681 = vsub.f32 %v679, %v680
        %v682 = vand.u32 %v681, 4294901760
        %683 = vmatprep.subr.mxu0 %v682
        %v684 = vand.u32 %v339, 4294901760
        %v685 = vsub.f32 %v339, %v684
        %v686 = vand.u32 %v685, 4294901760
        %v687 = vsub.f32 %v685, %v686
        %v688 = vand.u32 %v687, 4294901760
        %689 = vmatpush1.msra.mxu0 %v688
        %v690 = vand.u32 %v348, 4294901760
        %v691 = vsub.f32 %v348, %v690
        %v692 = vand.u32 %v691, 4294901760
        %v693 = vsub.f32 %v691, %v692
        %v694 = vand.u32 %v693, 4294901760
        %695 = vmatprep.subr.mxu0 %v694
        %v696 = vand.u32 %v347, 4294901760
        %v697 = vsub.f32 %v347, %v696
        %v698 = vand.u32 %v697, 4294901760
        %v699 = vsub.f32 %v697, %v698
        %v700 = vand.u32 %v699, 4294901760
        %701 = vmatpush1.msra.mxu0 %v700
        %v702 = vand.u32 %v356, 4294901760
        %v703 = vsub.f32 %v356, %v702
        %v704 = vand.u32 %v703, 4294901760
        %v705 = vsub.f32 %v703, %v704
        %v706 = vand.u32 %v705, 4294901760
        %707 = vmatprep.subr.mxu0 %v706
        %v708 = vand.u32 %v355, 4294901760
        %v709 = vsub.f32 %v355, %v708
        %v710 = vand.u32 %v709, 4294901760
        %v711 = vsub.f32 %v709, %v710
        %v712 = vand.u32 %v711, 4294901760
        %713 = vmatpush1.msra.mxu0 %v712
        %v714 = vand.u32 %v364, 4294901760
        %v715 = vsub.f32 %v364, %v714
        %v716 = vand.u32 %v715, 4294901760
        %v717 = vsub.f32 %v715, %v716
        %v718 = vand.u32 %v717, 4294901760
        %719 = vmatprep.subr.mxu0 %v718
        %v720 = vand.u32 %v363, 4294901760
        %v721 = vsub.f32 %v363, %v720
        %v722 = vand.u32 %v721, 4294901760
        %v723 = vsub.f32 %v721, %v722
        %v724 = vand.u32 %v723, 4294901760
        %725 = vmatpush1.msra.mxu0 %v724
        %v726 = vand.u32 %v372, 4294901760
        %v727 = vsub.f32 %v372, %v726
        %v728 = vand.u32 %v727, 4294901760
        %v729 = vsub.f32 %v727, %v728
        %v730 = vand.u32 %v729, 4294901760
        %731 = vmatprep.subr.mxu0 %v730
        %v732 = vand.u32 %v371, 4294901760
        %v733 = vsub.f32 %v371, %v732
        %v734 = vand.u32 %v733, 4294901760
        %v735 = vsub.f32 %v733, %v734
        %v736 = vand.u32 %v735, 4294901760
        %737 = vmatpush1.msra.mxu0 %v736
        %v738 = vand.u32 %v380, 4294901760
        %v739 = vsub.f32 %v380, %v738
        %v740 = vand.u32 %v739, 4294901760
        %v741 = vsub.f32 %v739, %v740
        %v742 = vand.u32 %v741, 4294901760
        %743 = vmatprep.subr.mxu0 %v742
        %v744 = vand.u32 %v379, 4294901760
        %v745 = vsub.f32 %v379, %v744
        %v746 = vand.u32 %v745, 4294901760
        %v747 = vsub.f32 %v745, %v746
        %v748 = vand.u32 %v747, 4294901760
        %749 = vmatpush1.msra.mxu0 %v748
        %v750 = vand.u32 %v388, 4294901760
        %v751 = vsub.f32 %v388, %v750
        %v752 = vand.u32 %v751, 4294901760
        %v753 = vsub.f32 %v751, %v752
        %v754 = vand.u32 %v753, 4294901760
        %755 = vmatprep.subr.mxu0 %v754
        %v756 = vand.u32 %v387, 4294901760
        %v757 = vsub.f32 %v387, %v756
        %v758 = vand.u32 %v757, 4294901760
        %v759 = vsub.f32 %v757, %v758
        %v760 = vand.u32 %v759, 4294901760
        %761 = vmatpush1.msra.mxu0 %v760
        %v762 = vand.u32 %v396, 4294901760
        %v763 = vsub.f32 %v396, %v762
        %v764 = vand.u32 %v763, 4294901760
        %v765 = vsub.f32 %v763, %v764
        %v766 = vand.u32 %v765, 4294901760
        %767 = vmatprep.subr.mxu0 %v766
        %v768 = vand.u32 %v395, 4294901760
        %v769 = vsub.f32 %v395, %v768
        %v770 = vand.u32 %v769, 4294901760
        %v771 = vsub.f32 %v769, %v770
        %v772 = vand.u32 %v771, 4294901760
        %773 = vmatpush1.msra.mxu0 %v772
        %v774 = vand.u32 %v404, 4294901760
        %v775 = vsub.f32 %v404, %v774
        %v776 = vand.u32 %v775, 4294901760
        %v777 = vsub.f32 %v775, %v776
        %v778 = vand.u32 %v777, 4294901760
        %779 = vmatprep.subr.mxu0 %v778
        %v780 = vand.u32 %v403, 4294901760
        %v781 = vsub.f32 %v403, %v780
        %v782 = vand.u32 %v781, 4294901760
        %v783 = vsub.f32 %v781, %v782
        %v784 = vand.u32 %v783, 4294901760
        %785 = vmatpush1.msra.mxu0 %v784
        %786 = vmatprep.subr.mxu0 0.0
        %787 = vmatpush1.msra.mxu0 0.0
        %788 = vmatprep.subr.mxu0 0.0
        %789 = vmatpush1.msra.mxu0 0.0
        %790 = vmatprep.subr.mxu0 0.0
        %791 = vmatpush1.msra.mxu0 0.0
        %792 = vmatprep.subr.mxu0 0.0
        %793 = vmatpush1.msra.mxu0 0.0
        %794 = vmatprep.subr.mxu0 0.0
        %795 = vmatpush1.msra.mxu0 0.0
        %796 = vmatprep.subr.mxu0 0.0
        %797 = vmatpush1.msra.mxu0 0.0
        %798 = vmatprep.subr.mxu0 0.0
        %799 = vmatpush1.msra.mxu0 0.0
        %800 = vmatprep.subr.mxu0 0.0
        %801 = vmatpush1.msra.mxu0 0.0
        %802 = vmatprep.subr.mxu0 0.0
        %803 = vmatpush1.msra.mxu0 0.0
        %804 = vmatprep.subr.mxu0 0.0
        %805 = vmatpush1.msra.mxu0 0.0
        %806 = vmatprep.subr.mxu0 0.0
        %807 = vmatpush1.msra.mxu0 0.0
        %808 = vmatprep.subr.mxu0 0.0
        %809 = vmatpush1.msra.mxu0 0.0
        %810 = vmatprep.subr.mxu0 0.0
        %811 = vmatpush1.msra.mxu0 0.0
        %812 = vmatprep.subr.mxu0 0.0
        %813 = vmatpush1.msra.mxu0 0.0
        %814 = vmatprep.subr.mxu0 0.0
        %815 = vmatpush1.msra.mxu0 0.0
        %816 = vmatprep.subr.mxu0 0.0
        %817 = vmatpush1.msra.mxu0 0.0
        %818 = vmatprep.mubr.f32.mxu0 0.0
        %v819 = vand.u32 %v279, 4294901760
        %820 = vmatmul.mubr.f32.gmra.mrb[0].mxu0 %v819
        %v821 = vpop.f32.mrb[0].mxu0
        %v822 = vadd.f32 %v557, %v821
        %v823 = vpop.f32.mrb[0].mxu0
        %v824 = vadd.f32 %v559, %v823
        %825 = vmatprep.mubr.f32.mxu0 0.0
        %v826 = vand.u32 %v280, 4294901760
        %827 = vmatmul.mubr.f32.gmra.mrb[0].mxu0 %v826
        %v828 = vpop.f32.mrb[0].mxu0
        %v829 = vadd.f32 %v568, %v828
        %v830 = vpop.f32.mrb[0].mxu0
        %v831 = vadd.f32 %v570, %v830
        %832 = vmatprep.mubr.f32.mxu0 0.0
        %v833 = vand.u32 %v281, 4294901760
        %834 = vmatmul.mubr.f32.gmra.mrb[0].mxu0 %v833
        %v835 = vpop.f32.mrb[0].mxu0
        %v836 = vadd.f32 %v579, %v835
        %v837 = vpop.f32.mrb[0].mxu0
        %v838 = vadd.f32 %v581, %v837
        %839 = vmatprep.mubr.f32.mxu0 0.0
        %v840 = vand.u32 %v282, 4294901760
        %841 = vmatmul.mubr.f32.gmra.mrb[0].mxu0 %v840
        %v842 = vpop.f32.mrb[0].mxu0
        %v843 = vadd.f32 %v590, %v842
        %v844 = vpop.f32.mrb[0].mxu0
        %v845 = vadd.f32 %v592, %v844
        %846 = vdwg.mxu0
        %v847 = vand.u32 %v284, 4294901760
        %v848 = vsub.f32 %v284, %v847
        %849 = vmatprep.subr.mxu0 %v848
        %v850 = vand.u32 %v283, 4294901760
        %v851 = vsub.f32 %v283, %v850
        %852 = vmatpush1.msra.mxu0 %v851
        %v853 = vand.u32 %v292, 4294901760
        %v854 = vsub.f32 %v292, %v853
        %855 = vmatprep.subr.mxu0 %v854
        %v856 = vand.u32 %v291, 4294901760
        %v857 = vsub.f32 %v291, %v856
        %858 = vmatpush1.msra.mxu0 %v857
        %v859 = vand.u32 %v300, 4294901760
        %v860 = vsub.f32 %v300, %v859
        %861 = vmatprep.subr.mxu0 %v860
        %v862 = vand.u32 %v299, 4294901760
        %v863 = vsub.f32 %v299, %v862
        %864 = vmatpush1.msra.mxu0 %v863
        %v865 = vand.u32 %v308, 4294901760
        %v866 = vsub.f32 %v308, %v865
        %867 = vmatprep.subr.mxu0 %v866
        %v868 = vand.u32 %v307, 4294901760
        %v869 = vsub.f32 %v307, %v868
        %870 = vmatpush1.msra.mxu0 %v869
        %v871 = vand.u32 %v316, 4294901760
        %v872 = vsub.f32 %v316, %v871
        %873 = vmatprep.subr.mxu0 %v872
        %v874 = vand.u32 %v315, 4294901760
        %v875 = vsub.f32 %v315, %v874
        %876 = vmatpush1.msra.mxu0 %v875
        %v877 = vand.u32 %v324, 4294901760
        %v878 = vsub.f32 %v324, %v877
        %879 = vmatprep.subr.mxu0 %v878
        %v880 = vand.u32 %v323, 4294901760
        %v881 = vsub.f32 %v323, %v880
        %882 = vmatpush1.msra.mxu0 %v881
        %v883 = vand.u32 %v332, 4294901760
        %v884 = vsub.f32 %v332, %v883
        %885 = vmatprep.subr.mxu0 %v884
        %v886 = vand.u32 %v331, 4294901760
        %v887 = vsub.f32 %v331, %v886
        %888 = vmatpush1.msra.mxu0 %v887
        %v889 = vand.u32 %v340, 4294901760
        %v890 = vsub.f32 %v340, %v889
        %891 = vmatprep.subr.mxu0 %v890
        %v892 = vand.u32 %v339, 4294901760
        %v893 = vsub.f32 %v339, %v892
        %894 = vmatpush1.msra.mxu0 %v893
        %v895 = vand.u32 %v348, 4294901760
        %v896 = vsub.f32 %v348, %v895
        %897 = vmatprep.subr.mxu0 %v896
        %v898 = vand.u32 %v347, 4294901760
        %v899 = vsub.f32 %v347, %v898
        %900 = vmatpush1.msra.mxu0 %v899
        %v901 = vand.u32 %v356, 4294901760
        %v902 = vsub.f32 %v356, %v901
        %903 = vmatprep.subr.mxu0 %v902
        %v904 = vand.u32 %v355, 4294901760
        %v905 = vsub.f32 %v355, %v904
        %906 = vmatpush1.msra.mxu0 %v905
        %v907 = vand.u32 %v364, 4294901760
        %v908 = vsub.f32 %v364, %v907
        %909 = vmatprep.subr.mxu0 %v908
        %v910 = vand.u32 %v363, 4294901760
        %v911 = vsub.f32 %v363, %v910
        %912 = vmatpush1.msra.mxu0 %v911
        %v913 = vand.u32 %v372, 4294901760
        %v914 = vsub.f32 %v372, %v913
        %915 = vmatprep.subr.mxu0 %v914
        %v916 = vand.u32 %v371, 4294901760
        %v917 = vsub.f32 %v371, %v916
        %918 = vmatpush1.msra.mxu0 %v917
        %v919 = vand.u32 %v380, 4294901760
        %v920 = vsub.f32 %v380, %v919
        %921 = vmatprep.subr.mxu0 %v920
        %v922 = vand.u32 %v379, 4294901760
        %v923 = vsub.f32 %v379, %v922
        %924 = vmatpush1.msra.mxu0 %v923
        %v925 = vand.u32 %v388, 4294901760
        %v926 = vsub.f32 %v388, %v925
        %927 = vmatprep.subr.mxu0 %v926
        %v928 = vand.u32 %v387, 4294901760
        %v929 = vsub.f32 %v387, %v928
        %930 = vmatpush1.msra.mxu0 %v929
        %v931 = vand.u32 %v396, 4294901760
        %v932 = vsub.f32 %v396, %v931
        %933 = vmatprep.subr.mxu0 %v932
        %v934 = vand.u32 %v395, 4294901760
        %v935 = vsub.f32 %v395, %v934
        %936 = vmatpush1.msra.mxu0 %v935
        %v937 = vand.u32 %v404, 4294901760
        %v938 = vsub.f32 %v404, %v937
        %939 = vmatprep.subr.mxu0 %v938
        %v940 = vand.u32 %v403, 4294901760
        %v941 = vsub.f32 %v403, %v940
        %942 = vmatpush1.msra.mxu0 %v941
        %943 = vmatprep.subr.mxu0 0.0
        %944 = vmatpush1.msra.mxu0 0.0
        %945 = vmatprep.subr.mxu0 0.0
        %946 = vmatpush1.msra.mxu0 0.0
        %947 = vmatprep.subr.mxu0 0.0
        %948 = vmatpush1.msra.mxu0 0.0
        %949 = vmatprep.subr.mxu0 0.0
        %950 = vmatpush1.msra.mxu0 0.0
        %951 = vmatprep.subr.mxu0 0.0
        %952 = vmatpush1.msra.mxu0 0.0
        %953 = vmatprep.subr.mxu0 0.0
        %954 = vmatpush1.msra.mxu0 0.0
        %955 = vmatprep.subr.mxu0 0.0
        %956 = vmatpush1.msra.mxu0 0.0
        %957 = vmatprep.subr.mxu0 0.0
        %958 = vmatpush1.msra.mxu0 0.0
        %959 = vmatprep.subr.mxu0 0.0
        %960 = vmatpush1.msra.mxu0 0.0
        %961 = vmatprep.subr.mxu0 0.0
        %962 = vmatpush1.msra.mxu0 0.0
        %963 = vmatprep.subr.mxu0 0.0
        %964 = vmatpush1.msra.mxu0 0.0
        %965 = vmatprep.subr.mxu0 0.0
        %966 = vmatpush1.msra.mxu0 0.0
        %967 = vmatprep.subr.mxu0 0.0
        %968 = vmatpush1.msra.mxu0 0.0
        %969 = vmatprep.subr.mxu0 0.0
        %970 = vmatpush1.msra.mxu0 0.0
        %971 = vmatprep.subr.mxu0 0.0
        %972 = vmatpush1.msra.mxu0 0.0
        %973 = vmatprep.subr.mxu0 0.0
        %974 = vmatpush1.msra.mxu0 0.0
        %975 = vmatprep.mubr.f32.mxu0 0.0
        %v976 = vand.u32 %v279, 4294901760
        %v977 = vsub.f32 %v279, %v976
        %978 = vmatmul.mubr.f32.gmra.mrb[0].mxu0 %v977
        %v979 = vpop.f32.mrb[0].mxu0
        %v980 = vadd.f32 %v822, %v979
        %v981 = vpop.f32.mrb[0].mxu0
        %v982 = vadd.f32 %v824, %v981
        %983 = vmatprep.mubr.f32.mxu0 0.0
        %v984 = vand.u32 %v280, 4294901760
        %v985 = vsub.f32 %v280, %v984
        %986 = vmatmul.mubr.f32.gmra.mrb[0].mxu0 %v985
        %v987 = vpop.f32.mrb[0].mxu0
        %v988 = vadd.f32 %v829, %v987
        %v989 = vpop.f32.mrb[0].mxu0
        %v990 = vadd.f32 %v831, %v989
        %991 = vmatprep.mubr.f32.mxu0 0.0
        %v992 = vand.u32 %v281, 4294901760
        %v993 = vsub.f32 %v281, %v992
        %994 = vmatmul.mubr.f32.gmra.mrb[0].mxu0 %v993
        %v995 = vpop.f32.mrb[0].mxu0
        %v996 = vadd.f32 %v836, %v995
        %v997 = vpop.f32.mrb[0].mxu0
        %v998 = vadd.f32 %v838, %v997
        %999 = vmatprep.mubr.f32.mxu0 0.0
        %v1000 = vand.u32 %v282, 4294901760
        %v1001 = vsub.f32 %v282, %v1000
        %1002 = vmatmul.mubr.f32.gmra.mrb[0].mxu0 %v1001
        %v1003 = vpop.f32.mrb[0].mxu0
        %v1004 = vadd.f32 %v843, %v1003
        %v1005 = vpop.f32.mrb[0].mxu0
        %v1006 = vadd.f32 %v845, %v1005
        %1007 = vdwg.mxu0
        %v1008 = vand.u32 %v284, 4294901760
        %1009 = vmatprep.subr.mxu0 %v1008
        %v1010 = vand.u32 %v283, 4294901760
        %1011 = vmatpush1.msra.mxu0 %v1010
        %v1012 = vand.u32 %v292, 4294901760
        %1013 = vmatprep.subr.mxu0 %v1012
        %v1014 = vand.u32 %v291, 4294901760
        %1015 = vmatpush1.msra.mxu0 %v1014
        %v1016 = vand.u32 %v300, 4294901760
        %1017 = vmatprep.subr.mxu0 %v1016
        %v1018 = vand.u32 %v299, 4294901760
        %1019 = vmatpush1.msra.mxu0 %v1018
        %v1020 = vand.u32 %v308, 4294901760
        %1021 = vmatprep.subr.mxu0 %v1020
        %v1022 = vand.u32 %v307, 4294901760
        %1023 = vmatpush1.msra.mxu0 %v1022
        %v1024 = vand.u32 %v316, 4294901760
        %1025 = vmatprep.subr.mxu0 %v1024
        %v1026 = vand.u32 %v315, 4294901760
        %1027 = vmatpush1.msra.mxu0 %v1026
        %v1028 = vand.u32 %v324, 4294901760
        %1029 = vmatprep.subr.mxu0 %v1028
        %v1030 = vand.u32 %v323, 4294901760
        %1031 = vmatpush1.msra.mxu0 %v1030
        %v1032 = vand.u32 %v332, 4294901760
        %1033 = vmatprep.subr.mxu0 %v1032
        %v1034 = vand.u32 %v331, 4294901760
        %1035 = vmatpush1.msra.mxu0 %v1034
        %v1036 = vand.u32 %v340, 4294901760
        %1037 = vmatprep.subr.mxu0 %v1036
        %v1038 = vand.u32 %v339, 4294901760
        %1039 = vmatpush1.msra.mxu0 %v1038
        %v1040 = vand.u32 %v348, 4294901760
        %1041 = vmatprep.subr.mxu0 %v1040
        %v1042 = vand.u32 %v347, 4294901760
        %1043 = vmatpush1.msra.mxu0 %v1042
        %v1044 = vand.u32 %v356, 4294901760
        %1045 = vmatprep.subr.mxu0 %v1044
        %v1046 = vand.u32 %v355, 4294901760
        %1047 = vmatpush1.msra.mxu0 %v1046
        %v1048 = vand.u32 %v364, 4294901760
        %1049 = vmatprep.subr.mxu0 %v1048
        %v1050 = vand.u32 %v363, 4294901760
        %1051 = vmatpush1.msra.mxu0 %v1050
        %v1052 = vand.u32 %v372, 4294901760
        %1053 = vmatprep.subr.mxu0 %v1052
        %v1054 = vand.u32 %v371, 4294901760
        %1055 = vmatpush1.msra.mxu0 %v1054
        %v1056 = vand.u32 %v380, 4294901760
        %1057 = vmatprep.subr.mxu0 %v1056
        %v1058 = vand.u32 %v379, 4294901760
        %1059 = vmatpush1.msra.mxu0 %v1058
        %v1060 = vand.u32 %v388, 4294901760
        %1061 = vmatprep.subr.mxu0 %v1060
        %v1062 = vand.u32 %v387, 4294901760
        %1063 = vmatpush1.msra.mxu0 %v1062
        %v1064 = vand.u32 %v396, 4294901760
        %1065 = vmatprep.subr.mxu0 %v1064
        %v1066 = vand.u32 %v395, 4294901760
        %1067 = vmatpush1.msra.mxu0 %v1066
        %v1068 = vand.u32 %v404, 4294901760
        %1069 = vmatprep.subr.mxu0 %v1068
        %v1070 = vand.u32 %v403, 4294901760
        %1071 = vmatpush1.msra.mxu0 %v1070
        %1072 = vmatprep.subr.mxu0 0.0
        %1073 = vmatpush1.msra.mxu0 0.0
        %1074 = vmatprep.subr.mxu0 0.0
        %1075 = vmatpush1.msra.mxu0 0.0
        %1076 = vmatprep.subr.mxu0 0.0
        %1077 = vmatpush1.msra.mxu0 0.0
        %1078 = vmatprep.subr.mxu0 0.0
        %1079 = vmatpush1.msra.mxu0 0.0
        %1080 = vmatprep.subr.mxu0 0.0
        %1081 = vmatpush1.msra.mxu0 0.0
        %1082 = vmatprep.subr.mxu0 0.0
        %1083 = vmatpush1.msra.mxu0 0.0
        %1084 = vmatprep.subr.mxu0 0.0
        %1085 = vmatpush1.msra.mxu0 0.0
        %1086 = vmatprep.subr.mxu0 0.0
        %1087 = vmatpush1.msra.mxu0 0.0
        %1088 = vmatprep.subr.mxu0 0.0
        %1089 = vmatpush1.msra.mxu0 0.0
        %1090 = vmatprep.subr.mxu0 0.0
        %1091 = vmatpush1.msra.mxu0 0.0
        %1092 = vmatprep.subr.mxu0 0.0
        %1093 = vmatpush1.msra.mxu0 0.0
        %1094 = vmatprep.subr.mxu0 0.0
        %1095 = vmatpush1.msra.mxu0 0.0
        %1096 = vmatprep.subr.mxu0 0.0
        %1097 = vmatpush1.msra.mxu0 0.0
        %1098 = vmatprep.subr.mxu0 0.0
        %1099 = vmatpush1.msra.mxu0 0.0
        %1100 = vmatprep.subr.mxu0 0.0
        %1101 = vmatpush1.msra.mxu0 0.0
        %1102 = vmatprep.subr.mxu0 0.0
        %1103 = vmatpush1.msra.mxu0 0.0
        %1104 = vmatprep.mubr.f32.mxu0 0.0
        %v1105 = vand.u32 %v279, 4294901760
        %v1106 = vsub.f32 %v279, %v1105
        %v1107 = vand.u32 %v1106, 4294901760
        %1108 = vmatmul.mubr.f32.gmra.mrb[0].mxu0 %v1107
        %v1109 = vpop.f32.mrb[0].mxu0
        %v1110 = vadd.f32 %v980, %v1109
        %v1111 = vpop.f32.mrb[0].mxu0
        %v1112 = vadd.f32 %v982, %v1111
        %1113 = vmatprep.mubr.f32.mxu0 0.0
        %v1114 = vand.u32 %v280, 4294901760
        %v1115 = vsub.f32 %v280, %v1114
        %v1116 = vand.u32 %v1115, 4294901760
        %1117 = vmatmul.mubr.f32.gmra.mrb[0].mxu0 %v1116
        %v1118 = vpop.f32.mrb[0].mxu0
        %v1119 = vadd.f32 %v988, %v1118
        %v1120 = vpop.f32.mrb[0].mxu0
        %v1121 = vadd.f32 %v990, %v1120
        %1122 = vmatprep.mubr.f32.mxu0 0.0
        %v1123 = vand.u32 %v281, 4294901760
        %v1124 = vsub.f32 %v281, %v1123
        %v1125 = vand.u32 %v1124, 4294901760
        %1126 = vmatmul.mubr.f32.gmra.mrb[0].mxu0 %v1125
        %v1127 = vpop.f32.mrb[0].mxu0
        %v1128 = vadd.f32 %v996, %v1127
        %v1129 = vpop.f32.mrb[0].mxu0
        %v1130 = vadd.f32 %v998, %v1129
        %1131 = vmatprep.mubr.f32.mxu0 0.0
        %v1132 = vand.u32 %v282, 4294901760
        %v1133 = vsub.f32 %v282, %v1132
        %v1134 = vand.u32 %v1133, 4294901760
        %1135 = vmatmul.mubr.f32.gmra.mrb[0].mxu0 %v1134
        %v1136 = vpop.f32.mrb[0].mxu0
        %v1137 = vadd.f32 %v1004, %v1136
        %v1138 = vpop.f32.mrb[0].mxu0
        %v1139 = vadd.f32 %v1006, %v1138
        %1140 = vdwg.mxu0
        %v1141 = vand.u32 %v284, 4294901760
        %v1142 = vsub.f32 %v284, %v1141
        %v1143 = vand.u32 %v1142, 4294901760
        %1144 = vmatprep.subr.mxu0 %v1143
        %v1145 = vand.u32 %v283, 4294901760
        %v1146 = vsub.f32 %v283, %v1145
        %v1147 = vand.u32 %v1146, 4294901760
        %1148 = vmatpush1.msra.mxu0 %v1147
        %v1149 = vand.u32 %v292, 4294901760
        %v1150 = vsub.f32 %v292, %v1149
        %v1151 = vand.u32 %v1150, 4294901760
        %1152 = vmatprep.subr.mxu0 %v1151
        %v1153 = vand.u32 %v291, 4294901760
        %v1154 = vsub.f32 %v291, %v1153
        %v1155 = vand.u32 %v1154, 4294901760
        %1156 = vmatpush1.msra.mxu0 %v1155
        %v1157 = vand.u32 %v300, 4294901760
        %v1158 = vsub.f32 %v300, %v1157
        %v1159 = vand.u32 %v1158, 4294901760
        %1160 = vmatprep.subr.mxu0 %v1159
        %v1161 = vand.u32 %v299, 4294901760
        %v1162 = vsub.f32 %v299, %v1161
        %v1163 = vand.u32 %v1162, 4294901760
        %1164 = vmatpush1.msra.mxu0 %v1163
        %v1165 = vand.u32 %v308, 4294901760
        %v1166 = vsub.f32 %v308, %v1165
        %v1167 = vand.u32 %v1166, 4294901760
        %1168 = vmatprep.subr.mxu0 %v1167
        %v1169 = vand.u32 %v307, 4294901760
        %v1170 = vsub.f32 %v307, %v1169
        %v1171 = vand.u32 %v1170, 4294901760
        %1172 = vmatpush1.msra.mxu0 %v1171
        %v1173 = vand.u32 %v316, 4294901760
        %v1174 = vsub.f32 %v316, %v1173
        %v1175 = vand.u32 %v1174, 4294901760
        %1176 = vmatprep.subr.mxu0 %v1175
        %v1177 = vand.u32 %v315, 4294901760
        %v1178 = vsub.f32 %v315, %v1177
        %v1179 = vand.u32 %v1178, 4294901760
        %1180 = vmatpush1.msra.mxu0 %v1179
        %v1181 = vand.u32 %v324, 4294901760
        %v1182 = vsub.f32 %v324, %v1181
        %v1183 = vand.u32 %v1182, 4294901760
        %1184 = vmatprep.subr.mxu0 %v1183
        %v1185 = vand.u32 %v323, 4294901760
        %v1186 = vsub.f32 %v323, %v1185
        %v1187 = vand.u32 %v1186, 4294901760
        %1188 = vmatpush1.msra.mxu0 %v1187
        %v1189 = vand.u32 %v332, 4294901760
        %v1190 = vsub.f32 %v332, %v1189
        %v1191 = vand.u32 %v1190, 4294901760
        %1192 = vmatprep.subr.mxu0 %v1191
        %v1193 = vand.u32 %v331, 4294901760
        %v1194 = vsub.f32 %v331, %v1193
        %v1195 = vand.u32 %v1194, 4294901760
        %1196 = vmatpush1.msra.mxu0 %v1195
        %v1197 = vand.u32 %v340, 4294901760
        %v1198 = vsub.f32 %v340, %v1197
        %v1199 = vand.u32 %v1198, 4294901760
        %1200 = vmatprep.subr.mxu0 %v1199
        %v1201 = vand.u32 %v339, 4294901760
        %v1202 = vsub.f32 %v339, %v1201
        %v1203 = vand.u32 %v1202, 4294901760
        %1204 = vmatpush1.msra.mxu0 %v1203
        %v1205 = vand.u32 %v348, 4294901760
        %v1206 = vsub.f32 %v348, %v1205
        %v1207 = vand.u32 %v1206, 4294901760
        %1208 = vmatprep.subr.mxu0 %v1207
        %v1209 = vand.u32 %v347, 4294901760
        %v1210 = vsub.f32 %v347, %v1209
        %v1211 = vand.u32 %v1210, 4294901760
        %1212 = vmatpush1.msra.mxu0 %v1211
        %v1213 = vand.u32 %v356, 4294901760
        %v1214 = vsub.f32 %v356, %v1213
        %v1215 = vand.u32 %v1214, 4294901760
        %1216 = vmatprep.subr.mxu0 %v1215
        %v1217 = vand.u32 %v355, 4294901760
        %v1218 = vsub.f32 %v355, %v1217
        %v1219 = vand.u32 %v1218, 4294901760
        %1220 = vmatpush1.msra.mxu0 %v1219
        %v1221 = vand.u32 %v364, 4294901760
        %v1222 = vsub.f32 %v364, %v1221
        %v1223 = vand.u32 %v1222, 4294901760
        %1224 = vmatprep.subr.mxu0 %v1223
        %v1225 = vand.u32 %v363, 4294901760
        %v1226 = vsub.f32 %v363, %v1225
        %v1227 = vand.u32 %v1226, 4294901760
        %1228 = vmatpush1.msra.mxu0 %v1227
        %v1229 = vand.u32 %v372, 4294901760
        %v1230 = vsub.f32 %v372, %v1229
        %v1231 = vand.u32 %v1230, 4294901760
        %1232 = vmatprep.subr.mxu0 %v1231
        %v1233 = vand.u32 %v371, 4294901760
        %v1234 = vsub.f32 %v371, %v1233
        %v1235 = vand.u32 %v1234, 4294901760
        %1236 = vmatpush1.msra.mxu0 %v1235
        %v1237 = vand.u32 %v380, 4294901760
        %v1238 = vsub.f32 %v380, %v1237
        %v1239 = vand.u32 %v1238, 4294901760
        %1240 = vmatprep.subr.mxu0 %v1239
        %v1241 = vand.u32 %v379, 4294901760
        %v1242 = vsub.f32 %v379, %v1241
        %v1243 = vand.u32 %v1242, 4294901760
        %1244 = vmatpush1.msra.mxu0 %v1243
        %v1245 = vand.u32 %v388, 4294901760
        %v1246 = vsub.f32 %v388, %v1245
        %v1247 = vand.u32 %v1246, 4294901760
        %1248 = vmatprep.subr.mxu0 %v1247
        %v1249 = vand.u32 %v387, 4294901760
        %v1250 = vsub.f32 %v387, %v1249
        %v1251 = vand.u32 %v1250, 4294901760
        %1252 = vmatpush1.msra.mxu0 %v1251
        %v1253 = vand.u32 %v396, 4294901760
        %v1254 = vsub.f32 %v396, %v1253
        %v1255 = vand.u32 %v1254, 4294901760
        %1256 = vmatprep.subr.mxu0 %v1255
        %v1257 = vand.u32 %v395, 4294901760
        %v1258 = vsub.f32 %v395, %v1257
        %v1259 = vand.u32 %v1258, 4294901760
        %1260 = vmatpush1.msra.mxu0 %v1259
        %v1261 = vand.u32 %v404, 4294901760
        %v1262 = vsub.f32 %v404, %v1261
        %v1263 = vand.u32 %v1262, 4294901760
        %1264 = vmatprep.subr.mxu0 %v1263
        %v1265 = vand.u32 %v403, 4294901760
        %v1266 = vsub.f32 %v403, %v1265
        %v1267 = vand.u32 %v1266, 4294901760
        %1268 = vmatpush1.msra.mxu0 %v1267
        %1269 = vmatprep.subr.mxu0 0.0
        %1270 = vmatpush1.msra.mxu0 0.0
        %1271 = vmatprep.subr.mxu0 0.0
        %1272 = vmatpush1.msra.mxu0 0.0
        %1273 = vmatprep.subr.mxu0 0.0
        %1274 = vmatpush1.msra.mxu0 0.0
        %1275 = vmatprep.subr.mxu0 0.0
        %1276 = vmatpush1.msra.mxu0 0.0
        %1277 = vmatprep.subr.mxu0 0.0
        %1278 = vmatpush1.msra.mxu0 0.0
        %1279 = vmatprep.subr.mxu0 0.0
        %1280 = vmatpush1.msra.mxu0 0.0
        %1281 = vmatprep.subr.mxu0 0.0
        %1282 = vmatpush1.msra.mxu0 0.0
        %1283 = vmatprep.subr.mxu0 0.0
        %1284 = vmatpush1.msra.mxu0 0.0
        %1285 = vmatprep.subr.mxu0 0.0
        %1286 = vmatpush1.msra.mxu0 0.0
        %1287 = vmatprep.subr.mxu0 0.0
        %1288 = vmatpush1.msra.mxu0 0.0
        %1289 = vmatprep.subr.mxu0 0.0
        %1290 = vmatpush1.msra.mxu0 0.0
        %1291 = vmatprep.subr.mxu0 0.0
        %1292 = vmatpush1.msra.mxu0 0.0
        %1293 = vmatprep.subr.mxu0 0.0
        %1294 = vmatpush1.msra.mxu0 0.0
        %1295 = vmatprep.subr.mxu0 0.0
        %1296 = vmatpush1.msra.mxu0 0.0
        %1297 = vmatprep.subr.mxu0 0.0
        %1298 = vmatpush1.msra.mxu0 0.0
        %1299 = vmatprep.subr.mxu0 0.0
        %1300 = vmatpush1.msra.mxu0 0.0
        %1301 = vmatprep.mubr.f32.mxu0 0.0
        %v1302 = vand.u32 %v279, 4294901760
        %1303 = vmatmul.mubr.f32.gmra.mrb[0].mxu0 %v1302
        %v1304 = vpop.f32.mrb[0].mxu0
        %v1305 = vadd.f32 %v1110, %v1304
        %v1306 = vpop.f32.mrb[0].mxu0
        %v1307 = vadd.f32 %v1112, %v1306
        %1308 = vmatprep.mubr.f32.mxu0 0.0
        %v1309 = vand.u32 %v280, 4294901760
        %1310 = vmatmul.mubr.f32.gmra.mrb[0].mxu0 %v1309
        %v1311 = vpop.f32.mrb[0].mxu0
        %v1312 = vadd.f32 %v1119, %v1311
        %v1313 = vpop.f32.mrb[0].mxu0
        %v1314 = vadd.f32 %v1121, %v1313
        %1315 = vmatprep.mubr.f32.mxu0 0.0
        %v1316 = vand.u32 %v281, 4294901760
        %1317 = vmatmul.mubr.f32.gmra.mrb[0].mxu0 %v1316
        %v1318 = vpop.f32.mrb[0].mxu0
        %v1319 = vadd.f32 %v1128, %v1318
        %v1320 = vpop.f32.mrb[0].mxu0
        %v1321 = vadd.f32 %v1130, %v1320
        %1322 = vmatprep.mubr.f32.mxu0 0.0
        %v1323 = vand.u32 %v282, 4294901760
        %1324 = vmatmul.mubr.f32.gmra.mrb[0].mxu0 %v1323
        %v1325 = vpop.f32.mrb[0].mxu0
        %v1326 = vadd.f32 %v1137, %v1325
        %v1327 = vpop.f32.mrb[0].mxu0
        %v1328 = vadd.f32 %v1139, %v1327
        %1329 = vdwg.mxu0
        %v1330 = vand.u32 %v284, 4294901760
        %1331 = vmatprep.subr.mxu0 %v1330
        %v1332 = vand.u32 %v283, 4294901760
        %1333 = vmatpush1.msra.mxu0 %v1332
        %v1334 = vand.u32 %v292, 4294901760
        %1335 = vmatprep.subr.mxu0 %v1334
        %v1336 = vand.u32 %v291, 4294901760
        %1337 = vmatpush1.msra.mxu0 %v1336
        %v1338 = vand.u32 %v300, 4294901760
        %1339 = vmatprep.subr.mxu0 %v1338
        %v1340 = vand.u32 %v299, 4294901760
        %1341 = vmatpush1.msra.mxu0 %v1340
        %v1342 = vand.u32 %v308, 4294901760
        %1343 = vmatprep.subr.mxu0 %v1342
        %v1344 = vand.u32 %v307, 4294901760
        %1345 = vmatpush1.msra.mxu0 %v1344
        %v1346 = vand.u32 %v316, 4294901760
        %1347 = vmatprep.subr.mxu0 %v1346
        %v1348 = vand.u32 %v315, 4294901760
        %1349 = vmatpush1.msra.mxu0 %v1348
        %v1350 = vand.u32 %v324, 4294901760
        %1351 = vmatprep.subr.mxu0 %v1350
        %v1352 = vand.u32 %v323, 4294901760
        %1353 = vmatpush1.msra.mxu0 %v1352
        %v1354 = vand.u32 %v332, 4294901760
        %1355 = vmatprep.subr.mxu0 %v1354
        %v1356 = vand.u32 %v331, 4294901760
        %1357 = vmatpush1.msra.mxu0 %v1356
        %v1358 = vand.u32 %v340, 4294901760
        %1359 = vmatprep.subr.mxu0 %v1358
        %v1360 = vand.u32 %v339, 4294901760
        %1361 = vmatpush1.msra.mxu0 %v1360
        %v1362 = vand.u32 %v348, 4294901760
        %1363 = vmatprep.subr.mxu0 %v1362
        %v1364 = vand.u32 %v347, 4294901760
        %1365 = vmatpush1.msra.mxu0 %v1364
        %v1366 = vand.u32 %v356, 4294901760
        %1367 = vmatprep.subr.mxu0 %v1366
        %v1368 = vand.u32 %v355, 4294901760
        %1369 = vmatpush1.msra.mxu0 %v1368
        %v1370 = vand.u32 %v364, 4294901760
        %1371 = vmatprep.subr.mxu0 %v1370
        %v1372 = vand.u32 %v363, 4294901760
        %1373 = vmatpush1.msra.mxu0 %v1372
        %v1374 = vand.u32 %v372, 4294901760
        %1375 = vmatprep.subr.mxu0 %v1374
        %v1376 = vand.u32 %v371, 4294901760
        %1377 = vmatpush1.msra.mxu0 %v1376
        %v1378 = vand.u32 %v380, 4294901760
        %1379 = vmatprep.subr.mxu0 %v1378
        %v1380 = vand.u32 %v379, 4294901760
        %1381 = vmatpush1.msra.mxu0 %v1380
        %v1382 = vand.u32 %v388, 4294901760
        %1383 = vmatprep.subr.mxu0 %v1382
        %v1384 = vand.u32 %v387, 4294901760
        %1385 = vmatpush1.msra.mxu0 %v1384
        %v1386 = vand.u32 %v396, 4294901760
        %1387 = vmatprep.subr.mxu0 %v1386
        %v1388 = vand.u32 %v395, 4294901760
        %1389 = vmatpush1.msra.mxu0 %v1388
        %v1390 = vand.u32 %v404, 4294901760
        %1391 = vmatprep.subr.mxu0 %v1390
        %v1392 = vand.u32 %v403, 4294901760
        %1393 = vmatpush1.msra.mxu0 %v1392
        %1394 = vmatprep.subr.mxu0 0.0
        %1395 = vmatpush1.msra.mxu0 0.0
        %1396 = vmatprep.subr.mxu0 0.0
        %1397 = vmatpush1.msra.mxu0 0.0
        %1398 = vmatprep.subr.mxu0 0.0
        %1399 = vmatpush1.msra.mxu0 0.0
        %1400 = vmatprep.subr.mxu0 0.0
        %1401 = vmatpush1.msra.mxu0 0.0
        %1402 = vmatprep.subr.mxu0 0.0
        %1403 = vmatpush1.msra.mxu0 0.0
        %1404 = vmatprep.subr.mxu0 0.0
        %1405 = vmatpush1.msra.mxu0 0.0
        %1406 = vmatprep.subr.mxu0 0.0
        %1407 = vmatpush1.msra.mxu0 0.0
        %1408 = vmatprep.subr.mxu0 0.0
        %1409 = vmatpush1.msra.mxu0 0.0
        %1410 = vmatprep.subr.mxu0 0.0
        %1411 = vmatpush1.msra.mxu0 0.0
        %1412 = vmatprep.subr.mxu0 0.0
        %1413 = vmatpush1.msra.mxu0 0.0
        %1414 = vmatprep.subr.mxu0 0.0
        %1415 = vmatpush1.msra.mxu0 0.0
        %1416 = vmatprep.subr.mxu0 0.0
        %1417 = vmatpush1.msra.mxu0 0.0
        %1418 = vmatprep.subr.mxu0 0.0
        %1419 = vmatpush1.msra.mxu0 0.0
        %1420 = vmatprep.subr.mxu0 0.0
        %1421 = vmatpush1.msra.mxu0 0.0
        %1422 = vmatprep.subr.mxu0 0.0
        %1423 = vmatpush1.msra.mxu0 0.0
        %1424 = vmatprep.subr.mxu0 0.0
        %1425 = vmatpush1.msra.mxu0 0.0
        %1426 = vmatprep.mubr.f32.mxu0 0.0
        %v1427 = vand.u32 %v279, 4294901760
        %1428 = vmatmul.mubr.f32.gmra.mrb[0].mxu0 %v1427
        %v1429 = vpop.f32.mrb[0].mxu0
        %v1430 = vadd.f32 %v1305, %v1429
        %v1431 = vpop.f32.mrb[0].mxu0
        %v1432 = vadd.f32 %v1307, %v1431
        %1433 = vmatprep.mubr.f32.mxu0 0.0
        %v1434 = vand.u32 %v280, 4294901760
        %1435 = vmatmul.mubr.f32.gmra.mrb[0].mxu0 %v1434
        %v1436 = vpop.f32.mrb[0].mxu0
        %v1437 = vadd.f32 %v1312, %v1436
        %v1438 = vpop.f32.mrb[0].mxu0
        %v1439 = vadd.f32 %v1314, %v1438
        %1440 = vmatprep.mubr.f32.mxu0 0.0
        %v1441 = vand.u32 %v281, 4294901760
        %1442 = vmatmul.mubr.f32.gmra.mrb[0].mxu0 %v1441
        %v1443 = vpop.f32.mrb[0].mxu0
        %v1444 = vadd.f32 %v1319, %v1443
        %v1445 = vpop.f32.mrb[0].mxu0
        %v1446 = vadd.f32 %v1321, %v1445
        %1447 = vmatprep.mubr.f32.mxu0 0.0
        %v1448 = vand.u32 %v282, 4294901760
        %1449 = vmatmul.mubr.f32.gmra.mrb[0].mxu0 %v1448
        %v1450 = vpop.f32.mrb[0].mxu0
        %v1451 = vadd.f32 %v1326, %v1450
        %v1452 = vpop.f32.mrb[0].mxu0
        %v1453 = vadd.f32 %v1328, %v1452
        %1454 = vdwg.mxu0
        %v1455 = vand.u32 %v286, 4294901760
        %1456 = vmatprep.subr.mxu0 %v1455
        %v1457 = vand.u32 %v285, 4294901760
        %1458 = vmatpush1.msra.mxu0 %v1457
        %v1459 = vand.u32 %v294, 4294901760
        %1460 = vmatprep.subr.mxu0 %v1459
        %v1461 = vand.u32 %v293, 4294901760
        %1462 = vmatpush1.msra.mxu0 %v1461
        %v1463 = vand.u32 %v302, 4294901760
        %1464 = vmatprep.subr.mxu0 %v1463
        %v1465 = vand.u32 %v301, 4294901760
        %1466 = vmatpush1.msra.mxu0 %v1465
        %v1467 = vand.u32 %v310, 4294901760
        %1468 = vmatprep.subr.mxu0 %v1467
        %v1469 = vand.u32 %v309, 4294901760
        %1470 = vmatpush1.msra.mxu0 %v1469
        %v1471 = vand.u32 %v318, 4294901760
        %1472 = vmatprep.subr.mxu0 %v1471
        %v1473 = vand.u32 %v317, 4294901760
        %1474 = vmatpush1.msra.mxu0 %v1473
        %v1475 = vand.u32 %v326, 4294901760
        %1476 = vmatprep.subr.mxu0 %v1475
        %v1477 = vand.u32 %v325, 4294901760
        %1478 = vmatpush1.msra.mxu0 %v1477
        %v1479 = vand.u32 %v334, 4294901760
        %1480 = vmatprep.subr.mxu0 %v1479
        %v1481 = vand.u32 %v333, 4294901760
        %1482 = vmatpush1.msra.mxu0 %v1481
        %v1483 = vand.u32 %v342, 4294901760
        %1484 = vmatprep.subr.mxu0 %v1483
        %v1485 = vand.u32 %v341, 4294901760
        %1486 = vmatpush1.msra.mxu0 %v1485
        %v1487 = vand.u32 %v350, 4294901760
        %1488 = vmatprep.subr.mxu0 %v1487
        %v1489 = vand.u32 %v349, 4294901760
        %1490 = vmatpush1.msra.mxu0 %v1489
        %v1491 = vand.u32 %v358, 4294901760
        %1492 = vmatprep.subr.mxu0 %v1491
        %v1493 = vand.u32 %v357, 4294901760
        %1494 = vmatpush1.msra.mxu0 %v1493
        %v1495 = vand.u32 %v366, 4294901760
        %1496 = vmatprep.subr.mxu0 %v1495
        %v1497 = vand.u32 %v365, 4294901760
        %1498 = vmatpush1.msra.mxu0 %v1497
        %v1499 = vand.u32 %v374, 4294901760
        %1500 = vmatprep.subr.mxu0 %v1499
        %v1501 = vand.u32 %v373, 4294901760
        %1502 = vmatpush1.msra.mxu0 %v1501
        %v1503 = vand.u32 %v382, 4294901760
        %1504 = vmatprep.subr.mxu0 %v1503
        %v1505 = vand.u32 %v381, 4294901760
        %1506 = vmatpush1.msra.mxu0 %v1505
        %v1507 = vand.u32 %v390, 4294901760
        %1508 = vmatprep.subr.mxu0 %v1507
        %v1509 = vand.u32 %v389, 4294901760
        %1510 = vmatpush1.msra.mxu0 %v1509
        %v1511 = vand.u32 %v398, 4294901760
        %1512 = vmatprep.subr.mxu0 %v1511
        %v1513 = vand.u32 %v397, 4294901760
        %1514 = vmatpush1.msra.mxu0 %v1513
        %v1515 = vand.u32 %v406, 4294901760
        %1516 = vmatprep.subr.mxu0 %v1515
        %v1517 = vand.u32 %v405, 4294901760
        %1518 = vmatpush1.msra.mxu0 %v1517
        %1519 = vmatprep.subr.mxu0 0.0
        %1520 = vmatpush1.msra.mxu0 0.0
        %1521 = vmatprep.subr.mxu0 0.0
        %1522 = vmatpush1.msra.mxu0 0.0
        %1523 = vmatprep.subr.mxu0 0.0
        %1524 = vmatpush1.msra.mxu0 0.0
        %1525 = vmatprep.subr.mxu0 0.0
        %1526 = vmatpush1.msra.mxu0 0.0
        %1527 = vmatprep.subr.mxu0 0.0
        %1528 = vmatpush1.msra.mxu0 0.0
        %1529 = vmatprep.subr.mxu0 0.0
        %1530 = vmatpush1.msra.mxu0 0.0
        %1531 = vmatprep.subr.mxu0 0.0
        %1532 = vmatpush1.msra.mxu0 0.0
        %1533 = vmatprep.subr.mxu0 0.0
        %1534 = vmatpush1.msra.mxu0 0.0
        %1535 = vmatprep.subr.mxu0 0.0
        %1536 = vmatpush1.msra.mxu0 0.0
        %1537 = vmatprep.subr.mxu0 0.0
        %1538 = vmatpush1.msra.mxu0 0.0
        %1539 = vmatprep.subr.mxu0 0.0
        %1540 = vmatpush1.msra.mxu0 0.0
        %1541 = vmatprep.subr.mxu0 0.0
        %1542 = vmatpush1.msra.mxu0 0.0
        %1543 = vmatprep.subr.mxu0 0.0
        %1544 = vmatpush1.msra.mxu0 0.0
        %1545 = vmatprep.subr.mxu0 0.0
        %1546 = vmatpush1.msra.mxu0 0.0
        %1547 = vmatprep.subr.mxu0 0.0
        %1548 = vmatpush1.msra.mxu0 0.0
        %1549 = vmatprep.subr.mxu0 0.0
        %1550 = vmatpush1.msra.mxu0 0.0
        %1551 = vmatprep.mubr.f32.mxu0 0.0
        %v1552 = vand.u32 %v279, 4294901760
        %v1553 = vsub.f32 %v279, %v1552
        %v1554 = vand.u32 %v1553, 4294901760
        %v1555 = vsub.f32 %v1553, %v1554
        %v1556 = vand.u32 %v1555, 4294901760
        %1557 = vmatmul.mubr.f32.gmra.mrb[0].mxu0 %v1556
        %v1558 = vpop.f32.mrb[0].mxu0
        %v1559 = vadd.f32 %v424, %v1558
        %v1560 = vpop.f32.mrb[0].mxu0
        %v1561 = vadd.f32 %v428, %v1560
        %1562 = vmatprep.mubr.f32.mxu0 0.0
        %v1563 = vand.u32 %v280, 4294901760
        %v1564 = vsub.f32 %v280, %v1563
        %v1565 = vand.u32 %v1564, 4294901760
        %v1566 = vsub.f32 %v1564, %v1565
        %v1567 = vand.u32 %v1566, 4294901760
        %1568 = vmatmul.mubr.f32.gmra.mrb[0].mxu0 %v1567
        %v1569 = vpop.f32.mrb[0].mxu0
        %v1570 = vadd.f32 %v424, %v1569
        %v1571 = vpop.f32.mrb[0].mxu0
        %v1572 = vadd.f32 %v428, %v1571
        %1573 = vmatprep.mubr.f32.mxu0 0.0
        %v1574 = vand.u32 %v281, 4294901760
        %v1575 = vsub.f32 %v281, %v1574
        %v1576 = vand.u32 %v1575, 4294901760
        %v1577 = vsub.f32 %v1575, %v1576
        %v1578 = vand.u32 %v1577, 4294901760
        %1579 = vmatmul.mubr.f32.gmra.mrb[0].mxu0 %v1578
        %v1580 = vpop.f32.mrb[0].mxu0
        %v1581 = vadd.f32 %v424, %v1580
        %v1582 = vpop.f32.mrb[0].mxu0
        %v1583 = vadd.f32 %v428, %v1582
        %1584 = vmatprep.mubr.f32.mxu0 0.0
        %v1585 = vand.u32 %v282, 4294901760
        %v1586 = vsub.f32 %v282, %v1585
        %v1587 = vand.u32 %v1586, 4294901760
        %v1588 = vsub.f32 %v1586, %v1587
        %v1589 = vand.u32 %v1588, 4294901760
        %1590 = vmatmul.mubr.f32.gmra.mrb[0].mxu0 %v1589
        %v1591 = vpop.f32.mrb[0].mxu0
        %v1592 = vadd.f32 %v424, %v1591
        %v1593 = vpop.f32.mrb[0].mxu0
        %v1594 = vadd.f32 %v428, %v1593
        %1595 = vdwg.mxu0
        %v1596 = vand.u32 %v286, 4294901760
        %v1597 = vsub.f32 %v286, %v1596
        %v1598 = vand.u32 %v1597, 4294901760
        %v1599 = vsub.f32 %v1597, %v1598
        %v1600 = vand.u32 %v1599, 4294901760
        %1601 = vmatprep.subr.mxu0 %v1600
        %v1602 = vand.u32 %v285, 4294901760
        %v1603 = vsub.f32 %v285, %v1602
        %v1604 = vand.u32 %v1603, 4294901760
        %v1605 = vsub.f32 %v1603, %v1604
        %v1606 = vand.u32 %v1605, 4294901760
        %1607 = vmatpush1.msra.mxu0 %v1606
        %v1608 = vand.u32 %v294, 4294901760
        %v1609 = vsub.f32 %v294, %v1608
        %v1610 = vand.u32 %v1609, 4294901760
        %v1611 = vsub.f32 %v1609, %v1610
        %v1612 = vand.u32 %v1611, 4294901760
        %1613 = vmatprep.subr.mxu0 %v1612
        %v1614 = vand.u32 %v293, 4294901760
        %v1615 = vsub.f32 %v293, %v1614
        %v1616 = vand.u32 %v1615, 4294901760
        %v1617 = vsub.f32 %v1615, %v1616
        %v1618 = vand.u32 %v1617, 4294901760
        %1619 = vmatpush1.msra.mxu0 %v1618
        %v1620 = vand.u32 %v302, 4294901760
        %v1621 = vsub.f32 %v302, %v1620
        %v1622 = vand.u32 %v1621, 4294901760
        %v1623 = vsub.f32 %v1621, %v1622
        %v1624 = vand.u32 %v1623, 4294901760
        %1625 = vmatprep.subr.mxu0 %v1624
        %v1626 = vand.u32 %v301, 4294901760
        %v1627 = vsub.f32 %v301, %v1626
        %v1628 = vand.u32 %v1627, 4294901760
        %v1629 = vsub.f32 %v1627, %v1628
        %v1630 = vand.u32 %v1629, 4294901760
        %1631 = vmatpush1.msra.mxu0 %v1630
        %v1632 = vand.u32 %v310, 4294901760
        %v1633 = vsub.f32 %v310, %v1632
        %v1634 = vand.u32 %v1633, 4294901760
        %v1635 = vsub.f32 %v1633, %v1634
        %v1636 = vand.u32 %v1635, 4294901760
        %1637 = vmatprep.subr.mxu0 %v1636
        %v1638 = vand.u32 %v309, 4294901760
        %v1639 = vsub.f32 %v309, %v1638
        %v1640 = vand.u32 %v1639, 4294901760
        %v1641 = vsub.f32 %v1639, %v1640
        %v1642 = vand.u32 %v1641, 4294901760
        %1643 = vmatpush1.msra.mxu0 %v1642
        %v1644 = vand.u32 %v318, 4294901760
        %v1645 = vsub.f32 %v318, %v1644
        %v1646 = vand.u32 %v1645, 4294901760
        %v1647 = vsub.f32 %v1645, %v1646
        %v1648 = vand.u32 %v1647, 4294901760
        %1649 = vmatprep.subr.mxu0 %v1648
        %v1650 = vand.u32 %v317, 4294901760
        %v1651 = vsub.f32 %v317, %v1650
        %v1652 = vand.u32 %v1651, 4294901760
        %v1653 = vsub.f32 %v1651, %v1652
        %v1654 = vand.u32 %v1653, 4294901760
        %1655 = vmatpush1.msra.mxu0 %v1654
        %v1656 = vand.u32 %v326, 4294901760
        %v1657 = vsub.f32 %v326, %v1656
        %v1658 = vand.u32 %v1657, 4294901760
        %v1659 = vsub.f32 %v1657, %v1658
        %v1660 = vand.u32 %v1659, 4294901760
        %1661 = vmatprep.subr.mxu0 %v1660
        %v1662 = vand.u32 %v325, 4294901760
        %v1663 = vsub.f32 %v325, %v1662
        %v1664 = vand.u32 %v1663, 4294901760
        %v1665 = vsub.f32 %v1663, %v1664
        %v1666 = vand.u32 %v1665, 4294901760
        %1667 = vmatpush1.msra.mxu0 %v1666
        %v1668 = vand.u32 %v334, 4294901760
        %v1669 = vsub.f32 %v334, %v1668
        %v1670 = vand.u32 %v1669, 4294901760
        %v1671 = vsub.f32 %v1669, %v1670
        %v1672 = vand.u32 %v1671, 4294901760
        %1673 = vmatprep.subr.mxu0 %v1672
        %v1674 = vand.u32 %v333, 4294901760
        %v1675 = vsub.f32 %v333, %v1674
        %v1676 = vand.u32 %v1675, 4294901760
        %v1677 = vsub.f32 %v1675, %v1676
        %v1678 = vand.u32 %v1677, 4294901760
        %1679 = vmatpush1.msra.mxu0 %v1678
        %v1680 = vand.u32 %v342, 4294901760
        %v1681 = vsub.f32 %v342, %v1680
        %v1682 = vand.u32 %v1681, 4294901760
        %v1683 = vsub.f32 %v1681, %v1682
        %v1684 = vand.u32 %v1683, 4294901760
        %1685 = vmatprep.subr.mxu0 %v1684
        %v1686 = vand.u32 %v341, 4294901760
        %v1687 = vsub.f32 %v341, %v1686
        %v1688 = vand.u32 %v1687, 4294901760
        %v1689 = vsub.f32 %v1687, %v1688
        %v1690 = vand.u32 %v1689, 4294901760
        %1691 = vmatpush1.msra.mxu0 %v1690
        %v1692 = vand.u32 %v350, 4294901760
        %v1693 = vsub.f32 %v350, %v1692
        %v1694 = vand.u32 %v1693, 4294901760
        %v1695 = vsub.f32 %v1693, %v1694
        %v1696 = vand.u32 %v1695, 4294901760
        %1697 = vmatprep.subr.mxu0 %v1696
        %v1698 = vand.u32 %v349, 4294901760
        %v1699 = vsub.f32 %v349, %v1698
        %v1700 = vand.u32 %v1699, 4294901760
        %v1701 = vsub.f32 %v1699, %v1700
        %v1702 = vand.u32 %v1701, 4294901760
        %1703 = vmatpush1.msra.mxu0 %v1702
        %v1704 = vand.u32 %v358, 4294901760
        %v1705 = vsub.f32 %v358, %v1704
        %v1706 = vand.u32 %v1705, 4294901760
        %v1707 = vsub.f32 %v1705, %v1706
        %v1708 = vand.u32 %v1707, 4294901760
        %1709 = vmatprep.subr.mxu0 %v1708
        %v1710 = vand.u32 %v357, 4294901760
        %v1711 = vsub.f32 %v357, %v1710
        %v1712 = vand.u32 %v1711, 4294901760
        %v1713 = vsub.f32 %v1711, %v1712
        %v1714 = vand.u32 %v1713, 4294901760
        %1715 = vmatpush1.msra.mxu0 %v1714
        %v1716 = vand.u32 %v366, 4294901760
        %v1717 = vsub.f32 %v366, %v1716
        %v1718 = vand.u32 %v1717, 4294901760
        %v1719 = vsub.f32 %v1717, %v1718
        %v1720 = vand.u32 %v1719, 4294901760
        %1721 = vmatprep.subr.mxu0 %v1720
        %v1722 = vand.u32 %v365, 4294901760
        %v1723 = vsub.f32 %v365, %v1722
        %v1724 = vand.u32 %v1723, 4294901760
        %v1725 = vsub.f32 %v1723, %v1724
        %v1726 = vand.u32 %v1725, 4294901760
        %1727 = vmatpush1.msra.mxu0 %v1726
        %v1728 = vand.u32 %v374, 4294901760
        %v1729 = vsub.f32 %v374, %v1728
        %v1730 = vand.u32 %v1729, 4294901760
        %v1731 = vsub.f32 %v1729, %v1730
        %v1732 = vand.u32 %v1731, 4294901760
        %1733 = vmatprep.subr.mxu0 %v1732
        %v1734 = vand.u32 %v373, 4294901760
        %v1735 = vsub.f32 %v373, %v1734
        %v1736 = vand.u32 %v1735, 4294901760
        %v1737 = vsub.f32 %v1735, %v1736
        %v1738 = vand.u32 %v1737, 4294901760
        %1739 = vmatpush1.msra.mxu0 %v1738
        %v1740 = vand.u32 %v382, 4294901760
        %v1741 = vsub.f32 %v382, %v1740
        %v1742 = vand.u32 %v1741, 4294901760
        %v1743 = vsub.f32 %v1741, %v1742
        %v1744 = vand.u32 %v1743, 4294901760
        %1745 = vmatprep.subr.mxu0 %v1744
        %v1746 = vand.u32 %v381, 4294901760
        %v1747 = vsub.f32 %v381, %v1746
        %v1748 = vand.u32 %v1747, 4294901760
        %v1749 = vsub.f32 %v1747, %v1748
        %v1750 = vand.u32 %v1749, 4294901760
        %1751 = vmatpush1.msra.mxu0 %v1750
        %v1752 = vand.u32 %v390, 4294901760
        %v1753 = vsub.f32 %v390, %v1752
        %v1754 = vand.u32 %v1753, 4294901760
        %v1755 = vsub.f32 %v1753, %v1754
        %v1756 = vand.u32 %v1755, 4294901760
        %1757 = vmatprep.subr.mxu0 %v1756
        %v1758 = vand.u32 %v389, 4294901760
        %v1759 = vsub.f32 %v389, %v1758
        %v1760 = vand.u32 %v1759, 4294901760
        %v1761 = vsub.f32 %v1759, %v1760
        %v1762 = vand.u32 %v1761, 4294901760
        %1763 = vmatpush1.msra.mxu0 %v1762
        %v1764 = vand.u32 %v398, 4294901760
        %v1765 = vsub.f32 %v398, %v1764
        %v1766 = vand.u32 %v1765, 4294901760
        %v1767 = vsub.f32 %v1765, %v1766
        %v1768 = vand.u32 %v1767, 4294901760
        %1769 = vmatprep.subr.mxu0 %v1768
        %v1770 = vand.u32 %v397, 4294901760
        %v1771 = vsub.f32 %v397, %v1770
        %v1772 = vand.u32 %v1771, 4294901760
        %v1773 = vsub.f32 %v1771, %v1772
        %v1774 = vand.u32 %v1773, 4294901760
        %1775 = vmatpush1.msra.mxu0 %v1774
        %v1776 = vand.u32 %v406, 4294901760
        %v1777 = vsub.f32 %v406, %v1776
        %v1778 = vand.u32 %v1777, 4294901760
        %v1779 = vsub.f32 %v1777, %v1778
        %v1780 = vand.u32 %v1779, 4294901760
        %1781 = vmatprep.subr.mxu0 %v1780
        %v1782 = vand.u32 %v405, 4294901760
        %v1783 = vsub.f32 %v405, %v1782
        %v1784 = vand.u32 %v1783, 4294901760
        %v1785 = vsub.f32 %v1783, %v1784
        %v1786 = vand.u32 %v1785, 4294901760
        %1787 = vmatpush1.msra.mxu0 %v1786
        %1788 = vmatprep.subr.mxu0 0.0
        %1789 = vmatpush1.msra.mxu0 0.0
        %1790 = vmatprep.subr.mxu0 0.0
        %1791 = vmatpush1.msra.mxu0 0.0
        %1792 = vmatprep.subr.mxu0 0.0
        %1793 = vmatpush1.msra.mxu0 0.0
        %1794 = vmatprep.subr.mxu0 0.0
        %1795 = vmatpush1.msra.mxu0 0.0
        %1796 = vmatprep.subr.mxu0 0.0
        %1797 = vmatpush1.msra.mxu0 0.0
        %1798 = vmatprep.subr.mxu0 0.0
        %1799 = vmatpush1.msra.mxu0 0.0
        %1800 = vmatprep.subr.mxu0 0.0
        %1801 = vmatpush1.msra.mxu0 0.0
        %1802 = vmatprep.subr.mxu0 0.0
        %1803 = vmatpush1.msra.mxu0 0.0
        %1804 = vmatprep.subr.mxu0 0.0
        %1805 = vmatpush1.msra.mxu0 0.0
        %1806 = vmatprep.subr.mxu0 0.0
        %1807 = vmatpush1.msra.mxu0 0.0
        %1808 = vmatprep.subr.mxu0 0.0
        %1809 = vmatpush1.msra.mxu0 0.0
        %1810 = vmatprep.subr.mxu0 0.0
        %1811 = vmatpush1.msra.mxu0 0.0
        %1812 = vmatprep.subr.mxu0 0.0
        %1813 = vmatpush1.msra.mxu0 0.0
        %1814 = vmatprep.subr.mxu0 0.0
        %1815 = vmatpush1.msra.mxu0 0.0
        %1816 = vmatprep.subr.mxu0 0.0
        %1817 = vmatpush1.msra.mxu0 0.0
        %1818 = vmatprep.subr.mxu0 0.0
        %1819 = vmatpush1.msra.mxu0 0.0
        %1820 = vmatprep.mubr.f32.mxu0 0.0
        %v1821 = vand.u32 %v279, 4294901760
        %1822 = vmatmul.mubr.f32.gmra.mrb[0].mxu0 %v1821
        %v1823 = vpop.f32.mrb[0].mxu0
        %v1824 = vadd.f32 %v1559, %v1823
        %v1825 = vpop.f32.mrb[0].mxu0
        %v1826 = vadd.f32 %v1561, %v1825
        %1827 = vmatprep.mubr.f32.mxu0 0.0
        %v1828 = vand.u32 %v280, 4294901760
        %1829 = vmatmul.mubr.f32.gmra.mrb[0].mxu0 %v1828
        %v1830 = vpop.f32.mrb[0].mxu0
        %v1831 = vadd.f32 %v1570, %v1830
        %v1832 = vpop.f32.mrb[0].mxu0
        %v1833 = vadd.f32 %v1572, %v1832
        %1834 = vmatprep.mubr.f32.mxu0 0.0
        %v1835 = vand.u32 %v281, 4294901760
        %1836 = vmatmul.mubr.f32.gmra.mrb[0].mxu0 %v1835
        %v1837 = vpop.f32.mrb[0].mxu0
        %v1838 = vadd.f32 %v1581, %v1837
        %v1839 = vpop.f32.mrb[0].mxu0
        %v1840 = vadd.f32 %v1583, %v1839
        %1841 = vmatprep.mubr.f32.mxu0 0.0
        %v1842 = vand.u32 %v282, 4294901760
        %1843 = vmatmul.mubr.f32.gmra.mrb[0].mxu0 %v1842
        %v1844 = vpop.f32.mrb[0].mxu0
        %v1845 = vadd.f32 %v1592, %v1844
        %v1846 = vpop.f32.mrb[0].mxu0
        %v1847 = vadd.f32 %v1594, %v1846
        %1848 = vdwg.mxu0
        %v1849 = vand.u32 %v286, 4294901760
        %v1850 = vsub.f32 %v286, %v1849
        %1851 = vmatprep.subr.mxu0 %v1850
        %v1852 = vand.u32 %v285, 4294901760
        %v1853 = vsub.f32 %v285, %v1852
        %1854 = vmatpush1.msra.mxu0 %v1853
        %v1855 = vand.u32 %v294, 4294901760
        %v1856 = vsub.f32 %v294, %v1855
        %1857 = vmatprep.subr.mxu0 %v1856
        %v1858 = vand.u32 %v293, 4294901760
        %v1859 = vsub.f32 %v293, %v1858
        %1860 = vmatpush1.msra.mxu0 %v1859
        %v1861 = vand.u32 %v302, 4294901760
        %v1862 = vsub.f32 %v302, %v1861
        %1863 = vmatprep.subr.mxu0 %v1862
        %v1864 = vand.u32 %v301, 4294901760
        %v1865 = vsub.f32 %v301, %v1864
        %1866 = vmatpush1.msra.mxu0 %v1865
        %v1867 = vand.u32 %v310, 4294901760
        %v1868 = vsub.f32 %v310, %v1867
        %1869 = vmatprep.subr.mxu0 %v1868
        %v1870 = vand.u32 %v309, 4294901760
        %v1871 = vsub.f32 %v309, %v1870
        %1872 = vmatpush1.msra.mxu0 %v1871
        %v1873 = vand.u32 %v318, 4294901760
        %v1874 = vsub.f32 %v318, %v1873
        %1875 = vmatprep.subr.mxu0 %v1874
        %v1876 = vand.u32 %v317, 4294901760
        %v1877 = vsub.f32 %v317, %v1876
        %1878 = vmatpush1.msra.mxu0 %v1877
        %v1879 = vand.u32 %v326, 4294901760
        %v1880 = vsub.f32 %v326, %v1879
        %1881 = vmatprep.subr.mxu0 %v1880
        %v1882 = vand.u32 %v325, 4294901760
        %v1883 = vsub.f32 %v325, %v1882
        %1884 = vmatpush1.msra.mxu0 %v1883
        %v1885 = vand.u32 %v334, 4294901760
        %v1886 = vsub.f32 %v334, %v1885
        %1887 = vmatprep.subr.mxu0 %v1886
        %v1888 = vand.u32 %v333, 4294901760
        %v1889 = vsub.f32 %v333, %v1888
        %1890 = vmatpush1.msra.mxu0 %v1889
        %v1891 = vand.u32 %v342, 4294901760
        %v1892 = vsub.f32 %v342, %v1891
        %1893 = vmatprep.subr.mxu0 %v1892
        %v1894 = vand.u32 %v341, 4294901760
        %v1895 = vsub.f32 %v341, %v1894
        %1896 = vmatpush1.msra.mxu0 %v1895
        %v1897 = vand.u32 %v350, 4294901760
        %v1898 = vsub.f32 %v350, %v1897
        %1899 = vmatprep.subr.mxu0 %v1898
        %v1900 = vand.u32 %v349, 4294901760
        %v1901 = vsub.f32 %v349, %v1900
        %1902 = vmatpush1.msra.mxu0 %v1901
        %v1903 = vand.u32 %v358, 4294901760
        %v1904 = vsub.f32 %v358, %v1903
        %1905 = vmatprep.subr.mxu0 %v1904
        %v1906 = vand.u32 %v357, 4294901760
        %v1907 = vsub.f32 %v357, %v1906
        %1908 = vmatpush1.msra.mxu0 %v1907
        %v1909 = vand.u32 %v366, 4294901760
        %v1910 = vsub.f32 %v366, %v1909
        %1911 = vmatprep.subr.mxu0 %v1910
        %v1912 = vand.u32 %v365, 4294901760
        %v1913 = vsub.f32 %v365, %v1912
        %1914 = vmatpush1.msra.mxu0 %v1913
        %v1915 = vand.u32 %v374, 4294901760
        %v1916 = vsub.f32 %v374, %v1915
        %1917 = vmatprep.subr.mxu0 %v1916
        %v1918 = vand.u32 %v373, 4294901760
        %v1919 = vsub.f32 %v373, %v1918
        %1920 = vmatpush1.msra.mxu0 %v1919
        %v1921 = vand.u32 %v382, 4294901760
        %v1922 = vsub.f32 %v382, %v1921
        %1923 = vmatprep.subr.mxu0 %v1922
        %v1924 = vand.u32 %v381, 4294901760
        %v1925 = vsub.f32 %v381, %v1924
        %1926 = vmatpush1.msra.mxu0 %v1925
        %v1927 = vand.u32 %v390, 4294901760
        %v1928 = vsub.f32 %v390, %v1927
        %1929 = vmatprep.subr.mxu0 %v1928
        %v1930 = vand.u32 %v389, 4294901760
        %v1931 = vsub.f32 %v389, %v1930
        %1932 = vmatpush1.msra.mxu0 %v1931
        %v1933 = vand.u32 %v398, 4294901760
        %v1934 = vsub.f32 %v398, %v1933
        %1935 = vmatprep.subr.mxu0 %v1934
        %v1936 = vand.u32 %v397, 4294901760
        %v1937 = vsub.f32 %v397, %v1936
        %1938 = vmatpush1.msra.mxu0 %v1937
        %v1939 = vand.u32 %v406, 4294901760
        %v1940 = vsub.f32 %v406, %v1939
        %1941 = vmatprep.subr.mxu0 %v1940
        %v1942 = vand.u32 %v405, 4294901760
        %v1943 = vsub.f32 %v405, %v1942
        %1944 = vmatpush1.msra.mxu0 %v1943
        %1945 = vmatprep.subr.mxu0 0.0
        %1946 = vmatpush1.msra.mxu0 0.0
        %1947 = vmatprep.subr.mxu0 0.0
        %1948 = vmatpush1.msra.mxu0 0.0
        %1949 = vmatprep.subr.mxu0 0.0
        %1950 = vmatpush1.msra.mxu0 0.0
        %1951 = vmatprep.subr.mxu0 0.0
        %1952 = vmatpush1.msra.mxu0 0.0
        %1953 = vmatprep.subr.mxu0 0.0
        %1954 = vmatpush1.msra.mxu0 0.0
        %1955 = vmatprep.subr.mxu0 0.0
        %1956 = vmatpush1.msra.mxu0 0.0
        %1957 = vmatprep.subr.mxu0 0.0
        %1958 = vmatpush1.msra.mxu0 0.0
        %1959 = vmatprep.subr.mxu0 0.0
        %1960 = vmatpush1.msra.mxu0 0.0
        %1961 = vmatprep.subr.mxu0 0.0
        %1962 = vmatpush1.msra.mxu0 0.0
        %1963 = vmatprep.subr.mxu0 0.0
        %1964 = vmatpush1.msra.mxu0 0.0
        %1965 = vmatprep.subr.mxu0 0.0
        %1966 = vmatpush1.msra.mxu0 0.0
        %1967 = vmatprep.subr.mxu0 0.0
        %1968 = vmatpush1.msra.mxu0 0.0
        %1969 = vmatprep.subr.mxu0 0.0
        %1970 = vmatpush1.msra.mxu0 0.0
        %1971 = vmatprep.subr.mxu0 0.0
        %1972 = vmatpush1.msra.mxu0 0.0
        %1973 = vmatprep.subr.mxu0 0.0
        %1974 = vmatpush1.msra.mxu0 0.0
        %1975 = vmatprep.subr.mxu0 0.0
        %1976 = vmatpush1.msra.mxu0 0.0
        %1977 = vmatprep.mubr.f32.mxu0 0.0
        %v1978 = vand.u32 %v279, 4294901760
        %v1979 = vsub.f32 %v279, %v1978
        %1980 = vmatmul.mubr.f32.gmra.mrb[0].mxu0 %v1979
        %v1981 = vpop.f32.mrb[0].mxu0
        %v1982 = vadd.f32 %v1824, %v1981
        %v1983 = vpop.f32.mrb[0].mxu0
        %v1984 = vadd.f32 %v1826, %v1983
        %1985 = vmatprep.mubr.f32.mxu0 0.0
        %v1986 = vand.u32 %v280, 4294901760
        %v1987 = vsub.f32 %v280, %v1986
        %1988 = vmatmul.mubr.f32.gmra.mrb[0].mxu0 %v1987
        %v1989 = vpop.f32.mrb[0].mxu0
        %v1990 = vadd.f32 %v1831, %v1989
        %v1991 = vpop.f32.mrb[0].mxu0
        %v1992 = vadd.f32 %v1833, %v1991
        %1993 = vmatprep.mubr.f32.mxu0 0.0
        %v1994 = vand.u32 %v281, 4294901760
        %v1995 = vsub.f32 %v281, %v1994
        %1996 = vmatmul.mubr.f32.gmra.mrb[0].mxu0 %v1995
        %v1997 = vpop.f32.mrb[0].mxu0
        %v1998 = vadd.f32 %v1838, %v1997
        %v1999 = vpop.f32.mrb[0].mxu0
        %v2000 = vadd.f32 %v1840, %v1999
        %2001 = vmatprep.mubr.f32.mxu0 0.0
        %v2002 = vand.u32 %v282, 4294901760
        %v2003 = vsub.f32 %v282, %v2002
        %2004 = vmatmul.mubr.f32.gmra.mrb[0].mxu0 %v2003
        %v2005 = vpop.f32.mrb[0].mxu0
        %v2006 = vadd.f32 %v1845, %v2005
        %v2007 = vpop.f32.mrb[0].mxu0
        %v2008 = vadd.f32 %v1847, %v2007
        %2009 = vdwg.mxu0
        %v2010 = vand.u32 %v286, 4294901760
        %2011 = vmatprep.subr.mxu0 %v2010
        %v2012 = vand.u32 %v285, 4294901760
        %2013 = vmatpush1.msra.mxu0 %v2012
        %v2014 = vand.u32 %v294, 4294901760
        %2015 = vmatprep.subr.mxu0 %v2014
        %v2016 = vand.u32 %v293, 4294901760
        %2017 = vmatpush1.msra.mxu0 %v2016
        %v2018 = vand.u32 %v302, 4294901760
        %2019 = vmatprep.subr.mxu0 %v2018
        %v2020 = vand.u32 %v301, 4294901760
        %2021 = vmatpush1.msra.mxu0 %v2020
        %v2022 = vand.u32 %v310, 4294901760
        %2023 = vmatprep.subr.mxu0 %v2022
        %v2024 = vand.u32 %v309, 4294901760
        %2025 = vmatpush1.msra.mxu0 %v2024
        %v2026 = vand.u32 %v318, 4294901760
        %2027 = vmatprep.subr.mxu0 %v2026
        %v2028 = vand.u32 %v317, 4294901760
        %2029 = vmatpush1.msra.mxu0 %v2028
        %v2030 = vand.u32 %v326, 4294901760
        %2031 = vmatprep.subr.mxu0 %v2030
        %v2032 = vand.u32 %v325, 4294901760
        %2033 = vmatpush1.msra.mxu0 %v2032
        %v2034 = vand.u32 %v334, 4294901760
        %2035 = vmatprep.subr.mxu0 %v2034
        %v2036 = vand.u32 %v333, 4294901760
        %2037 = vmatpush1.msra.mxu0 %v2036
        %v2038 = vand.u32 %v342, 4294901760
        %2039 = vmatprep.subr.mxu0 %v2038
        %v2040 = vand.u32 %v341, 4294901760
        %2041 = vmatpush1.msra.mxu0 %v2040
        %v2042 = vand.u32 %v350, 4294901760
        %2043 = vmatprep.subr.mxu0 %v2042
        %v2044 = vand.u32 %v349, 4294901760
        %2045 = vmatpush1.msra.mxu0 %v2044
        %v2046 = vand.u32 %v358, 4294901760
        %2047 = vmatprep.subr.mxu0 %v2046
        %v2048 = vand.u32 %v357, 4294901760
        %2049 = vmatpush1.msra.mxu0 %v2048
        %v2050 = vand.u32 %v366, 4294901760
        %2051 = vmatprep.subr.mxu0 %v2050
        %v2052 = vand.u32 %v365, 4294901760
        %2053 = vmatpush1.msra.mxu0 %v2052
        %v2054 = vand.u32 %v374, 4294901760
        %2055 = vmatprep.subr.mxu0 %v2054
        %v2056 = vand.u32 %v373, 4294901760
        %2057 = vmatpush1.msra.mxu0 %v2056
        %v2058 = vand.u32 %v382, 4294901760
        %2059 = vmatprep.subr.mxu0 %v2058
        %v2060 = vand.u32 %v381, 4294901760
        %2061 = vmatpush1.msra.mxu0 %v2060
        %v2062 = vand.u32 %v390, 4294901760
        %2063 = vmatprep.subr.mxu0 %v2062
        %v2064 = vand.u32 %v389, 4294901760
        %2065 = vmatpush1.msra.mxu0 %v2064
        %v2066 = vand.u32 %v398, 4294901760
        %2067 = vmatprep.subr.mxu0 %v2066
        %v2068 = vand.u32 %v397, 4294901760
        %2069 = vmatpush1.msra.mxu0 %v2068
        %v2070 = vand.u32 %v406, 4294901760
        %2071 = vmatprep.subr.mxu0 %v2070
        %v2072 = vand.u32 %v405, 4294901760
        %2073 = vmatpush1.msra.mxu0 %v2072
        %2074 = vmatprep.subr.mxu0 0.0
        %2075 = vmatpush1.msra.mxu0 0.0
        %2076 = vmatprep.subr.mxu0 0.0
        %2077 = vmatpush1.msra.mxu0 0.0
        %2078 = vmatprep.subr.mxu0 0.0
        %2079 = vmatpush1.msra.mxu0 0.0
        %2080 = vmatprep.subr.mxu0 0.0
        %2081 = vmatpush1.msra.mxu0 0.0
        %2082 = vmatprep.subr.mxu0 0.0
        %2083 = vmatpush1.msra.mxu0 0.0
        %2084 = vmatprep.subr.mxu0 0.0
        %2085 = vmatpush1.msra.mxu0 0.0
        %2086 = vmatprep.subr.mxu0 0.0
        %2087 = vmatpush1.msra.mxu0 0.0
        %2088 = vmatprep.subr.mxu0 0.0
        %2089 = vmatpush1.msra.mxu0 0.0
        %2090 = vmatprep.subr.mxu0 0.0
        %2091 = vmatpush1.msra.mxu0 0.0
        %2092 = vmatprep.subr.mxu0 0.0
        %2093 = vmatpush1.msra.mxu0 0.0
        %2094 = vmatprep.subr.mxu0 0.0
        %2095 = vmatpush1.msra.mxu0 0.0
        %2096 = vmatprep.subr.mxu0 0.0
        %2097 = vmatpush1.msra.mxu0 0.0
        %2098 = vmatprep.subr.mxu0 0.0
        %2099 = vmatpush1.msra.mxu0 0.0
        %2100 = vmatprep.subr.mxu0 0.0
        %2101 = vmatpush1.msra.mxu0 0.0
        %2102 = vmatprep.subr.mxu0 0.0
        %2103 = vmatpush1.msra.mxu0 0.0
        %2104 = vmatprep.subr.mxu0 0.0
        %2105 = vmatpush1.msra.mxu0 0.0
        %2106 = vmatprep.mubr.f32.mxu0 0.0
        %v2107 = vand.u32 %v279, 4294901760
        %v2108 = vsub.f32 %v279, %v2107
        %v2109 = vand.u32 %v2108, 4294901760
        %2110 = vmatmul.mubr.f32.gmra.mrb[0].mxu0 %v2109
        %v2111 = vpop.f32.mrb[0].mxu0
        %v2112 = vadd.f32 %v1982, %v2111
        %v2113 = vpop.f32.mrb[0].mxu0
        %v2114 = vadd.f32 %v1984, %v2113
        %2115 = vmatprep.mubr.f32.mxu0 0.0
        %v2116 = vand.u32 %v280, 4294901760
        %v2117 = vsub.f32 %v280, %v2116
        %v2118 = vand.u32 %v2117, 4294901760
        %2119 = vmatmul.mubr.f32.gmra.mrb[0].mxu0 %v2118
        %v2120 = vpop.f32.mrb[0].mxu0
        %v2121 = vadd.f32 %v1990, %v2120
        %v2122 = vpop.f32.mrb[0].mxu0
        %v2123 = vadd.f32 %v1992, %v2122
        %2124 = vmatprep.mubr.f32.mxu0 0.0
        %v2125 = vand.u32 %v281, 4294901760
        %v2126 = vsub.f32 %v281, %v2125
        %v2127 = vand.u32 %v2126, 4294901760
        %2128 = vmatmul.mubr.f32.gmra.mrb[0].mxu0 %v2127
        %v2129 = vpop.f32.mrb[0].mxu0
        %v2130 = vadd.f32 %v1998, %v2129
        %v2131 = vpop.f32.mrb[0].mxu0
        %v2132 = vadd.f32 %v2000, %v2131
        %2133 = vmatprep.mubr.f32.mxu0 0.0
        %v2134 = vand.u32 %v282, 4294901760
        %v2135 = vsub.f32 %v282, %v2134
        %v2136 = vand.u32 %v2135, 4294901760
        %2137 = vmatmul.mubr.f32.gmra.mrb[0].mxu0 %v2136
        %v2138 = vpop.f32.mrb[0].mxu0
        %v2139 = vadd.f32 %v2006, %v2138
        %v2140 = vpop.f32.mrb[0].mxu0
        %v2141 = vadd.f32 %v2008, %v2140
        %2142 = vdwg.mxu0
        %v2143 = vand.u32 %v286, 4294901760
        %v2144 = vsub.f32 %v286, %v2143
        %v2145 = vand.u32 %v2144, 4294901760
        %2146 = vmatprep.subr.mxu0 %v2145
        %v2147 = vand.u32 %v285, 4294901760
        %v2148 = vsub.f32 %v285, %v2147
        %v2149 = vand.u32 %v2148, 4294901760
        %2150 = vmatpush1.msra.mxu0 %v2149
        %v2151 = vand.u32 %v294, 4294901760
        %v2152 = vsub.f32 %v294, %v2151
        %v2153 = vand.u32 %v2152, 4294901760
        %2154 = vmatprep.subr.mxu0 %v2153
        %v2155 = vand.u32 %v293, 4294901760
        %v2156 = vsub.f32 %v293, %v2155
        %v2157 = vand.u32 %v2156, 4294901760
        %2158 = vmatpush1.msra.mxu0 %v2157
        %v2159 = vand.u32 %v302, 4294901760
        %v2160 = vsub.f32 %v302, %v2159
        %v2161 = vand.u32 %v2160, 4294901760
        %2162 = vmatprep.subr.mxu0 %v2161
        %v2163 = vand.u32 %v301, 4294901760
        %v2164 = vsub.f32 %v301, %v2163
        %v2165 = vand.u32 %v2164, 4294901760
        %2166 = vmatpush1.msra.mxu0 %v2165
        %v2167 = vand.u32 %v310, 4294901760
        %v2168 = vsub.f32 %v310, %v2167
        %v2169 = vand.u32 %v2168, 4294901760
        %2170 = vmatprep.subr.mxu0 %v2169
        %v2171 = vand.u32 %v309, 4294901760
        %v2172 = vsub.f32 %v309, %v2171
        %v2173 = vand.u32 %v2172, 4294901760
        %2174 = vmatpush1.msra.mxu0 %v2173
        %v2175 = vand.u32 %v318, 4294901760
        %v2176 = vsub.f32 %v318, %v2175
        %v2177 = vand.u32 %v2176, 4294901760
        %2178 = vmatprep.subr.mxu0 %v2177
        %v2179 = vand.u32 %v317, 4294901760
        %v2180 = vsub.f32 %v317, %v2179
        %v2181 = vand.u32 %v2180, 4294901760
        %2182 = vmatpush1.msra.mxu0 %v2181
        %v2183 = vand.u32 %v326, 4294901760
        %v2184 = vsub.f32 %v326, %v2183
        %v2185 = vand.u32 %v2184, 4294901760
        %2186 = vmatprep.subr.mxu0 %v2185
        %v2187 = vand.u32 %v325, 4294901760
        %v2188 = vsub.f32 %v325, %v2187
        %v2189 = vand.u32 %v2188, 4294901760
        %2190 = vmatpush1.msra.mxu0 %v2189
        %v2191 = vand.u32 %v334, 4294901760
        %v2192 = vsub.f32 %v334, %v2191
        %v2193 = vand.u32 %v2192, 4294901760
        %2194 = vmatprep.subr.mxu0 %v2193
        %v2195 = vand.u32 %v333, 4294901760
        %v2196 = vsub.f32 %v333, %v2195
        %v2197 = vand.u32 %v2196, 4294901760
        %2198 = vmatpush1.msra.mxu0 %v2197
        %v2199 = vand.u32 %v342, 4294901760
        %v2200 = vsub.f32 %v342, %v2199
        %v2201 = vand.u32 %v2200, 4294901760
        %2202 = vmatprep.subr.mxu0 %v2201
        %v2203 = vand.u32 %v341, 4294901760
        %v2204 = vsub.f32 %v341, %v2203
        %v2205 = vand.u32 %v2204, 4294901760
        %2206 = vmatpush1.msra.mxu0 %v2205
        %v2207 = vand.u32 %v350, 4294901760
        %v2208 = vsub.f32 %v350, %v2207
        %v2209 = vand.u32 %v2208, 4294901760
        %2210 = vmatprep.subr.mxu0 %v2209
        %v2211 = vand.u32 %v349, 4294901760
        %v2212 = vsub.f32 %v349, %v2211
        %v2213 = vand.u32 %v2212, 4294901760
        %2214 = vmatpush1.msra.mxu0 %v2213
        %v2215 = vand.u32 %v358, 4294901760
        %v2216 = vsub.f32 %v358, %v2215
        %v2217 = vand.u32 %v2216, 4294901760
        %2218 = vmatprep.subr.mxu0 %v2217
        %v2219 = vand.u32 %v357, 4294901760
        %v2220 = vsub.f32 %v357, %v2219
        %v2221 = vand.u32 %v2220, 4294901760
        %2222 = vmatpush1.msra.mxu0 %v2221
        %v2223 = vand.u32 %v366, 4294901760
        %v2224 = vsub.f32 %v366, %v2223
        %v2225 = vand.u32 %v2224, 4294901760
        %2226 = vmatprep.subr.mxu0 %v2225
        %v2227 = vand.u32 %v365, 4294901760
        %v2228 = vsub.f32 %v365, %v2227
        %v2229 = vand.u32 %v2228, 4294901760
        %2230 = vmatpush1.msra.mxu0 %v2229
        %v2231 = vand.u32 %v374, 4294901760
        %v2232 = vsub.f32 %v374, %v2231
        %v2233 = vand.u32 %v2232, 4294901760
        %2234 = vmatprep.subr.mxu0 %v2233
        %v2235 = vand.u32 %v373, 4294901760
        %v2236 = vsub.f32 %v373, %v2235
        %v2237 = vand.u32 %v2236, 4294901760
        %2238 = vmatpush1.msra.mxu0 %v2237
        %v2239 = vand.u32 %v382, 4294901760
        %v2240 = vsub.f32 %v382, %v2239
        %v2241 = vand.u32 %v2240, 4294901760
        %2242 = vmatprep.subr.mxu0 %v2241
        %v2243 = vand.u32 %v381, 4294901760
        %v2244 = vsub.f32 %v381, %v2243
        %v2245 = vand.u32 %v2244, 4294901760
        %2246 = vmatpush1.msra.mxu0 %v2245
        %v2247 = vand.u32 %v390, 4294901760
        %v2248 = vsub.f32 %v390, %v2247
        %v2249 = vand.u32 %v2248, 4294901760
        %2250 = vmatprep.subr.mxu0 %v2249
        %v2251 = vand.u32 %v389, 4294901760
        %v2252 = vsub.f32 %v389, %v2251
        %v2253 = vand.u32 %v2252, 4294901760
        %2254 = vmatpush1.msra.mxu0 %v2253
        %v2255 = vand.u32 %v398, 4294901760
        %v2256 = vsub.f32 %v398, %v2255
        %v2257 = vand.u32 %v2256, 4294901760
        %2258 = vmatprep.subr.mxu0 %v2257
        %v2259 = vand.u32 %v397, 4294901760
        %v2260 = vsub.f32 %v397, %v2259
        %v2261 = vand.u32 %v2260, 4294901760
        %2262 = vmatpush1.msra.mxu0 %v2261
        %v2263 = vand.u32 %v406, 4294901760
        %v2264 = vsub.f32 %v406, %v2263
        %v2265 = vand.u32 %v2264, 4294901760
        %2266 = vmatprep.subr.mxu0 %v2265
        %v2267 = vand.u32 %v405, 4294901760
        %v2268 = vsub.f32 %v405, %v2267
        %v2269 = vand.u32 %v2268, 4294901760
        %2270 = vmatpush1.msra.mxu0 %v2269
        %2271 = vmatprep.subr.mxu0 0.0
        %2272 = vmatpush1.msra.mxu0 0.0
        %2273 = vmatprep.subr.mxu0 0.0
        %2274 = vmatpush1.msra.mxu0 0.0
        %2275 = vmatprep.subr.mxu0 0.0
        %2276 = vmatpush1.msra.mxu0 0.0
        %2277 = vmatprep.subr.mxu0 0.0
        %2278 = vmatpush1.msra.mxu0 0.0
        %2279 = vmatprep.subr.mxu0 0.0
        %2280 = vmatpush1.msra.mxu0 0.0
        %2281 = vmatprep.subr.mxu0 0.0
        %2282 = vmatpush1.msra.mxu0 0.0
        %2283 = vmatprep.subr.mxu0 0.0
        %2284 = vmatpush1.msra.mxu0 0.0
        %2285 = vmatprep.subr.mxu0 0.0
        %2286 = vmatpush1.msra.mxu0 0.0
        %2287 = vmatprep.subr.mxu0 0.0
        %2288 = vmatpush1.msra.mxu0 0.0
        %2289 = vmatprep.subr.mxu0 0.0
        %2290 = vmatpush1.msra.mxu0 0.0
        %2291 = vmatprep.subr.mxu0 0.0
        %2292 = vmatpush1.msra.mxu0 0.0
        %2293 = vmatprep.subr.mxu0 0.0
        %2294 = vmatpush1.msra.mxu0 0.0
        %2295 = vmatprep.subr.mxu0 0.0
        %2296 = vmatpush1.msra.mxu0 0.0
        %2297 = vmatprep.subr.mxu0 0.0
        %2298 = vmatpush1.msra.mxu0 0.0
        %2299 = vmatprep.subr.mxu0 0.0
        %2300 = vmatpush1.msra.mxu0 0.0
        %2301 = vmatprep.subr.mxu0 0.0
        %2302 = vmatpush1.msra.mxu0 0.0
        %2303 = vmatprep.mubr.f32.mxu0 0.0
        %v2304 = vand.u32 %v279, 4294901760
        %2305 = vmatmul.mubr.f32.gmra.mrb[0].mxu0 %v2304
        %v2306 = vpop.f32.mrb[0].mxu0
        %v2307 = vadd.f32 %v2112, %v2306
        %v2308 = vpop.f32.mrb[0].mxu0
        %v2309 = vadd.f32 %v2114, %v2308
        %2310 = vmatprep.mubr.f32.mxu0 0.0
        %v2311 = vand.u32 %v280, 4294901760
        %2312 = vmatmul.mubr.f32.gmra.mrb[0].mxu0 %v2311
        %v2313 = vpop.f32.mrb[0].mxu0
        %v2314 = vadd.f32 %v2121, %v2313
        %v2315 = vpop.f32.mrb[0].mxu0
        %v2316 = vadd.f32 %v2123, %v2315
        %2317 = vmatprep.mubr.f32.mxu0 0.0
        %v2318 = vand.u32 %v281, 4294901760
        %2319 = vmatmul.mubr.f32.gmra.mrb[0].mxu0 %v2318
        %v2320 = vpop.f32.mrb[0].mxu0
        %v2321 = vadd.f32 %v2130, %v2320
        %v2322 = vpop.f32.mrb[0].mxu0
        %v2323 = vadd.f32 %v2132, %v2322
        %2324 = vmatprep.mubr.f32.mxu0 0.0
        %v2325 = vand.u32 %v282, 4294901760
        %2326 = vmatmul.mubr.f32.gmra.mrb[0].mxu0 %v2325
        %v2327 = vpop.f32.mrb[0].mxu0
        %v2328 = vadd.f32 %v2139, %v2327
        %v2329 = vpop.f32.mrb[0].mxu0
        %v2330 = vadd.f32 %v2141, %v2329
        %2331 = vdwg.mxu0
        %v2332 = vand.u32 %v286, 4294901760
        %2333 = vmatprep.subr.mxu0 %v2332
        %v2334 = vand.u32 %v285, 4294901760
        %2335 = vmatpush1.msra.mxu0 %v2334
        %v2336 = vand.u32 %v294, 4294901760
        %2337 = vmatprep.subr.mxu0 %v2336
        %v2338 = vand.u32 %v293, 4294901760
        %2339 = vmatpush1.msra.mxu0 %v2338
        %v2340 = vand.u32 %v302, 4294901760
        %2341 = vmatprep.subr.mxu0 %v2340
        %v2342 = vand.u32 %v301, 4294901760
        %2343 = vmatpush1.msra.mxu0 %v2342
        %v2344 = vand.u32 %v310, 4294901760
        %2345 = vmatprep.subr.mxu0 %v2344
        %v2346 = vand.u32 %v309, 4294901760
        %2347 = vmatpush1.msra.mxu0 %v2346
        %v2348 = vand.u32 %v318, 4294901760
        %2349 = vmatprep.subr.mxu0 %v2348
        %v2350 = vand.u32 %v317, 4294901760
        %2351 = vmatpush1.msra.mxu0 %v2350
        %v2352 = vand.u32 %v326, 4294901760
        %2353 = vmatprep.subr.mxu0 %v2352
        %v2354 = vand.u32 %v325, 4294901760
        %2355 = vmatpush1.msra.mxu0 %v2354
        %v2356 = vand.u32 %v334, 4294901760
        %2357 = vmatprep.subr.mxu0 %v2356
        %v2358 = vand.u32 %v333, 4294901760
        %2359 = vmatpush1.msra.mxu0 %v2358
        %v2360 = vand.u32 %v342, 4294901760
        %2361 = vmatprep.subr.mxu0 %v2360
        %v2362 = vand.u32 %v341, 4294901760
        %2363 = vmatpush1.msra.mxu0 %v2362
        %v2364 = vand.u32 %v350, 4294901760
        %2365 = vmatprep.subr.mxu0 %v2364
        %v2366 = vand.u32 %v349, 4294901760
        %2367 = vmatpush1.msra.mxu0 %v2366
        %v2368 = vand.u32 %v358, 4294901760
        %2369 = vmatprep.subr.mxu0 %v2368
        %v2370 = vand.u32 %v357, 4294901760
        %2371 = vmatpush1.msra.mxu0 %v2370
        %v2372 = vand.u32 %v366, 4294901760
        %2373 = vmatprep.subr.mxu0 %v2372
        %v2374 = vand.u32 %v365, 4294901760
        %2375 = vmatpush1.msra.mxu0 %v2374
        %v2376 = vand.u32 %v374, 4294901760
        %2377 = vmatprep.subr.mxu0 %v2376
        %v2378 = vand.u32 %v373, 4294901760
        %2379 = vmatpush1.msra.mxu0 %v2378
        %v2380 = vand.u32 %v382, 4294901760
        %2381 = vmatprep.subr.mxu0 %v2380
        %v2382 = vand.u32 %v381, 4294901760
        %2383 = vmatpush1.msra.mxu0 %v2382
        %v2384 = vand.u32 %v390, 4294901760
        %2385 = vmatprep.subr.mxu0 %v2384
        %v2386 = vand.u32 %v389, 4294901760
        %2387 = vmatpush1.msra.mxu0 %v2386
        %v2388 = vand.u32 %v398, 4294901760
        %2389 = vmatprep.subr.mxu0 %v2388
        %v2390 = vand.u32 %v397, 4294901760
        %2391 = vmatpush1.msra.mxu0 %v2390
        %v2392 = vand.u32 %v406, 4294901760
        %2393 = vmatprep.subr.mxu0 %v2392
        %v2394 = vand.u32 %v405, 4294901760
        %2395 = vmatpush1.msra.mxu0 %v2394
        %2396 = vmatprep.subr.mxu0 0.0
        %2397 = vmatpush1.msra.mxu0 0.0
        %2398 = vmatprep.subr.mxu0 0.0
        %2399 = vmatpush1.msra.mxu0 0.0
        %2400 = vmatprep.subr.mxu0 0.0
        %2401 = vmatpush1.msra.mxu0 0.0
        %2402 = vmatprep.subr.mxu0 0.0
        %2403 = vmatpush1.msra.mxu0 0.0
        %2404 = vmatprep.subr.mxu0 0.0
        %2405 = vmatpush1.msra.mxu0 0.0
        %2406 = vmatprep.subr.mxu0 0.0
        %2407 = vmatpush1.msra.mxu0 0.0
        %2408 = vmatprep.subr.mxu0 0.0
        %2409 = vmatpush1.msra.mxu0 0.0
        %2410 = vmatprep.subr.mxu0 0.0
        %2411 = vmatpush1.msra.mxu0 0.0
        %2412 = vmatprep.subr.mxu0 0.0
        %2413 = vmatpush1.msra.mxu0 0.0
        %2414 = vmatprep.subr.mxu0 0.0
        %2415 = vmatpush1.msra.mxu0 0.0
        %2416 = vmatprep.subr.mxu0 0.0
        %2417 = vmatpush1.msra.mxu0 0.0
        %2418 = vmatprep.subr.mxu0 0.0
        %2419 = vmatpush1.msra.mxu0 0.0
        %2420 = vmatprep.subr.mxu0 0.0
        %2421 = vmatpush1.msra.mxu0 0.0
        %2422 = vmatprep.subr.mxu0 0.0
        %2423 = vmatpush1.msra.mxu0 0.0
        %2424 = vmatprep.subr.mxu0 0.0
        %2425 = vmatpush1.msra.mxu0 0.0
        %2426 = vmatprep.subr.mxu0 0.0
        %2427 = vmatpush1.msra.mxu0 0.0
        %2428 = vmatprep.mubr.f32.mxu0 0.0
        %v2429 = vand.u32 %v279, 4294901760
        %2430 = vmatmul.mubr.f32.gmra.mrb[0].mxu0 %v2429
        %v2431 = vpop.f32.mrb[0].mxu0
        %v2432 = vadd.f32 %v2307, %v2431
        %v2433 = vpop.f32.mrb[0].mxu0
        %v2434 = vadd.f32 %v2309, %v2433
        %2435 = vmatprep.mubr.f32.mxu0 0.0
        %v2436 = vand.u32 %v280, 4294901760
        %2437 = vmatmul.mubr.f32.gmra.mrb[0].mxu0 %v2436
        %v2438 = vpop.f32.mrb[0].mxu0
        %v2439 = vadd.f32 %v2314, %v2438
        %v2440 = vpop.f32.mrb[0].mxu0
        %v2441 = vadd.f32 %v2316, %v2440
        %2442 = vmatprep.mubr.f32.mxu0 0.0
        %v2443 = vand.u32 %v281, 4294901760
        %2444 = vmatmul.mubr.f32.gmra.mrb[0].mxu0 %v2443
        %v2445 = vpop.f32.mrb[0].mxu0
        %v2446 = vadd.f32 %v2321, %v2445
        %v2447 = vpop.f32.mrb[0].mxu0
        %v2448 = vadd.f32 %v2323, %v2447
        %2449 = vmatprep.mubr.f32.mxu0 0.0
        %v2450 = vand.u32 %v282, 4294901760
        %2451 = vmatmul.mubr.f32.gmra.mrb[0].mxu0 %v2450
        %v2452 = vpop.f32.mrb[0].mxu0
        %v2453 = vadd.f32 %v2328, %v2452
        %v2454 = vpop.f32.mrb[0].mxu0
        %v2455 = vadd.f32 %v2330, %v2454
        %2456 = vdwg.mxu0
        %v2457 = vand.u32 %v288, 4294901760
        %2458 = vmatprep.subr.mxu0 %v2457
        %v2459 = vand.u32 %v287, 4294901760
        %2460 = vmatpush1.msra.mxu0 %v2459
        %v2461 = vand.u32 %v296, 4294901760
        %2462 = vmatprep.subr.mxu0 %v2461
        %v2463 = vand.u32 %v295, 4294901760
        %2464 = vmatpush1.msra.mxu0 %v2463
        %v2465 = vand.u32 %v304, 4294901760
        %2466 = vmatprep.subr.mxu0 %v2465
        %v2467 = vand.u32 %v303, 4294901760
        %2468 = vmatpush1.msra.mxu0 %v2467
        %v2469 = vand.u32 %v312, 4294901760
        %2470 = vmatprep.subr.mxu0 %v2469
        %v2471 = vand.u32 %v311, 4294901760
        %2472 = vmatpush1.msra.mxu0 %v2471
        %v2473 = vand.u32 %v320, 4294901760
        %2474 = vmatprep.subr.mxu0 %v2473
        %v2475 = vand.u32 %v319, 4294901760
        %2476 = vmatpush1.msra.mxu0 %v2475
        %v2477 = vand.u32 %v328, 4294901760
        %2478 = vmatprep.subr.mxu0 %v2477
        %v2479 = vand.u32 %v327, 4294901760
        %2480 = vmatpush1.msra.mxu0 %v2479
        %v2481 = vand.u32 %v336, 4294901760
        %2482 = vmatprep.subr.mxu0 %v2481
        %v2483 = vand.u32 %v335, 4294901760
        %2484 = vmatpush1.msra.mxu0 %v2483
        %v2485 = vand.u32 %v344, 4294901760
        %2486 = vmatprep.subr.mxu0 %v2485
        %v2487 = vand.u32 %v343, 4294901760
        %2488 = vmatpush1.msra.mxu0 %v2487
        %v2489 = vand.u32 %v352, 4294901760
        %2490 = vmatprep.subr.mxu0 %v2489
        %v2491 = vand.u32 %v351, 4294901760
        %2492 = vmatpush1.msra.mxu0 %v2491
        %v2493 = vand.u32 %v360, 4294901760
        %2494 = vmatprep.subr.mxu0 %v2493
        %v2495 = vand.u32 %v359, 4294901760
        %2496 = vmatpush1.msra.mxu0 %v2495
        %v2497 = vand.u32 %v368, 4294901760
        %2498 = vmatprep.subr.mxu0 %v2497
        %v2499 = vand.u32 %v367, 4294901760
        %2500 = vmatpush1.msra.mxu0 %v2499
        %v2501 = vand.u32 %v376, 4294901760
        %2502 = vmatprep.subr.mxu0 %v2501
        %v2503 = vand.u32 %v375, 4294901760
        %2504 = vmatpush1.msra.mxu0 %v2503
        %v2505 = vand.u32 %v384, 4294901760
        %2506 = vmatprep.subr.mxu0 %v2505
        %v2507 = vand.u32 %v383, 4294901760
        %2508 = vmatpush1.msra.mxu0 %v2507
        %v2509 = vand.u32 %v392, 4294901760
        %2510 = vmatprep.subr.mxu0 %v2509
        %v2511 = vand.u32 %v391, 4294901760
        %2512 = vmatpush1.msra.mxu0 %v2511
        %v2513 = vand.u32 %v400, 4294901760
        %2514 = vmatprep.subr.mxu0 %v2513
        %v2515 = vand.u32 %v399, 4294901760
        %2516 = vmatpush1.msra.mxu0 %v2515
        %v2517 = vand.u32 %v408, 4294901760
        %2518 = vmatprep.subr.mxu0 %v2517
        %v2519 = vand.u32 %v407, 4294901760
        %2520 = vmatpush1.msra.mxu0 %v2519
        %2521 = vmatprep.subr.mxu0 0.0
        %2522 = vmatpush1.msra.mxu0 0.0
        %2523 = vmatprep.subr.mxu0 0.0
        %2524 = vmatpush1.msra.mxu0 0.0
        %2525 = vmatprep.subr.mxu0 0.0
        %2526 = vmatpush1.msra.mxu0 0.0
        %2527 = vmatprep.subr.mxu0 0.0
        %2528 = vmatpush1.msra.mxu0 0.0
        %2529 = vmatprep.subr.mxu0 0.0
        %2530 = vmatpush1.msra.mxu0 0.0
        %2531 = vmatprep.subr.mxu0 0.0
        %2532 = vmatpush1.msra.mxu0 0.0
        %2533 = vmatprep.subr.mxu0 0.0
        %2534 = vmatpush1.msra.mxu0 0.0
        %2535 = vmatprep.subr.mxu0 0.0
        %2536 = vmatpush1.msra.mxu0 0.0
        %2537 = vmatprep.subr.mxu0 0.0
        %2538 = vmatpush1.msra.mxu0 0.0
        %2539 = vmatprep.subr.mxu0 0.0
        %2540 = vmatpush1.msra.mxu0 0.0
        %2541 = vmatprep.subr.mxu0 0.0
        %2542 = vmatpush1.msra.mxu0 0.0
        %2543 = vmatprep.subr.mxu0 0.0
        %2544 = vmatpush1.msra.mxu0 0.0
        %2545 = vmatprep.subr.mxu0 0.0
        %2546 = vmatpush1.msra.mxu0 0.0
        %2547 = vmatprep.subr.mxu0 0.0
        %2548 = vmatpush1.msra.mxu0 0.0
        %2549 = vmatprep.subr.mxu0 0.0
        %2550 = vmatpush1.msra.mxu0 0.0
        %2551 = vmatprep.subr.mxu0 0.0
        %2552 = vmatpush1.msra.mxu0 0.0
        %2553 = vmatprep.mubr.f32.mxu0 0.0
        %v2554 = vand.u32 %v279, 4294901760
        %v2555 = vsub.f32 %v279, %v2554
        %v2556 = vand.u32 %v2555, 4294901760
        %v2557 = vsub.f32 %v2555, %v2556
        %v2558 = vand.u32 %v2557, 4294901760
        %2559 = vmatmul.mubr.f32.gmra.mrb[0].mxu0 %v2558
        %v2560 = vpop.f32.mrb[0].mxu0
        %v2561 = vadd.f32 %v432, %v2560
        %v2562 = vpop.f32.mrb[0].mxu0
        %v2563 = vadd.f32 %v436, %v2562
        %2564 = vmatprep.mubr.f32.mxu0 0.0
        %v2565 = vand.u32 %v280, 4294901760
        %v2566 = vsub.f32 %v280, %v2565
        %v2567 = vand.u32 %v2566, 4294901760
        %v2568 = vsub.f32 %v2566, %v2567
        %v2569 = vand.u32 %v2568, 4294901760
        %2570 = vmatmul.mubr.f32.gmra.mrb[0].mxu0 %v2569
        %v2571 = vpop.f32.mrb[0].mxu0
        %v2572 = vadd.f32 %v432, %v2571
        %v2573 = vpop.f32.mrb[0].mxu0
        %v2574 = vadd.f32 %v436, %v2573
        %2575 = vmatprep.mubr.f32.mxu0 0.0
        %v2576 = vand.u32 %v281, 4294901760
        %v2577 = vsub.f32 %v281, %v2576
        %v2578 = vand.u32 %v2577, 4294901760
        %v2579 = vsub.f32 %v2577, %v2578
        %v2580 = vand.u32 %v2579, 4294901760
        %2581 = vmatmul.mubr.f32.gmra.mrb[0].mxu0 %v2580
        %v2582 = vpop.f32.mrb[0].mxu0
        %v2583 = vadd.f32 %v432, %v2582
        %v2584 = vpop.f32.mrb[0].mxu0
        %v2585 = vadd.f32 %v436, %v2584
        %2586 = vmatprep.mubr.f32.mxu0 0.0
        %v2587 = vand.u32 %v282, 4294901760
        %v2588 = vsub.f32 %v282, %v2587
        %v2589 = vand.u32 %v2588, 4294901760
        %v2590 = vsub.f32 %v2588, %v2589
        %v2591 = vand.u32 %v2590, 4294901760
        %2592 = vmatmul.mubr.f32.gmra.mrb[0].mxu0 %v2591
        %v2593 = vpop.f32.mrb[0].mxu0
        %v2594 = vadd.f32 %v432, %v2593
        %v2595 = vpop.f32.mrb[0].mxu0
        %v2596 = vadd.f32 %v436, %v2595
        %2597 = vdwg.mxu0
        %v2598 = vand.u32 %v288, 4294901760
        %v2599 = vsub.f32 %v288, %v2598
        %v2600 = vand.u32 %v2599, 4294901760
        %v2601 = vsub.f32 %v2599, %v2600
        %v2602 = vand.u32 %v2601, 4294901760
        %2603 = vmatprep.subr.mxu0 %v2602
        %v2604 = vand.u32 %v287, 4294901760
        %v2605 = vsub.f32 %v287, %v2604
        %v2606 = vand.u32 %v2605, 4294901760
        %v2607 = vsub.f32 %v2605, %v2606
        %v2608 = vand.u32 %v2607, 4294901760
        %2609 = vmatpush1.msra.mxu0 %v2608
        %v2610 = vand.u32 %v296, 4294901760
        %v2611 = vsub.f32 %v296, %v2610
        %v2612 = vand.u32 %v2611, 4294901760
        %v2613 = vsub.f32 %v2611, %v2612
        %v2614 = vand.u32 %v2613, 4294901760
        %2615 = vmatprep.subr.mxu0 %v2614
        %v2616 = vand.u32 %v295, 4294901760
        %v2617 = vsub.f32 %v295, %v2616
        %v2618 = vand.u32 %v2617, 4294901760
        %v2619 = vsub.f32 %v2617, %v2618
        %v2620 = vand.u32 %v2619, 4294901760
        %2621 = vmatpush1.msra.mxu0 %v2620
        %v2622 = vand.u32 %v304, 4294901760
        %v2623 = vsub.f32 %v304, %v2622
        %v2624 = vand.u32 %v2623, 4294901760
        %v2625 = vsub.f32 %v2623, %v2624
        %v2626 = vand.u32 %v2625, 4294901760
        %2627 = vmatprep.subr.mxu0 %v2626
        %v2628 = vand.u32 %v303, 4294901760
        %v2629 = vsub.f32 %v303, %v2628
        %v2630 = vand.u32 %v2629, 4294901760
        %v2631 = vsub.f32 %v2629, %v2630
        %v2632 = vand.u32 %v2631, 4294901760
        %2633 = vmatpush1.msra.mxu0 %v2632
        %v2634 = vand.u32 %v312, 4294901760
        %v2635 = vsub.f32 %v312, %v2634
        %v2636 = vand.u32 %v2635, 4294901760
        %v2637 = vsub.f32 %v2635, %v2636
        %v2638 = vand.u32 %v2637, 4294901760
        %2639 = vmatprep.subr.mxu0 %v2638
        %v2640 = vand.u32 %v311, 4294901760
        %v2641 = vsub.f32 %v311, %v2640
        %v2642 = vand.u32 %v2641, 4294901760
        %v2643 = vsub.f32 %v2641, %v2642
        %v2644 = vand.u32 %v2643, 4294901760
        %2645 = vmatpush1.msra.mxu0 %v2644
        %v2646 = vand.u32 %v320, 4294901760
        %v2647 = vsub.f32 %v320, %v2646
        %v2648 = vand.u32 %v2647, 4294901760
        %v2649 = vsub.f32 %v2647, %v2648
        %v2650 = vand.u32 %v2649, 4294901760
        %2651 = vmatprep.subr.mxu0 %v2650
        %v2652 = vand.u32 %v319, 4294901760
        %v2653 = vsub.f32 %v319, %v2652
        %v2654 = vand.u32 %v2653, 4294901760
        %v2655 = vsub.f32 %v2653, %v2654
        %v2656 = vand.u32 %v2655, 4294901760
        %2657 = vmatpush1.msra.mxu0 %v2656
        %v2658 = vand.u32 %v328, 4294901760
        %v2659 = vsub.f32 %v328, %v2658
        %v2660 = vand.u32 %v2659, 4294901760
        %v2661 = vsub.f32 %v2659, %v2660
        %v2662 = vand.u32 %v2661, 4294901760
        %2663 = vmatprep.subr.mxu0 %v2662
        %v2664 = vand.u32 %v327, 4294901760
        %v2665 = vsub.f32 %v327, %v2664
        %v2666 = vand.u32 %v2665, 4294901760
        %v2667 = vsub.f32 %v2665, %v2666
        %v2668 = vand.u32 %v2667, 4294901760
        %2669 = vmatpush1.msra.mxu0 %v2668
        %v2670 = vand.u32 %v336, 4294901760
        %v2671 = vsub.f32 %v336, %v2670
        %v2672 = vand.u32 %v2671, 4294901760
        %v2673 = vsub.f32 %v2671, %v2672
        %v2674 = vand.u32 %v2673, 4294901760
        %2675 = vmatprep.subr.mxu0 %v2674
        %v2676 = vand.u32 %v335, 4294901760
        %v2677 = vsub.f32 %v335, %v2676
        %v2678 = vand.u32 %v2677, 4294901760
        %v2679 = vsub.f32 %v2677, %v2678
        %v2680 = vand.u32 %v2679, 4294901760
        %2681 = vmatpush1.msra.mxu0 %v2680
        %v2682 = vand.u32 %v344, 4294901760
        %v2683 = vsub.f32 %v344, %v2682
        %v2684 = vand.u32 %v2683, 4294901760
        %v2685 = vsub.f32 %v2683, %v2684
        %v2686 = vand.u32 %v2685, 4294901760
        %2687 = vmatprep.subr.mxu0 %v2686
        %v2688 = vand.u32 %v343, 4294901760
        %v2689 = vsub.f32 %v343, %v2688
        %v2690 = vand.u32 %v2689, 4294901760
        %v2691 = vsub.f32 %v2689, %v2690
        %v2692 = vand.u32 %v2691, 4294901760
        %2693 = vmatpush1.msra.mxu0 %v2692
        %v2694 = vand.u32 %v352, 4294901760
        %v2695 = vsub.f32 %v352, %v2694
        %v2696 = vand.u32 %v2695, 4294901760
        %v2697 = vsub.f32 %v2695, %v2696
        %v2698 = vand.u32 %v2697, 4294901760
        %2699 = vmatprep.subr.mxu0 %v2698
        %v2700 = vand.u32 %v351, 4294901760
        %v2701 = vsub.f32 %v351, %v2700
        %v2702 = vand.u32 %v2701, 4294901760
        %v2703 = vsub.f32 %v2701, %v2702
        %v2704 = vand.u32 %v2703, 4294901760
        %2705 = vmatpush1.msra.mxu0 %v2704
        %v2706 = vand.u32 %v360, 4294901760
        %v2707 = vsub.f32 %v360, %v2706
        %v2708 = vand.u32 %v2707, 4294901760
        %v2709 = vsub.f32 %v2707, %v2708
        %v2710 = vand.u32 %v2709, 4294901760
        %2711 = vmatprep.subr.mxu0 %v2710
        %v2712 = vand.u32 %v359, 4294901760
        %v2713 = vsub.f32 %v359, %v2712
        %v2714 = vand.u32 %v2713, 4294901760
        %v2715 = vsub.f32 %v2713, %v2714
        %v2716 = vand.u32 %v2715, 4294901760
        %2717 = vmatpush1.msra.mxu0 %v2716
        %v2718 = vand.u32 %v368, 4294901760
        %v2719 = vsub.f32 %v368, %v2718
        %v2720 = vand.u32 %v2719, 4294901760
        %v2721 = vsub.f32 %v2719, %v2720
        %v2722 = vand.u32 %v2721, 4294901760
        %2723 = vmatprep.subr.mxu0 %v2722
        %v2724 = vand.u32 %v367, 4294901760
        %v2725 = vsub.f32 %v367, %v2724
        %v2726 = vand.u32 %v2725, 4294901760
        %v2727 = vsub.f32 %v2725, %v2726
        %v2728 = vand.u32 %v2727, 4294901760
        %2729 = vmatpush1.msra.mxu0 %v2728
        %v2730 = vand.u32 %v376, 4294901760
        %v2731 = vsub.f32 %v376, %v2730
        %v2732 = vand.u32 %v2731, 4294901760
        %v2733 = vsub.f32 %v2731, %v2732
        %v2734 = vand.u32 %v2733, 4294901760
        %2735 = vmatprep.subr.mxu0 %v2734
        %v2736 = vand.u32 %v375, 4294901760
        %v2737 = vsub.f32 %v375, %v2736
        %v2738 = vand.u32 %v2737, 4294901760
        %v2739 = vsub.f32 %v2737, %v2738
        %v2740 = vand.u32 %v2739, 4294901760
        %2741 = vmatpush1.msra.mxu0 %v2740
        %v2742 = vand.u32 %v384, 4294901760
        %v2743 = vsub.f32 %v384, %v2742
        %v2744 = vand.u32 %v2743, 4294901760
        %v2745 = vsub.f32 %v2743, %v2744
        %v2746 = vand.u32 %v2745, 4294901760
        %2747 = vmatprep.subr.mxu0 %v2746
        %v2748 = vand.u32 %v383, 4294901760
        %v2749 = vsub.f32 %v383, %v2748
        %v2750 = vand.u32 %v2749, 4294901760
        %v2751 = vsub.f32 %v2749, %v2750
        %v2752 = vand.u32 %v2751, 4294901760
        %2753 = vmatpush1.msra.mxu0 %v2752
        %v2754 = vand.u32 %v392, 4294901760
        %v2755 = vsub.f32 %v392, %v2754
        %v2756 = vand.u32 %v2755, 4294901760
        %v2757 = vsub.f32 %v2755, %v2756
        %v2758 = vand.u32 %v2757, 4294901760
        %2759 = vmatprep.subr.mxu0 %v2758
        %v2760 = vand.u32 %v391, 4294901760
        %v2761 = vsub.f32 %v391, %v2760
        %v2762 = vand.u32 %v2761, 4294901760
        %v2763 = vsub.f32 %v2761, %v2762
        %v2764 = vand.u32 %v2763, 4294901760
        %2765 = vmatpush1.msra.mxu0 %v2764
        %v2766 = vand.u32 %v400, 4294901760
        %v2767 = vsub.f32 %v400, %v2766
        %v2768 = vand.u32 %v2767, 4294901760
        %v2769 = vsub.f32 %v2767, %v2768
        %v2770 = vand.u32 %v2769, 4294901760
        %2771 = vmatprep.subr.mxu0 %v2770
        %v2772 = vand.u32 %v399, 4294901760
        %v2773 = vsub.f32 %v399, %v2772
        %v2774 = vand.u32 %v2773, 4294901760
        %v2775 = vsub.f32 %v2773, %v2774
        %v2776 = vand.u32 %v2775, 4294901760
        %2777 = vmatpush1.msra.mxu0 %v2776
        %v2778 = vand.u32 %v408, 4294901760
        %v2779 = vsub.f32 %v408, %v2778
        %v2780 = vand.u32 %v2779, 4294901760
        %v2781 = vsub.f32 %v2779, %v2780
        %v2782 = vand.u32 %v2781, 4294901760
        %2783 = vmatprep.subr.mxu0 %v2782
        %v2784 = vand.u32 %v407, 4294901760
        %v2785 = vsub.f32 %v407, %v2784
        %v2786 = vand.u32 %v2785, 4294901760
        %v2787 = vsub.f32 %v2785, %v2786
        %v2788 = vand.u32 %v2787, 4294901760
        %2789 = vmatpush1.msra.mxu0 %v2788
        %2790 = vmatprep.subr.mxu0 0.0
        %2791 = vmatpush1.msra.mxu0 0.0
        %2792 = vmatprep.subr.mxu0 0.0
        %2793 = vmatpush1.msra.mxu0 0.0
        %2794 = vmatprep.subr.mxu0 0.0
        %2795 = vmatpush1.msra.mxu0 0.0
        %2796 = vmatprep.subr.mxu0 0.0
        %2797 = vmatpush1.msra.mxu0 0.0
        %2798 = vmatprep.subr.mxu0 0.0
        %2799 = vmatpush1.msra.mxu0 0.0
        %2800 = vmatprep.subr.mxu0 0.0
        %2801 = vmatpush1.msra.mxu0 0.0
        %2802 = vmatprep.subr.mxu0 0.0
        %2803 = vmatpush1.msra.mxu0 0.0
        %2804 = vmatprep.subr.mxu0 0.0
        %2805 = vmatpush1.msra.mxu0 0.0
        %2806 = vmatprep.subr.mxu0 0.0
        %2807 = vmatpush1.msra.mxu0 0.0
        %2808 = vmatprep.subr.mxu0 0.0
        %2809 = vmatpush1.msra.mxu0 0.0
        %2810 = vmatprep.subr.mxu0 0.0
        %2811 = vmatpush1.msra.mxu0 0.0
        %2812 = vmatprep.subr.mxu0 0.0
        %2813 = vmatpush1.msra.mxu0 0.0
        %2814 = vmatprep.subr.mxu0 0.0
        %2815 = vmatpush1.msra.mxu0 0.0
        %2816 = vmatprep.subr.mxu0 0.0
        %2817 = vmatpush1.msra.mxu0 0.0
        %2818 = vmatprep.subr.mxu0 0.0
        %2819 = vmatpush1.msra.mxu0 0.0
        %2820 = vmatprep.subr.mxu0 0.0
        %2821 = vmatpush1.msra.mxu0 0.0
        %2822 = vmatprep.mubr.f32.mxu0 0.0
        %v2823 = vand.u32 %v279, 4294901760
        %2824 = vmatmul.mubr.f32.gmra.mrb[0].mxu0 %v2823
        %v2825 = vpop.f32.mrb[0].mxu0
        %v2826 = vadd.f32 %v2561, %v2825
        %v2827 = vpop.f32.mrb[0].mxu0
        %v2828 = vadd.f32 %v2563, %v2827
        %2829 = vmatprep.mubr.f32.mxu0 0.0
        %v2830 = vand.u32 %v280, 4294901760
        %2831 = vmatmul.mubr.f32.gmra.mrb[0].mxu0 %v2830
        %v2832 = vpop.f32.mrb[0].mxu0
        %v2833 = vadd.f32 %v2572, %v2832
        %v2834 = vpop.f32.mrb[0].mxu0
        %v2835 = vadd.f32 %v2574, %v2834
        %2836 = vmatprep.mubr.f32.mxu0 0.0
        %v2837 = vand.u32 %v281, 4294901760
        %2838 = vmatmul.mubr.f32.gmra.mrb[0].mxu0 %v2837
        %v2839 = vpop.f32.mrb[0].mxu0
        %v2840 = vadd.f32 %v2583, %v2839
        %v2841 = vpop.f32.mrb[0].mxu0
        %v2842 = vadd.f32 %v2585, %v2841
        %2843 = vmatprep.mubr.f32.mxu0 0.0
        %v2844 = vand.u32 %v282, 4294901760
        %2845 = vmatmul.mubr.f32.gmra.mrb[0].mxu0 %v2844
        %v2846 = vpop.f32.mrb[0].mxu0
        %v2847 = vadd.f32 %v2594, %v2846
        %v2848 = vpop.f32.mrb[0].mxu0
        %v2849 = vadd.f32 %v2596, %v2848
        %2850 = vdwg.mxu0
        %v2851 = vand.u32 %v288, 4294901760
        %v2852 = vsub.f32 %v288, %v2851
        %2853 = vmatprep.subr.mxu0 %v2852
        %v2854 = vand.u32 %v287, 4294901760
        %v2855 = vsub.f32 %v287, %v2854
        %2856 = vmatpush1.msra.mxu0 %v2855
        %v2857 = vand.u32 %v296, 4294901760
        %v2858 = vsub.f32 %v296, %v2857
        %2859 = vmatprep.subr.mxu0 %v2858
        %v2860 = vand.u32 %v295, 4294901760
        %v2861 = vsub.f32 %v295, %v2860
        %2862 = vmatpush1.msra.mxu0 %v2861
        %v2863 = vand.u32 %v304, 4294901760
        %v2864 = vsub.f32 %v304, %v2863
        %2865 = vmatprep.subr.mxu0 %v2864
        %v2866 = vand.u32 %v303, 4294901760
        %v2867 = vsub.f32 %v303, %v2866
        %2868 = vmatpush1.msra.mxu0 %v2867
        %v2869 = vand.u32 %v312, 4294901760
        %v2870 = vsub.f32 %v312, %v2869
        %2871 = vmatprep.subr.mxu0 %v2870
        %v2872 = vand.u32 %v311, 4294901760
        %v2873 = vsub.f32 %v311, %v2872
        %2874 = vmatpush1.msra.mxu0 %v2873
        %v2875 = vand.u32 %v320, 4294901760
        %v2876 = vsub.f32 %v320, %v2875
        %2877 = vmatprep.subr.mxu0 %v2876
        %v2878 = vand.u32 %v319, 4294901760
        %v2879 = vsub.f32 %v319, %v2878
        %2880 = vmatpush1.msra.mxu0 %v2879
        %v2881 = vand.u32 %v328, 4294901760
        %v2882 = vsub.f32 %v328, %v2881
        %2883 = vmatprep.subr.mxu0 %v2882
        %v2884 = vand.u32 %v327, 4294901760
        %v2885 = vsub.f32 %v327, %v2884
        %2886 = vmatpush1.msra.mxu0 %v2885
        %v2887 = vand.u32 %v336, 4294901760
        %v2888 = vsub.f32 %v336, %v2887
        %2889 = vmatprep.subr.mxu0 %v2888
        %v2890 = vand.u32 %v335, 4294901760
        %v2891 = vsub.f32 %v335, %v2890
        %2892 = vmatpush1.msra.mxu0 %v2891
        %v2893 = vand.u32 %v344, 4294901760
        %v2894 = vsub.f32 %v344, %v2893
        %2895 = vmatprep.subr.mxu0 %v2894
        %v2896 = vand.u32 %v343, 4294901760
        %v2897 = vsub.f32 %v343, %v2896
        %2898 = vmatpush1.msra.mxu0 %v2897
        %v2899 = vand.u32 %v352, 4294901760
        %v2900 = vsub.f32 %v352, %v2899
        %2901 = vmatprep.subr.mxu0 %v2900
        %v2902 = vand.u32 %v351, 4294901760
        %v2903 = vsub.f32 %v351, %v2902
        %2904 = vmatpush1.msra.mxu0 %v2903
        %v2905 = vand.u32 %v360, 4294901760
        %v2906 = vsub.f32 %v360, %v2905
        %2907 = vmatprep.subr.mxu0 %v2906
        %v2908 = vand.u32 %v359, 4294901760
        %v2909 = vsub.f32 %v359, %v2908
        %2910 = vmatpush1.msra.mxu0 %v2909
        %v2911 = vand.u32 %v368, 4294901760
        %v2912 = vsub.f32 %v368, %v2911
        %2913 = vmatprep.subr.mxu0 %v2912
        %v2914 = vand.u32 %v367, 4294901760
        %v2915 = vsub.f32 %v367, %v2914
        %2916 = vmatpush1.msra.mxu0 %v2915
        %v2917 = vand.u32 %v376, 4294901760
        %v2918 = vsub.f32 %v376, %v2917
        %2919 = vmatprep.subr.mxu0 %v2918
        %v2920 = vand.u32 %v375, 4294901760
        %v2921 = vsub.f32 %v375, %v2920
        %2922 = vmatpush1.msra.mxu0 %v2921
        %v2923 = vand.u32 %v384, 4294901760
        %v2924 = vsub.f32 %v384, %v2923
        %2925 = vmatprep.subr.mxu0 %v2924
        %v2926 = vand.u32 %v383, 4294901760
        %v2927 = vsub.f32 %v383, %v2926
        %2928 = vmatpush1.msra.mxu0 %v2927
        %v2929 = vand.u32 %v392, 4294901760
        %v2930 = vsub.f32 %v392, %v2929
        %2931 = vmatprep.subr.mxu0 %v2930
        %v2932 = vand.u32 %v391, 4294901760
        %v2933 = vsub.f32 %v391, %v2932
        %2934 = vmatpush1.msra.mxu0 %v2933
        %v2935 = vand.u32 %v400, 4294901760
        %v2936 = vsub.f32 %v400, %v2935
        %2937 = vmatprep.subr.mxu0 %v2936
        %v2938 = vand.u32 %v399, 4294901760
        %v2939 = vsub.f32 %v399, %v2938
        %2940 = vmatpush1.msra.mxu0 %v2939
        %v2941 = vand.u32 %v408, 4294901760
        %v2942 = vsub.f32 %v408, %v2941
        %2943 = vmatprep.subr.mxu0 %v2942
        %v2944 = vand.u32 %v407, 4294901760
        %v2945 = vsub.f32 %v407, %v2944
        %2946 = vmatpush1.msra.mxu0 %v2945
        %2947 = vmatprep.subr.mxu0 0.0
        %2948 = vmatpush1.msra.mxu0 0.0
        %2949 = vmatprep.subr.mxu0 0.0
        %2950 = vmatpush1.msra.mxu0 0.0
        %2951 = vmatprep.subr.mxu0 0.0
        %2952 = vmatpush1.msra.mxu0 0.0
        %2953 = vmatprep.subr.mxu0 0.0
        %2954 = vmatpush1.msra.mxu0 0.0
        %2955 = vmatprep.subr.mxu0 0.0
        %2956 = vmatpush1.msra.mxu0 0.0
        %2957 = vmatprep.subr.mxu0 0.0
        %2958 = vmatpush1.msra.mxu0 0.0
        %2959 = vmatprep.subr.mxu0 0.0
        %2960 = vmatpush1.msra.mxu0 0.0
        %2961 = vmatprep.subr.mxu0 0.0
        %2962 = vmatpush1.msra.mxu0 0.0
        %2963 = vmatprep.subr.mxu0 0.0
        %2964 = vmatpush1.msra.mxu0 0.0
        %2965 = vmatprep.subr.mxu0 0.0
        %2966 = vmatpush1.msra.mxu0 0.0
        %2967 = vmatprep.subr.mxu0 0.0
        %2968 = vmatpush1.msra.mxu0 0.0
        %2969 = vmatprep.subr.mxu0 0.0
        %2970 = vmatpush1.msra.mxu0 0.0
        %2971 = vmatprep.subr.mxu0 0.0
        %2972 = vmatpush1.msra.mxu0 0.0
        %2973 = vmatprep.subr.mxu0 0.0
        %2974 = vmatpush1.msra.mxu0 0.0
        %2975 = vmatprep.subr.mxu0 0.0
        %2976 = vmatpush1.msra.mxu0 0.0
        %2977 = vmatprep.subr.mxu0 0.0
        %2978 = vmatpush1.msra.mxu0 0.0
        %2979 = vmatprep.mubr.f32.mxu0 0.0
        %v2980 = vand.u32 %v279, 4294901760
        %v2981 = vsub.f32 %v279, %v2980
        %2982 = vmatmul.mubr.f32.gmra.mrb[0].mxu0 %v2981
        %v2983 = vpop.f32.mrb[0].mxu0
        %v2984 = vadd.f32 %v2826, %v2983
        %v2985 = vpop.f32.mrb[0].mxu0
        %v2986 = vadd.f32 %v2828, %v2985
        %2987 = vmatprep.mubr.f32.mxu0 0.0
        %v2988 = vand.u32 %v280, 4294901760
        %v2989 = vsub.f32 %v280, %v2988
        %2990 = vmatmul.mubr.f32.gmra.mrb[0].mxu0 %v2989
        %v2991 = vpop.f32.mrb[0].mxu0
        %v2992 = vadd.f32 %v2833, %v2991
        %v2993 = vpop.f32.mrb[0].mxu0
        %v2994 = vadd.f32 %v2835, %v2993
        %2995 = vmatprep.mubr.f32.mxu0 0.0
        %v2996 = vand.u32 %v281, 4294901760
        %v2997 = vsub.f32 %v281, %v2996
        %2998 = vmatmul.mubr.f32.gmra.mrb[0].mxu0 %v2997
        %v2999 = vpop.f32.mrb[0].mxu0
        %v3000 = vadd.f32 %v2840, %v2999
        %v3001 = vpop.f32.mrb[0].mxu0
        %v3002 = vadd.f32 %v2842, %v3001
        %3003 = vmatprep.mubr.f32.mxu0 0.0
        %v3004 = vand.u32 %v282, 4294901760
        %v3005 = vsub.f32 %v282, %v3004
        %3006 = vmatmul.mubr.f32.gmra.mrb[0].mxu0 %v3005
        %v3007 = vpop.f32.mrb[0].mxu0
        %v3008 = vadd.f32 %v2847, %v3007
        %v3009 = vpop.f32.mrb[0].mxu0
        %v3010 = vadd.f32 %v2849, %v3009
        %3011 = vdwg.mxu0
        %v3012 = vand.u32 %v288, 4294901760
        %3013 = vmatprep.subr.mxu0 %v3012
        %v3014 = vand.u32 %v287, 4294901760
        %3015 = vmatpush1.msra.mxu0 %v3014
        %v3016 = vand.u32 %v296, 4294901760
        %3017 = vmatprep.subr.mxu0 %v3016
        %v3018 = vand.u32 %v295, 4294901760
        %3019 = vmatpush1.msra.mxu0 %v3018
        %v3020 = vand.u32 %v304, 4294901760
        %3021 = vmatprep.subr.mxu0 %v3020
        %v3022 = vand.u32 %v303, 4294901760
        %3023 = vmatpush1.msra.mxu0 %v3022
        %v3024 = vand.u32 %v312, 4294901760
        %3025 = vmatprep.subr.mxu0 %v3024
        %v3026 = vand.u32 %v311, 4294901760
        %3027 = vmatpush1.msra.mxu0 %v3026
        %v3028 = vand.u32 %v320, 4294901760
        %3029 = vmatprep.subr.mxu0 %v3028
        %v3030 = vand.u32 %v319, 4294901760
        %3031 = vmatpush1.msra.mxu0 %v3030
        %v3032 = vand.u32 %v328, 4294901760
        %3033 = vmatprep.subr.mxu0 %v3032
        %v3034 = vand.u32 %v327, 4294901760
        %3035 = vmatpush1.msra.mxu0 %v3034
        %v3036 = vand.u32 %v336, 4294901760
        %3037 = vmatprep.subr.mxu0 %v3036
        %v3038 = vand.u32 %v335, 4294901760
        %3039 = vmatpush1.msra.mxu0 %v3038
        %v3040 = vand.u32 %v344, 4294901760
        %3041 = vmatprep.subr.mxu0 %v3040
        %v3042 = vand.u32 %v343, 4294901760
        %3043 = vmatpush1.msra.mxu0 %v3042
        %v3044 = vand.u32 %v352, 4294901760
        %3045 = vmatprep.subr.mxu0 %v3044
        %v3046 = vand.u32 %v351, 4294901760
        %3047 = vmatpush1.msra.mxu0 %v3046
        %v3048 = vand.u32 %v360, 4294901760
        %3049 = vmatprep.subr.mxu0 %v3048
        %v3050 = vand.u32 %v359, 4294901760
        %3051 = vmatpush1.msra.mxu0 %v3050
        %v3052 = vand.u32 %v368, 4294901760
        %3053 = vmatprep.subr.mxu0 %v3052
        %v3054 = vand.u32 %v367, 4294901760
        %3055 = vmatpush1.msra.mxu0 %v3054
        %v3056 = vand.u32 %v376, 4294901760
        %3057 = vmatprep.subr.mxu0 %v3056
        %v3058 = vand.u32 %v375, 4294901760
        %3059 = vmatpush1.msra.mxu0 %v3058
        %v3060 = vand.u32 %v384, 4294901760
        %3061 = vmatprep.subr.mxu0 %v3060
        %v3062 = vand.u32 %v383, 4294901760
        %3063 = vmatpush1.msra.mxu0 %v3062
        %v3064 = vand.u32 %v392, 4294901760
        %3065 = vmatprep.subr.mxu0 %v3064
        %v3066 = vand.u32 %v391, 4294901760
        %3067 = vmatpush1.msra.mxu0 %v3066
        %v3068 = vand.u32 %v400, 4294901760
        %3069 = vmatprep.subr.mxu0 %v3068
        %v3070 = vand.u32 %v399, 4294901760
        %3071 = vmatpush1.msra.mxu0 %v3070
        %v3072 = vand.u32 %v408, 4294901760
        %3073 = vmatprep.subr.mxu0 %v3072
        %v3074 = vand.u32 %v407, 4294901760
        %3075 = vmatpush1.msra.mxu0 %v3074
        %3076 = vmatprep.subr.mxu0 0.0
        %3077 = vmatpush1.msra.mxu0 0.0
        %3078 = vmatprep.subr.mxu0 0.0
        %3079 = vmatpush1.msra.mxu0 0.0
        %3080 = vmatprep.subr.mxu0 0.0
        %3081 = vmatpush1.msra.mxu0 0.0
        %3082 = vmatprep.subr.mxu0 0.0
        %3083 = vmatpush1.msra.mxu0 0.0
        %3084 = vmatprep.subr.mxu0 0.0
        %3085 = vmatpush1.msra.mxu0 0.0
        %3086 = vmatprep.subr.mxu0 0.0
        %3087 = vmatpush1.msra.mxu0 0.0
        %3088 = vmatprep.subr.mxu0 0.0
        %3089 = vmatpush1.msra.mxu0 0.0
        %3090 = vmatprep.subr.mxu0 0.0
        %3091 = vmatpush1.msra.mxu0 0.0
        %3092 = vmatprep.subr.mxu0 0.0
        %3093 = vmatpush1.msra.mxu0 0.0
        %3094 = vmatprep.subr.mxu0 0.0
        %3095 = vmatpush1.msra.mxu0 0.0
        %3096 = vmatprep.subr.mxu0 0.0
        %3097 = vmatpush1.msra.mxu0 0.0
        %3098 = vmatprep.subr.mxu0 0.0
        %3099 = vmatpush1.msra.mxu0 0.0
        %3100 = vmatprep.subr.mxu0 0.0
        %3101 = vmatpush1.msra.mxu0 0.0
        %3102 = vmatprep.subr.mxu0 0.0
        %3103 = vmatpush1.msra.mxu0 0.0
        %3104 = vmatprep.subr.mxu0 0.0
        %3105 = vmatpush1.msra.mxu0 0.0
        %3106 = vmatprep.subr.mxu0 0.0
        %3107 = vmatpush1.msra.mxu0 0.0
        %3108 = vmatprep.mubr.f32.mxu0 0.0
        %v3109 = vand.u32 %v279, 4294901760
        %v3110 = vsub.f32 %v279, %v3109
        %v3111 = vand.u32 %v3110, 4294901760
        %3112 = vmatmul.mubr.f32.gmra.mrb[0].mxu0 %v3111
        %v3113 = vpop.f32.mrb[0].mxu0
        %v3114 = vadd.f32 %v2984, %v3113
        %v3115 = vpop.f32.mrb[0].mxu0
        %v3116 = vadd.f32 %v2986, %v3115
        %3117 = vmatprep.mubr.f32.mxu0 0.0
        %v3118 = vand.u32 %v280, 4294901760
        %v3119 = vsub.f32 %v280, %v3118
        %v3120 = vand.u32 %v3119, 4294901760
        %3121 = vmatmul.mubr.f32.gmra.mrb[0].mxu0 %v3120
        %v3122 = vpop.f32.mrb[0].mxu0
        %v3123 = vadd.f32 %v2992, %v3122
        %v3124 = vpop.f32.mrb[0].mxu0
        %v3125 = vadd.f32 %v2994, %v3124
        %3126 = vmatprep.mubr.f32.mxu0 0.0
        %v3127 = vand.u32 %v281, 4294901760
        %v3128 = vsub.f32 %v281, %v3127
        %v3129 = vand.u32 %v3128, 4294901760
        %3130 = vmatmul.mubr.f32.gmra.mrb[0].mxu0 %v3129
        %v3131 = vpop.f32.mrb[0].mxu0
        %v3132 = vadd.f32 %v3000, %v3131
        %v3133 = vpop.f32.mrb[0].mxu0
        %v3134 = vadd.f32 %v3002, %v3133
        %3135 = vmatprep.mubr.f32.mxu0 0.0
        %v3136 = vand.u32 %v282, 4294901760
        %v3137 = vsub.f32 %v282, %v3136
        %v3138 = vand.u32 %v3137, 4294901760
        %3139 = vmatmul.mubr.f32.gmra.mrb[0].mxu0 %v3138
        %v3140 = vpop.f32.mrb[0].mxu0
        %v3141 = vadd.f32 %v3008, %v3140
        %v3142 = vpop.f32.mrb[0].mxu0
        %v3143 = vadd.f32 %v3010, %v3142
        %3144 = vdwg.mxu0
        %v3145 = vand.u32 %v288, 4294901760
        %v3146 = vsub.f32 %v288, %v3145
        %v3147 = vand.u32 %v3146, 4294901760
        %3148 = vmatprep.subr.mxu0 %v3147
        %v3149 = vand.u32 %v287, 4294901760
        %v3150 = vsub.f32 %v287, %v3149
        %v3151 = vand.u32 %v3150, 4294901760
        %3152 = vmatpush1.msra.mxu0 %v3151
        %v3153 = vand.u32 %v296, 4294901760
        %v3154 = vsub.f32 %v296, %v3153
        %v3155 = vand.u32 %v3154, 4294901760
        %3156 = vmatprep.subr.mxu0 %v3155
        %v3157 = vand.u32 %v295, 4294901760
        %v3158 = vsub.f32 %v295, %v3157
        %v3159 = vand.u32 %v3158, 4294901760
        %3160 = vmatpush1.msra.mxu0 %v3159
        %v3161 = vand.u32 %v304, 4294901760
        %v3162 = vsub.f32 %v304, %v3161
        %v3163 = vand.u32 %v3162, 4294901760
        %3164 = vmatprep.subr.mxu0 %v3163
        %v3165 = vand.u32 %v303, 4294901760
        %v3166 = vsub.f32 %v303, %v3165
        %v3167 = vand.u32 %v3166, 4294901760
        %3168 = vmatpush1.msra.mxu0 %v3167
        %v3169 = vand.u32 %v312, 4294901760
        %v3170 = vsub.f32 %v312, %v3169
        %v3171 = vand.u32 %v3170, 4294901760
        %3172 = vmatprep.subr.mxu0 %v3171
        %v3173 = vand.u32 %v311, 4294901760
        %v3174 = vsub.f32 %v311, %v3173
        %v3175 = vand.u32 %v3174, 4294901760
        %3176 = vmatpush1.msra.mxu0 %v3175
        %v3177 = vand.u32 %v320, 4294901760
        %v3178 = vsub.f32 %v320, %v3177
        %v3179 = vand.u32 %v3178, 4294901760
        %3180 = vmatprep.subr.mxu0 %v3179
        %v3181 = vand.u32 %v319, 4294901760
        %v3182 = vsub.f32 %v319, %v3181
        %v3183 = vand.u32 %v3182, 4294901760
        %3184 = vmatpush1.msra.mxu0 %v3183
        %v3185 = vand.u32 %v328, 4294901760
        %v3186 = vsub.f32 %v328, %v3185
        %v3187 = vand.u32 %v3186, 4294901760
        %3188 = vmatprep.subr.mxu0 %v3187
        %v3189 = vand.u32 %v327, 4294901760
        %v3190 = vsub.f32 %v327, %v3189
        %v3191 = vand.u32 %v3190, 4294901760
        %3192 = vmatpush1.msra.mxu0 %v3191
        %v3193 = vand.u32 %v336, 4294901760
        %v3194 = vsub.f32 %v336, %v3193
        %v3195 = vand.u32 %v3194, 4294901760
        %3196 = vmatprep.subr.mxu0 %v3195
        %v3197 = vand.u32 %v335, 4294901760
        %v3198 = vsub.f32 %v335, %v3197
        %v3199 = vand.u32 %v3198, 4294901760
        %3200 = vmatpush1.msra.mxu0 %v3199
        %v3201 = vand.u32 %v344, 4294901760
        %v3202 = vsub.f32 %v344, %v3201
        %v3203 = vand.u32 %v3202, 4294901760
        %3204 = vmatprep.subr.mxu0 %v3203
        %v3205 = vand.u32 %v343, 4294901760
        %v3206 = vsub.f32 %v343, %v3205
        %v3207 = vand.u32 %v3206, 4294901760
        %3208 = vmatpush1.msra.mxu0 %v3207
        %v3209 = vand.u32 %v352, 4294901760
        %v3210 = vsub.f32 %v352, %v3209
        %v3211 = vand.u32 %v3210, 4294901760
        %3212 = vmatprep.subr.mxu0 %v3211
        %v3213 = vand.u32 %v351, 4294901760
        %v3214 = vsub.f32 %v351, %v3213
        %v3215 = vand.u32 %v3214, 4294901760
        %3216 = vmatpush1.msra.mxu0 %v3215
        %v3217 = vand.u32 %v360, 4294901760
        %v3218 = vsub.f32 %v360, %v3217
        %v3219 = vand.u32 %v3218, 4294901760
        %3220 = vmatprep.subr.mxu0 %v3219
        %v3221 = vand.u32 %v359, 4294901760
        %v3222 = vsub.f32 %v359, %v3221
        %v3223 = vand.u32 %v3222, 4294901760
        %3224 = vmatpush1.msra.mxu0 %v3223
        %v3225 = vand.u32 %v368, 4294901760
        %v3226 = vsub.f32 %v368, %v3225
        %v3227 = vand.u32 %v3226, 4294901760
        %3228 = vmatprep.subr.mxu0 %v3227
        %v3229 = vand.u32 %v367, 4294901760
        %v3230 = vsub.f32 %v367, %v3229
        %v3231 = vand.u32 %v3230, 4294901760
        %3232 = vmatpush1.msra.mxu0 %v3231
        %v3233 = vand.u32 %v376, 4294901760
        %v3234 = vsub.f32 %v376, %v3233
        %v3235 = vand.u32 %v3234, 4294901760
        %3236 = vmatprep.subr.mxu0 %v3235
        %v3237 = vand.u32 %v375, 4294901760
        %v3238 = vsub.f32 %v375, %v3237
        %v3239 = vand.u32 %v3238, 4294901760
        %3240 = vmatpush1.msra.mxu0 %v3239
        %v3241 = vand.u32 %v384, 4294901760
        %v3242 = vsub.f32 %v384, %v3241
        %v3243 = vand.u32 %v3242, 4294901760
        %3244 = vmatprep.subr.mxu0 %v3243
        %v3245 = vand.u32 %v383, 4294901760
        %v3246 = vsub.f32 %v383, %v3245
        %v3247 = vand.u32 %v3246, 4294901760
        %3248 = vmatpush1.msra.mxu0 %v3247
        %v3249 = vand.u32 %v392, 4294901760
        %v3250 = vsub.f32 %v392, %v3249
        %v3251 = vand.u32 %v3250, 4294901760
        %3252 = vmatprep.subr.mxu0 %v3251
        %v3253 = vand.u32 %v391, 4294901760
        %v3254 = vsub.f32 %v391, %v3253
        %v3255 = vand.u32 %v3254, 4294901760
        %3256 = vmatpush1.msra.mxu0 %v3255
        %v3257 = vand.u32 %v400, 4294901760
        %v3258 = vsub.f32 %v400, %v3257
        %v3259 = vand.u32 %v3258, 4294901760
        %3260 = vmatprep.subr.mxu0 %v3259
        %v3261 = vand.u32 %v399, 4294901760
        %v3262 = vsub.f32 %v399, %v3261
        %v3263 = vand.u32 %v3262, 4294901760
        %3264 = vmatpush1.msra.mxu0 %v3263
        %v3265 = vand.u32 %v408, 4294901760
        %v3266 = vsub.f32 %v408, %v3265
        %v3267 = vand.u32 %v3266, 4294901760
        %3268 = vmatprep.subr.mxu0 %v3267
        %v3269 = vand.u32 %v407, 4294901760
        %v3270 = vsub.f32 %v407, %v3269
        %v3271 = vand.u32 %v3270, 4294901760
        %3272 = vmatpush1.msra.mxu0 %v3271
        %3273 = vmatprep.subr.mxu0 0.0
        %3274 = vmatpush1.msra.mxu0 0.0
        %3275 = vmatprep.subr.mxu0 0.0
        %3276 = vmatpush1.msra.mxu0 0.0
        %3277 = vmatprep.subr.mxu0 0.0
        %3278 = vmatpush1.msra.mxu0 0.0
        %3279 = vmatprep.subr.mxu0 0.0
        %3280 = vmatpush1.msra.mxu0 0.0
        %3281 = vmatprep.subr.mxu0 0.0
        %3282 = vmatpush1.msra.mxu0 0.0
        %3283 = vmatprep.subr.mxu0 0.0
        %3284 = vmatpush1.msra.mxu0 0.0
        %3285 = vmatprep.subr.mxu0 0.0
        %3286 = vmatpush1.msra.mxu0 0.0
        %3287 = vmatprep.subr.mxu0 0.0
        %3288 = vmatpush1.msra.mxu0 0.0
        %3289 = vmatprep.subr.mxu0 0.0
        %3290 = vmatpush1.msra.mxu0 0.0
        %3291 = vmatprep.subr.mxu0 0.0
        %3292 = vmatpush1.msra.mxu0 0.0
        %3293 = vmatprep.subr.mxu0 0.0
        %3294 = vmatpush1.msra.mxu0 0.0
        %3295 = vmatprep.subr.mxu0 0.0
        %3296 = vmatpush1.msra.mxu0 0.0
        %3297 = vmatprep.subr.mxu0 0.0
        %3298 = vmatpush1.msra.mxu0 0.0
        %3299 = vmatprep.subr.mxu0 0.0
        %3300 = vmatpush1.msra.mxu0 0.0
        %3301 = vmatprep.subr.mxu0 0.0
        %3302 = vmatpush1.msra.mxu0 0.0
        %3303 = vmatprep.subr.mxu0 0.0
        %3304 = vmatpush1.msra.mxu0 0.0
        %3305 = vmatprep.mubr.f32.mxu0 0.0
        %v3306 = vand.u32 %v279, 4294901760
        %3307 = vmatmul.mubr.f32.gmra.mrb[0].mxu0 %v3306
        %v3308 = vpop.f32.mrb[0].mxu0
        %v3309 = vadd.f32 %v3114, %v3308
        %v3310 = vpop.f32.mrb[0].mxu0
        %v3311 = vadd.f32 %v3116, %v3310
        %3312 = vmatprep.mubr.f32.mxu0 0.0
        %v3313 = vand.u32 %v280, 4294901760
        %3314 = vmatmul.mubr.f32.gmra.mrb[0].mxu0 %v3313
        %v3315 = vpop.f32.mrb[0].mxu0
        %v3316 = vadd.f32 %v3123, %v3315
        %v3317 = vpop.f32.mrb[0].mxu0
        %v3318 = vadd.f32 %v3125, %v3317
        %3319 = vmatprep.mubr.f32.mxu0 0.0
        %v3320 = vand.u32 %v281, 4294901760
        %3321 = vmatmul.mubr.f32.gmra.mrb[0].mxu0 %v3320
        %v3322 = vpop.f32.mrb[0].mxu0
        %v3323 = vadd.f32 %v3132, %v3322
        %v3324 = vpop.f32.mrb[0].mxu0
        %v3325 = vadd.f32 %v3134, %v3324
        %3326 = vmatprep.mubr.f32.mxu0 0.0
        %v3327 = vand.u32 %v282, 4294901760
        %3328 = vmatmul.mubr.f32.gmra.mrb[0].mxu0 %v3327
        %v3329 = vpop.f32.mrb[0].mxu0
        %v3330 = vadd.f32 %v3141, %v3329
        %v3331 = vpop.f32.mrb[0].mxu0
        %v3332 = vadd.f32 %v3143, %v3331
        %3333 = vdwg.mxu0
        %v3334 = vand.u32 %v288, 4294901760
        %3335 = vmatprep.subr.mxu0 %v3334
        %v3336 = vand.u32 %v287, 4294901760
        %3337 = vmatpush1.msra.mxu0 %v3336
        %v3338 = vand.u32 %v296, 4294901760
        %3339 = vmatprep.subr.mxu0 %v3338
        %v3340 = vand.u32 %v295, 4294901760
        %3341 = vmatpush1.msra.mxu0 %v3340
        %v3342 = vand.u32 %v304, 4294901760
        %3343 = vmatprep.subr.mxu0 %v3342
        %v3344 = vand.u32 %v303, 4294901760
        %3345 = vmatpush1.msra.mxu0 %v3344
        %v3346 = vand.u32 %v312, 4294901760
        %3347 = vmatprep.subr.mxu0 %v3346
        %v3348 = vand.u32 %v311, 4294901760
        %3349 = vmatpush1.msra.mxu0 %v3348
        %v3350 = vand.u32 %v320, 4294901760
        %3351 = vmatprep.subr.mxu0 %v3350
        %v3352 = vand.u32 %v319, 4294901760
        %3353 = vmatpush1.msra.mxu0 %v3352
        %v3354 = vand.u32 %v328, 4294901760
        %3355 = vmatprep.subr.mxu0 %v3354
        %v3356 = vand.u32 %v327, 4294901760
        %3357 = vmatpush1.msra.mxu0 %v3356
        %v3358 = vand.u32 %v336, 4294901760
        %3359 = vmatprep.subr.mxu0 %v3358
        %v3360 = vand.u32 %v335, 4294901760
        %3361 = vmatpush1.msra.mxu0 %v3360
        %v3362 = vand.u32 %v344, 4294901760
        %3363 = vmatprep.subr.mxu0 %v3362
        %v3364 = vand.u32 %v343, 4294901760
        %3365 = vmatpush1.msra.mxu0 %v3364
        %v3366 = vand.u32 %v352, 4294901760
        %3367 = vmatprep.subr.mxu0 %v3366
        %v3368 = vand.u32 %v351, 4294901760
        %3369 = vmatpush1.msra.mxu0 %v3368
        %v3370 = vand.u32 %v360, 4294901760
        %3371 = vmatprep.subr.mxu0 %v3370
        %v3372 = vand.u32 %v359, 4294901760
        %3373 = vmatpush1.msra.mxu0 %v3372
        %v3374 = vand.u32 %v368, 4294901760
        %3375 = vmatprep.subr.mxu0 %v3374
        %v3376 = vand.u32 %v367, 4294901760
        %3377 = vmatpush1.msra.mxu0 %v3376
        %v3378 = vand.u32 %v376, 4294901760
        %3379 = vmatprep.subr.mxu0 %v3378
        %v3380 = vand.u32 %v375, 4294901760
        %3381 = vmatpush1.msra.mxu0 %v3380
        %v3382 = vand.u32 %v384, 4294901760
        %3383 = vmatprep.subr.mxu0 %v3382
        %v3384 = vand.u32 %v383, 4294901760
        %3385 = vmatpush1.msra.mxu0 %v3384
        %v3386 = vand.u32 %v392, 4294901760
        %3387 = vmatprep.subr.mxu0 %v3386
        %v3388 = vand.u32 %v391, 4294901760
        %3389 = vmatpush1.msra.mxu0 %v3388
        %v3390 = vand.u32 %v400, 4294901760
        %3391 = vmatprep.subr.mxu0 %v3390
        %v3392 = vand.u32 %v399, 4294901760
        %3393 = vmatpush1.msra.mxu0 %v3392
        %v3394 = vand.u32 %v408, 4294901760
        %3395 = vmatprep.subr.mxu0 %v3394
        %v3396 = vand.u32 %v407, 4294901760
        %3397 = vmatpush1.msra.mxu0 %v3396
        %3398 = vmatprep.subr.mxu0 0.0
        %3399 = vmatpush1.msra.mxu0 0.0
        %3400 = vmatprep.subr.mxu0 0.0
        %3401 = vmatpush1.msra.mxu0 0.0
        %3402 = vmatprep.subr.mxu0 0.0
        %3403 = vmatpush1.msra.mxu0 0.0
        %3404 = vmatprep.subr.mxu0 0.0
        %3405 = vmatpush1.msra.mxu0 0.0
        %3406 = vmatprep.subr.mxu0 0.0
        %3407 = vmatpush1.msra.mxu0 0.0
        %3408 = vmatprep.subr.mxu0 0.0
        %3409 = vmatpush1.msra.mxu0 0.0
        %3410 = vmatprep.subr.mxu0 0.0
        %3411 = vmatpush1.msra.mxu0 0.0
        %3412 = vmatprep.subr.mxu0 0.0
        %3413 = vmatpush1.msra.mxu0 0.0
        %3414 = vmatprep.subr.mxu0 0.0
        %3415 = vmatpush1.msra.mxu0 0.0
        %3416 = vmatprep.subr.mxu0 0.0
        %3417 = vmatpush1.msra.mxu0 0.0
        %3418 = vmatprep.subr.mxu0 0.0
        %3419 = vmatpush1.msra.mxu0 0.0
        %3420 = vmatprep.subr.mxu0 0.0
        %3421 = vmatpush1.msra.mxu0 0.0
        %3422 = vmatprep.subr.mxu0 0.0
        %3423 = vmatpush1.msra.mxu0 0.0
        %3424 = vmatprep.subr.mxu0 0.0
        %3425 = vmatpush1.msra.mxu0 0.0
        %3426 = vmatprep.subr.mxu0 0.0
        %3427 = vmatpush1.msra.mxu0 0.0
        %3428 = vmatprep.subr.mxu0 0.0
        %3429 = vmatpush1.msra.mxu0 0.0
        %3430 = vmatprep.mubr.f32.mxu0 0.0
        %v3431 = vand.u32 %v279, 4294901760
        %3432 = vmatmul.mubr.f32.gmra.mrb[0].mxu0 %v3431
        %v3433 = vpop.f32.mrb[0].mxu0
        %v3434 = vadd.f32 %v3309, %v3433
        %v3435 = vpop.f32.mrb[0].mxu0
        %v3436 = vadd.f32 %v3311, %v3435
        %3437 = vmatprep.mubr.f32.mxu0 0.0
        %v3438 = vand.u32 %v280, 4294901760
        %3439 = vmatmul.mubr.f32.gmra.mrb[0].mxu0 %v3438
        %v3440 = vpop.f32.mrb[0].mxu0
        %v3441 = vadd.f32 %v3316, %v3440
        %v3442 = vpop.f32.mrb[0].mxu0
        %v3443 = vadd.f32 %v3318, %v3442
        %3444 = vmatprep.mubr.f32.mxu0 0.0
        %v3445 = vand.u32 %v281, 4294901760
        %3446 = vmatmul.mubr.f32.gmra.mrb[0].mxu0 %v3445
        %v3447 = vpop.f32.mrb[0].mxu0
        %v3448 = vadd.f32 %v3323, %v3447
        %v3449 = vpop.f32.mrb[0].mxu0
        %v3450 = vadd.f32 %v3325, %v3449
        %3451 = vmatprep.mubr.f32.mxu0 0.0
        %v3452 = vand.u32 %v282, 4294901760
        %3453 = vmatmul.mubr.f32.gmra.mrb[0].mxu0 %v3452
        %v3454 = vpop.f32.mrb[0].mxu0
        %v3455 = vadd.f32 %v3330, %v3454
        %v3456 = vpop.f32.mrb[0].mxu0
        %v3457 = vadd.f32 %v3332, %v3456
        %3458 = vdwg.mxu0
        %v3459 = vand.u32 %v290, 4294901760
        %3460 = vmatprep.subr.mxu0 %v3459
        %v3461 = vand.u32 %v289, 4294901760
        %3462 = vmatpush1.msra.mxu0 %v3461
        %v3463 = vand.u32 %v298, 4294901760
        %3464 = vmatprep.subr.mxu0 %v3463
        %v3465 = vand.u32 %v297, 4294901760
        %3466 = vmatpush1.msra.mxu0 %v3465
        %v3467 = vand.u32 %v306, 4294901760
        %3468 = vmatprep.subr.mxu0 %v3467
        %v3469 = vand.u32 %v305, 4294901760
        %3470 = vmatpush1.msra.mxu0 %v3469
        %v3471 = vand.u32 %v314, 4294901760
        %3472 = vmatprep.subr.mxu0 %v3471
        %v3473 = vand.u32 %v313, 4294901760
        %3474 = vmatpush1.msra.mxu0 %v3473
        %v3475 = vand.u32 %v322, 4294901760
        %3476 = vmatprep.subr.mxu0 %v3475
        %v3477 = vand.u32 %v321, 4294901760
        %3478 = vmatpush1.msra.mxu0 %v3477
        %v3479 = vand.u32 %v330, 4294901760
        %3480 = vmatprep.subr.mxu0 %v3479
        %v3481 = vand.u32 %v329, 4294901760
        %3482 = vmatpush1.msra.mxu0 %v3481
        %v3483 = vand.u32 %v338, 4294901760
        %3484 = vmatprep.subr.mxu0 %v3483
        %v3485 = vand.u32 %v337, 4294901760
        %3486 = vmatpush1.msra.mxu0 %v3485
        %v3487 = vand.u32 %v346, 4294901760
        %3488 = vmatprep.subr.mxu0 %v3487
        %v3489 = vand.u32 %v345, 4294901760
        %3490 = vmatpush1.msra.mxu0 %v3489
        %v3491 = vand.u32 %v354, 4294901760
        %3492 = vmatprep.subr.mxu0 %v3491
        %v3493 = vand.u32 %v353, 4294901760
        %3494 = vmatpush1.msra.mxu0 %v3493
        %v3495 = vand.u32 %v362, 4294901760
        %3496 = vmatprep.subr.mxu0 %v3495
        %v3497 = vand.u32 %v361, 4294901760
        %3498 = vmatpush1.msra.mxu0 %v3497
        %v3499 = vand.u32 %v370, 4294901760
        %3500 = vmatprep.subr.mxu0 %v3499
        %v3501 = vand.u32 %v369, 4294901760
        %3502 = vmatpush1.msra.mxu0 %v3501
        %v3503 = vand.u32 %v378, 4294901760
        %3504 = vmatprep.subr.mxu0 %v3503
        %v3505 = vand.u32 %v377, 4294901760
        %3506 = vmatpush1.msra.mxu0 %v3505
        %v3507 = vand.u32 %v386, 4294901760
        %3508 = vmatprep.subr.mxu0 %v3507
        %v3509 = vand.u32 %v385, 4294901760
        %3510 = vmatpush1.msra.mxu0 %v3509
        %v3511 = vand.u32 %v394, 4294901760
        %3512 = vmatprep.subr.mxu0 %v3511
        %v3513 = vand.u32 %v393, 4294901760
        %3514 = vmatpush1.msra.mxu0 %v3513
        %v3515 = vand.u32 %v402, 4294901760
        %3516 = vmatprep.subr.mxu0 %v3515
        %v3517 = vand.u32 %v401, 4294901760
        %3518 = vmatpush1.msra.mxu0 %v3517
        %v3519 = vand.u32 %v410, 4294901760
        %3520 = vmatprep.subr.mxu0 %v3519
        %v3521 = vand.u32 %v409, 4294901760
        %3522 = vmatpush1.msra.mxu0 %v3521
        %3523 = vmatprep.subr.mxu0 0.0
        %3524 = vmatpush1.msra.mxu0 0.0
        %3525 = vmatprep.subr.mxu0 0.0
        %3526 = vmatpush1.msra.mxu0 0.0
        %3527 = vmatprep.subr.mxu0 0.0
        %3528 = vmatpush1.msra.mxu0 0.0
        %3529 = vmatprep.subr.mxu0 0.0
        %3530 = vmatpush1.msra.mxu0 0.0
        %3531 = vmatprep.subr.mxu0 0.0
        %3532 = vmatpush1.msra.mxu0 0.0
        %3533 = vmatprep.subr.mxu0 0.0
        %3534 = vmatpush1.msra.mxu0 0.0
        %3535 = vmatprep.subr.mxu0 0.0
        %3536 = vmatpush1.msra.mxu0 0.0
        %3537 = vmatprep.subr.mxu0 0.0
        %3538 = vmatpush1.msra.mxu0 0.0
        %3539 = vmatprep.subr.mxu0 0.0
        %3540 = vmatpush1.msra.mxu0 0.0
        %3541 = vmatprep.subr.mxu0 0.0
        %3542 = vmatpush1.msra.mxu0 0.0
        %3543 = vmatprep.subr.mxu0 0.0
        %3544 = vmatpush1.msra.mxu0 0.0
        %3545 = vmatprep.subr.mxu0 0.0
        %3546 = vmatpush1.msra.mxu0 0.0
        %3547 = vmatprep.subr.mxu0 0.0
        %3548 = vmatpush1.msra.mxu0 0.0
        %3549 = vmatprep.subr.mxu0 0.0
        %3550 = vmatpush1.msra.mxu0 0.0
        %3551 = vmatprep.subr.mxu0 0.0
        %3552 = vmatpush1.msra.mxu0 0.0
        %3553 = vmatprep.subr.mxu0 0.0
        %3554 = vmatpush1.msra.mxu0 0.0
        %3555 = vmatprep.mubr.f32.mxu0 0.0
        %v3556 = vand.u32 %v279, 4294901760
        %v3557 = vsub.f32 %v279, %v3556
        %v3558 = vand.u32 %v3557, 4294901760
        %v3559 = vsub.f32 %v3557, %v3558
        %v3560 = vand.u32 %v3559, 4294901760
        %3561 = vmatmul.mubr.f32.gmra.mrb[0].mxu0 %v3560
        %v3562 = vpop.f32.mrb[0].mxu0
        %v3563 = vadd.f32 %v440, %v3562
        %v3564 = vpop.f32.mrb[0].mxu0
        %v3565 = vadd.f32 %v444, %v3564
        %3566 = vmatprep.mubr.f32.mxu0 0.0
        %v3567 = vand.u32 %v280, 4294901760
        %v3568 = vsub.f32 %v280, %v3567
        %v3569 = vand.u32 %v3568, 4294901760
        %v3570 = vsub.f32 %v3568, %v3569
        %v3571 = vand.u32 %v3570, 4294901760
        %3572 = vmatmul.mubr.f32.gmra.mrb[0].mxu0 %v3571
        %v3573 = vpop.f32.mrb[0].mxu0
        %v3574 = vadd.f32 %v440, %v3573
        %v3575 = vpop.f32.mrb[0].mxu0
        %v3576 = vadd.f32 %v444, %v3575
        %3577 = vmatprep.mubr.f32.mxu0 0.0
        %v3578 = vand.u32 %v281, 4294901760
        %v3579 = vsub.f32 %v281, %v3578
        %v3580 = vand.u32 %v3579, 4294901760
        %v3581 = vsub.f32 %v3579, %v3580
        %v3582 = vand.u32 %v3581, 4294901760
        %3583 = vmatmul.mubr.f32.gmra.mrb[0].mxu0 %v3582
        %v3584 = vpop.f32.mrb[0].mxu0
        %v3585 = vadd.f32 %v440, %v3584
        %v3586 = vpop.f32.mrb[0].mxu0
        %v3587 = vadd.f32 %v444, %v3586
        %3588 = vmatprep.mubr.f32.mxu0 0.0
        %v3589 = vand.u32 %v282, 4294901760
        %v3590 = vsub.f32 %v282, %v3589
        %v3591 = vand.u32 %v3590, 4294901760
        %v3592 = vsub.f32 %v3590, %v3591
        %v3593 = vand.u32 %v3592, 4294901760
        %3594 = vmatmul.mubr.f32.gmra.mrb[0].mxu0 %v3593
        %v3595 = vpop.f32.mrb[0].mxu0
        %v3596 = vadd.f32 %v440, %v3595
        %v3597 = vpop.f32.mrb[0].mxu0
        %v3598 = vadd.f32 %v444, %v3597
        %3599 = vdwg.mxu0
        %v3600 = vand.u32 %v290, 4294901760
        %v3601 = vsub.f32 %v290, %v3600
        %v3602 = vand.u32 %v3601, 4294901760
        %v3603 = vsub.f32 %v3601, %v3602
        %v3604 = vand.u32 %v3603, 4294901760
        %3605 = vmatprep.subr.mxu0 %v3604
        %v3606 = vand.u32 %v289, 4294901760
        %v3607 = vsub.f32 %v289, %v3606
        %v3608 = vand.u32 %v3607, 4294901760
        %v3609 = vsub.f32 %v3607, %v3608
        %v3610 = vand.u32 %v3609, 4294901760
        %3611 = vmatpush1.msra.mxu0 %v3610
        %v3612 = vand.u32 %v298, 4294901760
        %v3613 = vsub.f32 %v298, %v3612
        %v3614 = vand.u32 %v3613, 4294901760
        %v3615 = vsub.f32 %v3613, %v3614
        %v3616 = vand.u32 %v3615, 4294901760
        %3617 = vmatprep.subr.mxu0 %v3616
        %v3618 = vand.u32 %v297, 4294901760
        %v3619 = vsub.f32 %v297, %v3618
        %v3620 = vand.u32 %v3619, 4294901760
        %v3621 = vsub.f32 %v3619, %v3620
        %v3622 = vand.u32 %v3621, 4294901760
        %3623 = vmatpush1.msra.mxu0 %v3622
        %v3624 = vand.u32 %v306, 4294901760
        %v3625 = vsub.f32 %v306, %v3624
        %v3626 = vand.u32 %v3625, 4294901760
        %v3627 = vsub.f32 %v3625, %v3626
        %v3628 = vand.u32 %v3627, 4294901760
        %3629 = vmatprep.subr.mxu0 %v3628
        %v3630 = vand.u32 %v305, 4294901760
        %v3631 = vsub.f32 %v305, %v3630
        %v3632 = vand.u32 %v3631, 4294901760
        %v3633 = vsub.f32 %v3631, %v3632
        %v3634 = vand.u32 %v3633, 4294901760
        %3635 = vmatpush1.msra.mxu0 %v3634
        %v3636 = vand.u32 %v314, 4294901760
        %v3637 = vsub.f32 %v314, %v3636
        %v3638 = vand.u32 %v3637, 4294901760
        %v3639 = vsub.f32 %v3637, %v3638
        %v3640 = vand.u32 %v3639, 4294901760
        %3641 = vmatprep.subr.mxu0 %v3640
        %v3642 = vand.u32 %v313, 4294901760
        %v3643 = vsub.f32 %v313, %v3642
        %v3644 = vand.u32 %v3643, 4294901760
        %v3645 = vsub.f32 %v3643, %v3644
        %v3646 = vand.u32 %v3645, 4294901760
        %3647 = vmatpush1.msra.mxu0 %v3646
        %v3648 = vand.u32 %v322, 4294901760
        %v3649 = vsub.f32 %v322, %v3648
        %v3650 = vand.u32 %v3649, 4294901760
        %v3651 = vsub.f32 %v3649, %v3650
        %v3652 = vand.u32 %v3651, 4294901760
        %3653 = vmatprep.subr.mxu0 %v3652
        %v3654 = vand.u32 %v321, 4294901760
        %v3655 = vsub.f32 %v321, %v3654
        %v3656 = vand.u32 %v3655, 4294901760
        %v3657 = vsub.f32 %v3655, %v3656
        %v3658 = vand.u32 %v3657, 4294901760
        %3659 = vmatpush1.msra.mxu0 %v3658
        %v3660 = vand.u32 %v330, 4294901760
        %v3661 = vsub.f32 %v330, %v3660
        %v3662 = vand.u32 %v3661, 4294901760
        %v3663 = vsub.f32 %v3661, %v3662
        %v3664 = vand.u32 %v3663, 4294901760
        %3665 = vmatprep.subr.mxu0 %v3664
        %v3666 = vand.u32 %v329, 4294901760
        %v3667 = vsub.f32 %v329, %v3666
        %v3668 = vand.u32 %v3667, 4294901760
        %v3669 = vsub.f32 %v3667, %v3668
        %v3670 = vand.u32 %v3669, 4294901760
        %3671 = vmatpush1.msra.mxu0 %v3670
        %v3672 = vand.u32 %v338, 4294901760
        %v3673 = vsub.f32 %v338, %v3672
        %v3674 = vand.u32 %v3673, 4294901760
        %v3675 = vsub.f32 %v3673, %v3674
        %v3676 = vand.u32 %v3675, 4294901760
        %3677 = vmatprep.subr.mxu0 %v3676
        %v3678 = vand.u32 %v337, 4294901760
        %v3679 = vsub.f32 %v337, %v3678
        %v3680 = vand.u32 %v3679, 4294901760
        %v3681 = vsub.f32 %v3679, %v3680
        %v3682 = vand.u32 %v3681, 4294901760
        %3683 = vmatpush1.msra.mxu0 %v3682
        %v3684 = vand.u32 %v346, 4294901760
        %v3685 = vsub.f32 %v346, %v3684
        %v3686 = vand.u32 %v3685, 4294901760
        %v3687 = vsub.f32 %v3685, %v3686
        %v3688 = vand.u32 %v3687, 4294901760
        %3689 = vmatprep.subr.mxu0 %v3688
        %v3690 = vand.u32 %v345, 4294901760
        %v3691 = vsub.f32 %v345, %v3690
        %v3692 = vand.u32 %v3691, 4294901760
        %v3693 = vsub.f32 %v3691, %v3692
        %v3694 = vand.u32 %v3693, 4294901760
        %3695 = vmatpush1.msra.mxu0 %v3694
        %v3696 = vand.u32 %v354, 4294901760
        %v3697 = vsub.f32 %v354, %v3696
        %v3698 = vand.u32 %v3697, 4294901760
        %v3699 = vsub.f32 %v3697, %v3698
        %v3700 = vand.u32 %v3699, 4294901760
        %3701 = vmatprep.subr.mxu0 %v3700
        %v3702 = vand.u32 %v353, 4294901760
        %v3703 = vsub.f32 %v353, %v3702
        %v3704 = vand.u32 %v3703, 4294901760
        %v3705 = vsub.f32 %v3703, %v3704
        %v3706 = vand.u32 %v3705, 4294901760
        %3707 = vmatpush1.msra.mxu0 %v3706
        %v3708 = vand.u32 %v362, 4294901760
        %v3709 = vsub.f32 %v362, %v3708
        %v3710 = vand.u32 %v3709, 4294901760
        %v3711 = vsub.f32 %v3709, %v3710
        %v3712 = vand.u32 %v3711, 4294901760
        %3713 = vmatprep.subr.mxu0 %v3712
        %v3714 = vand.u32 %v361, 4294901760
        %v3715 = vsub.f32 %v361, %v3714
        %v3716 = vand.u32 %v3715, 4294901760
        %v3717 = vsub.f32 %v3715, %v3716
        %v3718 = vand.u32 %v3717, 4294901760
        %3719 = vmatpush1.msra.mxu0 %v3718
        %v3720 = vand.u32 %v370, 4294901760
        %v3721 = vsub.f32 %v370, %v3720
        %v3722 = vand.u32 %v3721, 4294901760
        %v3723 = vsub.f32 %v3721, %v3722
        %v3724 = vand.u32 %v3723, 4294901760
        %3725 = vmatprep.subr.mxu0 %v3724
        %v3726 = vand.u32 %v369, 4294901760
        %v3727 = vsub.f32 %v369, %v3726
        %v3728 = vand.u32 %v3727, 4294901760
        %v3729 = vsub.f32 %v3727, %v3728
        %v3730 = vand.u32 %v3729, 4294901760
        %3731 = vmatpush1.msra.mxu0 %v3730
        %v3732 = vand.u32 %v378, 4294901760
        %v3733 = vsub.f32 %v378, %v3732
        %v3734 = vand.u32 %v3733, 4294901760
        %v3735 = vsub.f32 %v3733, %v3734
        %v3736 = vand.u32 %v3735, 4294901760
        %3737 = vmatprep.subr.mxu0 %v3736
        %v3738 = vand.u32 %v377, 4294901760
        %v3739 = vsub.f32 %v377, %v3738
        %v3740 = vand.u32 %v3739, 4294901760
        %v3741 = vsub.f32 %v3739, %v3740
        %v3742 = vand.u32 %v3741, 4294901760
        %3743 = vmatpush1.msra.mxu0 %v3742
        %v3744 = vand.u32 %v386, 4294901760
        %v3745 = vsub.f32 %v386, %v3744
        %v3746 = vand.u32 %v3745, 4294901760
        %v3747 = vsub.f32 %v3745, %v3746
        %v3748 = vand.u32 %v3747, 4294901760
        %3749 = vmatprep.subr.mxu0 %v3748
        %v3750 = vand.u32 %v385, 4294901760
        %v3751 = vsub.f32 %v385, %v3750
        %v3752 = vand.u32 %v3751, 4294901760
        %v3753 = vsub.f32 %v3751, %v3752
        %v3754 = vand.u32 %v3753, 4294901760
        %3755 = vmatpush1.msra.mxu0 %v3754
        %v3756 = vand.u32 %v394, 4294901760
        %v3757 = vsub.f32 %v394, %v3756
        %v3758 = vand.u32 %v3757, 4294901760
        %v3759 = vsub.f32 %v3757, %v3758
        %v3760 = vand.u32 %v3759, 4294901760
        %3761 = vmatprep.subr.mxu0 %v3760
        %v3762 = vand.u32 %v393, 4294901760
        %v3763 = vsub.f32 %v393, %v3762
        %v3764 = vand.u32 %v3763, 4294901760
        %v3765 = vsub.f32 %v3763, %v3764
        %v3766 = vand.u32 %v3765, 4294901760
        %3767 = vmatpush1.msra.mxu0 %v3766
        %v3768 = vand.u32 %v402, 4294901760
        %v3769 = vsub.f32 %v402, %v3768
        %v3770 = vand.u32 %v3769, 4294901760
        %v3771 = vsub.f32 %v3769, %v3770
        %v3772 = vand.u32 %v3771, 4294901760
        %3773 = vmatprep.subr.mxu0 %v3772
        %v3774 = vand.u32 %v401, 4294901760
        %v3775 = vsub.f32 %v401, %v3774
        %v3776 = vand.u32 %v3775, 4294901760
        %v3777 = vsub.f32 %v3775, %v3776
        %v3778 = vand.u32 %v3777, 4294901760
        %3779 = vmatpush1.msra.mxu0 %v3778
        %v3780 = vand.u32 %v410, 4294901760
        %v3781 = vsub.f32 %v410, %v3780
        %v3782 = vand.u32 %v3781, 4294901760
        %v3783 = vsub.f32 %v3781, %v3782
        %v3784 = vand.u32 %v3783, 4294901760
        %3785 = vmatprep.subr.mxu0 %v3784
        %v3786 = vand.u32 %v409, 4294901760
        %v3787 = vsub.f32 %v409, %v3786
        %v3788 = vand.u32 %v3787, 4294901760
        %v3789 = vsub.f32 %v3787, %v3788
        %v3790 = vand.u32 %v3789, 4294901760
        %3791 = vmatpush1.msra.mxu0 %v3790
        %3792 = vmatprep.subr.mxu0 0.0
        %3793 = vmatpush1.msra.mxu0 0.0
        %3794 = vmatprep.subr.mxu0 0.0
        %3795 = vmatpush1.msra.mxu0 0.0
        %3796 = vmatprep.subr.mxu0 0.0
        %3797 = vmatpush1.msra.mxu0 0.0
        %3798 = vmatprep.subr.mxu0 0.0
        %3799 = vmatpush1.msra.mxu0 0.0
        %3800 = vmatprep.subr.mxu0 0.0
        %3801 = vmatpush1.msra.mxu0 0.0
        %3802 = vmatprep.subr.mxu0 0.0
        %3803 = vmatpush1.msra.mxu0 0.0
        %3804 = vmatprep.subr.mxu0 0.0
        %3805 = vmatpush1.msra.mxu0 0.0
        %3806 = vmatprep.subr.mxu0 0.0
        %3807 = vmatpush1.msra.mxu0 0.0
        %3808 = vmatprep.subr.mxu0 0.0
        %3809 = vmatpush1.msra.mxu0 0.0
        %3810 = vmatprep.subr.mxu0 0.0
        %3811 = vmatpush1.msra.mxu0 0.0
        %3812 = vmatprep.subr.mxu0 0.0
        %3813 = vmatpush1.msra.mxu0 0.0
        %3814 = vmatprep.subr.mxu0 0.0
        %3815 = vmatpush1.msra.mxu0 0.0
        %3816 = vmatprep.subr.mxu0 0.0
        %3817 = vmatpush1.msra.mxu0 0.0
        %3818 = vmatprep.subr.mxu0 0.0
        %3819 = vmatpush1.msra.mxu0 0.0
        %3820 = vmatprep.subr.mxu0 0.0
        %3821 = vmatpush1.msra.mxu0 0.0
        %3822 = vmatprep.subr.mxu0 0.0
        %3823 = vmatpush1.msra.mxu0 0.0
        %3824 = vmatprep.mubr.f32.mxu0 0.0
        %v3825 = vand.u32 %v279, 4294901760
        %3826 = vmatmul.mubr.f32.gmra.mrb[0].mxu0 %v3825
        %v3827 = vpop.f32.mrb[0].mxu0
        %v3828 = vadd.f32 %v3563, %v3827
        %v3829 = vpop.f32.mrb[0].mxu0
        %v3830 = vadd.f32 %v3565, %v3829
        %3831 = vmatprep.mubr.f32.mxu0 0.0
        %v3832 = vand.u32 %v280, 4294901760
        %3833 = vmatmul.mubr.f32.gmra.mrb[0].mxu0 %v3832
        %v3834 = vpop.f32.mrb[0].mxu0
        %v3835 = vadd.f32 %v3574, %v3834
        %v3836 = vpop.f32.mrb[0].mxu0
        %v3837 = vadd.f32 %v3576, %v3836
        %3838 = vmatprep.mubr.f32.mxu0 0.0
        %v3839 = vand.u32 %v281, 4294901760
        %3840 = vmatmul.mubr.f32.gmra.mrb[0].mxu0 %v3839
        %v3841 = vpop.f32.mrb[0].mxu0
        %v3842 = vadd.f32 %v3585, %v3841
        %v3843 = vpop.f32.mrb[0].mxu0
        %v3844 = vadd.f32 %v3587, %v3843
        %3845 = vmatprep.mubr.f32.mxu0 0.0
        %v3846 = vand.u32 %v282, 4294901760
        %3847 = vmatmul.mubr.f32.gmra.mrb[0].mxu0 %v3846
        %v3848 = vpop.f32.mrb[0].mxu0
        %v3849 = vadd.f32 %v3596, %v3848
        %v3850 = vpop.f32.mrb[0].mxu0
        %v3851 = vadd.f32 %v3598, %v3850
        %3852 = vdwg.mxu0
        %v3853 = vand.u32 %v290, 4294901760
        %v3854 = vsub.f32 %v290, %v3853
        %3855 = vmatprep.subr.mxu0 %v3854
        %v3856 = vand.u32 %v289, 4294901760
        %v3857 = vsub.f32 %v289, %v3856
        %3858 = vmatpush1.msra.mxu0 %v3857
        %v3859 = vand.u32 %v298, 4294901760
        %v3860 = vsub.f32 %v298, %v3859
        %3861 = vmatprep.subr.mxu0 %v3860
        %v3862 = vand.u32 %v297, 4294901760
        %v3863 = vsub.f32 %v297, %v3862
        %3864 = vmatpush1.msra.mxu0 %v3863
        %v3865 = vand.u32 %v306, 4294901760
        %v3866 = vsub.f32 %v306, %v3865
        %3867 = vmatprep.subr.mxu0 %v3866
        %v3868 = vand.u32 %v305, 4294901760
        %v3869 = vsub.f32 %v305, %v3868
        %3870 = vmatpush1.msra.mxu0 %v3869
        %v3871 = vand.u32 %v314, 4294901760
        %v3872 = vsub.f32 %v314, %v3871
        %3873 = vmatprep.subr.mxu0 %v3872
        %v3874 = vand.u32 %v313, 4294901760
        %v3875 = vsub.f32 %v313, %v3874
        %3876 = vmatpush1.msra.mxu0 %v3875
        %v3877 = vand.u32 %v322, 4294901760
        %v3878 = vsub.f32 %v322, %v3877
        %3879 = vmatprep.subr.mxu0 %v3878
        %v3880 = vand.u32 %v321, 4294901760
        %v3881 = vsub.f32 %v321, %v3880
        %3882 = vmatpush1.msra.mxu0 %v3881
        %v3883 = vand.u32 %v330, 4294901760
        %v3884 = vsub.f32 %v330, %v3883
        %3885 = vmatprep.subr.mxu0 %v3884
        %v3886 = vand.u32 %v329, 4294901760
        %v3887 = vsub.f32 %v329, %v3886
        %3888 = vmatpush1.msra.mxu0 %v3887
        %v3889 = vand.u32 %v338, 4294901760
        %v3890 = vsub.f32 %v338, %v3889
        %3891 = vmatprep.subr.mxu0 %v3890
        %v3892 = vand.u32 %v337, 4294901760
        %v3893 = vsub.f32 %v337, %v3892
        %3894 = vmatpush1.msra.mxu0 %v3893
        %v3895 = vand.u32 %v346, 4294901760
        %v3896 = vsub.f32 %v346, %v3895
        %3897 = vmatprep.subr.mxu0 %v3896
        %v3898 = vand.u32 %v345, 4294901760
        %v3899 = vsub.f32 %v345, %v3898
        %3900 = vmatpush1.msra.mxu0 %v3899
        %v3901 = vand.u32 %v354, 4294901760
        %v3902 = vsub.f32 %v354, %v3901
        %3903 = vmatprep.subr.mxu0 %v3902
        %v3904 = vand.u32 %v353, 4294901760
        %v3905 = vsub.f32 %v353, %v3904
        %3906 = vmatpush1.msra.mxu0 %v3905
        %v3907 = vand.u32 %v362, 4294901760
        %v3908 = vsub.f32 %v362, %v3907
        %3909 = vmatprep.subr.mxu0 %v3908
        %v3910 = vand.u32 %v361, 4294901760
        %v3911 = vsub.f32 %v361, %v3910
        %3912 = vmatpush1.msra.mxu0 %v3911
        %v3913 = vand.u32 %v370, 4294901760
        %v3914 = vsub.f32 %v370, %v3913
        %3915 = vmatprep.subr.mxu0 %v3914
        %v3916 = vand.u32 %v369, 4294901760
        %v3917 = vsub.f32 %v369, %v3916
        %3918 = vmatpush1.msra.mxu0 %v3917
        %v3919 = vand.u32 %v378, 4294901760
        %v3920 = vsub.f32 %v378, %v3919
        %3921 = vmatprep.subr.mxu0 %v3920
        %v3922 = vand.u32 %v377, 4294901760
        %v3923 = vsub.f32 %v377, %v3922
        %3924 = vmatpush1.msra.mxu0 %v3923
        %v3925 = vand.u32 %v386, 4294901760
        %v3926 = vsub.f32 %v386, %v3925
        %3927 = vmatprep.subr.mxu0 %v3926
        %v3928 = vand.u32 %v385, 4294901760
        %v3929 = vsub.f32 %v385, %v3928
        %3930 = vmatpush1.msra.mxu0 %v3929
        %v3931 = vand.u32 %v394, 4294901760
        %v3932 = vsub.f32 %v394, %v3931
        %3933 = vmatprep.subr.mxu0 %v3932
        %v3934 = vand.u32 %v393, 4294901760
        %v3935 = vsub.f32 %v393, %v3934
        %3936 = vmatpush1.msra.mxu0 %v3935
        %v3937 = vand.u32 %v402, 4294901760
        %v3938 = vsub.f32 %v402, %v3937
        %3939 = vmatprep.subr.mxu0 %v3938
        %v3940 = vand.u32 %v401, 4294901760
        %v3941 = vsub.f32 %v401, %v3940
        %3942 = vmatpush1.msra.mxu0 %v3941
        %v3943 = vand.u32 %v410, 4294901760
        %v3944 = vsub.f32 %v410, %v3943
        %3945 = vmatprep.subr.mxu0 %v3944
        %v3946 = vand.u32 %v409, 4294901760
        %v3947 = vsub.f32 %v409, %v3946
        %3948 = vmatpush1.msra.mxu0 %v3947
        %3949 = vmatprep.subr.mxu0 0.0
        %3950 = vmatpush1.msra.mxu0 0.0
        %3951 = vmatprep.subr.mxu0 0.0
        %3952 = vmatpush1.msra.mxu0 0.0
        %3953 = vmatprep.subr.mxu0 0.0
        %3954 = vmatpush1.msra.mxu0 0.0
        %3955 = vmatprep.subr.mxu0 0.0
        %3956 = vmatpush1.msra.mxu0 0.0
        %3957 = vmatprep.subr.mxu0 0.0
        %3958 = vmatpush1.msra.mxu0 0.0
        %3959 = vmatprep.subr.mxu0 0.0
        %3960 = vmatpush1.msra.mxu0 0.0
        %3961 = vmatprep.subr.mxu0 0.0
        %3962 = vmatpush1.msra.mxu0 0.0
        %3963 = vmatprep.subr.mxu0 0.0
        %3964 = vmatpush1.msra.mxu0 0.0
        %3965 = vmatprep.subr.mxu0 0.0
        %3966 = vmatpush1.msra.mxu0 0.0
        %3967 = vmatprep.subr.mxu0 0.0
        %3968 = vmatpush1.msra.mxu0 0.0
        %3969 = vmatprep.subr.mxu0 0.0
        %3970 = vmatpush1.msra.mxu0 0.0
        %3971 = vmatprep.subr.mxu0 0.0
        %3972 = vmatpush1.msra.mxu0 0.0
        %3973 = vmatprep.subr.mxu0 0.0
        %3974 = vmatpush1.msra.mxu0 0.0
        %3975 = vmatprep.subr.mxu0 0.0
        %3976 = vmatpush1.msra.mxu0 0.0
        %3977 = vmatprep.subr.mxu0 0.0
        %3978 = vmatpush1.msra.mxu0 0.0
        %3979 = vmatprep.subr.mxu0 0.0
        %3980 = vmatpush1.msra.mxu0 0.0
        %3981 = vmatprep.mubr.f32.mxu0 0.0
        %v3982 = vand.u32 %v279, 4294901760
        %v3983 = vsub.f32 %v279, %v3982
        %3984 = vmatmul.mubr.f32.gmra.mrb[0].mxu0 %v3983
        %v3985 = vpop.f32.mrb[0].mxu0
        %v3986 = vadd.f32 %v3828, %v3985
        %v3987 = vpop.f32.mrb[0].mxu0
        %v3988 = vadd.f32 %v3830, %v3987
        %3989 = vmatprep.mubr.f32.mxu0 0.0
        %v3990 = vand.u32 %v280, 4294901760
        %v3991 = vsub.f32 %v280, %v3990
        %3992 = vmatmul.mubr.f32.gmra.mrb[0].mxu0 %v3991
        %v3993 = vpop.f32.mrb[0].mxu0
        %v3994 = vadd.f32 %v3835, %v3993
        %v3995 = vpop.f32.mrb[0].mxu0
        %v3996 = vadd.f32 %v3837, %v3995
        %3997 = vmatprep.mubr.f32.mxu0 0.0
        %v3998 = vand.u32 %v281, 4294901760
        %v3999 = vsub.f32 %v281, %v3998
        %4000 = vmatmul.mubr.f32.gmra.mrb[0].mxu0 %v3999
        %v4001 = vpop.f32.mrb[0].mxu0
        %v4002 = vadd.f32 %v3842, %v4001
        %v4003 = vpop.f32.mrb[0].mxu0
        %v4004 = vadd.f32 %v3844, %v4003
        %4005 = vmatprep.mubr.f32.mxu0 0.0
        %v4006 = vand.u32 %v282, 4294901760
        %v4007 = vsub.f32 %v282, %v4006
        %4008 = vmatmul.mubr.f32.gmra.mrb[0].mxu0 %v4007
        %v4009 = vpop.f32.mrb[0].mxu0
        %v4010 = vadd.f32 %v3849, %v4009
        %v4011 = vpop.f32.mrb[0].mxu0
        %v4012 = vadd.f32 %v3851, %v4011
        %4013 = vdwg.mxu0
        %v4014 = vand.u32 %v290, 4294901760
        %4015 = vmatprep.subr.mxu0 %v4014
        %v4016 = vand.u32 %v289, 4294901760
        %4017 = vmatpush1.msra.mxu0 %v4016
        %v4018 = vand.u32 %v298, 4294901760
        %4019 = vmatprep.subr.mxu0 %v4018
        %v4020 = vand.u32 %v297, 4294901760
        %4021 = vmatpush1.msra.mxu0 %v4020
        %v4022 = vand.u32 %v306, 4294901760
        %4023 = vmatprep.subr.mxu0 %v4022
        %v4024 = vand.u32 %v305, 4294901760
        %4025 = vmatpush1.msra.mxu0 %v4024
        %v4026 = vand.u32 %v314, 4294901760
        %4027 = vmatprep.subr.mxu0 %v4026
        %v4028 = vand.u32 %v313, 4294901760
        %4029 = vmatpush1.msra.mxu0 %v4028
        %v4030 = vand.u32 %v322, 4294901760
        %4031 = vmatprep.subr.mxu0 %v4030
        %v4032 = vand.u32 %v321, 4294901760
        %4033 = vmatpush1.msra.mxu0 %v4032
        %v4034 = vand.u32 %v330, 4294901760
        %4035 = vmatprep.subr.mxu0 %v4034
        %v4036 = vand.u32 %v329, 4294901760
        %4037 = vmatpush1.msra.mxu0 %v4036
        %v4038 = vand.u32 %v338, 4294901760
        %4039 = vmatprep.subr.mxu0 %v4038
        %v4040 = vand.u32 %v337, 4294901760
        %4041 = vmatpush1.msra.mxu0 %v4040
        %v4042 = vand.u32 %v346, 4294901760
        %4043 = vmatprep.subr.mxu0 %v4042
        %v4044 = vand.u32 %v345, 4294901760
        %4045 = vmatpush1.msra.mxu0 %v4044
        %v4046 = vand.u32 %v354, 4294901760
        %4047 = vmatprep.subr.mxu0 %v4046
        %v4048 = vand.u32 %v353, 4294901760
        %4049 = vmatpush1.msra.mxu0 %v4048
        %v4050 = vand.u32 %v362, 4294901760
        %4051 = vmatprep.subr.mxu0 %v4050
        %v4052 = vand.u32 %v361, 4294901760
        %4053 = vmatpush1.msra.mxu0 %v4052
        %v4054 = vand.u32 %v370, 4294901760
        %4055 = vmatprep.subr.mxu0 %v4054
        %v4056 = vand.u32 %v369, 4294901760
        %4057 = vmatpush1.msra.mxu0 %v4056
        %v4058 = vand.u32 %v378, 4294901760
        %4059 = vmatprep.subr.mxu0 %v4058
        %v4060 = vand.u32 %v377, 4294901760
        %4061 = vmatpush1.msra.mxu0 %v4060
        %v4062 = vand.u32 %v386, 4294901760
        %4063 = vmatprep.subr.mxu0 %v4062
        %v4064 = vand.u32 %v385, 4294901760
        %4065 = vmatpush1.msra.mxu0 %v4064
        %v4066 = vand.u32 %v394, 4294901760
        %4067 = vmatprep.subr.mxu0 %v4066
        %v4068 = vand.u32 %v393, 4294901760
        %4069 = vmatpush1.msra.mxu0 %v4068
        %v4070 = vand.u32 %v402, 4294901760
        %4071 = vmatprep.subr.mxu0 %v4070
        %v4072 = vand.u32 %v401, 4294901760
        %4073 = vmatpush1.msra.mxu0 %v4072
        %v4074 = vand.u32 %v410, 4294901760
        %4075 = vmatprep.subr.mxu0 %v4074
        %v4076 = vand.u32 %v409, 4294901760
        %4077 = vmatpush1.msra.mxu0 %v4076
        %4078 = vmatprep.subr.mxu0 0.0
        %4079 = vmatpush1.msra.mxu0 0.0
        %4080 = vmatprep.subr.mxu0 0.0
        %4081 = vmatpush1.msra.mxu0 0.0
        %4082 = vmatprep.subr.mxu0 0.0
        %4083 = vmatpush1.msra.mxu0 0.0
        %4084 = vmatprep.subr.mxu0 0.0
        %4085 = vmatpush1.msra.mxu0 0.0
        %4086 = vmatprep.subr.mxu0 0.0
        %4087 = vmatpush1.msra.mxu0 0.0
        %4088 = vmatprep.subr.mxu0 0.0
        %4089 = vmatpush1.msra.mxu0 0.0
        %4090 = vmatprep.subr.mxu0 0.0
        %4091 = vmatpush1.msra.mxu0 0.0
        %4092 = vmatprep.subr.mxu0 0.0
        %4093 = vmatpush1.msra.mxu0 0.0
        %4094 = vmatprep.subr.mxu0 0.0
        %4095 = vmatpush1.msra.mxu0 0.0
        %4096 = vmatprep.subr.mxu0 0.0
        %4097 = vmatpush1.msra.mxu0 0.0
        %4098 = vmatprep.subr.mxu0 0.0
        %4099 = vmatpush1.msra.mxu0 0.0
        %4100 = vmatprep.subr.mxu0 0.0
        %4101 = vmatpush1.msra.mxu0 0.0
        %4102 = vmatprep.subr.mxu0 0.0
        %4103 = vmatpush1.msra.mxu0 0.0
        %4104 = vmatprep.subr.mxu0 0.0
        %4105 = vmatpush1.msra.mxu0 0.0
        %4106 = vmatprep.subr.mxu0 0.0
        %4107 = vmatpush1.msra.mxu0 0.0
        %4108 = vmatprep.subr.mxu0 0.0
        %4109 = vmatpush1.msra.mxu0 0.0
        %4110 = vmatprep.mubr.f32.mxu0 0.0
        %v4111 = vand.u32 %v279, 4294901760
        %v4112 = vsub.f32 %v279, %v4111
        %v4113 = vand.u32 %v4112, 4294901760
        %4114 = vmatmul.mubr.f32.gmra.mrb[0].mxu0 %v4113
        %v4115 = vpop.f32.mrb[0].mxu0
        %v4116 = vadd.f32 %v3986, %v4115
        %v4117 = vpop.f32.mrb[0].mxu0
        %v4118 = vadd.f32 %v3988, %v4117
        %4119 = vmatprep.mubr.f32.mxu0 0.0
        %v4120 = vand.u32 %v280, 4294901760
        %v4121 = vsub.f32 %v280, %v4120
        %v4122 = vand.u32 %v4121, 4294901760
        %4123 = vmatmul.mubr.f32.gmra.mrb[0].mxu0 %v4122
        %v4124 = vpop.f32.mrb[0].mxu0
        %v4125 = vadd.f32 %v3994, %v4124
        %v4126 = vpop.f32.mrb[0].mxu0
        %v4127 = vadd.f32 %v3996, %v4126
        %4128 = vmatprep.mubr.f32.mxu0 0.0
        %v4129 = vand.u32 %v281, 4294901760
        %v4130 = vsub.f32 %v281, %v4129
        %v4131 = vand.u32 %v4130, 4294901760
        %4132 = vmatmul.mubr.f32.gmra.mrb[0].mxu0 %v4131
        %v4133 = vpop.f32.mrb[0].mxu0
        %v4134 = vadd.f32 %v4002, %v4133
        %v4135 = vpop.f32.mrb[0].mxu0
        %v4136 = vadd.f32 %v4004, %v4135
        %4137 = vmatprep.mubr.f32.mxu0 0.0
        %v4138 = vand.u32 %v282, 4294901760
        %v4139 = vsub.f32 %v282, %v4138
        %v4140 = vand.u32 %v4139, 4294901760
        %4141 = vmatmul.mubr.f32.gmra.mrb[0].mxu0 %v4140
        %v4142 = vpop.f32.mrb[0].mxu0
        %v4143 = vadd.f32 %v4010, %v4142
        %v4144 = vpop.f32.mrb[0].mxu0
        %v4145 = vadd.f32 %v4012, %v4144
        %4146 = vdwg.mxu0
        %v4147 = vand.u32 %v290, 4294901760
        %v4148 = vsub.f32 %v290, %v4147
        %v4149 = vand.u32 %v4148, 4294901760
        %4150 = vmatprep.subr.mxu0 %v4149
        %v4151 = vand.u32 %v289, 4294901760
        %v4152 = vsub.f32 %v289, %v4151
        %v4153 = vand.u32 %v4152, 4294901760
        %4154 = vmatpush1.msra.mxu0 %v4153
        %v4155 = vand.u32 %v298, 4294901760
        %v4156 = vsub.f32 %v298, %v4155
        %v4157 = vand.u32 %v4156, 4294901760
        %4158 = vmatprep.subr.mxu0 %v4157
        %v4159 = vand.u32 %v297, 4294901760
        %v4160 = vsub.f32 %v297, %v4159
        %v4161 = vand.u32 %v4160, 4294901760
        %4162 = vmatpush1.msra.mxu0 %v4161
        %v4163 = vand.u32 %v306, 4294901760
        %v4164 = vsub.f32 %v306, %v4163
        %v4165 = vand.u32 %v4164, 4294901760
        %4166 = vmatprep.subr.mxu0 %v4165
        %v4167 = vand.u32 %v305, 4294901760
        %v4168 = vsub.f32 %v305, %v4167
        %v4169 = vand.u32 %v4168, 4294901760
        %4170 = vmatpush1.msra.mxu0 %v4169
        %v4171 = vand.u32 %v314, 4294901760
        %v4172 = vsub.f32 %v314, %v4171
        %v4173 = vand.u32 %v4172, 4294901760
        %4174 = vmatprep.subr.mxu0 %v4173
        %v4175 = vand.u32 %v313, 4294901760
        %v4176 = vsub.f32 %v313, %v4175
        %v4177 = vand.u32 %v4176, 4294901760
        %4178 = vmatpush1.msra.mxu0 %v4177
        %v4179 = vand.u32 %v322, 4294901760
        %v4180 = vsub.f32 %v322, %v4179
        %v4181 = vand.u32 %v4180, 4294901760
        %4182 = vmatprep.subr.mxu0 %v4181
        %v4183 = vand.u32 %v321, 4294901760
        %v4184 = vsub.f32 %v321, %v4183
        %v4185 = vand.u32 %v4184, 4294901760
        %4186 = vmatpush1.msra.mxu0 %v4185
        %v4187 = vand.u32 %v330, 4294901760
        %v4188 = vsub.f32 %v330, %v4187
        %v4189 = vand.u32 %v4188, 4294901760
        %4190 = vmatprep.subr.mxu0 %v4189
        %v4191 = vand.u32 %v329, 4294901760
        %v4192 = vsub.f32 %v329, %v4191
        %v4193 = vand.u32 %v4192, 4294901760
        %4194 = vmatpush1.msra.mxu0 %v4193
        %v4195 = vand.u32 %v338, 4294901760
        %v4196 = vsub.f32 %v338, %v4195
        %v4197 = vand.u32 %v4196, 4294901760
        %4198 = vmatprep.subr.mxu0 %v4197
        %v4199 = vand.u32 %v337, 4294901760
        %v4200 = vsub.f32 %v337, %v4199
        %v4201 = vand.u32 %v4200, 4294901760
        %4202 = vmatpush1.msra.mxu0 %v4201
        %v4203 = vand.u32 %v346, 4294901760
        %v4204 = vsub.f32 %v346, %v4203
        %v4205 = vand.u32 %v4204, 4294901760
        %4206 = vmatprep.subr.mxu0 %v4205
        %v4207 = vand.u32 %v345, 4294901760
        %v4208 = vsub.f32 %v345, %v4207
        %v4209 = vand.u32 %v4208, 4294901760
        %4210 = vmatpush1.msra.mxu0 %v4209
        %v4211 = vand.u32 %v354, 4294901760
        %v4212 = vsub.f32 %v354, %v4211
        %v4213 = vand.u32 %v4212, 4294901760
        %4214 = vmatprep.subr.mxu0 %v4213
        %v4215 = vand.u32 %v353, 4294901760
        %v4216 = vsub.f32 %v353, %v4215
        %v4217 = vand.u32 %v4216, 4294901760
        %4218 = vmatpush1.msra.mxu0 %v4217
        %v4219 = vand.u32 %v362, 4294901760
        %v4220 = vsub.f32 %v362, %v4219
        %v4221 = vand.u32 %v4220, 4294901760
        %4222 = vmatprep.subr.mxu0 %v4221
        %v4223 = vand.u32 %v361, 4294901760
        %v4224 = vsub.f32 %v361, %v4223
        %v4225 = vand.u32 %v4224, 4294901760
        %4226 = vmatpush1.msra.mxu0 %v4225
        %v4227 = vand.u32 %v370, 4294901760
        %v4228 = vsub.f32 %v370, %v4227
        %v4229 = vand.u32 %v4228, 4294901760
        %4230 = vmatprep.subr.mxu0 %v4229
        %v4231 = vand.u32 %v369, 4294901760
        %v4232 = vsub.f32 %v369, %v4231
        %v4233 = vand.u32 %v4232, 4294901760
        %4234 = vmatpush1.msra.mxu0 %v4233
        %v4235 = vand.u32 %v378, 4294901760
        %v4236 = vsub.f32 %v378, %v4235
        %v4237 = vand.u32 %v4236, 4294901760
        %4238 = vmatprep.subr.mxu0 %v4237
        %v4239 = vand.u32 %v377, 4294901760
        %v4240 = vsub.f32 %v377, %v4239
        %v4241 = vand.u32 %v4240, 4294901760
        %4242 = vmatpush1.msra.mxu0 %v4241
        %v4243 = vand.u32 %v386, 4294901760
        %v4244 = vsub.f32 %v386, %v4243
        %v4245 = vand.u32 %v4244, 4294901760
        %4246 = vmatprep.subr.mxu0 %v4245
        %v4247 = vand.u32 %v385, 4294901760
        %v4248 = vsub.f32 %v385, %v4247
        %v4249 = vand.u32 %v4248, 4294901760
        %4250 = vmatpush1.msra.mxu0 %v4249
        %v4251 = vand.u32 %v394, 4294901760
        %v4252 = vsub.f32 %v394, %v4251
        %v4253 = vand.u32 %v4252, 4294901760
        %4254 = vmatprep.subr.mxu0 %v4253
        %v4255 = vand.u32 %v393, 4294901760
        %v4256 = vsub.f32 %v393, %v4255
        %v4257 = vand.u32 %v4256, 4294901760
        %4258 = vmatpush1.msra.mxu0 %v4257
        %v4259 = vand.u32 %v402, 4294901760
        %v4260 = vsub.f32 %v402, %v4259
        %v4261 = vand.u32 %v4260, 4294901760
        %4262 = vmatprep.subr.mxu0 %v4261
        %v4263 = vand.u32 %v401, 4294901760
        %v4264 = vsub.f32 %v401, %v4263
        %v4265 = vand.u32 %v4264, 4294901760
        %4266 = vmatpush1.msra.mxu0 %v4265
        %v4267 = vand.u32 %v410, 4294901760
        %v4268 = vsub.f32 %v410, %v4267
        %v4269 = vand.u32 %v4268, 4294901760
        %4270 = vmatprep.subr.mxu0 %v4269
        %v4271 = vand.u32 %v409, 4294901760
        %v4272 = vsub.f32 %v409, %v4271
        %v4273 = vand.u32 %v4272, 4294901760
        %4274 = vmatpush1.msra.mxu0 %v4273
        %4275 = vmatprep.subr.mxu0 0.0
        %4276 = vmatpush1.msra.mxu0 0.0
        %4277 = vmatprep.subr.mxu0 0.0
        %4278 = vmatpush1.msra.mxu0 0.0
        %4279 = vmatprep.subr.mxu0 0.0
        %4280 = vmatpush1.msra.mxu0 0.0
        %4281 = vmatprep.subr.mxu0 0.0
        %4282 = vmatpush1.msra.mxu0 0.0
        %4283 = vmatprep.subr.mxu0 0.0
        %4284 = vmatpush1.msra.mxu0 0.0
        %4285 = vmatprep.subr.mxu0 0.0
        %4286 = vmatpush1.msra.mxu0 0.0
        %4287 = vmatprep.subr.mxu0 0.0
        %4288 = vmatpush1.msra.mxu0 0.0
        %4289 = vmatprep.subr.mxu0 0.0
        %4290 = vmatpush1.msra.mxu0 0.0
        %4291 = vmatprep.subr.mxu0 0.0
        %4292 = vmatpush1.msra.mxu0 0.0
        %4293 = vmatprep.subr.mxu0 0.0
        %4294 = vmatpush1.msra.mxu0 0.0
        %4295 = vmatprep.subr.mxu0 0.0
        %4296 = vmatpush1.msra.mxu0 0.0
        %4297 = vmatprep.subr.mxu0 0.0
        %4298 = vmatpush1.msra.mxu0 0.0
        %4299 = vmatprep.subr.mxu0 0.0
        %4300 = vmatpush1.msra.mxu0 0.0
        %4301 = vmatprep.subr.mxu0 0.0
        %4302 = vmatpush1.msra.mxu0 0.0
        %4303 = vmatprep.subr.mxu0 0.0
        %4304 = vmatpush1.msra.mxu0 0.0
        %4305 = vmatprep.subr.mxu0 0.0
        %4306 = vmatpush1.msra.mxu0 0.0
        %4307 = vmatprep.mubr.f32.mxu0 0.0
        %v4308 = vand.u32 %v279, 4294901760
        %4309 = vmatmul.mubr.f32.gmra.mrb[0].mxu0 %v4308
        %v4310 = vpop.f32.mrb[0].mxu0
        %v4311 = vadd.f32 %v4116, %v4310
        %v4312 = vpop.f32.mrb[0].mxu0
        %v4313 = vadd.f32 %v4118, %v4312
        %4314 = vmatprep.mubr.f32.mxu0 0.0
        %v4315 = vand.u32 %v280, 4294901760
        %4316 = vmatmul.mubr.f32.gmra.mrb[0].mxu0 %v4315
        %v4317 = vpop.f32.mrb[0].mxu0
        %v4318 = vadd.f32 %v4125, %v4317
        %v4319 = vpop.f32.mrb[0].mxu0
        %v4320 = vadd.f32 %v4127, %v4319
        %4321 = vmatprep.mubr.f32.mxu0 0.0
        %v4322 = vand.u32 %v281, 4294901760
        %4323 = vmatmul.mubr.f32.gmra.mrb[0].mxu0 %v4322
        %v4324 = vpop.f32.mrb[0].mxu0
        %v4325 = vadd.f32 %v4134, %v4324
        %v4326 = vpop.f32.mrb[0].mxu0
        %v4327 = vadd.f32 %v4136, %v4326
        %4328 = vmatprep.mubr.f32.mxu0 0.0
        %v4329 = vand.u32 %v282, 4294901760
        %4330 = vmatmul.mubr.f32.gmra.mrb[0].mxu0 %v4329
        %v4331 = vpop.f32.mrb[0].mxu0
        %v4332 = vadd.f32 %v4143, %v4331
        %v4333 = vpop.f32.mrb[0].mxu0
        %v4334 = vadd.f32 %v4145, %v4333
        %4335 = vdwg.mxu0
        %v4336 = vand.u32 %v290, 4294901760
        %4337 = vmatprep.subr.mxu0 %v4336
        %v4338 = vand.u32 %v289, 4294901760
        %4339 = vmatpush1.msra.mxu0 %v4338
        %v4340 = vand.u32 %v298, 4294901760
        %4341 = vmatprep.subr.mxu0 %v4340
        %v4342 = vand.u32 %v297, 4294901760
        %4343 = vmatpush1.msra.mxu0 %v4342
        %v4344 = vand.u32 %v306, 4294901760
        %4345 = vmatprep.subr.mxu0 %v4344
        %v4346 = vand.u32 %v305, 4294901760
        %4347 = vmatpush1.msra.mxu0 %v4346
        %v4348 = vand.u32 %v314, 4294901760
        %4349 = vmatprep.subr.mxu0 %v4348
        %v4350 = vand.u32 %v313, 4294901760
        %4351 = vmatpush1.msra.mxu0 %v4350
        %v4352 = vand.u32 %v322, 4294901760
        %4353 = vmatprep.subr.mxu0 %v4352
        %v4354 = vand.u32 %v321, 4294901760
        %4355 = vmatpush1.msra.mxu0 %v4354
        %v4356 = vand.u32 %v330, 4294901760
        %4357 = vmatprep.subr.mxu0 %v4356
        %v4358 = vand.u32 %v329, 4294901760
        %4359 = vmatpush1.msra.mxu0 %v4358
        %v4360 = vand.u32 %v338, 4294901760
        %4361 = vmatprep.subr.mxu0 %v4360
        %v4362 = vand.u32 %v337, 4294901760
        %4363 = vmatpush1.msra.mxu0 %v4362
        %v4364 = vand.u32 %v346, 4294901760
        %4365 = vmatprep.subr.mxu0 %v4364
        %v4366 = vand.u32 %v345, 4294901760
        %4367 = vmatpush1.msra.mxu0 %v4366
        %v4368 = vand.u32 %v354, 4294901760
        %4369 = vmatprep.subr.mxu0 %v4368
        %v4370 = vand.u32 %v353, 4294901760
        %4371 = vmatpush1.msra.mxu0 %v4370
        %v4372 = vand.u32 %v362, 4294901760
        %4373 = vmatprep.subr.mxu0 %v4372
        %v4374 = vand.u32 %v361, 4294901760
        %4375 = vmatpush1.msra.mxu0 %v4374
        %v4376 = vand.u32 %v370, 4294901760
        %4377 = vmatprep.subr.mxu0 %v4376
        %v4378 = vand.u32 %v369, 4294901760
        %4379 = vmatpush1.msra.mxu0 %v4378
        %v4380 = vand.u32 %v378, 4294901760
        %4381 = vmatprep.subr.mxu0 %v4380
        %v4382 = vand.u32 %v377, 4294901760
        %4383 = vmatpush1.msra.mxu0 %v4382
        %v4384 = vand.u32 %v386, 4294901760
        %4385 = vmatprep.subr.mxu0 %v4384
        %v4386 = vand.u32 %v385, 4294901760
        %4387 = vmatpush1.msra.mxu0 %v4386
        %v4388 = vand.u32 %v394, 4294901760
        %4389 = vmatprep.subr.mxu0 %v4388
        %v4390 = vand.u32 %v393, 4294901760
        %4391 = vmatpush1.msra.mxu0 %v4390
        %v4392 = vand.u32 %v402, 4294901760
        %4393 = vmatprep.subr.mxu0 %v4392
        %v4394 = vand.u32 %v401, 4294901760
        %4395 = vmatpush1.msra.mxu0 %v4394
        %v4396 = vand.u32 %v410, 4294901760
        %4397 = vmatprep.subr.mxu0 %v4396
        %v4398 = vand.u32 %v409, 4294901760
        %4399 = vmatpush1.msra.mxu0 %v4398
        %4400 = vmatprep.subr.mxu0 0.0
        %4401 = vmatpush1.msra.mxu0 0.0
        %4402 = vmatprep.subr.mxu0 0.0
        %4403 = vmatpush1.msra.mxu0 0.0
        %4404 = vmatprep.subr.mxu0 0.0
        %4405 = vmatpush1.msra.mxu0 0.0
        %4406 = vmatprep.subr.mxu0 0.0
        %4407 = vmatpush1.msra.mxu0 0.0
        %4408 = vmatprep.subr.mxu0 0.0
        %4409 = vmatpush1.msra.mxu0 0.0
        %4410 = vmatprep.subr.mxu0 0.0
        %4411 = vmatpush1.msra.mxu0 0.0
        %4412 = vmatprep.subr.mxu0 0.0
        %4413 = vmatpush1.msra.mxu0 0.0
        %4414 = vmatprep.subr.mxu0 0.0
        %4415 = vmatpush1.msra.mxu0 0.0
        %4416 = vmatprep.subr.mxu0 0.0
        %4417 = vmatpush1.msra.mxu0 0.0
        %4418 = vmatprep.subr.mxu0 0.0
        %4419 = vmatpush1.msra.mxu0 0.0
        %4420 = vmatprep.subr.mxu0 0.0
        %4421 = vmatpush1.msra.mxu0 0.0
        %4422 = vmatprep.subr.mxu0 0.0
        %4423 = vmatpush1.msra.mxu0 0.0
        %4424 = vmatprep.subr.mxu0 0.0
        %4425 = vmatpush1.msra.mxu0 0.0
        %4426 = vmatprep.subr.mxu0 0.0
        %4427 = vmatpush1.msra.mxu0 0.0
        %4428 = vmatprep.subr.mxu0 0.0
        %4429 = vmatpush1.msra.mxu0 0.0
        %4430 = vmatprep.subr.mxu0 0.0
        %4431 = vmatpush1.msra.mxu0 0.0
        %4432 = vmatprep.mubr.f32.mxu0 0.0
        %v4433 = vand.u32 %v279, 4294901760
        %4434 = vmatmul.mubr.f32.gmra.mrb[0].mxu0 %v4433
        %v4435 = vpop.f32.mrb[0].mxu0
        %v4436 = vadd.f32 %v4311, %v4435
        %v4437 = vpop.f32.mrb[0].mxu0
        %v4438 = vadd.f32 %v4313, %v4437
        %4439 = vmatprep.mubr.f32.mxu0 0.0
        %v4440 = vand.u32 %v280, 4294901760
        %4441 = vmatmul.mubr.f32.gmra.mrb[0].mxu0 %v4440
        %v4442 = vpop.f32.mrb[0].mxu0
        %v4443 = vadd.f32 %v4318, %v4442
        %v4444 = vpop.f32.mrb[0].mxu0
        %v4445 = vadd.f32 %v4320, %v4444
        %4446 = vmatprep.mubr.f32.mxu0 0.0
        %v4447 = vand.u32 %v281, 4294901760
        %4448 = vmatmul.mubr.f32.gmra.mrb[0].mxu0 %v4447
        %v4449 = vpop.f32.mrb[0].mxu0
        %v4450 = vadd.f32 %v4325, %v4449
        %v4451 = vpop.f32.mrb[0].mxu0
        %v4452 = vadd.f32 %v4327, %v4451
        %4453 = vmatprep.mubr.f32.mxu0 0.0
        %v4454 = vand.u32 %v282, 4294901760
        %4455 = vmatmul.mubr.f32.gmra.mrb[0].mxu0 %v4454
        %v4456 = vpop.f32.mrb[0].mxu0
        %v4457 = vadd.f32 %v4332, %v4456
        %v4458 = vpop.f32.mrb[0].mxu0
        %v4459 = vadd.f32 %v4334, %v4458
        %4460 = vdwg.mxu0
        %v4461 = vmax.f32 %v1430, 0.0
        %v4462 = vmax.f32 %v1432, 0.0
        %v4463 = vmax.f32 %v2432, 0.0
        %v4464 = vmax.f32 %v2434, 0.0
        %v4465 = vmax.f32 %v3434, 0.0
        %v4466 = vmax.f32 %v3436, 0.0
        %v4467 = vmax.f32 %v4436, 0.0
        %v4468 = vmax.f32 %v4438, 0.0
        %v4469 = vmax.f32 %v1437, 0.0
        %v4470 = vmax.f32 %v1439, 0.0
        %v4471 = vmax.f32 %v2439, 0.0
        %v4472 = vmax.f32 %v2441, 0.0
        %v4473 = vmax.f32 %v3441, 0.0
        %v4474 = vmax.f32 %v3443, 0.0
        %v4475 = vmax.f32 %v4443, 0.0
        %v4476 = vmax.f32 %v4445, 0.0
        %v4477 = vmax.f32 %v1444, 0.0
        %v4478 = vmax.f32 %v1446, 0.0
        %v4479 = vmax.f32 %v2446, 0.0
        %v4480 = vmax.f32 %v2448, 0.0
        %v4481 = vmax.f32 %v3448, 0.0
        %v4482 = vmax.f32 %v3450, 0.0
        %v4483 = vmax.f32 %v4450, 0.0
        %v4484 = vmax.f32 %v4452, 0.0
        %v4485 = vmax.f32 %v1451, 0.0
        %v4486 = vmax.f32 %v1453, 0.0
        %v4487 = vmax.f32 %v2453, 0.0
        %v4488 = vmax.f32 %v2455, 0.0
        %v4489 = vmax.f32 %v3455, 0.0
        %v4490 = vmax.f32 %v3457, 0.0
        %v4491 = vmax.f32 %v4457, 0.0
        %v4492 = vmax.f32 %v4459, 0.0
        %v4493 = vld [vmem:[%s3] sm:$0xff]
        %v4494 = vld [vmem:[%s3 + $0x8] sm:$0xff]
        %v4495 = vld [vmem:[%s3 + $0x10] sm:$0xff]
        %v4496 = vld [vmem:[%s3 + $0x18] sm:$0xff]
        %v4497 = vld [vmem:[%s3 + $0x20] sm:$0xff]
        %v4498 = vld [vmem:[%s3 + $0x28] sm:$0xff]
        %v4499 = vld [vmem:[%s3 + $0x30] sm:$0xff]
        %v4500 = vld [vmem:[%s3 + $0x38] sm:$0xff]
        %v4501 = vld [vmem:[%s3 + $0x40] sm:$0xff]
        %v4502 = vld [vmem:[%s3 + $0x48] sm:$0xff]
        %v4503 = vld [vmem:[%s3 + $0x50] sm:$0xff]
        %v4504 = vld [vmem:[%s3 + $0x58] sm:$0xff]
        %v4505 = vld [vmem:[%s3 + $0x60] sm:$0xff]
        %v4506 = vld [vmem:[%s3 + $0x68] sm:$0xff]
        %v4507 = vld [vmem:[%s3 + $0x70] sm:$0xff]
        %v4508 = vld [vmem:[%s3 + $0x78] sm:$0xff]
        %vm4509 = vcmask 261120
        %v4511 = vsel %vm4509, %v4493, 0
        %v4514 = vsel %vm4509, %v4494, 0
        %v4517 = vsel %vm4509, %v4495, 0
        %v4520 = vsel %vm4509, %v4496, 0
        %v4523 = vsel %vm4509, %v4497, 0
        %v4526 = vsel %vm4509, %v4498, 0
        %v4529 = vsel %vm4509, %v4499, 0
        %v4532 = vsel %vm4509, %v4500, 0
        %v4535 = vsel %vm4509, %v4501, 0
        %v4538 = vsel %vm4509, %v4502, 0
        %v4541 = vsel %vm4509, %v4503, 0
        %v4544 = vsel %vm4509, %v4504, 0
        %v4547 = vsel %vm4509, %v4505, 0
        %v4550 = vsel %vm4509, %v4506, 0
        %v4553 = vsel %vm4509, %v4507, 0
        %v4556 = vsel %vm4509, %v4508, 0
        %v4558 = vand.u32 %v4462, 4294901760
        %4559 = vmatprep.subr.mxu0 %v4558
        %v4560 = vand.u32 %v4461, 4294901760
        %4561 = vmatpush1.msra.mxu0 %v4560
        %v4562 = vand.u32 %v4470, 4294901760
        %4563 = vmatprep.subr.mxu0 %v4562
        %v4564 = vand.u32 %v4469, 4294901760
        %4565 = vmatpush1.msra.mxu0 %v4564
        %v4566 = vand.u32 %v4478, 4294901760
        %4567 = vmatprep.subr.mxu0 %v4566
        %v4568 = vand.u32 %v4477, 4294901760
        %4569 = vmatpush1.msra.mxu0 %v4568
        %v4570 = vand.u32 %v4486, 4294901760
        %4571 = vmatprep.subr.mxu0 %v4570
        %v4572 = vand.u32 %v4485, 4294901760
        %4573 = vmatpush1.msra.mxu0 %v4572
        %4574 = vmatprep.subr.mxu0 0.0
        %4575 = vmatpush1.msra.mxu0 0.0
        %4576 = vmatprep.subr.mxu0 0.0
        %4577 = vmatpush1.msra.mxu0 0.0
        %4578 = vmatprep.subr.mxu0 0.0
        %4579 = vmatpush1.msra.mxu0 0.0
        %4580 = vmatprep.subr.mxu0 0.0
        %4581 = vmatpush1.msra.mxu0 0.0
        %4582 = vmatprep.subr.mxu0 0.0
        %4583 = vmatpush1.msra.mxu0 0.0
        %4584 = vmatprep.subr.mxu0 0.0
        %4585 = vmatpush1.msra.mxu0 0.0
        %4586 = vmatprep.subr.mxu0 0.0
        %4587 = vmatpush1.msra.mxu0 0.0
        %4588 = vmatprep.subr.mxu0 0.0
        %4589 = vmatpush1.msra.mxu0 0.0
        %4590 = vmatprep.subr.mxu0 0.0
        %4591 = vmatpush1.msra.mxu0 0.0
        %4592 = vmatprep.subr.mxu0 0.0
        %4593 = vmatpush1.msra.mxu0 0.0
        %4594 = vmatprep.subr.mxu0 0.0
        %4595 = vmatpush1.msra.mxu0 0.0
        %4596 = vmatprep.subr.mxu0 0.0
        %4597 = vmatpush1.msra.mxu0 0.0
        %4598 = vmatprep.subr.mxu0 0.0
        %4599 = vmatpush1.msra.mxu0 0.0
        %4600 = vmatprep.subr.mxu0 0.0
        %4601 = vmatpush1.msra.mxu0 0.0
        %4602 = vmatprep.subr.mxu0 0.0
        %4603 = vmatpush1.msra.mxu0 0.0
        %4604 = vmatprep.subr.mxu0 0.0
        %4605 = vmatpush1.msra.mxu0 0.0
        %4606 = vmatprep.subr.mxu0 0.0
        %4607 = vmatpush1.msra.mxu0 0.0
        %4608 = vmatprep.subr.mxu0 0.0
        %4609 = vmatpush1.msra.mxu0 0.0
        %4610 = vmatprep.subr.mxu0 0.0
        %4611 = vmatpush1.msra.mxu0 0.0
        %4612 = vmatprep.subr.mxu0 0.0
        %4613 = vmatpush1.msra.mxu0 0.0
        %4614 = vmatprep.subr.mxu0 0.0
        %4615 = vmatpush1.msra.mxu0 0.0
        %4616 = vmatprep.subr.mxu0 0.0
        %4617 = vmatpush1.msra.mxu0 0.0
        %4618 = vmatprep.subr.mxu0 0.0
        %4619 = vmatpush1.msra.mxu0 0.0
        %4620 = vmatprep.subr.mxu0 0.0
        %4621 = vmatpush1.msra.mxu0 0.0
        %4622 = vmatprep.subr.mxu0 0.0
        %4623 = vmatpush1.msra.mxu0 0.0
        %4624 = vmatprep.subr.mxu0 0.0
        %4625 = vmatpush1.msra.mxu0 0.0
        %4626 = vmatprep.subr.mxu0 0.0
        %4627 = vmatpush1.msra.mxu0 0.0
        %4628 = vmatprep.subr.mxu0 0.0
        %4629 = vmatpush1.msra.mxu0 0.0
        %4630 = vmatprep.mubr.f32.mxu0 0.0
        %v4631 = vand.u32 %v4511, 4294901760
        %v4632 = vsub.f32 %v4511, %v4631
        %v4633 = vand.u32 %v4632, 4294901760
        %v4634 = vsub.f32 %v4632, %v4633
        %v4635 = vand.u32 %v4634, 4294901760
        %4636 = vmatmul.mubr.f32.gmra.mrb[0].mxu0 %v4635
        %v4637 = vpop.f32.mrb[0].mxu0
        %v4638 = vadd.f32 0.0, %v4637
        %v4639 = vpop.f32.mrb[0].mxu0
        %v4640 = vadd.f32 0.0, %v4639
        %4641 = vmatprep.mubr.f32.mxu0 0.0
        %v4642 = vand.u32 %v4514, 4294901760
        %v4643 = vsub.f32 %v4514, %v4642
        %v4644 = vand.u32 %v4643, 4294901760
        %v4645 = vsub.f32 %v4643, %v4644
        %v4646 = vand.u32 %v4645, 4294901760
        %4647 = vmatmul.mubr.f32.gmra.mrb[0].mxu0 %v4646
        %v4648 = vpop.f32.mrb[0].mxu0
        %v4649 = vadd.f32 0.0, %v4648
        %v4650 = vpop.f32.mrb[0].mxu0
        %v4651 = vadd.f32 0.0, %v4650
        %4652 = vmatprep.mubr.f32.mxu0 0.0
        %v4653 = vand.u32 %v4517, 4294901760
        %v4654 = vsub.f32 %v4517, %v4653
        %v4655 = vand.u32 %v4654, 4294901760
        %v4656 = vsub.f32 %v4654, %v4655
        %v4657 = vand.u32 %v4656, 4294901760
        %4658 = vmatmul.mubr.f32.gmra.mrb[0].mxu0 %v4657
        %v4659 = vpop.f32.mrb[0].mxu0
        %v4660 = vadd.f32 0.0, %v4659
        %v4661 = vpop.f32.mrb[0].mxu0
        %v4662 = vadd.f32 0.0, %v4661
        %4663 = vmatprep.mubr.f32.mxu0 0.0
        %v4664 = vand.u32 %v4520, 4294901760
        %v4665 = vsub.f32 %v4520, %v4664
        %v4666 = vand.u32 %v4665, 4294901760
        %v4667 = vsub.f32 %v4665, %v4666
        %v4668 = vand.u32 %v4667, 4294901760
        %4669 = vmatmul.mubr.f32.gmra.mrb[0].mxu0 %v4668
        %v4670 = vpop.f32.mrb[0].mxu0
        %v4671 = vadd.f32 0.0, %v4670
        %v4672 = vpop.f32.mrb[0].mxu0
        %v4673 = vadd.f32 0.0, %v4672
        %4674 = vmatprep.mubr.f32.mxu0 0.0
        %v4675 = vand.u32 %v4523, 4294901760
        %v4676 = vsub.f32 %v4523, %v4675
        %v4677 = vand.u32 %v4676, 4294901760
        %v4678 = vsub.f32 %v4676, %v4677
        %v4679 = vand.u32 %v4678, 4294901760
        %4680 = vmatmul.mubr.f32.gmra.mrb[0].mxu0 %v4679
        %v4681 = vpop.f32.mrb[0].mxu0
        %v4682 = vadd.f32 0.0, %v4681
        %v4683 = vpop.f32.mrb[0].mxu0
        %v4684 = vadd.f32 0.0, %v4683
        %4685 = vmatprep.mubr.f32.mxu0 0.0
        %v4686 = vand.u32 %v4526, 4294901760
        %v4687 = vsub.f32 %v4526, %v4686
        %v4688 = vand.u32 %v4687, 4294901760
        %v4689 = vsub.f32 %v4687, %v4688
        %v4690 = vand.u32 %v4689, 4294901760
        %4691 = vmatmul.mubr.f32.gmra.mrb[0].mxu0 %v4690
        %v4692 = vpop.f32.mrb[0].mxu0
        %v4693 = vadd.f32 0.0, %v4692
        %v4694 = vpop.f32.mrb[0].mxu0
        %v4695 = vadd.f32 0.0, %v4694
        %4696 = vmatprep.mubr.f32.mxu0 0.0
        %v4697 = vand.u32 %v4529, 4294901760
        %v4698 = vsub.f32 %v4529, %v4697
        %v4699 = vand.u32 %v4698, 4294901760
        %v4700 = vsub.f32 %v4698, %v4699
        %v4701 = vand.u32 %v4700, 4294901760
        %4702 = vmatmul.mubr.f32.gmra.mrb[0].mxu0 %v4701
        %v4703 = vpop.f32.mrb[0].mxu0
        %v4704 = vadd.f32 0.0, %v4703
        %v4705 = vpop.f32.mrb[0].mxu0
        %v4706 = vadd.f32 0.0, %v4705
        %4707 = vmatprep.mubr.f32.mxu0 0.0
        %v4708 = vand.u32 %v4532, 4294901760
        %v4709 = vsub.f32 %v4532, %v4708
        %v4710 = vand.u32 %v4709, 4294901760
        %v4711 = vsub.f32 %v4709, %v4710
        %v4712 = vand.u32 %v4711, 4294901760
        %4713 = vmatmul.mubr.f32.gmra.mrb[0].mxu0 %v4712
        %v4714 = vpop.f32.mrb[0].mxu0
        %v4715 = vadd.f32 0.0, %v4714
        %v4716 = vpop.f32.mrb[0].mxu0
        %v4717 = vadd.f32 0.0, %v4716
        %4718 = vmatprep.mubr.f32.mxu0 0.0
        %v4719 = vand.u32 %v4535, 4294901760
        %v4720 = vsub.f32 %v4535, %v4719
        %v4721 = vand.u32 %v4720, 4294901760
        %v4722 = vsub.f32 %v4720, %v4721
        %v4723 = vand.u32 %v4722, 4294901760
        %4724 = vmatmul.mubr.f32.gmra.mrb[0].mxu0 %v4723
        %v4725 = vpop.f32.mrb[0].mxu0
        %v4726 = vadd.f32 0.0, %v4725
        %v4727 = vpop.f32.mrb[0].mxu0
        %v4728 = vadd.f32 0.0, %v4727
        %4729 = vmatprep.mubr.f32.mxu0 0.0
        %v4730 = vand.u32 %v4538, 4294901760
        %v4731 = vsub.f32 %v4538, %v4730
        %v4732 = vand.u32 %v4731, 4294901760
        %v4733 = vsub.f32 %v4731, %v4732
        %v4734 = vand.u32 %v4733, 4294901760
        %4735 = vmatmul.mubr.f32.gmra.mrb[0].mxu0 %v4734
        %v4736 = vpop.f32.mrb[0].mxu0
        %v4737 = vadd.f32 0.0, %v4736
        %v4738 = vpop.f32.mrb[0].mxu0
        %v4739 = vadd.f32 0.0, %v4738
        %4740 = vmatprep.mubr.f32.mxu0 0.0
        %v4741 = vand.u32 %v4541, 4294901760
        %v4742 = vsub.f32 %v4541, %v4741
        %v4743 = vand.u32 %v4742, 4294901760
        %v4744 = vsub.f32 %v4742, %v4743
        %v4745 = vand.u32 %v4744, 4294901760
        %4746 = vmatmul.mubr.f32.gmra.mrb[0].mxu0 %v4745
        %v4747 = vpop.f32.mrb[0].mxu0
        %v4748 = vadd.f32 0.0, %v4747
        %v4749 = vpop.f32.mrb[0].mxu0
        %v4750 = vadd.f32 0.0, %v4749
        %4751 = vmatprep.mubr.f32.mxu0 0.0
        %v4752 = vand.u32 %v4544, 4294901760
        %v4753 = vsub.f32 %v4544, %v4752
        %v4754 = vand.u32 %v4753, 4294901760
        %v4755 = vsub.f32 %v4753, %v4754
        %v4756 = vand.u32 %v4755, 4294901760
        %4757 = vmatmul.mubr.f32.gmra.mrb[0].mxu0 %v4756
        %v4758 = vpop.f32.mrb[0].mxu0
        %v4759 = vadd.f32 0.0, %v4758
        %v4760 = vpop.f32.mrb[0].mxu0
        %v4761 = vadd.f32 0.0, %v4760
        %4762 = vmatprep.mubr.f32.mxu0 0.0
        %v4763 = vand.u32 %v4547, 4294901760
        %v4764 = vsub.f32 %v4547, %v4763
        %v4765 = vand.u32 %v4764, 4294901760
        %v4766 = vsub.f32 %v4764, %v4765
        %v4767 = vand.u32 %v4766, 4294901760
        %4768 = vmatmul.mubr.f32.gmra.mrb[0].mxu0 %v4767
        %v4769 = vpop.f32.mrb[0].mxu0
        %v4770 = vadd.f32 0.0, %v4769
        %v4771 = vpop.f32.mrb[0].mxu0
        %v4772 = vadd.f32 0.0, %v4771
        %4773 = vmatprep.mubr.f32.mxu0 0.0
        %v4774 = vand.u32 %v4550, 4294901760
        %v4775 = vsub.f32 %v4550, %v4774
        %v4776 = vand.u32 %v4775, 4294901760
        %v4777 = vsub.f32 %v4775, %v4776
        %v4778 = vand.u32 %v4777, 4294901760
        %4779 = vmatmul.mubr.f32.gmra.mrb[0].mxu0 %v4778
        %v4780 = vpop.f32.mrb[0].mxu0
        %v4781 = vadd.f32 0.0, %v4780
        %v4782 = vpop.f32.mrb[0].mxu0
        %v4783 = vadd.f32 0.0, %v4782
        %4784 = vmatprep.mubr.f32.mxu0 0.0
        %v4785 = vand.u32 %v4553, 4294901760
        %v4786 = vsub.f32 %v4553, %v4785
        %v4787 = vand.u32 %v4786, 4294901760
        %v4788 = vsub.f32 %v4786, %v4787
        %v4789 = vand.u32 %v4788, 4294901760
        %4790 = vmatmul.mubr.f32.gmra.mrb[0].mxu0 %v4789
        %v4791 = vpop.f32.mrb[0].mxu0
        %v4792 = vadd.f32 0.0, %v4791
        %v4793 = vpop.f32.mrb[0].mxu0
        %v4794 = vadd.f32 0.0, %v4793
        %4795 = vmatprep.mubr.f32.mxu0 0.0
        %v4796 = vand.u32 %v4556, 4294901760
        %v4797 = vsub.f32 %v4556, %v4796
        %v4798 = vand.u32 %v4797, 4294901760
        %v4799 = vsub.f32 %v4797, %v4798
        %v4800 = vand.u32 %v4799, 4294901760
        %4801 = vmatmul.mubr.f32.gmra.mrb[0].mxu0 %v4800
        %v4802 = vpop.f32.mrb[0].mxu0
        %v4803 = vadd.f32 0.0, %v4802
        %v4804 = vpop.f32.mrb[0].mxu0
        %v4805 = vadd.f32 0.0, %v4804
        %4806 = vdwg.mxu0
        %v4807 = vand.u32 %v4462, 4294901760
        %v4808 = vsub.f32 %v4462, %v4807
        %v4809 = vand.u32 %v4808, 4294901760
        %v4810 = vsub.f32 %v4808, %v4809
        %v4811 = vand.u32 %v4810, 4294901760
        %4812 = vmatprep.subr.mxu0 %v4811
        %v4813 = vand.u32 %v4461, 4294901760
        %v4814 = vsub.f32 %v4461, %v4813
        %v4815 = vand.u32 %v4814, 4294901760
        %v4816 = vsub.f32 %v4814, %v4815
        %v4817 = vand.u32 %v4816, 4294901760
        %4818 = vmatpush1.msra.mxu0 %v4817
        %v4819 = vand.u32 %v4470, 4294901760
        %v4820 = vsub.f32 %v4470, %v4819
        %v4821 = vand.u32 %v4820, 4294901760
        %v4822 = vsub.f32 %v4820, %v4821
        %v4823 = vand.u32 %v4822, 4294901760
        %4824 = vmatprep.subr.mxu0 %v4823
        %v4825 = vand.u32 %v4469, 4294901760
        %v4826 = vsub.f32 %v4469, %v4825
        %v4827 = vand.u32 %v4826, 4294901760
        %v4828 = vsub.f32 %v4826, %v4827
        %v4829 = vand.u32 %v4828, 4294901760
        %4830 = vmatpush1.msra.mxu0 %v4829
        %v4831 = vand.u32 %v4478, 4294901760
        %v4832 = vsub.f32 %v4478, %v4831
        %v4833 = vand.u32 %v4832, 4294901760
        %v4834 = vsub.f32 %v4832, %v4833
        %v4835 = vand.u32 %v4834, 4294901760
        %4836 = vmatprep.subr.mxu0 %v4835
        %v4837 = vand.u32 %v4477, 4294901760
        %v4838 = vsub.f32 %v4477, %v4837
        %v4839 = vand.u32 %v4838, 4294901760
        %v4840 = vsub.f32 %v4838, %v4839
        %v4841 = vand.u32 %v4840, 4294901760
        %4842 = vmatpush1.msra.mxu0 %v4841
        %v4843 = vand.u32 %v4486, 4294901760
        %v4844 = vsub.f32 %v4486, %v4843
        %v4845 = vand.u32 %v4844, 4294901760
        %v4846 = vsub.f32 %v4844, %v4845
        %v4847 = vand.u32 %v4846, 4294901760
        %4848 = vmatprep.subr.mxu0 %v4847
        %v4849 = vand.u32 %v4485, 4294901760
        %v4850 = vsub.f32 %v4485, %v4849
        %v4851 = vand.u32 %v4850, 4294901760
        %v4852 = vsub.f32 %v4850, %v4851
        %v4853 = vand.u32 %v4852, 4294901760
        %4854 = vmatpush1.msra.mxu0 %v4853
        %4855 = vmatprep.subr.mxu0 0.0
        %4856 = vmatpush1.msra.mxu0 0.0
        %4857 = vmatprep.subr.mxu0 0.0
        %4858 = vmatpush1.msra.mxu0 0.0
        %4859 = vmatprep.subr.mxu0 0.0
        %4860 = vmatpush1.msra.mxu0 0.0
        %4861 = vmatprep.subr.mxu0 0.0
        %4862 = vmatpush1.msra.mxu0 0.0
        %4863 = vmatprep.subr.mxu0 0.0
        %4864 = vmatpush1.msra.mxu0 0.0
        %4865 = vmatprep.subr.mxu0 0.0
        %4866 = vmatpush1.msra.mxu0 0.0
        %4867 = vmatprep.subr.mxu0 0.0
        %4868 = vmatpush1.msra.mxu0 0.0
        %4869 = vmatprep.subr.mxu0 0.0
        %4870 = vmatpush1.msra.mxu0 0.0
        %4871 = vmatprep.subr.mxu0 0.0
        %4872 = vmatpush1.msra.mxu0 0.0
        %4873 = vmatprep.subr.mxu0 0.0
        %4874 = vmatpush1.msra.mxu0 0.0
        %4875 = vmatprep.subr.mxu0 0.0
        %4876 = vmatpush1.msra.mxu0 0.0
        %4877 = vmatprep.subr.mxu0 0.0
        %4878 = vmatpush1.msra.mxu0 0.0
        %4879 = vmatprep.subr.mxu0 0.0
        %4880 = vmatpush1.msra.mxu0 0.0
        %4881 = vmatprep.subr.mxu0 0.0
        %4882 = vmatpush1.msra.mxu0 0.0
        %4883 = vmatprep.subr.mxu0 0.0
        %4884 = vmatpush1.msra.mxu0 0.0
        %4885 = vmatprep.subr.mxu0 0.0
        %4886 = vmatpush1.msra.mxu0 0.0
        %4887 = vmatprep.subr.mxu0 0.0
        %4888 = vmatpush1.msra.mxu0 0.0
        %4889 = vmatprep.subr.mxu0 0.0
        %4890 = vmatpush1.msra.mxu0 0.0
        %4891 = vmatprep.subr.mxu0 0.0
        %4892 = vmatpush1.msra.mxu0 0.0
        %4893 = vmatprep.subr.mxu0 0.0
        %4894 = vmatpush1.msra.mxu0 0.0
        %4895 = vmatprep.subr.mxu0 0.0
        %4896 = vmatpush1.msra.mxu0 0.0
        %4897 = vmatprep.subr.mxu0 0.0
        %4898 = vmatpush1.msra.mxu0 0.0
        %4899 = vmatprep.subr.mxu0 0.0
        %4900 = vmatpush1.msra.mxu0 0.0
        %4901 = vmatprep.subr.mxu0 0.0
        %4902 = vmatpush1.msra.mxu0 0.0
        %4903 = vmatprep.subr.mxu0 0.0
        %4904 = vmatpush1.msra.mxu0 0.0
        %4905 = vmatprep.subr.mxu0 0.0
        %4906 = vmatpush1.msra.mxu0 0.0
        %4907 = vmatprep.subr.mxu0 0.0
        %4908 = vmatpush1.msra.mxu0 0.0
        %4909 = vmatprep.subr.mxu0 0.0
        %4910 = vmatpush1.msra.mxu0 0.0
        %4911 = vmatprep.mubr.f32.mxu0 0.0
        %v4912 = vand.u32 %v4511, 4294901760
        %4913 = vmatmul.mubr.f32.gmra.mrb[0].mxu0 %v4912
        %v4914 = vpop.f32.mrb[0].mxu0
        %v4915 = vadd.f32 %v4638, %v4914
        %v4916 = vpop.f32.mrb[0].mxu0
        %v4917 = vadd.f32 %v4640, %v4916
        %4918 = vmatprep.mubr.f32.mxu0 0.0
        %v4919 = vand.u32 %v4514, 4294901760
        %4920 = vmatmul.mubr.f32.gmra.mrb[0].mxu0 %v4919
        %v4921 = vpop.f32.mrb[0].mxu0
        %v4922 = vadd.f32 %v4649, %v4921
        %v4923 = vpop.f32.mrb[0].mxu0
        %v4924 = vadd.f32 %v4651, %v4923
        %4925 = vmatprep.mubr.f32.mxu0 0.0
        %v4926 = vand.u32 %v4517, 4294901760
        %4927 = vmatmul.mubr.f32.gmra.mrb[0].mxu0 %v4926
        %v4928 = vpop.f32.mrb[0].mxu0
        %v4929 = vadd.f32 %v4660, %v4928
        %v4930 = vpop.f32.mrb[0].mxu0
        %v4931 = vadd.f32 %v4662, %v4930
        %4932 = vmatprep.mubr.f32.mxu0 0.0
        %v4933 = vand.u32 %v4520, 4294901760
        %4934 = vmatmul.mubr.f32.gmra.mrb[0].mxu0 %v4933
        %v4935 = vpop.f32.mrb[0].mxu0
        %v4936 = vadd.f32 %v4671, %v4935
        %v4937 = vpop.f32.mrb[0].mxu0
        %v4938 = vadd.f32 %v4673, %v4937
        %4939 = vmatprep.mubr.f32.mxu0 0.0
        %v4940 = vand.u32 %v4523, 4294901760
        %4941 = vmatmul.mubr.f32.gmra.mrb[0].mxu0 %v4940
        %v4942 = vpop.f32.mrb[0].mxu0
        %v4943 = vadd.f32 %v4682, %v4942
        %v4944 = vpop.f32.mrb[0].mxu0
        %v4945 = vadd.f32 %v4684, %v4944
        %4946 = vmatprep.mubr.f32.mxu0 0.0
        %v4947 = vand.u32 %v4526, 4294901760
        %4948 = vmatmul.mubr.f32.gmra.mrb[0].mxu0 %v4947
        %v4949 = vpop.f32.mrb[0].mxu0
        %v4950 = vadd.f32 %v4693, %v4949
        %v4951 = vpop.f32.mrb[0].mxu0
        %v4952 = vadd.f32 %v4695, %v4951
        %4953 = vmatprep.mubr.f32.mxu0 0.0
        %v4954 = vand.u32 %v4529, 4294901760
        %4955 = vmatmul.mubr.f32.gmra.mrb[0].mxu0 %v4954
        %v4956 = vpop.f32.mrb[0].mxu0
        %v4957 = vadd.f32 %v4704, %v4956
        %v4958 = vpop.f32.mrb[0].mxu0
        %v4959 = vadd.f32 %v4706, %v4958
        %4960 = vmatprep.mubr.f32.mxu0 0.0
        %v4961 = vand.u32 %v4532, 4294901760
        %4962 = vmatmul.mubr.f32.gmra.mrb[0].mxu0 %v4961
        %v4963 = vpop.f32.mrb[0].mxu0
        %v4964 = vadd.f32 %v4715, %v4963
        %v4965 = vpop.f32.mrb[0].mxu0
        %v4966 = vadd.f32 %v4717, %v4965
        %4967 = vmatprep.mubr.f32.mxu0 0.0
        %v4968 = vand.u32 %v4535, 4294901760
        %4969 = vmatmul.mubr.f32.gmra.mrb[0].mxu0 %v4968
        %v4970 = vpop.f32.mrb[0].mxu0
        %v4971 = vadd.f32 %v4726, %v4970
        %v4972 = vpop.f32.mrb[0].mxu0
        %v4973 = vadd.f32 %v4728, %v4972
        %4974 = vmatprep.mubr.f32.mxu0 0.0
        %v4975 = vand.u32 %v4538, 4294901760
        %4976 = vmatmul.mubr.f32.gmra.mrb[0].mxu0 %v4975
        %v4977 = vpop.f32.mrb[0].mxu0
        %v4978 = vadd.f32 %v4737, %v4977
        %v4979 = vpop.f32.mrb[0].mxu0
        %v4980 = vadd.f32 %v4739, %v4979
        %4981 = vmatprep.mubr.f32.mxu0 0.0
        %v4982 = vand.u32 %v4541, 4294901760
        %4983 = vmatmul.mubr.f32.gmra.mrb[0].mxu0 %v4982
        %v4984 = vpop.f32.mrb[0].mxu0
        %v4985 = vadd.f32 %v4748, %v4984
        %v4986 = vpop.f32.mrb[0].mxu0
        %v4987 = vadd.f32 %v4750, %v4986
        %4988 = vmatprep.mubr.f32.mxu0 0.0
        %v4989 = vand.u32 %v4544, 4294901760
        %4990 = vmatmul.mubr.f32.gmra.mrb[0].mxu0 %v4989
        %v4991 = vpop.f32.mrb[0].mxu0
        %v4992 = vadd.f32 %v4759, %v4991
        %v4993 = vpop.f32.mrb[0].mxu0
        %v4994 = vadd.f32 %v4761, %v4993
        %4995 = vmatprep.mubr.f32.mxu0 0.0
        %v4996 = vand.u32 %v4547, 4294901760
        %4997 = vmatmul.mubr.f32.gmra.mrb[0].mxu0 %v4996
        %v4998 = vpop.f32.mrb[0].mxu0
        %v4999 = vadd.f32 %v4770, %v4998
        %v5000 = vpop.f32.mrb[0].mxu0
        %v5001 = vadd.f32 %v4772, %v5000
        %5002 = vmatprep.mubr.f32.mxu0 0.0
        %v5003 = vand.u32 %v4550, 4294901760
        %5004 = vmatmul.mubr.f32.gmra.mrb[0].mxu0 %v5003
        %v5005 = vpop.f32.mrb[0].mxu0
        %v5006 = vadd.f32 %v4781, %v5005
        %v5007 = vpop.f32.mrb[0].mxu0
        %v5008 = vadd.f32 %v4783, %v5007
        %5009 = vmatprep.mubr.f32.mxu0 0.0
        %v5010 = vand.u32 %v4553, 4294901760
        %5011 = vmatmul.mubr.f32.gmra.mrb[0].mxu0 %v5010
        %v5012 = vpop.f32.mrb[0].mxu0
        %v5013 = vadd.f32 %v4792, %v5012
        %v5014 = vpop.f32.mrb[0].mxu0
        %v5015 = vadd.f32 %v4794, %v5014
        %5016 = vmatprep.mubr.f32.mxu0 0.0
        %v5017 = vand.u32 %v4556, 4294901760
        %5018 = vmatmul.mubr.f32.gmra.mrb[0].mxu0 %v5017
        %v5019 = vpop.f32.mrb[0].mxu0
        %v5020 = vadd.f32 %v4803, %v5019
        %v5021 = vpop.f32.mrb[0].mxu0
        %v5022 = vadd.f32 %v4805, %v5021
        %5023 = vdwg.mxu0
        %v5024 = vand.u32 %v4462, 4294901760
        %v5025 = vsub.f32 %v4462, %v5024
        %5026 = vmatprep.subr.mxu0 %v5025
        %v5027 = vand.u32 %v4461, 4294901760
        %v5028 = vsub.f32 %v4461, %v5027
        %5029 = vmatpush1.msra.mxu0 %v5028
        %v5030 = vand.u32 %v4470, 4294901760
        %v5031 = vsub.f32 %v4470, %v5030
        %5032 = vmatprep.subr.mxu0 %v5031
        %v5033 = vand.u32 %v4469, 4294901760
        %v5034 = vsub.f32 %v4469, %v5033
        %5035 = vmatpush1.msra.mxu0 %v5034
        %v5036 = vand.u32 %v4478, 4294901760
        %v5037 = vsub.f32 %v4478, %v5036
        %5038 = vmatprep.subr.mxu0 %v5037
        %v5039 = vand.u32 %v4477, 4294901760
        %v5040 = vsub.f32 %v4477, %v5039
        %5041 = vmatpush1.msra.mxu0 %v5040
        %v5042 = vand.u32 %v4486, 4294901760
        %v5043 = vsub.f32 %v4486, %v5042
        %5044 = vmatprep.subr.mxu0 %v5043
        %v5045 = vand.u32 %v4485, 4294901760
        %v5046 = vsub.f32 %v4485, %v5045
        %5047 = vmatpush1.msra.mxu0 %v5046
        %5048 = vmatprep.subr.mxu0 0.0
        %5049 = vmatpush1.msra.mxu0 0.0
        %5050 = vmatprep.subr.mxu0 0.0
        %5051 = vmatpush1.msra.mxu0 0.0
        %5052 = vmatprep.subr.mxu0 0.0
        %5053 = vmatpush1.msra.mxu0 0.0
        %5054 = vmatprep.subr.mxu0 0.0
        %5055 = vmatpush1.msra.mxu0 0.0
        %5056 = vmatprep.subr.mxu0 0.0
        %5057 = vmatpush1.msra.mxu0 0.0
        %5058 = vmatprep.subr.mxu0 0.0
        %5059 = vmatpush1.msra.mxu0 0.0
        %5060 = vmatprep.subr.mxu0 0.0
        %5061 = vmatpush1.msra.mxu0 0.0
        %5062 = vmatprep.subr.mxu0 0.0
        %5063 = vmatpush1.msra.mxu0 0.0
        %5064 = vmatprep.subr.mxu0 0.0
        %5065 = vmatpush1.msra.mxu0 0.0
        %5066 = vmatprep.subr.mxu0 0.0
        %5067 = vmatpush1.msra.mxu0 0.0
        %5068 = vmatprep.subr.mxu0 0.0
        %5069 = vmatpush1.msra.mxu0 0.0
        %5070 = vmatprep.subr.mxu0 0.0
        %5071 = vmatpush1.msra.mxu0 0.0
        %5072 = vmatprep.subr.mxu0 0.0
        %5073 = vmatpush1.msra.mxu0 0.0
        %5074 = vmatprep.subr.mxu0 0.0
        %5075 = vmatpush1.msra.mxu0 0.0
        %5076 = vmatprep.subr.mxu0 0.0
        %5077 = vmatpush1.msra.mxu0 0.0
        %5078 = vmatprep.subr.mxu0 0.0
        %5079 = vmatpush1.msra.mxu0 0.0
        %5080 = vmatprep.subr.mxu0 0.0
        %5081 = vmatpush1.msra.mxu0 0.0
        %5082 = vmatprep.subr.mxu0 0.0
        %5083 = vmatpush1.msra.mxu0 0.0
        %5084 = vmatprep.subr.mxu0 0.0
        %5085 = vmatpush1.msra.mxu0 0.0
        %5086 = vmatprep.subr.mxu0 0.0
        %5087 = vmatpush1.msra.mxu0 0.0
        %5088 = vmatprep.subr.mxu0 0.0
        %5089 = vmatpush1.msra.mxu0 0.0
        %5090 = vmatprep.subr.mxu0 0.0
        %5091 = vmatpush1.msra.mxu0 0.0
        %5092 = vmatprep.subr.mxu0 0.0
        %5093 = vmatpush1.msra.mxu0 0.0
        %5094 = vmatprep.subr.mxu0 0.0
        %5095 = vmatpush1.msra.mxu0 0.0
        %5096 = vmatprep.subr.mxu0 0.0
        %5097 = vmatpush1.msra.mxu0 0.0
        %5098 = vmatprep.subr.mxu0 0.0
        %5099 = vmatpush1.msra.mxu0 0.0
        %5100 = vmatprep.subr.mxu0 0.0
        %5101 = vmatpush1.msra.mxu0 0.0
        %5102 = vmatprep.subr.mxu0 0.0
        %5103 = vmatpush1.msra.mxu0 0.0
        %5104 = vmatprep.mubr.f32.mxu0 0.0
        %v5105 = vand.u32 %v4511, 4294901760
        %v5106 = vsub.f32 %v4511, %v5105
        %5107 = vmatmul.mubr.f32.gmra.mrb[0].mxu0 %v5106
        %v5108 = vpop.f32.mrb[0].mxu0
        %v5109 = vadd.f32 %v4915, %v5108
        %v5110 = vpop.f32.mrb[0].mxu0
        %v5111 = vadd.f32 %v4917, %v5110
        %5112 = vmatprep.mubr.f32.mxu0 0.0
        %v5113 = vand.u32 %v4514, 4294901760
        %v5114 = vsub.f32 %v4514, %v5113
        %5115 = vmatmul.mubr.f32.gmra.mrb[0].mxu0 %v5114
        %v5116 = vpop.f32.mrb[0].mxu0
        %v5117 = vadd.f32 %v4922, %v5116
        %v5118 = vpop.f32.mrb[0].mxu0
        %v5119 = vadd.f32 %v4924, %v5118
        %5120 = vmatprep.mubr.f32.mxu0 0.0
        %v5121 = vand.u32 %v4517, 4294901760
        %v5122 = vsub.f32 %v4517, %v5121
        %5123 = vmatmul.mubr.f32.gmra.mrb[0].mxu0 %v5122
        %v5124 = vpop.f32.mrb[0].mxu0
        %v5125 = vadd.f32 %v4929, %v5124
        %v5126 = vpop.f32.mrb[0].mxu0
        %v5127 = vadd.f32 %v4931, %v5126
        %5128 = vmatprep.mubr.f32.mxu0 0.0
        %v5129 = vand.u32 %v4520, 4294901760
        %v5130 = vsub.f32 %v4520, %v5129
        %5131 = vmatmul.mubr.f32.gmra.mrb[0].mxu0 %v5130
        %v5132 = vpop.f32.mrb[0].mxu0
        %v5133 = vadd.f32 %v4936, %v5132
        %v5134 = vpop.f32.mrb[0].mxu0
        %v5135 = vadd.f32 %v4938, %v5134
        %5136 = vmatprep.mubr.f32.mxu0 0.0
        %v5137 = vand.u32 %v4523, 4294901760
        %v5138 = vsub.f32 %v4523, %v5137
        %5139 = vmatmul.mubr.f32.gmra.mrb[0].mxu0 %v5138
        %v5140 = vpop.f32.mrb[0].mxu0
        %v5141 = vadd.f32 %v4943, %v5140
        %v5142 = vpop.f32.mrb[0].mxu0
        %v5143 = vadd.f32 %v4945, %v5142
        %5144 = vmatprep.mubr.f32.mxu0 0.0
        %v5145 = vand.u32 %v4526, 4294901760
        %v5146 = vsub.f32 %v4526, %v5145
        %5147 = vmatmul.mubr.f32.gmra.mrb[0].mxu0 %v5146
        %v5148 = vpop.f32.mrb[0].mxu0
        %v5149 = vadd.f32 %v4950, %v5148
        %v5150 = vpop.f32.mrb[0].mxu0
        %v5151 = vadd.f32 %v4952, %v5150
        %5152 = vmatprep.mubr.f32.mxu0 0.0
        %v5153 = vand.u32 %v4529, 4294901760
        %v5154 = vsub.f32 %v4529, %v5153
        %5155 = vmatmul.mubr.f32.gmra.mrb[0].mxu0 %v5154
        %v5156 = vpop.f32.mrb[0].mxu0
        %v5157 = vadd.f32 %v4957, %v5156
        %v5158 = vpop.f32.mrb[0].mxu0
        %v5159 = vadd.f32 %v4959, %v5158
        %5160 = vmatprep.mubr.f32.mxu0 0.0
        %v5161 = vand.u32 %v4532, 4294901760
        %v5162 = vsub.f32 %v4532, %v5161
        %5163 = vmatmul.mubr.f32.gmra.mrb[0].mxu0 %v5162
        %v5164 = vpop.f32.mrb[0].mxu0
        %v5165 = vadd.f32 %v4964, %v5164
        %v5166 = vpop.f32.mrb[0].mxu0
        %v5167 = vadd.f32 %v4966, %v5166
        %5168 = vmatprep.mubr.f32.mxu0 0.0
        %v5169 = vand.u32 %v4535, 4294901760
        %v5170 = vsub.f32 %v4535, %v5169
        %5171 = vmatmul.mubr.f32.gmra.mrb[0].mxu0 %v5170
        %v5172 = vpop.f32.mrb[0].mxu0
        %v5173 = vadd.f32 %v4971, %v5172
        %v5174 = vpop.f32.mrb[0].mxu0
        %v5175 = vadd.f32 %v4973, %v5174
        %5176 = vmatprep.mubr.f32.mxu0 0.0
        %v5177 = vand.u32 %v4538, 4294901760
        %v5178 = vsub.f32 %v4538, %v5177
        %5179 = vmatmul.mubr.f32.gmra.mrb[0].mxu0 %v5178
        %v5180 = vpop.f32.mrb[0].mxu0
        %v5181 = vadd.f32 %v4978, %v5180
        %v5182 = vpop.f32.mrb[0].mxu0
        %v5183 = vadd.f32 %v4980, %v5182
        %5184 = vmatprep.mubr.f32.mxu0 0.0
        %v5185 = vand.u32 %v4541, 4294901760
        %v5186 = vsub.f32 %v4541, %v5185
        %5187 = vmatmul.mubr.f32.gmra.mrb[0].mxu0 %v5186
        %v5188 = vpop.f32.mrb[0].mxu0
        %v5189 = vadd.f32 %v4985, %v5188
        %v5190 = vpop.f32.mrb[0].mxu0
        %v5191 = vadd.f32 %v4987, %v5190
        %5192 = vmatprep.mubr.f32.mxu0 0.0
        %v5193 = vand.u32 %v4544, 4294901760
        %v5194 = vsub.f32 %v4544, %v5193
        %5195 = vmatmul.mubr.f32.gmra.mrb[0].mxu0 %v5194
        %v5196 = vpop.f32.mrb[0].mxu0
        %v5197 = vadd.f32 %v4992, %v5196
        %v5198 = vpop.f32.mrb[0].mxu0
        %v5199 = vadd.f32 %v4994, %v5198
        %5200 = vmatprep.mubr.f32.mxu0 0.0
        %v5201 = vand.u32 %v4547, 4294901760
        %v5202 = vsub.f32 %v4547, %v5201
        %5203 = vmatmul.mubr.f32.gmra.mrb[0].mxu0 %v5202
        %v5204 = vpop.f32.mrb[0].mxu0
        %v5205 = vadd.f32 %v4999, %v5204
        %v5206 = vpop.f32.mrb[0].mxu0
        %v5207 = vadd.f32 %v5001, %v5206
        %5208 = vmatprep.mubr.f32.mxu0 0.0
        %v5209 = vand.u32 %v4550, 4294901760
        %v5210 = vsub.f32 %v4550, %v5209
        %5211 = vmatmul.mubr.f32.gmra.mrb[0].mxu0 %v5210
        %v5212 = vpop.f32.mrb[0].mxu0
        %v5213 = vadd.f32 %v5006, %v5212
        %v5214 = vpop.f32.mrb[0].mxu0
        %v5215 = vadd.f32 %v5008, %v5214
        %5216 = vmatprep.mubr.f32.mxu0 0.0
        %v5217 = vand.u32 %v4553, 4294901760
        %v5218 = vsub.f32 %v4553, %v5217
        %5219 = vmatmul.mubr.f32.gmra.mrb[0].mxu0 %v5218
        %v5220 = vpop.f32.mrb[0].mxu0
        %v5221 = vadd.f32 %v5013, %v5220
        %v5222 = vpop.f32.mrb[0].mxu0
        %v5223 = vadd.f32 %v5015, %v5222
        %5224 = vmatprep.mubr.f32.mxu0 0.0
        %v5225 = vand.u32 %v4556, 4294901760
        %v5226 = vsub.f32 %v4556, %v5225
        %5227 = vmatmul.mubr.f32.gmra.mrb[0].mxu0 %v5226
        %v5228 = vpop.f32.mrb[0].mxu0
        %v5229 = vadd.f32 %v5020, %v5228
        %v5230 = vpop.f32.mrb[0].mxu0
        %v5231 = vadd.f32 %v5022, %v5230
        %5232 = vdwg.mxu0
        %v5233 = vand.u32 %v4462, 4294901760
        %5234 = vmatprep.subr.mxu0 %v5233
        %v5235 = vand.u32 %v4461, 4294901760
        %5236 = vmatpush1.msra.mxu0 %v5235
        %v5237 = vand.u32 %v4470, 4294901760
        %5238 = vmatprep.subr.mxu0 %v5237
        %v5239 = vand.u32 %v4469, 4294901760
        %5240 = vmatpush1.msra.mxu0 %v5239
        %v5241 = vand.u32 %v4478, 4294901760
        %5242 = vmatprep.subr.mxu0 %v5241
        %v5243 = vand.u32 %v4477, 4294901760
        %5244 = vmatpush1.msra.mxu0 %v5243
        %v5245 = vand.u32 %v4486, 4294901760
        %5246 = vmatprep.subr.mxu0 %v5245
        %v5247 = vand.u32 %v4485, 4294901760
        %5248 = vmatpush1.msra.mxu0 %v5247
        %5249 = vmatprep.subr.mxu0 0.0
        %5250 = vmatpush1.msra.mxu0 0.0
        %5251 = vmatprep.subr.mxu0 0.0
        %5252 = vmatpush1.msra.mxu0 0.0
        %5253 = vmatprep.subr.mxu0 0.0
        %5254 = vmatpush1.msra.mxu0 0.0
        %5255 = vmatprep.subr.mxu0 0.0
        %5256 = vmatpush1.msra.mxu0 0.0
        %5257 = vmatprep.subr.mxu0 0.0
        %5258 = vmatpush1.msra.mxu0 0.0
        %5259 = vmatprep.subr.mxu0 0.0
        %5260 = vmatpush1.msra.mxu0 0.0
        %5261 = vmatprep.subr.mxu0 0.0
        %5262 = vmatpush1.msra.mxu0 0.0
        %5263 = vmatprep.subr.mxu0 0.0
        %5264 = vmatpush1.msra.mxu0 0.0
        %5265 = vmatprep.subr.mxu0 0.0
        %5266 = vmatpush1.msra.mxu0 0.0
        %5267 = vmatprep.subr.mxu0 0.0
        %5268 = vmatpush1.msra.mxu0 0.0
        %5269 = vmatprep.subr.mxu0 0.0
        %5270 = vmatpush1.msra.mxu0 0.0
        %5271 = vmatprep.subr.mxu0 0.0
        %5272 = vmatpush1.msra.mxu0 0.0
        %5273 = vmatprep.subr.mxu0 0.0
        %5274 = vmatpush1.msra.mxu0 0.0
        %5275 = vmatprep.subr.mxu0 0.0
        %5276 = vmatpush1.msra.mxu0 0.0
        %5277 = vmatprep.subr.mxu0 0.0
        %5278 = vmatpush1.msra.mxu0 0.0
        %5279 = vmatprep.subr.mxu0 0.0
        %5280 = vmatpush1.msra.mxu0 0.0
        %5281 = vmatprep.subr.mxu0 0.0
        %5282 = vmatpush1.msra.mxu0 0.0
        %5283 = vmatprep.subr.mxu0 0.0
        %5284 = vmatpush1.msra.mxu0 0.0
        %5285 = vmatprep.subr.mxu0 0.0
        %5286 = vmatpush1.msra.mxu0 0.0
        %5287 = vmatprep.subr.mxu0 0.0
        %5288 = vmatpush1.msra.mxu0 0.0
        %5289 = vmatprep.subr.mxu0 0.0
        %5290 = vmatpush1.msra.mxu0 0.0
        %5291 = vmatprep.subr.mxu0 0.0
        %5292 = vmatpush1.msra.mxu0 0.0
        %5293 = vmatprep.subr.mxu0 0.0
        %5294 = vmatpush1.msra.mxu0 0.0
        %5295 = vmatprep.subr.mxu0 0.0
        %5296 = vmatpush1.msra.mxu0 0.0
        %5297 = vmatprep.subr.mxu0 0.0
        %5298 = vmatpush1.msra.mxu0 0.0
        %5299 = vmatprep.subr.mxu0 0.0
        %5300 = vmatpush1.msra.mxu0 0.0
        %5301 = vmatprep.subr.mxu0 0.0
        %5302 = vmatpush1.msra.mxu0 0.0
        %5303 = vmatprep.subr.mxu0 0.0
        %5304 = vmatpush1.msra.mxu0 0.0
        %5305 = vmatprep.mubr.f32.mxu0 0.0
        %v5306 = vand.u32 %v4511, 4294901760
        %v5307 = vsub.f32 %v4511, %v5306
        %v5308 = vand.u32 %v5307, 4294901760
        %5309 = vmatmul.mubr.f32.gmra.mrb[0].mxu0 %v5308
        %v5310 = vpop.f32.mrb[0].mxu0
        %v5311 = vadd.f32 %v5109, %v5310
        %v5312 = vpop.f32.mrb[0].mxu0
        %v5313 = vadd.f32 %v5111, %v5312
        %5314 = vmatprep.mubr.f32.mxu0 0.0
        %v5315 = vand.u32 %v4514, 4294901760
        %v5316 = vsub.f32 %v4514, %v5315
        %v5317 = vand.u32 %v5316, 4294901760
        %5318 = vmatmul.mubr.f32.gmra.mrb[0].mxu0 %v5317
        %v5319 = vpop.f32.mrb[0].mxu0
        %v5320 = vadd.f32 %v5117, %v5319
        %v5321 = vpop.f32.mrb[0].mxu0
        %v5322 = vadd.f32 %v5119, %v5321
        %5323 = vmatprep.mubr.f32.mxu0 0.0
        %v5324 = vand.u32 %v4517, 4294901760
        %v5325 = vsub.f32 %v4517, %v5324
        %v5326 = vand.u32 %v5325, 4294901760
        %5327 = vmatmul.mubr.f32.gmra.mrb[0].mxu0 %v5326
        %v5328 = vpop.f32.mrb[0].mxu0
        %v5329 = vadd.f32 %v5125, %v5328
        %v5330 = vpop.f32.mrb[0].mxu0
        %v5331 = vadd.f32 %v5127, %v5330
        %5332 = vmatprep.mubr.f32.mxu0 0.0
        %v5333 = vand.u32 %v4520, 4294901760
        %v5334 = vsub.f32 %v4520, %v5333
        %v5335 = vand.u32 %v5334, 4294901760
        %5336 = vmatmul.mubr.f32.gmra.mrb[0].mxu0 %v5335
        %v5337 = vpop.f32.mrb[0].mxu0
        %v5338 = vadd.f32 %v5133, %v5337
        %v5339 = vpop.f32.mrb[0].mxu0
        %v5340 = vadd.f32 %v5135, %v5339
        %5341 = vmatprep.mubr.f32.mxu0 0.0
        %v5342 = vand.u32 %v4523, 4294901760
        %v5343 = vsub.f32 %v4523, %v5342
        %v5344 = vand.u32 %v5343, 4294901760
        %5345 = vmatmul.mubr.f32.gmra.mrb[0].mxu0 %v5344
        %v5346 = vpop.f32.mrb[0].mxu0
        %v5347 = vadd.f32 %v5141, %v5346
        %v5348 = vpop.f32.mrb[0].mxu0
        %v5349 = vadd.f32 %v5143, %v5348
        %5350 = vmatprep.mubr.f32.mxu0 0.0
        %v5351 = vand.u32 %v4526, 4294901760
        %v5352 = vsub.f32 %v4526, %v5351
        %v5353 = vand.u32 %v5352, 4294901760
        %5354 = vmatmul.mubr.f32.gmra.mrb[0].mxu0 %v5353
        %v5355 = vpop.f32.mrb[0].mxu0
        %v5356 = vadd.f32 %v5149, %v5355
        %v5357 = vpop.f32.mrb[0].mxu0
        %v5358 = vadd.f32 %v5151, %v5357
        %5359 = vmatprep.mubr.f32.mxu0 0.0
        %v5360 = vand.u32 %v4529, 4294901760
        %v5361 = vsub.f32 %v4529, %v5360
        %v5362 = vand.u32 %v5361, 4294901760
        %5363 = vmatmul.mubr.f32.gmra.mrb[0].mxu0 %v5362
        %v5364 = vpop.f32.mrb[0].mxu0
        %v5365 = vadd.f32 %v5157, %v5364
        %v5366 = vpop.f32.mrb[0].mxu0
        %v5367 = vadd.f32 %v5159, %v5366
        %5368 = vmatprep.mubr.f32.mxu0 0.0
        %v5369 = vand.u32 %v4532, 4294901760
        %v5370 = vsub.f32 %v4532, %v5369
        %v5371 = vand.u32 %v5370, 4294901760
        %5372 = vmatmul.mubr.f32.gmra.mrb[0].mxu0 %v5371
        %v5373 = vpop.f32.mrb[0].mxu0
        %v5374 = vadd.f32 %v5165, %v5373
        %v5375 = vpop.f32.mrb[0].mxu0
        %v5376 = vadd.f32 %v5167, %v5375
        %5377 = vmatprep.mubr.f32.mxu0 0.0
        %v5378 = vand.u32 %v4535, 4294901760
        %v5379 = vsub.f32 %v4535, %v5378
        %v5380 = vand.u32 %v5379, 4294901760
        %5381 = vmatmul.mubr.f32.gmra.mrb[0].mxu0 %v5380
        %v5382 = vpop.f32.mrb[0].mxu0
        %v5383 = vadd.f32 %v5173, %v5382
        %v5384 = vpop.f32.mrb[0].mxu0
        %v5385 = vadd.f32 %v5175, %v5384
        %5386 = vmatprep.mubr.f32.mxu0 0.0
        %v5387 = vand.u32 %v4538, 4294901760
        %v5388 = vsub.f32 %v4538, %v5387
        %v5389 = vand.u32 %v5388, 4294901760
        %5390 = vmatmul.mubr.f32.gmra.mrb[0].mxu0 %v5389
        %v5391 = vpop.f32.mrb[0].mxu0
        %v5392 = vadd.f32 %v5181, %v5391
        %v5393 = vpop.f32.mrb[0].mxu0
        %v5394 = vadd.f32 %v5183, %v5393
        %5395 = vmatprep.mubr.f32.mxu0 0.0
        %v5396 = vand.u32 %v4541, 4294901760
        %v5397 = vsub.f32 %v4541, %v5396
        %v5398 = vand.u32 %v5397, 4294901760
        %5399 = vmatmul.mubr.f32.gmra.mrb[0].mxu0 %v5398
        %v5400 = vpop.f32.mrb[0].mxu0
        %v5401 = vadd.f32 %v5189, %v5400
        %v5402 = vpop.f32.mrb[0].mxu0
        %v5403 = vadd.f32 %v5191, %v5402
        %5404 = vmatprep.mubr.f32.mxu0 0.0
        %v5405 = vand.u32 %v4544, 4294901760
        %v5406 = vsub.f32 %v4544, %v5405
        %v5407 = vand.u32 %v5406, 4294901760
        %5408 = vmatmul.mubr.f32.gmra.mrb[0].mxu0 %v5407
        %v5409 = vpop.f32.mrb[0].mxu0
        %v5410 = vadd.f32 %v5197, %v5409
        %v5411 = vpop.f32.mrb[0].mxu0
        %v5412 = vadd.f32 %v5199, %v5411
        %5413 = vmatprep.mubr.f32.mxu0 0.0
        %v5414 = vand.u32 %v4547, 4294901760
        %v5415 = vsub.f32 %v4547, %v5414
        %v5416 = vand.u32 %v5415, 4294901760
        %5417 = vmatmul.mubr.f32.gmra.mrb[0].mxu0 %v5416
        %v5418 = vpop.f32.mrb[0].mxu0
        %v5419 = vadd.f32 %v5205, %v5418
        %v5420 = vpop.f32.mrb[0].mxu0
        %v5421 = vadd.f32 %v5207, %v5420
        %5422 = vmatprep.mubr.f32.mxu0 0.0
        %v5423 = vand.u32 %v4550, 4294901760
        %v5424 = vsub.f32 %v4550, %v5423
        %v5425 = vand.u32 %v5424, 4294901760
        %5426 = vmatmul.mubr.f32.gmra.mrb[0].mxu0 %v5425
        %v5427 = vpop.f32.mrb[0].mxu0
        %v5428 = vadd.f32 %v5213, %v5427
        %v5429 = vpop.f32.mrb[0].mxu0
        %v5430 = vadd.f32 %v5215, %v5429
        %5431 = vmatprep.mubr.f32.mxu0 0.0
        %v5432 = vand.u32 %v4553, 4294901760
        %v5433 = vsub.f32 %v4553, %v5432
        %v5434 = vand.u32 %v5433, 4294901760
        %5435 = vmatmul.mubr.f32.gmra.mrb[0].mxu0 %v5434
        %v5436 = vpop.f32.mrb[0].mxu0
        %v5437 = vadd.f32 %v5221, %v5436
        %v5438 = vpop.f32.mrb[0].mxu0
        %v5439 = vadd.f32 %v5223, %v5438
        %5440 = vmatprep.mubr.f32.mxu0 0.0
        %v5441 = vand.u32 %v4556, 4294901760
        %v5442 = vsub.f32 %v4556, %v5441
        %v5443 = vand.u32 %v5442, 4294901760
        %5444 = vmatmul.mubr.f32.gmra.mrb[0].mxu0 %v5443
        %v5445 = vpop.f32.mrb[0].mxu0
        %v5446 = vadd.f32 %v5229, %v5445
        %v5447 = vpop.f32.mrb[0].mxu0
        %v5448 = vadd.f32 %v5231, %v5447
        %5449 = vdwg.mxu0
        %v5450 = vand.u32 %v4462, 4294901760
        %v5451 = vsub.f32 %v4462, %v5450
        %v5452 = vand.u32 %v5451, 4294901760
        %5453 = vmatprep.subr.mxu0 %v5452
        %v5454 = vand.u32 %v4461, 4294901760
        %v5455 = vsub.f32 %v4461, %v5454
        %v5456 = vand.u32 %v5455, 4294901760
        %5457 = vmatpush1.msra.mxu0 %v5456
        %v5458 = vand.u32 %v4470, 4294901760
        %v5459 = vsub.f32 %v4470, %v5458
        %v5460 = vand.u32 %v5459, 4294901760
        %5461 = vmatprep.subr.mxu0 %v5460
        %v5462 = vand.u32 %v4469, 4294901760
        %v5463 = vsub.f32 %v4469, %v5462
        %v5464 = vand.u32 %v5463, 4294901760
        %5465 = vmatpush1.msra.mxu0 %v5464
        %v5466 = vand.u32 %v4478, 4294901760
        %v5467 = vsub.f32 %v4478, %v5466
        %v5468 = vand.u32 %v5467, 4294901760
        %5469 = vmatprep.subr.mxu0 %v5468
        %v5470 = vand.u32 %v4477, 4294901760
        %v5471 = vsub.f32 %v4477, %v5470
        %v5472 = vand.u32 %v5471, 4294901760
        %5473 = vmatpush1.msra.mxu0 %v5472
        %v5474 = vand.u32 %v4486, 4294901760
        %v5475 = vsub.f32 %v4486, %v5474
        %v5476 = vand.u32 %v5475, 4294901760
        %5477 = vmatprep.subr.mxu0 %v5476
        %v5478 = vand.u32 %v4485, 4294901760
        %v5479 = vsub.f32 %v4485, %v5478
        %v5480 = vand.u32 %v5479, 4294901760
        %5481 = vmatpush1.msra.mxu0 %v5480
        %5482 = vmatprep.subr.mxu0 0.0
        %5483 = vmatpush1.msra.mxu0 0.0
        %5484 = vmatprep.subr.mxu0 0.0
        %5485 = vmatpush1.msra.mxu0 0.0
        %5486 = vmatprep.subr.mxu0 0.0
        %5487 = vmatpush1.msra.mxu0 0.0
        %5488 = vmatprep.subr.mxu0 0.0
        %5489 = vmatpush1.msra.mxu0 0.0
        %5490 = vmatprep.subr.mxu0 0.0
        %5491 = vmatpush1.msra.mxu0 0.0
        %5492 = vmatprep.subr.mxu0 0.0
        %5493 = vmatpush1.msra.mxu0 0.0
        %5494 = vmatprep.subr.mxu0 0.0
        %5495 = vmatpush1.msra.mxu0 0.0
        %5496 = vmatprep.subr.mxu0 0.0
        %5497 = vmatpush1.msra.mxu0 0.0
        %5498 = vmatprep.subr.mxu0 0.0
        %5499 = vmatpush1.msra.mxu0 0.0
        %5500 = vmatprep.subr.mxu0 0.0
        %5501 = vmatpush1.msra.mxu0 0.0
        %5502 = vmatprep.subr.mxu0 0.0
        %5503 = vmatpush1.msra.mxu0 0.0
        %5504 = vmatprep.subr.mxu0 0.0
        %5505 = vmatpush1.msra.mxu0 0.0
        %5506 = vmatprep.subr.mxu0 0.0
        %5507 = vmatpush1.msra.mxu0 0.0
        %5508 = vmatprep.subr.mxu0 0.0
        %5509 = vmatpush1.msra.mxu0 0.0
        %5510 = vmatprep.subr.mxu0 0.0
        %5511 = vmatpush1.msra.mxu0 0.0
        %5512 = vmatprep.subr.mxu0 0.0
        %5513 = vmatpush1.msra.mxu0 0.0
        %5514 = vmatprep.subr.mxu0 0.0
        %5515 = vmatpush1.msra.mxu0 0.0
        %5516 = vmatprep.subr.mxu0 0.0
        %5517 = vmatpush1.msra.mxu0 0.0
        %5518 = vmatprep.subr.mxu0 0.0
        %5519 = vmatpush1.msra.mxu0 0.0
        %5520 = vmatprep.subr.mxu0 0.0
        %5521 = vmatpush1.msra.mxu0 0.0
        %5522 = vmatprep.subr.mxu0 0.0
        %5523 = vmatpush1.msra.mxu0 0.0
        %5524 = vmatprep.subr.mxu0 0.0
        %5525 = vmatpush1.msra.mxu0 0.0
        %5526 = vmatprep.subr.mxu0 0.0
        %5527 = vmatpush1.msra.mxu0 0.0
        %5528 = vmatprep.subr.mxu0 0.0
        %5529 = vmatpush1.msra.mxu0 0.0
        %5530 = vmatprep.subr.mxu0 0.0
        %5531 = vmatpush1.msra.mxu0 0.0
        %5532 = vmatprep.subr.mxu0 0.0
        %5533 = vmatpush1.msra.mxu0 0.0
        %5534 = vmatprep.subr.mxu0 0.0
        %5535 = vmatpush1.msra.mxu0 0.0
        %5536 = vmatprep.subr.mxu0 0.0
        %5537 = vmatpush1.msra.mxu0 0.0
        %5538 = vmatprep.mubr.f32.mxu0 0.0
        %v5539 = vand.u32 %v4511, 4294901760
        %5540 = vmatmul.mubr.f32.gmra.mrb[0].mxu0 %v5539
        %v5541 = vpop.f32.mrb[0].mxu0
        %v5542 = vadd.f32 %v5311, %v5541
        %v5543 = vpop.f32.mrb[0].mxu0
        %v5544 = vadd.f32 %v5313, %v5543
        %5545 = vmatprep.mubr.f32.mxu0 0.0
        %v5546 = vand.u32 %v4514, 4294901760
        %5547 = vmatmul.mubr.f32.gmra.mrb[0].mxu0 %v5546
        %v5548 = vpop.f32.mrb[0].mxu0
        %v5549 = vadd.f32 %v5320, %v5548
        %v5550 = vpop.f32.mrb[0].mxu0
        %v5551 = vadd.f32 %v5322, %v5550
        %5552 = vmatprep.mubr.f32.mxu0 0.0
        %v5553 = vand.u32 %v4517, 4294901760
        %5554 = vmatmul.mubr.f32.gmra.mrb[0].mxu0 %v5553
        %v5555 = vpop.f32.mrb[0].mxu0
        %v5556 = vadd.f32 %v5329, %v5555
        %v5557 = vpop.f32.mrb[0].mxu0
        %v5558 = vadd.f32 %v5331, %v5557
        %5559 = vmatprep.mubr.f32.mxu0 0.0
        %v5560 = vand.u32 %v4520, 4294901760
        %5561 = vmatmul.mubr.f32.gmra.mrb[0].mxu0 %v5560
        %v5562 = vpop.f32.mrb[0].mxu0
        %v5563 = vadd.f32 %v5338, %v5562
        %v5564 = vpop.f32.mrb[0].mxu0
        %v5565 = vadd.f32 %v5340, %v5564
        %5566 = vmatprep.mubr.f32.mxu0 0.0
        %v5567 = vand.u32 %v4523, 4294901760
        %5568 = vmatmul.mubr.f32.gmra.mrb[0].mxu0 %v5567
        %v5569 = vpop.f32.mrb[0].mxu0
        %v5570 = vadd.f32 %v5347, %v5569
        %v5571 = vpop.f32.mrb[0].mxu0
        %v5572 = vadd.f32 %v5349, %v5571
        %5573 = vmatprep.mubr.f32.mxu0 0.0
        %v5574 = vand.u32 %v4526, 4294901760
        %5575 = vmatmul.mubr.f32.gmra.mrb[0].mxu0 %v5574
        %v5576 = vpop.f32.mrb[0].mxu0
        %v5577 = vadd.f32 %v5356, %v5576
        %v5578 = vpop.f32.mrb[0].mxu0
        %v5579 = vadd.f32 %v5358, %v5578
        %5580 = vmatprep.mubr.f32.mxu0 0.0
        %v5581 = vand.u32 %v4529, 4294901760
        %5582 = vmatmul.mubr.f32.gmra.mrb[0].mxu0 %v5581
        %v5583 = vpop.f32.mrb[0].mxu0
        %v5584 = vadd.f32 %v5365, %v5583
        %v5585 = vpop.f32.mrb[0].mxu0
        %v5586 = vadd.f32 %v5367, %v5585
        %5587 = vmatprep.mubr.f32.mxu0 0.0
        %v5588 = vand.u32 %v4532, 4294901760
        %5589 = vmatmul.mubr.f32.gmra.mrb[0].mxu0 %v5588
        %v5590 = vpop.f32.mrb[0].mxu0
        %v5591 = vadd.f32 %v5374, %v5590
        %v5592 = vpop.f32.mrb[0].mxu0
        %v5593 = vadd.f32 %v5376, %v5592
        %5594 = vmatprep.mubr.f32.mxu0 0.0
        %v5595 = vand.u32 %v4535, 4294901760
        %5596 = vmatmul.mubr.f32.gmra.mrb[0].mxu0 %v5595
        %v5597 = vpop.f32.mrb[0].mxu0
        %v5598 = vadd.f32 %v5383, %v5597
        %v5599 = vpop.f32.mrb[0].mxu0
        %v5600 = vadd.f32 %v5385, %v5599
        %5601 = vmatprep.mubr.f32.mxu0 0.0
        %v5602 = vand.u32 %v4538, 4294901760
        %5603 = vmatmul.mubr.f32.gmra.mrb[0].mxu0 %v5602
        %v5604 = vpop.f32.mrb[0].mxu0
        %v5605 = vadd.f32 %v5392, %v5604
        %v5606 = vpop.f32.mrb[0].mxu0
        %v5607 = vadd.f32 %v5394, %v5606
        %5608 = vmatprep.mubr.f32.mxu0 0.0
        %v5609 = vand.u32 %v4541, 4294901760
        %5610 = vmatmul.mubr.f32.gmra.mrb[0].mxu0 %v5609
        %v5611 = vpop.f32.mrb[0].mxu0
        %v5612 = vadd.f32 %v5401, %v5611
        %v5613 = vpop.f32.mrb[0].mxu0
        %v5614 = vadd.f32 %v5403, %v5613
        %5615 = vmatprep.mubr.f32.mxu0 0.0
        %v5616 = vand.u32 %v4544, 4294901760
        %5617 = vmatmul.mubr.f32.gmra.mrb[0].mxu0 %v5616
        %v5618 = vpop.f32.mrb[0].mxu0
        %v5619 = vadd.f32 %v5410, %v5618
        %v5620 = vpop.f32.mrb[0].mxu0
        %v5621 = vadd.f32 %v5412, %v5620
        %5622 = vmatprep.mubr.f32.mxu0 0.0
        %v5623 = vand.u32 %v4547, 4294901760
        %5624 = vmatmul.mubr.f32.gmra.mrb[0].mxu0 %v5623
        %v5625 = vpop.f32.mrb[0].mxu0
        %v5626 = vadd.f32 %v5419, %v5625
        %v5627 = vpop.f32.mrb[0].mxu0
        %v5628 = vadd.f32 %v5421, %v5627
        %5629 = vmatprep.mubr.f32.mxu0 0.0
        %v5630 = vand.u32 %v4550, 4294901760
        %5631 = vmatmul.mubr.f32.gmra.mrb[0].mxu0 %v5630
        %v5632 = vpop.f32.mrb[0].mxu0
        %v5633 = vadd.f32 %v5428, %v5632
        %v5634 = vpop.f32.mrb[0].mxu0
        %v5635 = vadd.f32 %v5430, %v5634
        %5636 = vmatprep.mubr.f32.mxu0 0.0
        %v5637 = vand.u32 %v4553, 4294901760
        %5638 = vmatmul.mubr.f32.gmra.mrb[0].mxu0 %v5637
        %v5639 = vpop.f32.mrb[0].mxu0
        %v5640 = vadd.f32 %v5437, %v5639
        %v5641 = vpop.f32.mrb[0].mxu0
        %v5642 = vadd.f32 %v5439, %v5641
        %5643 = vmatprep.mubr.f32.mxu0 0.0
        %v5644 = vand.u32 %v4556, 4294901760
        %5645 = vmatmul.mubr.f32.gmra.mrb[0].mxu0 %v5644
        %v5646 = vpop.f32.mrb[0].mxu0
        %v5647 = vadd.f32 %v5446, %v5646
        %v5648 = vpop.f32.mrb[0].mxu0
        %v5649 = vadd.f32 %v5448, %v5648
        %5650 = vdwg.mxu0
        %v5651 = vand.u32 %v4462, 4294901760
        %5652 = vmatprep.subr.mxu0 %v5651
        %v5653 = vand.u32 %v4461, 4294901760
        %5654 = vmatpush1.msra.mxu0 %v5653
        %v5655 = vand.u32 %v4470, 4294901760
        %5656 = vmatprep.subr.mxu0 %v5655
        %v5657 = vand.u32 %v4469, 4294901760
        %5658 = vmatpush1.msra.mxu0 %v5657
        %v5659 = vand.u32 %v4478, 4294901760
        %5660 = vmatprep.subr.mxu0 %v5659
        %v5661 = vand.u32 %v4477, 4294901760
        %5662 = vmatpush1.msra.mxu0 %v5661
        %v5663 = vand.u32 %v4486, 4294901760
        %5664 = vmatprep.subr.mxu0 %v5663
        %v5665 = vand.u32 %v4485, 4294901760
        %5666 = vmatpush1.msra.mxu0 %v5665
        %5667 = vmatprep.subr.mxu0 0.0
        %5668 = vmatpush1.msra.mxu0 0.0
        %5669 = vmatprep.subr.mxu0 0.0
        %5670 = vmatpush1.msra.mxu0 0.0
        %5671 = vmatprep.subr.mxu0 0.0
        %5672 = vmatpush1.msra.mxu0 0.0
        %5673 = vmatprep.subr.mxu0 0.0
        %5674 = vmatpush1.msra.mxu0 0.0
        %5675 = vmatprep.subr.mxu0 0.0
        %5676 = vmatpush1.msra.mxu0 0.0
        %5677 = vmatprep.subr.mxu0 0.0
        %5678 = vmatpush1.msra.mxu0 0.0
        %5679 = vmatprep.subr.mxu0 0.0
        %5680 = vmatpush1.msra.mxu0 0.0
        %5681 = vmatprep.subr.mxu0 0.0
        %5682 = vmatpush1.msra.mxu0 0.0
        %5683 = vmatprep.subr.mxu0 0.0
        %5684 = vmatpush1.msra.mxu0 0.0
        %5685 = vmatprep.subr.mxu0 0.0
        %5686 = vmatpush1.msra.mxu0 0.0
        %5687 = vmatprep.subr.mxu0 0.0
        %5688 = vmatpush1.msra.mxu0 0.0
        %5689 = vmatprep.subr.mxu0 0.0
        %5690 = vmatpush1.msra.mxu0 0.0
        %5691 = vmatprep.subr.mxu0 0.0
        %5692 = vmatpush1.msra.mxu0 0.0
        %5693 = vmatprep.subr.mxu0 0.0
        %5694 = vmatpush1.msra.mxu0 0.0
        %5695 = vmatprep.subr.mxu0 0.0
        %5696 = vmatpush1.msra.mxu0 0.0
        %5697 = vmatprep.subr.mxu0 0.0
        %5698 = vmatpush1.msra.mxu0 0.0
        %5699 = vmatprep.subr.mxu0 0.0
        %5700 = vmatpush1.msra.mxu0 0.0
        %5701 = vmatprep.subr.mxu0 0.0
        %5702 = vmatpush1.msra.mxu0 0.0
        %5703 = vmatprep.subr.mxu0 0.0
        %5704 = vmatpush1.msra.mxu0 0.0
        %5705 = vmatprep.subr.mxu0 0.0
        %5706 = vmatpush1.msra.mxu0 0.0
        %5707 = vmatprep.subr.mxu0 0.0
        %5708 = vmatpush1.msra.mxu0 0.0
        %5709 = vmatprep.subr.mxu0 0.0
        %5710 = vmatpush1.msra.mxu0 0.0
        %5711 = vmatprep.subr.mxu0 0.0
        %5712 = vmatpush1.msra.mxu0 0.0
        %5713 = vmatprep.subr.mxu0 0.0
        %5714 = vmatpush1.msra.mxu0 0.0
        %5715 = vmatprep.subr.mxu0 0.0
        %5716 = vmatpush1.msra.mxu0 0.0
        %5717 = vmatprep.subr.mxu0 0.0
        %5718 = vmatpush1.msra.mxu0 0.0
        %5719 = vmatprep.subr.mxu0 0.0
        %5720 = vmatpush1.msra.mxu0 0.0
        %5721 = vmatprep.subr.mxu0 0.0
        %5722 = vmatpush1.msra.mxu0 0.0
        %5723 = vmatprep.mubr.f32.mxu0 0.0
        %v5724 = vand.u32 %v4511, 4294901760
        %5725 = vmatmul.mubr.f32.gmra.mrb[0].mxu0 %v5724
        %v5726 = vpop.f32.mrb[0].mxu0
        %v5727 = vadd.f32 %v5542, %v5726
        %v5728 = vpop.f32.mrb[0].mxu0
        %v5729 = vadd.f32 %v5544, %v5728
        %5730 = vmatprep.mubr.f32.mxu0 0.0
        %v5731 = vand.u32 %v4514, 4294901760
        %5732 = vmatmul.mubr.f32.gmra.mrb[0].mxu0 %v5731
        %v5733 = vpop.f32.mrb[0].mxu0
        %v5734 = vadd.f32 %v5549, %v5733
        %v5735 = vpop.f32.mrb[0].mxu0
        %v5736 = vadd.f32 %v5551, %v5735
        %5737 = vmatprep.mubr.f32.mxu0 0.0
        %v5738 = vand.u32 %v4517, 4294901760
        %5739 = vmatmul.mubr.f32.gmra.mrb[0].mxu0 %v5738
        %v5740 = vpop.f32.mrb[0].mxu0
        %v5741 = vadd.f32 %v5556, %v5740
        %v5742 = vpop.f32.mrb[0].mxu0
        %v5743 = vadd.f32 %v5558, %v5742
        %5744 = vmatprep.mubr.f32.mxu0 0.0
        %v5745 = vand.u32 %v4520, 4294901760
        %5746 = vmatmul.mubr.f32.gmra.mrb[0].mxu0 %v5745
        %v5747 = vpop.f32.mrb[0].mxu0
        %v5748 = vadd.f32 %v5563, %v5747
        %v5749 = vpop.f32.mrb[0].mxu0
        %v5750 = vadd.f32 %v5565, %v5749
        %5751 = vmatprep.mubr.f32.mxu0 0.0
        %v5752 = vand.u32 %v4523, 4294901760
        %5753 = vmatmul.mubr.f32.gmra.mrb[0].mxu0 %v5752
        %v5754 = vpop.f32.mrb[0].mxu0
        %v5755 = vadd.f32 %v5570, %v5754
        %v5756 = vpop.f32.mrb[0].mxu0
        %v5757 = vadd.f32 %v5572, %v5756
        %5758 = vmatprep.mubr.f32.mxu0 0.0
        %v5759 = vand.u32 %v4526, 4294901760
        %5760 = vmatmul.mubr.f32.gmra.mrb[0].mxu0 %v5759
        %v5761 = vpop.f32.mrb[0].mxu0
        %v5762 = vadd.f32 %v5577, %v5761
        %v5763 = vpop.f32.mrb[0].mxu0
        %v5764 = vadd.f32 %v5579, %v5763
        %5765 = vmatprep.mubr.f32.mxu0 0.0
        %v5766 = vand.u32 %v4529, 4294901760
        %5767 = vmatmul.mubr.f32.gmra.mrb[0].mxu0 %v5766
        %v5768 = vpop.f32.mrb[0].mxu0
        %v5769 = vadd.f32 %v5584, %v5768
        %v5770 = vpop.f32.mrb[0].mxu0
        %v5771 = vadd.f32 %v5586, %v5770
        %5772 = vmatprep.mubr.f32.mxu0 0.0
        %v5773 = vand.u32 %v4532, 4294901760
        %5774 = vmatmul.mubr.f32.gmra.mrb[0].mxu0 %v5773
        %v5775 = vpop.f32.mrb[0].mxu0
        %v5776 = vadd.f32 %v5591, %v5775
        %v5777 = vpop.f32.mrb[0].mxu0
        %v5778 = vadd.f32 %v5593, %v5777
        %5779 = vmatprep.mubr.f32.mxu0 0.0
        %v5780 = vand.u32 %v4535, 4294901760
        %5781 = vmatmul.mubr.f32.gmra.mrb[0].mxu0 %v5780
        %v5782 = vpop.f32.mrb[0].mxu0
        %v5783 = vadd.f32 %v5598, %v5782
        %v5784 = vpop.f32.mrb[0].mxu0
        %v5785 = vadd.f32 %v5600, %v5784
        %5786 = vmatprep.mubr.f32.mxu0 0.0
        %v5787 = vand.u32 %v4538, 4294901760
        %5788 = vmatmul.mubr.f32.gmra.mrb[0].mxu0 %v5787
        %v5789 = vpop.f32.mrb[0].mxu0
        %v5790 = vadd.f32 %v5605, %v5789
        %v5791 = vpop.f32.mrb[0].mxu0
        %v5792 = vadd.f32 %v5607, %v5791
        %5793 = vmatprep.mubr.f32.mxu0 0.0
        %v5794 = vand.u32 %v4541, 4294901760
        %5795 = vmatmul.mubr.f32.gmra.mrb[0].mxu0 %v5794
        %v5796 = vpop.f32.mrb[0].mxu0
        %v5797 = vadd.f32 %v5612, %v5796
        %v5798 = vpop.f32.mrb[0].mxu0
        %v5799 = vadd.f32 %v5614, %v5798
        %5800 = vmatprep.mubr.f32.mxu0 0.0
        %v5801 = vand.u32 %v4544, 4294901760
        %5802 = vmatmul.mubr.f32.gmra.mrb[0].mxu0 %v5801
        %v5803 = vpop.f32.mrb[0].mxu0
        %v5804 = vadd.f32 %v5619, %v5803
        %v5805 = vpop.f32.mrb[0].mxu0
        %v5806 = vadd.f32 %v5621, %v5805
        %5807 = vmatprep.mubr.f32.mxu0 0.0
        %v5808 = vand.u32 %v4547, 4294901760
        %5809 = vmatmul.mubr.f32.gmra.mrb[0].mxu0 %v5808
        %v5810 = vpop.f32.mrb[0].mxu0
        %v5811 = vadd.f32 %v5626, %v5810
        %v5812 = vpop.f32.mrb[0].mxu0
        %v5813 = vadd.f32 %v5628, %v5812
        %5814 = vmatprep.mubr.f32.mxu0 0.0
        %v5815 = vand.u32 %v4550, 4294901760
        %5816 = vmatmul.mubr.f32.gmra.mrb[0].mxu0 %v5815
        %v5817 = vpop.f32.mrb[0].mxu0
        %v5818 = vadd.f32 %v5633, %v5817
        %v5819 = vpop.f32.mrb[0].mxu0
        %v5820 = vadd.f32 %v5635, %v5819
        %5821 = vmatprep.mubr.f32.mxu0 0.0
        %v5822 = vand.u32 %v4553, 4294901760
        %5823 = vmatmul.mubr.f32.gmra.mrb[0].mxu0 %v5822
        %v5824 = vpop.f32.mrb[0].mxu0
        %v5825 = vadd.f32 %v5640, %v5824
        %v5826 = vpop.f32.mrb[0].mxu0
        %v5827 = vadd.f32 %v5642, %v5826
        %5828 = vmatprep.mubr.f32.mxu0 0.0
        %v5829 = vand.u32 %v4556, 4294901760
        %5830 = vmatmul.mubr.f32.gmra.mrb[0].mxu0 %v5829
        %v5831 = vpop.f32.mrb[0].mxu0
        %v5832 = vadd.f32 %v5647, %v5831
        %v5833 = vpop.f32.mrb[0].mxu0
        %v5834 = vadd.f32 %v5649, %v5833
        %5835 = vdwg.mxu0
        %v5836 = vand.u32 %v4464, 4294901760
        %5837 = vmatprep.subr.mxu0 %v5836
        %v5838 = vand.u32 %v4463, 4294901760
        %5839 = vmatpush1.msra.mxu0 %v5838
        %v5840 = vand.u32 %v4472, 4294901760
        %5841 = vmatprep.subr.mxu0 %v5840
        %v5842 = vand.u32 %v4471, 4294901760
        %5843 = vmatpush1.msra.mxu0 %v5842
        %v5844 = vand.u32 %v4480, 4294901760
        %5845 = vmatprep.subr.mxu0 %v5844
        %v5846 = vand.u32 %v4479, 4294901760
        %5847 = vmatpush1.msra.mxu0 %v5846
        %v5848 = vand.u32 %v4488, 4294901760
        %5849 = vmatprep.subr.mxu0 %v5848
        %v5850 = vand.u32 %v4487, 4294901760
        %5851 = vmatpush1.msra.mxu0 %v5850
        %5852 = vmatprep.subr.mxu0 0.0
        %5853 = vmatpush1.msra.mxu0 0.0
        %5854 = vmatprep.subr.mxu0 0.0
        %5855 = vmatpush1.msra.mxu0 0.0
        %5856 = vmatprep.subr.mxu0 0.0
        %5857 = vmatpush1.msra.mxu0 0.0
        %5858 = vmatprep.subr.mxu0 0.0
        %5859 = vmatpush1.msra.mxu0 0.0
        %5860 = vmatprep.subr.mxu0 0.0
        %5861 = vmatpush1.msra.mxu0 0.0
        %5862 = vmatprep.subr.mxu0 0.0
        %5863 = vmatpush1.msra.mxu0 0.0
        %5864 = vmatprep.subr.mxu0 0.0
        %5865 = vmatpush1.msra.mxu0 0.0
        %5866 = vmatprep.subr.mxu0 0.0
        %5867 = vmatpush1.msra.mxu0 0.0
        %5868 = vmatprep.subr.mxu0 0.0
        %5869 = vmatpush1.msra.mxu0 0.0
        %5870 = vmatprep.subr.mxu0 0.0
        %5871 = vmatpush1.msra.mxu0 0.0
        %5872 = vmatprep.subr.mxu0 0.0
        %5873 = vmatpush1.msra.mxu0 0.0
        %5874 = vmatprep.subr.mxu0 0.0
        %5875 = vmatpush1.msra.mxu0 0.0
        %5876 = vmatprep.subr.mxu0 0.0
        %5877 = vmatpush1.msra.mxu0 0.0
        %5878 = vmatprep.subr.mxu0 0.0
        %5879 = vmatpush1.msra.mxu0 0.0
        %5880 = vmatprep.subr.mxu0 0.0
        %5881 = vmatpush1.msra.mxu0 0.0
        %5882 = vmatprep.subr.mxu0 0.0
        %5883 = vmatpush1.msra.mxu0 0.0
        %5884 = vmatprep.subr.mxu0 0.0
        %5885 = vmatpush1.msra.mxu0 0.0
        %5886 = vmatprep.subr.mxu0 0.0
        %5887 = vmatpush1.msra.mxu0 0.0
        %5888 = vmatprep.subr.mxu0 0.0
        %5889 = vmatpush1.msra.mxu0 0.0
        %5890 = vmatprep.subr.mxu0 0.0
        %5891 = vmatpush1.msra.mxu0 0.0
        %5892 = vmatprep.subr.mxu0 0.0
        %5893 = vmatpush1.msra.mxu0 0.0
        %5894 = vmatprep.subr.mxu0 0.0
        %5895 = vmatpush1.msra.mxu0 0.0
        %5896 = vmatprep.subr.mxu0 0.0
        %5897 = vmatpush1.msra.mxu0 0.0
        %5898 = vmatprep.subr.mxu0 0.0
        %5899 = vmatpush1.msra.mxu0 0.0
        %5900 = vmatprep.subr.mxu0 0.0
        %5901 = vmatpush1.msra.mxu0 0.0
        %5902 = vmatprep.subr.mxu0 0.0
        %5903 = vmatpush1.msra.mxu0 0.0
        %5904 = vmatprep.subr.mxu0 0.0
        %5905 = vmatpush1.msra.mxu0 0.0
        %5906 = vmatprep.subr.mxu0 0.0
        %5907 = vmatpush1.msra.mxu0 0.0
        %5908 = vmatprep.mubr.f32.mxu0 0.0
        %v5909 = vand.u32 %v4511, 4294901760
        %v5910 = vsub.f32 %v4511, %v5909
        %v5911 = vand.u32 %v5910, 4294901760
        %v5912 = vsub.f32 %v5910, %v5911
        %v5913 = vand.u32 %v5912, 4294901760
        %5914 = vmatmul.mubr.f32.gmra.mrb[0].mxu0 %v5913
        %v5915 = vpop.f32.mrb[0].mxu0
        %v5916 = vadd.f32 0.0, %v5915
        %v5917 = vpop.f32.mrb[0].mxu0
        %v5918 = vadd.f32 0.0, %v5917
        %5919 = vmatprep.mubr.f32.mxu0 0.0
        %v5920 = vand.u32 %v4514, 4294901760
        %v5921 = vsub.f32 %v4514, %v5920
        %v5922 = vand.u32 %v5921, 4294901760
        %v5923 = vsub.f32 %v5921, %v5922
        %v5924 = vand.u32 %v5923, 4294901760
        %5925 = vmatmul.mubr.f32.gmra.mrb[0].mxu0 %v5924
        %v5926 = vpop.f32.mrb[0].mxu0
        %v5927 = vadd.f32 0.0, %v5926
        %v5928 = vpop.f32.mrb[0].mxu0
        %v5929 = vadd.f32 0.0, %v5928
        %5930 = vmatprep.mubr.f32.mxu0 0.0
        %v5931 = vand.u32 %v4517, 4294901760
        %v5932 = vsub.f32 %v4517, %v5931
        %v5933 = vand.u32 %v5932, 4294901760
        %v5934 = vsub.f32 %v5932, %v5933
        %v5935 = vand.u32 %v5934, 4294901760
        %5936 = vmatmul.mubr.f32.gmra.mrb[0].mxu0 %v5935
        %v5937 = vpop.f32.mrb[0].mxu0
        %v5938 = vadd.f32 0.0, %v5937
        %v5939 = vpop.f32.mrb[0].mxu0
        %v5940 = vadd.f32 0.0, %v5939
        %5941 = vmatprep.mubr.f32.mxu0 0.0
        %v5942 = vand.u32 %v4520, 4294901760
        %v5943 = vsub.f32 %v4520, %v5942
        %v5944 = vand.u32 %v5943, 4294901760
        %v5945 = vsub.f32 %v5943, %v5944
        %v5946 = vand.u32 %v5945, 4294901760
        %5947 = vmatmul.mubr.f32.gmra.mrb[0].mxu0 %v5946
        %v5948 = vpop.f32.mrb[0].mxu0
        %v5949 = vadd.f32 0.0, %v5948
        %v5950 = vpop.f32.mrb[0].mxu0
        %v5951 = vadd.f32 0.0, %v5950
        %5952 = vmatprep.mubr.f32.mxu0 0.0
        %v5953 = vand.u32 %v4523, 4294901760
        %v5954 = vsub.f32 %v4523, %v5953
        %v5955 = vand.u32 %v5954, 4294901760
        %v5956 = vsub.f32 %v5954, %v5955
        %v5957 = vand.u32 %v5956, 4294901760
        %5958 = vmatmul.mubr.f32.gmra.mrb[0].mxu0 %v5957
        %v5959 = vpop.f32.mrb[0].mxu0
        %v5960 = vadd.f32 0.0, %v5959
        %v5961 = vpop.f32.mrb[0].mxu0
        %v5962 = vadd.f32 0.0, %v5961
        %5963 = vmatprep.mubr.f32.mxu0 0.0
        %v5964 = vand.u32 %v4526, 4294901760
        %v5965 = vsub.f32 %v4526, %v5964
        %v5966 = vand.u32 %v5965, 4294901760
        %v5967 = vsub.f32 %v5965, %v5966
        %v5968 = vand.u32 %v5967, 4294901760
        %5969 = vmatmul.mubr.f32.gmra.mrb[0].mxu0 %v5968
        %v5970 = vpop.f32.mrb[0].mxu0
        %v5971 = vadd.f32 0.0, %v5970
        %v5972 = vpop.f32.mrb[0].mxu0
        %v5973 = vadd.f32 0.0, %v5972
        %5974 = vmatprep.mubr.f32.mxu0 0.0
        %v5975 = vand.u32 %v4529, 4294901760
        %v5976 = vsub.f32 %v4529, %v5975
        %v5977 = vand.u32 %v5976, 4294901760
        %v5978 = vsub.f32 %v5976, %v5977
        %v5979 = vand.u32 %v5978, 4294901760
        %5980 = vmatmul.mubr.f32.gmra.mrb[0].mxu0 %v5979
        %v5981 = vpop.f32.mrb[0].mxu0
        %v5982 = vadd.f32 0.0, %v5981
        %v5983 = vpop.f32.mrb[0].mxu0
        %v5984 = vadd.f32 0.0, %v5983
        %5985 = vmatprep.mubr.f32.mxu0 0.0
        %v5986 = vand.u32 %v4532, 4294901760
        %v5987 = vsub.f32 %v4532, %v5986
        %v5988 = vand.u32 %v5987, 4294901760
        %v5989 = vsub.f32 %v5987, %v5988
        %v5990 = vand.u32 %v5989, 4294901760
        %5991 = vmatmul.mubr.f32.gmra.mrb[0].mxu0 %v5990
        %v5992 = vpop.f32.mrb[0].mxu0
        %v5993 = vadd.f32 0.0, %v5992
        %v5994 = vpop.f32.mrb[0].mxu0
        %v5995 = vadd.f32 0.0, %v5994
        %5996 = vmatprep.mubr.f32.mxu0 0.0
        %v5997 = vand.u32 %v4535, 4294901760
        %v5998 = vsub.f32 %v4535, %v5997
        %v5999 = vand.u32 %v5998, 4294901760
        %v6000 = vsub.f32 %v5998, %v5999
        %v6001 = vand.u32 %v6000, 4294901760
        %6002 = vmatmul.mubr.f32.gmra.mrb[0].mxu0 %v6001
        %v6003 = vpop.f32.mrb[0].mxu0
        %v6004 = vadd.f32 0.0, %v6003
        %v6005 = vpop.f32.mrb[0].mxu0
        %v6006 = vadd.f32 0.0, %v6005
        %6007 = vmatprep.mubr.f32.mxu0 0.0
        %v6008 = vand.u32 %v4538, 4294901760
        %v6009 = vsub.f32 %v4538, %v6008
        %v6010 = vand.u32 %v6009, 4294901760
        %v6011 = vsub.f32 %v6009, %v6010
        %v6012 = vand.u32 %v6011, 4294901760
        %6013 = vmatmul.mubr.f32.gmra.mrb[0].mxu0 %v6012
        %v6014 = vpop.f32.mrb[0].mxu0
        %v6015 = vadd.f32 0.0, %v6014
        %v6016 = vpop.f32.mrb[0].mxu0
        %v6017 = vadd.f32 0.0, %v6016
        %6018 = vmatprep.mubr.f32.mxu0 0.0
        %v6019 = vand.u32 %v4541, 4294901760
        %v6020 = vsub.f32 %v4541, %v6019
        %v6021 = vand.u32 %v6020, 4294901760
        %v6022 = vsub.f32 %v6020, %v6021
        %v6023 = vand.u32 %v6022, 4294901760
        %6024 = vmatmul.mubr.f32.gmra.mrb[0].mxu0 %v6023
        %v6025 = vpop.f32.mrb[0].mxu0
        %v6026 = vadd.f32 0.0, %v6025
        %v6027 = vpop.f32.mrb[0].mxu0
        %v6028 = vadd.f32 0.0, %v6027
        %6029 = vmatprep.mubr.f32.mxu0 0.0
        %v6030 = vand.u32 %v4544, 4294901760
        %v6031 = vsub.f32 %v4544, %v6030
        %v6032 = vand.u32 %v6031, 4294901760
        %v6033 = vsub.f32 %v6031, %v6032
        %v6034 = vand.u32 %v6033, 4294901760
        %6035 = vmatmul.mubr.f32.gmra.mrb[0].mxu0 %v6034
        %v6036 = vpop.f32.mrb[0].mxu0
        %v6037 = vadd.f32 0.0, %v6036
        %v6038 = vpop.f32.mrb[0].mxu0
        %v6039 = vadd.f32 0.0, %v6038
        %6040 = vmatprep.mubr.f32.mxu0 0.0
        %v6041 = vand.u32 %v4547, 4294901760
        %v6042 = vsub.f32 %v4547, %v6041
        %v6043 = vand.u32 %v6042, 4294901760
        %v6044 = vsub.f32 %v6042, %v6043
        %v6045 = vand.u32 %v6044, 4294901760
        %6046 = vmatmul.mubr.f32.gmra.mrb[0].mxu0 %v6045
        %v6047 = vpop.f32.mrb[0].mxu0
        %v6048 = vadd.f32 0.0, %v6047
        %v6049 = vpop.f32.mrb[0].mxu0
        %v6050 = vadd.f32 0.0, %v6049
        %6051 = vmatprep.mubr.f32.mxu0 0.0
        %v6052 = vand.u32 %v4550, 4294901760
        %v6053 = vsub.f32 %v4550, %v6052
        %v6054 = vand.u32 %v6053, 4294901760
        %v6055 = vsub.f32 %v6053, %v6054
        %v6056 = vand.u32 %v6055, 4294901760
        %6057 = vmatmul.mubr.f32.gmra.mrb[0].mxu0 %v6056
        %v6058 = vpop.f32.mrb[0].mxu0
        %v6059 = vadd.f32 0.0, %v6058
        %v6060 = vpop.f32.mrb[0].mxu0
        %v6061 = vadd.f32 0.0, %v6060
        %6062 = vmatprep.mubr.f32.mxu0 0.0
        %v6063 = vand.u32 %v4553, 4294901760
        %v6064 = vsub.f32 %v4553, %v6063
        %v6065 = vand.u32 %v6064, 4294901760
        %v6066 = vsub.f32 %v6064, %v6065
        %v6067 = vand.u32 %v6066, 4294901760
        %6068 = vmatmul.mubr.f32.gmra.mrb[0].mxu0 %v6067
        %v6069 = vpop.f32.mrb[0].mxu0
        %v6070 = vadd.f32 0.0, %v6069
        %v6071 = vpop.f32.mrb[0].mxu0
        %v6072 = vadd.f32 0.0, %v6071
        %6073 = vmatprep.mubr.f32.mxu0 0.0
        %v6074 = vand.u32 %v4556, 4294901760
        %v6075 = vsub.f32 %v4556, %v6074
        %v6076 = vand.u32 %v6075, 4294901760
        %v6077 = vsub.f32 %v6075, %v6076
        %v6078 = vand.u32 %v6077, 4294901760
        %6079 = vmatmul.mubr.f32.gmra.mrb[0].mxu0 %v6078
        %v6080 = vpop.f32.mrb[0].mxu0
        %v6081 = vadd.f32 0.0, %v6080
        %v6082 = vpop.f32.mrb[0].mxu0
        %v6083 = vadd.f32 0.0, %v6082
        %6084 = vdwg.mxu0
        %v6085 = vand.u32 %v4464, 4294901760
        %v6086 = vsub.f32 %v4464, %v6085
        %v6087 = vand.u32 %v6086, 4294901760
        %v6088 = vsub.f32 %v6086, %v6087
        %v6089 = vand.u32 %v6088, 4294901760
        %6090 = vmatprep.subr.mxu0 %v6089
        %v6091 = vand.u32 %v4463, 4294901760
        %v6092 = vsub.f32 %v4463, %v6091
        %v6093 = vand.u32 %v6092, 4294901760
        %v6094 = vsub.f32 %v6092, %v6093
        %v6095 = vand.u32 %v6094, 4294901760
        %6096 = vmatpush1.msra.mxu0 %v6095
        %v6097 = vand.u32 %v4472, 4294901760
        %v6098 = vsub.f32 %v4472, %v6097
        %v6099 = vand.u32 %v6098, 4294901760
        %v6100 = vsub.f32 %v6098, %v6099
        %v6101 = vand.u32 %v6100, 4294901760
        %6102 = vmatprep.subr.mxu0 %v6101
        %v6103 = vand.u32 %v4471, 4294901760
        %v6104 = vsub.f32 %v4471, %v6103
        %v6105 = vand.u32 %v6104, 4294901760
        %v6106 = vsub.f32 %v6104, %v6105
        %v6107 = vand.u32 %v6106, 4294901760
        %6108 = vmatpush1.msra.mxu0 %v6107
        %v6109 = vand.u32 %v4480, 4294901760
        %v6110 = vsub.f32 %v4480, %v6109
        %v6111 = vand.u32 %v6110, 4294901760
        %v6112 = vsub.f32 %v6110, %v6111
        %v6113 = vand.u32 %v6112, 4294901760
        %6114 = vmatprep.subr.mxu0 %v6113
        %v6115 = vand.u32 %v4479, 4294901760
        %v6116 = vsub.f32 %v4479, %v6115
        %v6117 = vand.u32 %v6116, 4294901760
        %v6118 = vsub.f32 %v6116, %v6117
        %v6119 = vand.u32 %v6118, 4294901760
        %6120 = vmatpush1.msra.mxu0 %v6119
        %v6121 = vand.u32 %v4488, 4294901760
        %v6122 = vsub.f32 %v4488, %v6121
        %v6123 = vand.u32 %v6122, 4294901760
        %v6124 = vsub.f32 %v6122, %v6123
        %v6125 = vand.u32 %v6124, 4294901760
        %6126 = vmatprep.subr.mxu0 %v6125
        %v6127 = vand.u32 %v4487, 4294901760
        %v6128 = vsub.f32 %v4487, %v6127
        %v6129 = vand.u32 %v6128, 4294901760
        %v6130 = vsub.f32 %v6128, %v6129
        %v6131 = vand.u32 %v6130, 4294901760
        %6132 = vmatpush1.msra.mxu0 %v6131
        %6133 = vmatprep.subr.mxu0 0.0
        %6134 = vmatpush1.msra.mxu0 0.0
        %6135 = vmatprep.subr.mxu0 0.0
        %6136 = vmatpush1.msra.mxu0 0.0
        %6137 = vmatprep.subr.mxu0 0.0
        %6138 = vmatpush1.msra.mxu0 0.0
        %6139 = vmatprep.subr.mxu0 0.0
        %6140 = vmatpush1.msra.mxu0 0.0
        %6141 = vmatprep.subr.mxu0 0.0
        %6142 = vmatpush1.msra.mxu0 0.0
        %6143 = vmatprep.subr.mxu0 0.0
        %6144 = vmatpush1.msra.mxu0 0.0
        %6145 = vmatprep.subr.mxu0 0.0
        %6146 = vmatpush1.msra.mxu0 0.0
        %6147 = vmatprep.subr.mxu0 0.0
        %6148 = vmatpush1.msra.mxu0 0.0
        %6149 = vmatprep.subr.mxu0 0.0
        %6150 = vmatpush1.msra.mxu0 0.0
        %6151 = vmatprep.subr.mxu0 0.0
        %6152 = vmatpush1.msra.mxu0 0.0
        %6153 = vmatprep.subr.mxu0 0.0
        %6154 = vmatpush1.msra.mxu0 0.0
        %6155 = vmatprep.subr.mxu0 0.0
        %6156 = vmatpush1.msra.mxu0 0.0
        %6157 = vmatprep.subr.mxu0 0.0
        %6158 = vmatpush1.msra.mxu0 0.0
        %6159 = vmatprep.subr.mxu0 0.0
        %6160 = vmatpush1.msra.mxu0 0.0
        %6161 = vmatprep.subr.mxu0 0.0
        %6162 = vmatpush1.msra.mxu0 0.0
        %6163 = vmatprep.subr.mxu0 0.0
        %6164 = vmatpush1.msra.mxu0 0.0
        %6165 = vmatprep.subr.mxu0 0.0
        %6166 = vmatpush1.msra.mxu0 0.0
        %6167 = vmatprep.subr.mxu0 0.0
        %6168 = vmatpush1.msra.mxu0 0.0
        %6169 = vmatprep.subr.mxu0 0.0
        %6170 = vmatpush1.msra.mxu0 0.0
        %6171 = vmatprep.subr.mxu0 0.0
        %6172 = vmatpush1.msra.mxu0 0.0
        %6173 = vmatprep.subr.mxu0 0.0
        %6174 = vmatpush1.msra.mxu0 0.0
        %6175 = vmatprep.subr.mxu0 0.0
        %6176 = vmatpush1.msra.mxu0 0.0
        %6177 = vmatprep.subr.mxu0 0.0
        %6178 = vmatpush1.msra.mxu0 0.0
        %6179 = vmatprep.subr.mxu0 0.0
        %6180 = vmatpush1.msra.mxu0 0.0
        %6181 = vmatprep.subr.mxu0 0.0
        %6182 = vmatpush1.msra.mxu0 0.0
        %6183 = vmatprep.subr.mxu0 0.0
        %6184 = vmatpush1.msra.mxu0 0.0
        %6185 = vmatprep.subr.mxu0 0.0
        %6186 = vmatpush1.msra.mxu0 0.0
        %6187 = vmatprep.subr.mxu0 0.0
        %6188 = vmatpush1.msra.mxu0 0.0
        %6189 = vmatprep.mubr.f32.mxu0 0.0
        %v6190 = vand.u32 %v4511, 4294901760
        %6191 = vmatmul.mubr.f32.gmra.mrb[0].mxu0 %v6190
        %v6192 = vpop.f32.mrb[0].mxu0
        %v6193 = vadd.f32 %v5916, %v6192
        %v6194 = vpop.f32.mrb[0].mxu0
        %v6195 = vadd.f32 %v5918, %v6194
        %6196 = vmatprep.mubr.f32.mxu0 0.0
        %v6197 = vand.u32 %v4514, 4294901760
        %6198 = vmatmul.mubr.f32.gmra.mrb[0].mxu0 %v6197
        %v6199 = vpop.f32.mrb[0].mxu0
        %v6200 = vadd.f32 %v5927, %v6199
        %v6201 = vpop.f32.mrb[0].mxu0
        %v6202 = vadd.f32 %v5929, %v6201
        %6203 = vmatprep.mubr.f32.mxu0 0.0
        %v6204 = vand.u32 %v4517, 4294901760
        %6205 = vmatmul.mubr.f32.gmra.mrb[0].mxu0 %v6204
        %v6206 = vpop.f32.mrb[0].mxu0
        %v6207 = vadd.f32 %v5938, %v6206
        %v6208 = vpop.f32.mrb[0].mxu0
        %v6209 = vadd.f32 %v5940, %v6208
        %6210 = vmatprep.mubr.f32.mxu0 0.0
        %v6211 = vand.u32 %v4520, 4294901760
        %6212 = vmatmul.mubr.f32.gmra.mrb[0].mxu0 %v6211
        %v6213 = vpop.f32.mrb[0].mxu0
        %v6214 = vadd.f32 %v5949, %v6213
        %v6215 = vpop.f32.mrb[0].mxu0
        %v6216 = vadd.f32 %v5951, %v6215
        %6217 = vmatprep.mubr.f32.mxu0 0.0
        %v6218 = vand.u32 %v4523, 4294901760
        %6219 = vmatmul.mubr.f32.gmra.mrb[0].mxu0 %v6218
        %v6220 = vpop.f32.mrb[0].mxu0
        %v6221 = vadd.f32 %v5960, %v6220
        %v6222 = vpop.f32.mrb[0].mxu0
        %v6223 = vadd.f32 %v5962, %v6222
        %6224 = vmatprep.mubr.f32.mxu0 0.0
        %v6225 = vand.u32 %v4526, 4294901760
        %6226 = vmatmul.mubr.f32.gmra.mrb[0].mxu0 %v6225
        %v6227 = vpop.f32.mrb[0].mxu0
        %v6228 = vadd.f32 %v5971, %v6227
        %v6229 = vpop.f32.mrb[0].mxu0
        %v6230 = vadd.f32 %v5973, %v6229
        %6231 = vmatprep.mubr.f32.mxu0 0.0
        %v6232 = vand.u32 %v4529, 4294901760
        %6233 = vmatmul.mubr.f32.gmra.mrb[0].mxu0 %v6232
        %v6234 = vpop.f32.mrb[0].mxu0
        %v6235 = vadd.f32 %v5982, %v6234
        %v6236 = vpop.f32.mrb[0].mxu0
        %v6237 = vadd.f32 %v5984, %v6236
        %6238 = vmatprep.mubr.f32.mxu0 0.0
        %v6239 = vand.u32 %v4532, 4294901760
        %6240 = vmatmul.mubr.f32.gmra.mrb[0].mxu0 %v6239
        %v6241 = vpop.f32.mrb[0].mxu0
        %v6242 = vadd.f32 %v5993, %v6241
        %v6243 = vpop.f32.mrb[0].mxu0
        %v6244 = vadd.f32 %v5995, %v6243
        %6245 = vmatprep.mubr.f32.mxu0 0.0
        %v6246 = vand.u32 %v4535, 4294901760
        %6247 = vmatmul.mubr.f32.gmra.mrb[0].mxu0 %v6246
        %v6248 = vpop.f32.mrb[0].mxu0
        %v6249 = vadd.f32 %v6004, %v6248
        %v6250 = vpop.f32.mrb[0].mxu0
        %v6251 = vadd.f32 %v6006, %v6250
        %6252 = vmatprep.mubr.f32.mxu0 0.0
        %v6253 = vand.u32 %v4538, 4294901760
        %6254 = vmatmul.mubr.f32.gmra.mrb[0].mxu0 %v6253
        %v6255 = vpop.f32.mrb[0].mxu0
        %v6256 = vadd.f32 %v6015, %v6255
        %v6257 = vpop.f32.mrb[0].mxu0
        %v6258 = vadd.f32 %v6017, %v6257
        %6259 = vmatprep.mubr.f32.mxu0 0.0
        %v6260 = vand.u32 %v4541, 4294901760
        %6261 = vmatmul.mubr.f32.gmra.mrb[0].mxu0 %v6260
        %v6262 = vpop.f32.mrb[0].mxu0
        %v6263 = vadd.f32 %v6026, %v6262
        %v6264 = vpop.f32.mrb[0].mxu0
        %v6265 = vadd.f32 %v6028, %v6264
        %6266 = vmatprep.mubr.f32.mxu0 0.0
        %v6267 = vand.u32 %v4544, 4294901760
        %6268 = vmatmul.mubr.f32.gmra.mrb[0].mxu0 %v6267
        %v6269 = vpop.f32.mrb[0].mxu0
        %v6270 = vadd.f32 %v6037, %v6269
        %v6271 = vpop.f32.mrb[0].mxu0
        %v6272 = vadd.f32 %v6039, %v6271
        %6273 = vmatprep.mubr.f32.mxu0 0.0
        %v6274 = vand.u32 %v4547, 4294901760
        %6275 = vmatmul.mubr.f32.gmra.mrb[0].mxu0 %v6274
        %v6276 = vpop.f32.mrb[0].mxu0
        %v6277 = vadd.f32 %v6048, %v6276
        %v6278 = vpop.f32.mrb[0].mxu0
        %v6279 = vadd.f32 %v6050, %v6278
        %6280 = vmatprep.mubr.f32.mxu0 0.0
        %v6281 = vand.u32 %v4550, 4294901760
        %6282 = vmatmul.mubr.f32.gmra.mrb[0].mxu0 %v6281
        %v6283 = vpop.f32.mrb[0].mxu0
        %v6284 = vadd.f32 %v6059, %v6283
        %v6285 = vpop.f32.mrb[0].mxu0
        %v6286 = vadd.f32 %v6061, %v6285
        %6287 = vmatprep.mubr.f32.mxu0 0.0
        %v6288 = vand.u32 %v4553, 4294901760
        %6289 = vmatmul.mubr.f32.gmra.mrb[0].mxu0 %v6288
        %v6290 = vpop.f32.mrb[0].mxu0
        %v6291 = vadd.f32 %v6070, %v6290
        %v6292 = vpop.f32.mrb[0].mxu0
        %v6293 = vadd.f32 %v6072, %v6292
        %6294 = vmatprep.mubr.f32.mxu0 0.0
        %v6295 = vand.u32 %v4556, 4294901760
        %6296 = vmatmul.mubr.f32.gmra.mrb[0].mxu0 %v6295
        %v6297 = vpop.f32.mrb[0].mxu0
        %v6298 = vadd.f32 %v6081, %v6297
        %v6299 = vpop.f32.mrb[0].mxu0
        %v6300 = vadd.f32 %v6083, %v6299
        %6301 = vdwg.mxu0
        %v6302 = vand.u32 %v4464, 4294901760
        %v6303 = vsub.f32 %v4464, %v6302
        %6304 = vmatprep.subr.mxu0 %v6303
        %v6305 = vand.u32 %v4463, 4294901760
        %v6306 = vsub.f32 %v4463, %v6305
        %6307 = vmatpush1.msra.mxu0 %v6306
        %v6308 = vand.u32 %v4472, 4294901760
        %v6309 = vsub.f32 %v4472, %v6308
        %6310 = vmatprep.subr.mxu0 %v6309
        %v6311 = vand.u32 %v4471, 4294901760
        %v6312 = vsub.f32 %v4471, %v6311
        %6313 = vmatpush1.msra.mxu0 %v6312
        %v6314 = vand.u32 %v4480, 4294901760
        %v6315 = vsub.f32 %v4480, %v6314
        %6316 = vmatprep.subr.mxu0 %v6315
        %v6317 = vand.u32 %v4479, 4294901760
        %v6318 = vsub.f32 %v4479, %v6317
        %6319 = vmatpush1.msra.mxu0 %v6318
        %v6320 = vand.u32 %v4488, 4294901760
        %v6321 = vsub.f32 %v4488, %v6320
        %6322 = vmatprep.subr.mxu0 %v6321
        %v6323 = vand.u32 %v4487, 4294901760
        %v6324 = vsub.f32 %v4487, %v6323
        %6325 = vmatpush1.msra.mxu0 %v6324
        %6326 = vmatprep.subr.mxu0 0.0
        %6327 = vmatpush1.msra.mxu0 0.0
        %6328 = vmatprep.subr.mxu0 0.0
        %6329 = vmatpush1.msra.mxu0 0.0
        %6330 = vmatprep.subr.mxu0 0.0
        %6331 = vmatpush1.msra.mxu0 0.0
        %6332 = vmatprep.subr.mxu0 0.0
        %6333 = vmatpush1.msra.mxu0 0.0
        %6334 = vmatprep.subr.mxu0 0.0
        %6335 = vmatpush1.msra.mxu0 0.0
        %6336 = vmatprep.subr.mxu0 0.0
        %6337 = vmatpush1.msra.mxu0 0.0
        %6338 = vmatprep.subr.mxu0 0.0
        %6339 = vmatpush1.msra.mxu0 0.0
        %6340 = vmatprep.subr.mxu0 0.0
        %6341 = vmatpush1.msra.mxu0 0.0
        %6342 = vmatprep.subr.mxu0 0.0
        %6343 = vmatpush1.msra.mxu0 0.0
        %6344 = vmatprep.subr.mxu0 0.0
        %6345 = vmatpush1.msra.mxu0 0.0
        %6346 = vmatprep.subr.mxu0 0.0
        %6347 = vmatpush1.msra.mxu0 0.0
        %6348 = vmatprep.subr.mxu0 0.0
        %6349 = vmatpush1.msra.mxu0 0.0
        %6350 = vmatprep.subr.mxu0 0.0
        %6351 = vmatpush1.msra.mxu0 0.0
        %6352 = vmatprep.subr.mxu0 0.0
        %6353 = vmatpush1.msra.mxu0 0.0
        %6354 = vmatprep.subr.mxu0 0.0
        %6355 = vmatpush1.msra.mxu0 0.0
        %6356 = vmatprep.subr.mxu0 0.0
        %6357 = vmatpush1.msra.mxu0 0.0
        %6358 = vmatprep.subr.mxu0 0.0
        %6359 = vmatpush1.msra.mxu0 0.0
        %6360 = vmatprep.subr.mxu0 0.0
        %6361 = vmatpush1.msra.mxu0 0.0
        %6362 = vmatprep.subr.mxu0 0.0
        %6363 = vmatpush1.msra.mxu0 0.0
        %6364 = vmatprep.subr.mxu0 0.0
        %6365 = vmatpush1.msra.mxu0 0.0
        %6366 = vmatprep.subr.mxu0 0.0
        %6367 = vmatpush1.msra.mxu0 0.0
        %6368 = vmatprep.subr.mxu0 0.0
        %6369 = vmatpush1.msra.mxu0 0.0
        %6370 = vmatprep.subr.mxu0 0.0
        %6371 = vmatpush1.msra.mxu0 0.0
        %6372 = vmatprep.subr.mxu0 0.0
        %6373 = vmatpush1.msra.mxu0 0.0
        %6374 = vmatprep.subr.mxu0 0.0
        %6375 = vmatpush1.msra.mxu0 0.0
        %6376 = vmatprep.subr.mxu0 0.0
        %6377 = vmatpush1.msra.mxu0 0.0
        %6378 = vmatprep.subr.mxu0 0.0
        %6379 = vmatpush1.msra.mxu0 0.0
        %6380 = vmatprep.subr.mxu0 0.0
        %6381 = vmatpush1.msra.mxu0 0.0
        %6382 = vmatprep.mubr.f32.mxu0 0.0
        %v6383 = vand.u32 %v4511, 4294901760
        %v6384 = vsub.f32 %v4511, %v6383
        %6385 = vmatmul.mubr.f32.gmra.mrb[0].mxu0 %v6384
        %v6386 = vpop.f32.mrb[0].mxu0
        %v6387 = vadd.f32 %v6193, %v6386
        %v6388 = vpop.f32.mrb[0].mxu0
        %v6389 = vadd.f32 %v6195, %v6388
        %6390 = vmatprep.mubr.f32.mxu0 0.0
        %v6391 = vand.u32 %v4514, 4294901760
        %v6392 = vsub.f32 %v4514, %v6391
        %6393 = vmatmul.mubr.f32.gmra.mrb[0].mxu0 %v6392
        %v6394 = vpop.f32.mrb[0].mxu0
        %v6395 = vadd.f32 %v6200, %v6394
        %v6396 = vpop.f32.mrb[0].mxu0
        %v6397 = vadd.f32 %v6202, %v6396
        %6398 = vmatprep.mubr.f32.mxu0 0.0
        %v6399 = vand.u32 %v4517, 4294901760
        %v6400 = vsub.f32 %v4517, %v6399
        %6401 = vmatmul.mubr.f32.gmra.mrb[0].mxu0 %v6400
        %v6402 = vpop.f32.mrb[0].mxu0
        %v6403 = vadd.f32 %v6207, %v6402
        %v6404 = vpop.f32.mrb[0].mxu0
        %v6405 = vadd.f32 %v6209, %v6404
        %6406 = vmatprep.mubr.f32.mxu0 0.0
        %v6407 = vand.u32 %v4520, 4294901760
        %v6408 = vsub.f32 %v4520, %v6407
        %6409 = vmatmul.mubr.f32.gmra.mrb[0].mxu0 %v6408
        %v6410 = vpop.f32.mrb[0].mxu0
        %v6411 = vadd.f32 %v6214, %v6410
        %v6412 = vpop.f32.mrb[0].mxu0
        %v6413 = vadd.f32 %v6216, %v6412
        %6414 = vmatprep.mubr.f32.mxu0 0.0
        %v6415 = vand.u32 %v4523, 4294901760
        %v6416 = vsub.f32 %v4523, %v6415
        %6417 = vmatmul.mubr.f32.gmra.mrb[0].mxu0 %v6416
        %v6418 = vpop.f32.mrb[0].mxu0
        %v6419 = vadd.f32 %v6221, %v6418
        %v6420 = vpop.f32.mrb[0].mxu0
        %v6421 = vadd.f32 %v6223, %v6420
        %6422 = vmatprep.mubr.f32.mxu0 0.0
        %v6423 = vand.u32 %v4526, 4294901760
        %v6424 = vsub.f32 %v4526, %v6423
        %6425 = vmatmul.mubr.f32.gmra.mrb[0].mxu0 %v6424
        %v6426 = vpop.f32.mrb[0].mxu0
        %v6427 = vadd.f32 %v6228, %v6426
        %v6428 = vpop.f32.mrb[0].mxu0
        %v6429 = vadd.f32 %v6230, %v6428
        %6430 = vmatprep.mubr.f32.mxu0 0.0
        %v6431 = vand.u32 %v4529, 4294901760
        %v6432 = vsub.f32 %v4529, %v6431
        %6433 = vmatmul.mubr.f32.gmra.mrb[0].mxu0 %v6432
        %v6434 = vpop.f32.mrb[0].mxu0
        %v6435 = vadd.f32 %v6235, %v6434
        %v6436 = vpop.f32.mrb[0].mxu0
        %v6437 = vadd.f32 %v6237, %v6436
        %6438 = vmatprep.mubr.f32.mxu0 0.0
        %v6439 = vand.u32 %v4532, 4294901760
        %v6440 = vsub.f32 %v4532, %v6439
        %6441 = vmatmul.mubr.f32.gmra.mrb[0].mxu0 %v6440
        %v6442 = vpop.f32.mrb[0].mxu0
        %v6443 = vadd.f32 %v6242, %v6442
        %v6444 = vpop.f32.mrb[0].mxu0
        %v6445 = vadd.f32 %v6244, %v6444
        %6446 = vmatprep.mubr.f32.mxu0 0.0
        %v6447 = vand.u32 %v4535, 4294901760
        %v6448 = vsub.f32 %v4535, %v6447
        %6449 = vmatmul.mubr.f32.gmra.mrb[0].mxu0 %v6448
        %v6450 = vpop.f32.mrb[0].mxu0
        %v6451 = vadd.f32 %v6249, %v6450
        %v6452 = vpop.f32.mrb[0].mxu0
        %v6453 = vadd.f32 %v6251, %v6452
        %6454 = vmatprep.mubr.f32.mxu0 0.0
        %v6455 = vand.u32 %v4538, 4294901760
        %v6456 = vsub.f32 %v4538, %v6455
        %6457 = vmatmul.mubr.f32.gmra.mrb[0].mxu0 %v6456
        %v6458 = vpop.f32.mrb[0].mxu0
        %v6459 = vadd.f32 %v6256, %v6458
        %v6460 = vpop.f32.mrb[0].mxu0
        %v6461 = vadd.f32 %v6258, %v6460
        %6462 = vmatprep.mubr.f32.mxu0 0.0
        %v6463 = vand.u32 %v4541, 4294901760
        %v6464 = vsub.f32 %v4541, %v6463
        %6465 = vmatmul.mubr.f32.gmra.mrb[0].mxu0 %v6464
        %v6466 = vpop.f32.mrb[0].mxu0
        %v6467 = vadd.f32 %v6263, %v6466
        %v6468 = vpop.f32.mrb[0].mxu0
        %v6469 = vadd.f32 %v6265, %v6468
        %6470 = vmatprep.mubr.f32.mxu0 0.0
        %v6471 = vand.u32 %v4544, 4294901760
        %v6472 = vsub.f32 %v4544, %v6471
        %6473 = vmatmul.mubr.f32.gmra.mrb[0].mxu0 %v6472
        %v6474 = vpop.f32.mrb[0].mxu0
        %v6475 = vadd.f32 %v6270, %v6474
        %v6476 = vpop.f32.mrb[0].mxu0
        %v6477 = vadd.f32 %v6272, %v6476
        %6478 = vmatprep.mubr.f32.mxu0 0.0
        %v6479 = vand.u32 %v4547, 4294901760
        %v6480 = vsub.f32 %v4547, %v6479
        %6481 = vmatmul.mubr.f32.gmra.mrb[0].mxu0 %v6480
        %v6482 = vpop.f32.mrb[0].mxu0
        %v6483 = vadd.f32 %v6277, %v6482
        %v6484 = vpop.f32.mrb[0].mxu0
        %v6485 = vadd.f32 %v6279, %v6484
        %6486 = vmatprep.mubr.f32.mxu0 0.0
        %v6487 = vand.u32 %v4550, 4294901760
        %v6488 = vsub.f32 %v4550, %v6487
        %6489 = vmatmul.mubr.f32.gmra.mrb[0].mxu0 %v6488
        %v6490 = vpop.f32.mrb[0].mxu0
        %v6491 = vadd.f32 %v6284, %v6490
        %v6492 = vpop.f32.mrb[0].mxu0
        %v6493 = vadd.f32 %v6286, %v6492
        %6494 = vmatprep.mubr.f32.mxu0 0.0
        %v6495 = vand.u32 %v4553, 4294901760
        %v6496 = vsub.f32 %v4553, %v6495
        %6497 = vmatmul.mubr.f32.gmra.mrb[0].mxu0 %v6496
        %v6498 = vpop.f32.mrb[0].mxu0
        %v6499 = vadd.f32 %v6291, %v6498
        %v6500 = vpop.f32.mrb[0].mxu0
        %v6501 = vadd.f32 %v6293, %v6500
        %6502 = vmatprep.mubr.f32.mxu0 0.0
        %v6503 = vand.u32 %v4556, 4294901760
        %v6504 = vsub.f32 %v4556, %v6503
        %6505 = vmatmul.mubr.f32.gmra.mrb[0].mxu0 %v6504
        %v6506 = vpop.f32.mrb[0].mxu0
        %v6507 = vadd.f32 %v6298, %v6506
        %v6508 = vpop.f32.mrb[0].mxu0
        %v6509 = vadd.f32 %v6300, %v6508
        %6510 = vdwg.mxu0
        %v6511 = vand.u32 %v4464, 4294901760
        %6512 = vmatprep.subr.mxu0 %v6511
        %v6513 = vand.u32 %v4463, 4294901760
        %6514 = vmatpush1.msra.mxu0 %v6513
        %v6515 = vand.u32 %v4472, 4294901760
        %6516 = vmatprep.subr.mxu0 %v6515
        %v6517 = vand.u32 %v4471, 4294901760
        %6518 = vmatpush1.msra.mxu0 %v6517
        %v6519 = vand.u32 %v4480, 4294901760
        %6520 = vmatprep.subr.mxu0 %v6519
        %v6521 = vand.u32 %v4479, 4294901760
        %6522 = vmatpush1.msra.mxu0 %v6521
        %v6523 = vand.u32 %v4488, 4294901760
        %6524 = vmatprep.subr.mxu0 %v6523
        %v6525 = vand.u32 %v4487, 4294901760
        %6526 = vmatpush1.msra.mxu0 %v6525
        %6527 = vmatprep.subr.mxu0 0.0
        %6528 = vmatpush1.msra.mxu0 0.0
        %6529 = vmatprep.subr.mxu0 0.0
        %6530 = vmatpush1.msra.mxu0 0.0
        %6531 = vmatprep.subr.mxu0 0.0
        %6532 = vmatpush1.msra.mxu0 0.0
        %6533 = vmatprep.subr.mxu0 0.0
        %6534 = vmatpush1.msra.mxu0 0.0
        %6535 = vmatprep.subr.mxu0 0.0
        %6536 = vmatpush1.msra.mxu0 0.0
        %6537 = vmatprep.subr.mxu0 0.0
        %6538 = vmatpush1.msra.mxu0 0.0
        %6539 = vmatprep.subr.mxu0 0.0
        %6540 = vmatpush1.msra.mxu0 0.0
        %6541 = vmatprep.subr.mxu0 0.0
        %6542 = vmatpush1.msra.mxu0 0.0
        %6543 = vmatprep.subr.mxu0 0.0
        %6544 = vmatpush1.msra.mxu0 0.0
        %6545 = vmatprep.subr.mxu0 0.0
        %6546 = vmatpush1.msra.mxu0 0.0
        %6547 = vmatprep.subr.mxu0 0.0
        %6548 = vmatpush1.msra.mxu0 0.0
        %6549 = vmatprep.subr.mxu0 0.0
        %6550 = vmatpush1.msra.mxu0 0.0
        %6551 = vmatprep.subr.mxu0 0.0
        %6552 = vmatpush1.msra.mxu0 0.0
        %6553 = vmatprep.subr.mxu0 0.0
        %6554 = vmatpush1.msra.mxu0 0.0
        %6555 = vmatprep.subr.mxu0 0.0
        %6556 = vmatpush1.msra.mxu0 0.0
        %6557 = vmatprep.subr.mxu0 0.0
        %6558 = vmatpush1.msra.mxu0 0.0
        %6559 = vmatprep.subr.mxu0 0.0
        %6560 = vmatpush1.msra.mxu0 0.0
        %6561 = vmatprep.subr.mxu0 0.0
        %6562 = vmatpush1.msra.mxu0 0.0
        %6563 = vmatprep.subr.mxu0 0.0
        %6564 = vmatpush1.msra.mxu0 0.0
        %6565 = vmatprep.subr.mxu0 0.0
        %6566 = vmatpush1.msra.mxu0 0.0
        %6567 = vmatprep.subr.mxu0 0.0
        %6568 = vmatpush1.msra.mxu0 0.0
        %6569 = vmatprep.subr.mxu0 0.0
        %6570 = vmatpush1.msra.mxu0 0.0
        %6571 = vmatprep.subr.mxu0 0.0
        %6572 = vmatpush1.msra.mxu0 0.0
        %6573 = vmatprep.subr.mxu0 0.0
        %6574 = vmatpush1.msra.mxu0 0.0
        %6575 = vmatprep.subr.mxu0 0.0
        %6576 = vmatpush1.msra.mxu0 0.0
        %6577 = vmatprep.subr.mxu0 0.0
        %6578 = vmatpush1.msra.mxu0 0.0
        %6579 = vmatprep.subr.mxu0 0.0
        %6580 = vmatpush1.msra.mxu0 0.0
        %6581 = vmatprep.subr.mxu0 0.0
        %6582 = vmatpush1.msra.mxu0 0.0
        %6583 = vmatprep.mubr.f32.mxu0 0.0
        %v6584 = vand.u32 %v4511, 4294901760
        %v6585 = vsub.f32 %v4511, %v6584
        %v6586 = vand.u32 %v6585, 4294901760
        %6587 = vmatmul.mubr.f32.gmra.mrb[0].mxu0 %v6586
        %v6588 = vpop.f32.mrb[0].mxu0
        %v6589 = vadd.f32 %v6387, %v6588
        %v6590 = vpop.f32.mrb[0].mxu0
        %v6591 = vadd.f32 %v6389, %v6590
        %6592 = vmatprep.mubr.f32.mxu0 0.0
        %v6593 = vand.u32 %v4514, 4294901760
        %v6594 = vsub.f32 %v4514, %v6593
        %v6595 = vand.u32 %v6594, 4294901760
        %6596 = vmatmul.mubr.f32.gmra.mrb[0].mxu0 %v6595
        %v6597 = vpop.f32.mrb[0].mxu0
        %v6598 = vadd.f32 %v6395, %v6597
        %v6599 = vpop.f32.mrb[0].mxu0
        %v6600 = vadd.f32 %v6397, %v6599
        %6601 = vmatprep.mubr.f32.mxu0 0.0
        %v6602 = vand.u32 %v4517, 4294901760
        %v6603 = vsub.f32 %v4517, %v6602
        %v6604 = vand.u32 %v6603, 4294901760
        %6605 = vmatmul.mubr.f32.gmra.mrb[0].mxu0 %v6604
        %v6606 = vpop.f32.mrb[0].mxu0
        %v6607 = vadd.f32 %v6403, %v6606
        %v6608 = vpop.f32.mrb[0].mxu0
        %v6609 = vadd.f32 %v6405, %v6608
        %6610 = vmatprep.mubr.f32.mxu0 0.0
        %v6611 = vand.u32 %v4520, 4294901760
        %v6612 = vsub.f32 %v4520, %v6611
        %v6613 = vand.u32 %v6612, 4294901760
        %6614 = vmatmul.mubr.f32.gmra.mrb[0].mxu0 %v6613
        %v6615 = vpop.f32.mrb[0].mxu0
        %v6616 = vadd.f32 %v6411, %v6615
        %v6617 = vpop.f32.mrb[0].mxu0
        %v6618 = vadd.f32 %v6413, %v6617
        %6619 = vmatprep.mubr.f32.mxu0 0.0
        %v6620 = vand.u32 %v4523, 4294901760
        %v6621 = vsub.f32 %v4523, %v6620
        %v6622 = vand.u32 %v6621, 4294901760
        %6623 = vmatmul.mubr.f32.gmra.mrb[0].mxu0 %v6622
        %v6624 = vpop.f32.mrb[0].mxu0
        %v6625 = vadd.f32 %v6419, %v6624
        %v6626 = vpop.f32.mrb[0].mxu0
        %v6627 = vadd.f32 %v6421, %v6626
        %6628 = vmatprep.mubr.f32.mxu0 0.0
        %v6629 = vand.u32 %v4526, 4294901760
        %v6630 = vsub.f32 %v4526, %v6629
        %v6631 = vand.u32 %v6630, 4294901760
        %6632 = vmatmul.mubr.f32.gmra.mrb[0].mxu0 %v6631
        %v6633 = vpop.f32.mrb[0].mxu0
        %v6634 = vadd.f32 %v6427, %v6633
        %v6635 = vpop.f32.mrb[0].mxu0
        %v6636 = vadd.f32 %v6429, %v6635
        %6637 = vmatprep.mubr.f32.mxu0 0.0
        %v6638 = vand.u32 %v4529, 4294901760
        %v6639 = vsub.f32 %v4529, %v6638
        %v6640 = vand.u32 %v6639, 4294901760
        %6641 = vmatmul.mubr.f32.gmra.mrb[0].mxu0 %v6640
        %v6642 = vpop.f32.mrb[0].mxu0
        %v6643 = vadd.f32 %v6435, %v6642
        %v6644 = vpop.f32.mrb[0].mxu0
        %v6645 = vadd.f32 %v6437, %v6644
        %6646 = vmatprep.mubr.f32.mxu0 0.0
        %v6647 = vand.u32 %v4532, 4294901760
        %v6648 = vsub.f32 %v4532, %v6647
        %v6649 = vand.u32 %v6648, 4294901760
        %6650 = vmatmul.mubr.f32.gmra.mrb[0].mxu0 %v6649
        %v6651 = vpop.f32.mrb[0].mxu0
        %v6652 = vadd.f32 %v6443, %v6651
        %v6653 = vpop.f32.mrb[0].mxu0
        %v6654 = vadd.f32 %v6445, %v6653
        %6655 = vmatprep.mubr.f32.mxu0 0.0
        %v6656 = vand.u32 %v4535, 4294901760
        %v6657 = vsub.f32 %v4535, %v6656
        %v6658 = vand.u32 %v6657, 4294901760
        %6659 = vmatmul.mubr.f32.gmra.mrb[0].mxu0 %v6658
        %v6660 = vpop.f32.mrb[0].mxu0
        %v6661 = vadd.f32 %v6451, %v6660
        %v6662 = vpop.f32.mrb[0].mxu0
        %v6663 = vadd.f32 %v6453, %v6662
        %6664 = vmatprep.mubr.f32.mxu0 0.0
        %v6665 = vand.u32 %v4538, 4294901760
        %v6666 = vsub.f32 %v4538, %v6665
        %v6667 = vand.u32 %v6666, 4294901760
        %6668 = vmatmul.mubr.f32.gmra.mrb[0].mxu0 %v6667
        %v6669 = vpop.f32.mrb[0].mxu0
        %v6670 = vadd.f32 %v6459, %v6669
        %v6671 = vpop.f32.mrb[0].mxu0
        %v6672 = vadd.f32 %v6461, %v6671
        %6673 = vmatprep.mubr.f32.mxu0 0.0
        %v6674 = vand.u32 %v4541, 4294901760
        %v6675 = vsub.f32 %v4541, %v6674
        %v6676 = vand.u32 %v6675, 4294901760
        %6677 = vmatmul.mubr.f32.gmra.mrb[0].mxu0 %v6676
        %v6678 = vpop.f32.mrb[0].mxu0
        %v6679 = vadd.f32 %v6467, %v6678
        %v6680 = vpop.f32.mrb[0].mxu0
        %v6681 = vadd.f32 %v6469, %v6680
        %6682 = vmatprep.mubr.f32.mxu0 0.0
        %v6683 = vand.u32 %v4544, 4294901760
        %v6684 = vsub.f32 %v4544, %v6683
        %v6685 = vand.u32 %v6684, 4294901760
        %6686 = vmatmul.mubr.f32.gmra.mrb[0].mxu0 %v6685
        %v6687 = vpop.f32.mrb[0].mxu0
        %v6688 = vadd.f32 %v6475, %v6687
        %v6689 = vpop.f32.mrb[0].mxu0
        %v6690 = vadd.f32 %v6477, %v6689
        %6691 = vmatprep.mubr.f32.mxu0 0.0
        %v6692 = vand.u32 %v4547, 4294901760
        %v6693 = vsub.f32 %v4547, %v6692
        %v6694 = vand.u32 %v6693, 4294901760
        %6695 = vmatmul.mubr.f32.gmra.mrb[0].mxu0 %v6694
        %v6696 = vpop.f32.mrb[0].mxu0
        %v6697 = vadd.f32 %v6483, %v6696
        %v6698 = vpop.f32.mrb[0].mxu0
        %v6699 = vadd.f32 %v6485, %v6698
        %6700 = vmatprep.mubr.f32.mxu0 0.0
        %v6701 = vand.u32 %v4550, 4294901760
        %v6702 = vsub.f32 %v4550, %v6701
        %v6703 = vand.u32 %v6702, 4294901760
        %6704 = vmatmul.mubr.f32.gmra.mrb[0].mxu0 %v6703
        %v6705 = vpop.f32.mrb[0].mxu0
        %v6706 = vadd.f32 %v6491, %v6705
        %v6707 = vpop.f32.mrb[0].mxu0
        %v6708 = vadd.f32 %v6493, %v6707
        %6709 = vmatprep.mubr.f32.mxu0 0.0
        %v6710 = vand.u32 %v4553, 4294901760
        %v6711 = vsub.f32 %v4553, %v6710
        %v6712 = vand.u32 %v6711, 4294901760
        %6713 = vmatmul.mubr.f32.gmra.mrb[0].mxu0 %v6712
        %v6714 = vpop.f32.mrb[0].mxu0
        %v6715 = vadd.f32 %v6499, %v6714
        %v6716 = vpop.f32.mrb[0].mxu0
        %v6717 = vadd.f32 %v6501, %v6716
        %6718 = vmatprep.mubr.f32.mxu0 0.0
        %v6719 = vand.u32 %v4556, 4294901760
        %v6720 = vsub.f32 %v4556, %v6719
        %v6721 = vand.u32 %v6720, 4294901760
        %6722 = vmatmul.mubr.f32.gmra.mrb[0].mxu0 %v6721
        %v6723 = vpop.f32.mrb[0].mxu0
        %v6724 = vadd.f32 %v6507, %v6723
        %v6725 = vpop.f32.mrb[0].mxu0
        %v6726 = vadd.f32 %v6509, %v6725
        %6727 = vdwg.mxu0
        %v6728 = vand.u32 %v4464, 4294901760
        %v6729 = vsub.f32 %v4464, %v6728
        %v6730 = vand.u32 %v6729, 4294901760
        %6731 = vmatprep.subr.mxu0 %v6730
        %v6732 = vand.u32 %v4463, 4294901760
        %v6733 = vsub.f32 %v4463, %v6732
        %v6734 = vand.u32 %v6733, 4294901760
        %6735 = vmatpush1.msra.mxu0 %v6734
        %v6736 = vand.u32 %v4472, 4294901760
        %v6737 = vsub.f32 %v4472, %v6736
        %v6738 = vand.u32 %v6737, 4294901760
        %6739 = vmatprep.subr.mxu0 %v6738
        %v6740 = vand.u32 %v4471, 4294901760
        %v6741 = vsub.f32 %v4471, %v6740
        %v6742 = vand.u32 %v6741, 4294901760
        %6743 = vmatpush1.msra.mxu0 %v6742
        %v6744 = vand.u32 %v4480, 4294901760
        %v6745 = vsub.f32 %v4480, %v6744
        %v6746 = vand.u32 %v6745, 4294901760
        %6747 = vmatprep.subr.mxu0 %v6746
        %v6748 = vand.u32 %v4479, 4294901760
        %v6749 = vsub.f32 %v4479, %v6748
        %v6750 = vand.u32 %v6749, 4294901760
        %6751 = vmatpush1.msra.mxu0 %v6750
        %v6752 = vand.u32 %v4488, 4294901760
        %v6753 = vsub.f32 %v4488, %v6752
        %v6754 = vand.u32 %v6753, 4294901760
        %6755 = vmatprep.subr.mxu0 %v6754
        %v6756 = vand.u32 %v4487, 4294901760
        %v6757 = vsub.f32 %v4487, %v6756
        %v6758 = vand.u32 %v6757, 4294901760
        %6759 = vmatpush1.msra.mxu0 %v6758
        %6760 = vmatprep.subr.mxu0 0.0
        %6761 = vmatpush1.msra.mxu0 0.0
        %6762 = vmatprep.subr.mxu0 0.0
        %6763 = vmatpush1.msra.mxu0 0.0
        %6764 = vmatprep.subr.mxu0 0.0
        %6765 = vmatpush1.msra.mxu0 0.0
        %6766 = vmatprep.subr.mxu0 0.0
        %6767 = vmatpush1.msra.mxu0 0.0
        %6768 = vmatprep.subr.mxu0 0.0
        %6769 = vmatpush1.msra.mxu0 0.0
        %6770 = vmatprep.subr.mxu0 0.0
        %6771 = vmatpush1.msra.mxu0 0.0
        %6772 = vmatprep.subr.mxu0 0.0
        %6773 = vmatpush1.msra.mxu0 0.0
        %6774 = vmatprep.subr.mxu0 0.0
        %6775 = vmatpush1.msra.mxu0 0.0
        %6776 = vmatprep.subr.mxu0 0.0
        %6777 = vmatpush1.msra.mxu0 0.0
        %6778 = vmatprep.subr.mxu0 0.0
        %6779 = vmatpush1.msra.mxu0 0.0
        %6780 = vmatprep.subr.mxu0 0.0
        %6781 = vmatpush1.msra.mxu0 0.0
        %6782 = vmatprep.subr.mxu0 0.0
        %6783 = vmatpush1.msra.mxu0 0.0
        %6784 = vmatprep.subr.mxu0 0.0
        %6785 = vmatpush1.msra.mxu0 0.0
        %6786 = vmatprep.subr.mxu0 0.0
        %6787 = vmatpush1.msra.mxu0 0.0
        %6788 = vmatprep.subr.mxu0 0.0
        %6789 = vmatpush1.msra.mxu0 0.0
        %6790 = vmatprep.subr.mxu0 0.0
        %6791 = vmatpush1.msra.mxu0 0.0
        %6792 = vmatprep.subr.mxu0 0.0
        %6793 = vmatpush1.msra.mxu0 0.0
        %6794 = vmatprep.subr.mxu0 0.0
        %6795 = vmatpush1.msra.mxu0 0.0
        %6796 = vmatprep.subr.mxu0 0.0
        %6797 = vmatpush1.msra.mxu0 0.0
        %6798 = vmatprep.subr.mxu0 0.0
        %6799 = vmatpush1.msra.mxu0 0.0
        %6800 = vmatprep.subr.mxu0 0.0
        %6801 = vmatpush1.msra.mxu0 0.0
        %6802 = vmatprep.subr.mxu0 0.0
        %6803 = vmatpush1.msra.mxu0 0.0
        %6804 = vmatprep.subr.mxu0 0.0
        %6805 = vmatpush1.msra.mxu0 0.0
        %6806 = vmatprep.subr.mxu0 0.0
        %6807 = vmatpush1.msra.mxu0 0.0
        %6808 = vmatprep.subr.mxu0 0.0
        %6809 = vmatpush1.msra.mxu0 0.0
        %6810 = vmatprep.subr.mxu0 0.0
        %6811 = vmatpush1.msra.mxu0 0.0
        %6812 = vmatprep.subr.mxu0 0.0
        %6813 = vmatpush1.msra.mxu0 0.0
        %6814 = vmatprep.subr.mxu0 0.0
        %6815 = vmatpush1.msra.mxu0 0.0
        %6816 = vmatprep.mubr.f32.mxu0 0.0
        %v6817 = vand.u32 %v4511, 4294901760
        %6818 = vmatmul.mubr.f32.gmra.mrb[0].mxu0 %v6817
        %v6819 = vpop.f32.mrb[0].mxu0
        %v6820 = vadd.f32 %v6589, %v6819
        %v6821 = vpop.f32.mrb[0].mxu0
        %v6822 = vadd.f32 %v6591, %v6821
        %6823 = vmatprep.mubr.f32.mxu0 0.0
        %v6824 = vand.u32 %v4514, 4294901760
        %6825 = vmatmul.mubr.f32.gmra.mrb[0].mxu0 %v6824
        %v6826 = vpop.f32.mrb[0].mxu0
        %v6827 = vadd.f32 %v6598, %v6826
        %v6828 = vpop.f32.mrb[0].mxu0
        %v6829 = vadd.f32 %v6600, %v6828
        %6830 = vmatprep.mubr.f32.mxu0 0.0
        %v6831 = vand.u32 %v4517, 4294901760
        %6832 = vmatmul.mubr.f32.gmra.mrb[0].mxu0 %v6831
        %v6833 = vpop.f32.mrb[0].mxu0
        %v6834 = vadd.f32 %v6607, %v6833
        %v6835 = vpop.f32.mrb[0].mxu0
        %v6836 = vadd.f32 %v6609, %v6835
        %6837 = vmatprep.mubr.f32.mxu0 0.0
        %v6838 = vand.u32 %v4520, 4294901760
        %6839 = vmatmul.mubr.f32.gmra.mrb[0].mxu0 %v6838
        %v6840 = vpop.f32.mrb[0].mxu0
        %v6841 = vadd.f32 %v6616, %v6840
        %v6842 = vpop.f32.mrb[0].mxu0
        %v6843 = vadd.f32 %v6618, %v6842
        %6844 = vmatprep.mubr.f32.mxu0 0.0
        %v6845 = vand.u32 %v4523, 4294901760
        %6846 = vmatmul.mubr.f32.gmra.mrb[0].mxu0 %v6845
        %v6847 = vpop.f32.mrb[0].mxu0
        %v6848 = vadd.f32 %v6625, %v6847
        %v6849 = vpop.f32.mrb[0].mxu0
        %v6850 = vadd.f32 %v6627, %v6849
        %6851 = vmatprep.mubr.f32.mxu0 0.0
        %v6852 = vand.u32 %v4526, 4294901760
        %6853 = vmatmul.mubr.f32.gmra.mrb[0].mxu0 %v6852
        %v6854 = vpop.f32.mrb[0].mxu0
        %v6855 = vadd.f32 %v6634, %v6854
        %v6856 = vpop.f32.mrb[0].mxu0
        %v6857 = vadd.f32 %v6636, %v6856
        %6858 = vmatprep.mubr.f32.mxu0 0.0
        %v6859 = vand.u32 %v4529, 4294901760
        %6860 = vmatmul.mubr.f32.gmra.mrb[0].mxu0 %v6859
        %v6861 = vpop.f32.mrb[0].mxu0
        %v6862 = vadd.f32 %v6643, %v6861
        %v6863 = vpop.f32.mrb[0].mxu0
        %v6864 = vadd.f32 %v6645, %v6863
        %6865 = vmatprep.mubr.f32.mxu0 0.0
        %v6866 = vand.u32 %v4532, 4294901760
        %6867 = vmatmul.mubr.f32.gmra.mrb[0].mxu0 %v6866
        %v6868 = vpop.f32.mrb[0].mxu0
        %v6869 = vadd.f32 %v6652, %v6868
        %v6870 = vpop.f32.mrb[0].mxu0
        %v6871 = vadd.f32 %v6654, %v6870
        %6872 = vmatprep.mubr.f32.mxu0 0.0
        %v6873 = vand.u32 %v4535, 4294901760
        %6874 = vmatmul.mubr.f32.gmra.mrb[0].mxu0 %v6873
        %v6875 = vpop.f32.mrb[0].mxu0
        %v6876 = vadd.f32 %v6661, %v6875
        %v6877 = vpop.f32.mrb[0].mxu0
        %v6878 = vadd.f32 %v6663, %v6877
        %6879 = vmatprep.mubr.f32.mxu0 0.0
        %v6880 = vand.u32 %v4538, 4294901760
        %6881 = vmatmul.mubr.f32.gmra.mrb[0].mxu0 %v6880
        %v6882 = vpop.f32.mrb[0].mxu0
        %v6883 = vadd.f32 %v6670, %v6882
        %v6884 = vpop.f32.mrb[0].mxu0
        %v6885 = vadd.f32 %v6672, %v6884
        %6886 = vmatprep.mubr.f32.mxu0 0.0
        %v6887 = vand.u32 %v4541, 4294901760
        %6888 = vmatmul.mubr.f32.gmra.mrb[0].mxu0 %v6887
        %v6889 = vpop.f32.mrb[0].mxu0
        %v6890 = vadd.f32 %v6679, %v6889
        %v6891 = vpop.f32.mrb[0].mxu0
        %v6892 = vadd.f32 %v6681, %v6891
        %6893 = vmatprep.mubr.f32.mxu0 0.0
        %v6894 = vand.u32 %v4544, 4294901760
        %6895 = vmatmul.mubr.f32.gmra.mrb[0].mxu0 %v6894
        %v6896 = vpop.f32.mrb[0].mxu0
        %v6897 = vadd.f32 %v6688, %v6896
        %v6898 = vpop.f32.mrb[0].mxu0
        %v6899 = vadd.f32 %v6690, %v6898
        %6900 = vmatprep.mubr.f32.mxu0 0.0
        %v6901 = vand.u32 %v4547, 4294901760
        %6902 = vmatmul.mubr.f32.gmra.mrb[0].mxu0 %v6901
        %v6903 = vpop.f32.mrb[0].mxu0
        %v6904 = vadd.f32 %v6697, %v6903
        %v6905 = vpop.f32.mrb[0].mxu0
        %v6906 = vadd.f32 %v6699, %v6905
        %6907 = vmatprep.mubr.f32.mxu0 0.0
        %v6908 = vand.u32 %v4550, 4294901760
        %6909 = vmatmul.mubr.f32.gmra.mrb[0].mxu0 %v6908
        %v6910 = vpop.f32.mrb[0].mxu0
        %v6911 = vadd.f32 %v6706, %v6910
        %v6912 = vpop.f32.mrb[0].mxu0
        %v6913 = vadd.f32 %v6708, %v6912
        %6914 = vmatprep.mubr.f32.mxu0 0.0
        %v6915 = vand.u32 %v4553, 4294901760
        %6916 = vmatmul.mubr.f32.gmra.mrb[0].mxu0 %v6915
        %v6917 = vpop.f32.mrb[0].mxu0
        %v6918 = vadd.f32 %v6715, %v6917
        %v6919 = vpop.f32.mrb[0].mxu0
        %v6920 = vadd.f32 %v6717, %v6919
        %6921 = vmatprep.mubr.f32.mxu0 0.0
        %v6922 = vand.u32 %v4556, 4294901760
        %6923 = vmatmul.mubr.f32.gmra.mrb[0].mxu0 %v6922
        %v6924 = vpop.f32.mrb[0].mxu0
        %v6925 = vadd.f32 %v6724, %v6924
        %v6926 = vpop.f32.mrb[0].mxu0
        %v6927 = vadd.f32 %v6726, %v6926
        %6928 = vdwg.mxu0
        %v6929 = vand.u32 %v4464, 4294901760
        %6930 = vmatprep.subr.mxu0 %v6929
        %v6931 = vand.u32 %v4463, 4294901760
        %6932 = vmatpush1.msra.mxu0 %v6931
        %v6933 = vand.u32 %v4472, 4294901760
        %6934 = vmatprep.subr.mxu0 %v6933
        %v6935 = vand.u32 %v4471, 4294901760
        %6936 = vmatpush1.msra.mxu0 %v6935
        %v6937 = vand.u32 %v4480, 4294901760
        %6938 = vmatprep.subr.mxu0 %v6937
        %v6939 = vand.u32 %v4479, 4294901760
        %6940 = vmatpush1.msra.mxu0 %v6939
        %v6941 = vand.u32 %v4488, 4294901760
        %6942 = vmatprep.subr.mxu0 %v6941
        %v6943 = vand.u32 %v4487, 4294901760
        %6944 = vmatpush1.msra.mxu0 %v6943
        %6945 = vmatprep.subr.mxu0 0.0
        %6946 = vmatpush1.msra.mxu0 0.0
        %6947 = vmatprep.subr.mxu0 0.0
        %6948 = vmatpush1.msra.mxu0 0.0
        %6949 = vmatprep.subr.mxu0 0.0
        %6950 = vmatpush1.msra.mxu0 0.0
        %6951 = vmatprep.subr.mxu0 0.0
        %6952 = vmatpush1.msra.mxu0 0.0
        %6953 = vmatprep.subr.mxu0 0.0
        %6954 = vmatpush1.msra.mxu0 0.0
        %6955 = vmatprep.subr.mxu0 0.0
        %6956 = vmatpush1.msra.mxu0 0.0
        %6957 = vmatprep.subr.mxu0 0.0
        %6958 = vmatpush1.msra.mxu0 0.0
        %6959 = vmatprep.subr.mxu0 0.0
        %6960 = vmatpush1.msra.mxu0 0.0
        %6961 = vmatprep.subr.mxu0 0.0
        %6962 = vmatpush1.msra.mxu0 0.0
        %6963 = vmatprep.subr.mxu0 0.0
        %6964 = vmatpush1.msra.mxu0 0.0
        %6965 = vmatprep.subr.mxu0 0.0
        %6966 = vmatpush1.msra.mxu0 0.0
        %6967 = vmatprep.subr.mxu0 0.0
        %6968 = vmatpush1.msra.mxu0 0.0
        %6969 = vmatprep.subr.mxu0 0.0
        %6970 = vmatpush1.msra.mxu0 0.0
        %6971 = vmatprep.subr.mxu0 0.0
        %6972 = vmatpush1.msra.mxu0 0.0
        %6973 = vmatprep.subr.mxu0 0.0
        %6974 = vmatpush1.msra.mxu0 0.0
        %6975 = vmatprep.subr.mxu0 0.0
        %6976 = vmatpush1.msra.mxu0 0.0
        %6977 = vmatprep.subr.mxu0 0.0
        %6978 = vmatpush1.msra.mxu0 0.0
        %6979 = vmatprep.subr.mxu0 0.0
        %6980 = vmatpush1.msra.mxu0 0.0
        %6981 = vmatprep.subr.mxu0 0.0
        %6982 = vmatpush1.msra.mxu0 0.0
        %6983 = vmatprep.subr.mxu0 0.0
        %6984 = vmatpush1.msra.mxu0 0.0
        %6985 = vmatprep.subr.mxu0 0.0
        %6986 = vmatpush1.msra.mxu0 0.0
        %6987 = vmatprep.subr.mxu0 0.0
        %6988 = vmatpush1.msra.mxu0 0.0
        %6989 = vmatprep.subr.mxu0 0.0
        %6990 = vmatpush1.msra.mxu0 0.0
        %6991 = vmatprep.subr.mxu0 0.0
        %6992 = vmatpush1.msra.mxu0 0.0
        %6993 = vmatprep.subr.mxu0 0.0
        %6994 = vmatpush1.msra.mxu0 0.0
        %6995 = vmatprep.subr.mxu0 0.0
        %6996 = vmatpush1.msra.mxu0 0.0
        %6997 = vmatprep.subr.mxu0 0.0
        %6998 = vmatpush1.msra.mxu0 0.0
        %6999 = vmatprep.subr.mxu0 0.0
        %7000 = vmatpush1.msra.mxu0 0.0
        %7001 = vmatprep.mubr.f32.mxu0 0.0
        %v7002 = vand.u32 %v4511, 4294901760
        %7003 = vmatmul.mubr.f32.gmra.mrb[0].mxu0 %v7002
        %v7004 = vpop.f32.mrb[0].mxu0
        %v7005 = vadd.f32 %v6820, %v7004
        %v7006 = vpop.f32.mrb[0].mxu0
        %v7007 = vadd.f32 %v6822, %v7006
        %7008 = vmatprep.mubr.f32.mxu0 0.0
        %v7009 = vand.u32 %v4514, 4294901760
        %7010 = vmatmul.mubr.f32.gmra.mrb[0].mxu0 %v7009
        %v7011 = vpop.f32.mrb[0].mxu0
        %v7012 = vadd.f32 %v6827, %v7011
        %v7013 = vpop.f32.mrb[0].mxu0
        %v7014 = vadd.f32 %v6829, %v7013
        %7015 = vmatprep.mubr.f32.mxu0 0.0
        %v7016 = vand.u32 %v4517, 4294901760
        %7017 = vmatmul.mubr.f32.gmra.mrb[0].mxu0 %v7016
        %v7018 = vpop.f32.mrb[0].mxu0
        %v7019 = vadd.f32 %v6834, %v7018
        %v7020 = vpop.f32.mrb[0].mxu0
        %v7021 = vadd.f32 %v6836, %v7020
        %7022 = vmatprep.mubr.f32.mxu0 0.0
        %v7023 = vand.u32 %v4520, 4294901760
        %7024 = vmatmul.mubr.f32.gmra.mrb[0].mxu0 %v7023
        %v7025 = vpop.f32.mrb[0].mxu0
        %v7026 = vadd.f32 %v6841, %v7025
        %v7027 = vpop.f32.mrb[0].mxu0
        %v7028 = vadd.f32 %v6843, %v7027
        %7029 = vmatprep.mubr.f32.mxu0 0.0
        %v7030 = vand.u32 %v4523, 4294901760
        %7031 = vmatmul.mubr.f32.gmra.mrb[0].mxu0 %v7030
        %v7032 = vpop.f32.mrb[0].mxu0
        %v7033 = vadd.f32 %v6848, %v7032
        %v7034 = vpop.f32.mrb[0].mxu0
        %v7035 = vadd.f32 %v6850, %v7034
        %7036 = vmatprep.mubr.f32.mxu0 0.0
        %v7037 = vand.u32 %v4526, 4294901760
        %7038 = vmatmul.mubr.f32.gmra.mrb[0].mxu0 %v7037
        %v7039 = vpop.f32.mrb[0].mxu0
        %v7040 = vadd.f32 %v6855, %v7039
        %v7041 = vpop.f32.mrb[0].mxu0
        %v7042 = vadd.f32 %v6857, %v7041
        %7043 = vmatprep.mubr.f32.mxu0 0.0
        %v7044 = vand.u32 %v4529, 4294901760
        %7045 = vmatmul.mubr.f32.gmra.mrb[0].mxu0 %v7044
        %v7046 = vpop.f32.mrb[0].mxu0
        %v7047 = vadd.f32 %v6862, %v7046
        %v7048 = vpop.f32.mrb[0].mxu0
        %v7049 = vadd.f32 %v6864, %v7048
        %7050 = vmatprep.mubr.f32.mxu0 0.0
        %v7051 = vand.u32 %v4532, 4294901760
        %7052 = vmatmul.mubr.f32.gmra.mrb[0].mxu0 %v7051
        %v7053 = vpop.f32.mrb[0].mxu0
        %v7054 = vadd.f32 %v6869, %v7053
        %v7055 = vpop.f32.mrb[0].mxu0
        %v7056 = vadd.f32 %v6871, %v7055
        %7057 = vmatprep.mubr.f32.mxu0 0.0
        %v7058 = vand.u32 %v4535, 4294901760
        %7059 = vmatmul.mubr.f32.gmra.mrb[0].mxu0 %v7058
        %v7060 = vpop.f32.mrb[0].mxu0
        %v7061 = vadd.f32 %v6876, %v7060
        %v7062 = vpop.f32.mrb[0].mxu0
        %v7063 = vadd.f32 %v6878, %v7062
        %7064 = vmatprep.mubr.f32.mxu0 0.0
        %v7065 = vand.u32 %v4538, 4294901760
        %7066 = vmatmul.mubr.f32.gmra.mrb[0].mxu0 %v7065
        %v7067 = vpop.f32.mrb[0].mxu0
        %v7068 = vadd.f32 %v6883, %v7067
        %v7069 = vpop.f32.mrb[0].mxu0
        %v7070 = vadd.f32 %v6885, %v7069
        %7071 = vmatprep.mubr.f32.mxu0 0.0
        %v7072 = vand.u32 %v4541, 4294901760
        %7073 = vmatmul.mubr.f32.gmra.mrb[0].mxu0 %v7072
        %v7074 = vpop.f32.mrb[0].mxu0
        %v7075 = vadd.f32 %v6890, %v7074
        %v7076 = vpop.f32.mrb[0].mxu0
        %v7077 = vadd.f32 %v6892, %v7076
        %7078 = vmatprep.mubr.f32.mxu0 0.0
        %v7079 = vand.u32 %v4544, 4294901760
        %7080 = vmatmul.mubr.f32.gmra.mrb[0].mxu0 %v7079
        %v7081 = vpop.f32.mrb[0].mxu0
        %v7082 = vadd.f32 %v6897, %v7081
        %v7083 = vpop.f32.mrb[0].mxu0
        %v7084 = vadd.f32 %v6899, %v7083
        %7085 = vmatprep.mubr.f32.mxu0 0.0
        %v7086 = vand.u32 %v4547, 4294901760
        %7087 = vmatmul.mubr.f32.gmra.mrb[0].mxu0 %v7086
        %v7088 = vpop.f32.mrb[0].mxu0
        %v7089 = vadd.f32 %v6904, %v7088
        %v7090 = vpop.f32.mrb[0].mxu0
        %v7091 = vadd.f32 %v6906, %v7090
        %7092 = vmatprep.mubr.f32.mxu0 0.0
        %v7093 = vand.u32 %v4550, 4294901760
        %7094 = vmatmul.mubr.f32.gmra.mrb[0].mxu0 %v7093
        %v7095 = vpop.f32.mrb[0].mxu0
        %v7096 = vadd.f32 %v6911, %v7095
        %v7097 = vpop.f32.mrb[0].mxu0
        %v7098 = vadd.f32 %v6913, %v7097
        %7099 = vmatprep.mubr.f32.mxu0 0.0
        %v7100 = vand.u32 %v4553, 4294901760
        %7101 = vmatmul.mubr.f32.gmra.mrb[0].mxu0 %v7100
        %v7102 = vpop.f32.mrb[0].mxu0
        %v7103 = vadd.f32 %v6918, %v7102
        %v7104 = vpop.f32.mrb[0].mxu0
        %v7105 = vadd.f32 %v6920, %v7104
        %7106 = vmatprep.mubr.f32.mxu0 0.0
        %v7107 = vand.u32 %v4556, 4294901760
        %7108 = vmatmul.mubr.f32.gmra.mrb[0].mxu0 %v7107
        %v7109 = vpop.f32.mrb[0].mxu0
        %v7110 = vadd.f32 %v6925, %v7109
        %v7111 = vpop.f32.mrb[0].mxu0
        %v7112 = vadd.f32 %v6927, %v7111
        %7113 = vdwg.mxu0
        %v7114 = vand.u32 %v4466, 4294901760
        %7115 = vmatprep.subr.mxu0 %v7114
        %v7116 = vand.u32 %v4465, 4294901760
        %7117 = vmatpush1.msra.mxu0 %v7116
        %v7118 = vand.u32 %v4474, 4294901760
        %7119 = vmatprep.subr.mxu0 %v7118
        %v7120 = vand.u32 %v4473, 4294901760
        %7121 = vmatpush1.msra.mxu0 %v7120
        %v7122 = vand.u32 %v4482, 4294901760
        %7123 = vmatprep.subr.mxu0 %v7122
        %v7124 = vand.u32 %v4481, 4294901760
        %7125 = vmatpush1.msra.mxu0 %v7124
        %v7126 = vand.u32 %v4490, 4294901760
        %7127 = vmatprep.subr.mxu0 %v7126
        %v7128 = vand.u32 %v4489, 4294901760
        %7129 = vmatpush1.msra.mxu0 %v7128
        %7130 = vmatprep.subr.mxu0 0.0
        %7131 = vmatpush1.msra.mxu0 0.0
        %7132 = vmatprep.subr.mxu0 0.0
        %7133 = vmatpush1.msra.mxu0 0.0
        %7134 = vmatprep.subr.mxu0 0.0
        %7135 = vmatpush1.msra.mxu0 0.0
        %7136 = vmatprep.subr.mxu0 0.0
        %7137 = vmatpush1.msra.mxu0 0.0
        %7138 = vmatprep.subr.mxu0 0.0
        %7139 = vmatpush1.msra.mxu0 0.0
        %7140 = vmatprep.subr.mxu0 0.0
        %7141 = vmatpush1.msra.mxu0 0.0
        %7142 = vmatprep.subr.mxu0 0.0
        %7143 = vmatpush1.msra.mxu0 0.0
        %7144 = vmatprep.subr.mxu0 0.0
        %7145 = vmatpush1.msra.mxu0 0.0
        %7146 = vmatprep.subr.mxu0 0.0
        %7147 = vmatpush1.msra.mxu0 0.0
        %7148 = vmatprep.subr.mxu0 0.0
        %7149 = vmatpush1.msra.mxu0 0.0
        %7150 = vmatprep.subr.mxu0 0.0
        %7151 = vmatpush1.msra.mxu0 0.0
        %7152 = vmatprep.subr.mxu0 0.0
        %7153 = vmatpush1.msra.mxu0 0.0
        %7154 = vmatprep.subr.mxu0 0.0
        %7155 = vmatpush1.msra.mxu0 0.0
        %7156 = vmatprep.subr.mxu0 0.0
        %7157 = vmatpush1.msra.mxu0 0.0
        %7158 = vmatprep.subr.mxu0 0.0
        %7159 = vmatpush1.msra.mxu0 0.0
        %7160 = vmatprep.subr.mxu0 0.0
        %7161 = vmatpush1.msra.mxu0 0.0
        %7162 = vmatprep.subr.mxu0 0.0
        %7163 = vmatpush1.msra.mxu0 0.0
        %7164 = vmatprep.subr.mxu0 0.0
        %7165 = vmatpush1.msra.mxu0 0.0
        %7166 = vmatprep.subr.mxu0 0.0
        %7167 = vmatpush1.msra.mxu0 0.0
        %7168 = vmatprep.subr.mxu0 0.0
        %7169 = vmatpush1.msra.mxu0 0.0
        %7170 = vmatprep.subr.mxu0 0.0
        %7171 = vmatpush1.msra.mxu0 0.0
        %7172 = vmatprep.subr.mxu0 0.0
        %7173 = vmatpush1.msra.mxu0 0.0
        %7174 = vmatprep.subr.mxu0 0.0
        %7175 = vmatpush1.msra.mxu0 0.0
        %7176 = vmatprep.subr.mxu0 0.0
        %7177 = vmatpush1.msra.mxu0 0.0
        %7178 = vmatprep.subr.mxu0 0.0
        %7179 = vmatpush1.msra.mxu0 0.0
        %7180 = vmatprep.subr.mxu0 0.0
        %7181 = vmatpush1.msra.mxu0 0.0
        %7182 = vmatprep.subr.mxu0 0.0
        %7183 = vmatpush1.msra.mxu0 0.0
        %7184 = vmatprep.subr.mxu0 0.0
        %7185 = vmatpush1.msra.mxu0 0.0
        %7186 = vmatprep.mubr.f32.mxu0 0.0
        %v7187 = vand.u32 %v4511, 4294901760
        %v7188 = vsub.f32 %v4511, %v7187
        %v7189 = vand.u32 %v7188, 4294901760
        %v7190 = vsub.f32 %v7188, %v7189
        %v7191 = vand.u32 %v7190, 4294901760
        %7192 = vmatmul.mubr.f32.gmra.mrb[0].mxu0 %v7191
        %v7193 = vpop.f32.mrb[0].mxu0
        %v7194 = vadd.f32 0.0, %v7193
        %v7195 = vpop.f32.mrb[0].mxu0
        %v7196 = vadd.f32 0.0, %v7195
        %7197 = vmatprep.mubr.f32.mxu0 0.0
        %v7198 = vand.u32 %v4514, 4294901760
        %v7199 = vsub.f32 %v4514, %v7198
        %v7200 = vand.u32 %v7199, 4294901760
        %v7201 = vsub.f32 %v7199, %v7200
        %v7202 = vand.u32 %v7201, 4294901760
        %7203 = vmatmul.mubr.f32.gmra.mrb[0].mxu0 %v7202
        %v7204 = vpop.f32.mrb[0].mxu0
        %v7205 = vadd.f32 0.0, %v7204
        %v7206 = vpop.f32.mrb[0].mxu0
        %v7207 = vadd.f32 0.0, %v7206
        %7208 = vmatprep.mubr.f32.mxu0 0.0
        %v7209 = vand.u32 %v4517, 4294901760
        %v7210 = vsub.f32 %v4517, %v7209
        %v7211 = vand.u32 %v7210, 4294901760
        %v7212 = vsub.f32 %v7210, %v7211
        %v7213 = vand.u32 %v7212, 4294901760
        %7214 = vmatmul.mubr.f32.gmra.mrb[0].mxu0 %v7213
        %v7215 = vpop.f32.mrb[0].mxu0
        %v7216 = vadd.f32 0.0, %v7215
        %v7217 = vpop.f32.mrb[0].mxu0
        %v7218 = vadd.f32 0.0, %v7217
        %7219 = vmatprep.mubr.f32.mxu0 0.0
        %v7220 = vand.u32 %v4520, 4294901760
        %v7221 = vsub.f32 %v4520, %v7220
        %v7222 = vand.u32 %v7221, 4294901760
        %v7223 = vsub.f32 %v7221, %v7222
        %v7224 = vand.u32 %v7223, 4294901760
        %7225 = vmatmul.mubr.f32.gmra.mrb[0].mxu0 %v7224
        %v7226 = vpop.f32.mrb[0].mxu0
        %v7227 = vadd.f32 0.0, %v7226
        %v7228 = vpop.f32.mrb[0].mxu0
        %v7229 = vadd.f32 0.0, %v7228
        %7230 = vmatprep.mubr.f32.mxu0 0.0
        %v7231 = vand.u32 %v4523, 4294901760
        %v7232 = vsub.f32 %v4523, %v7231
        %v7233 = vand.u32 %v7232, 4294901760
        %v7234 = vsub.f32 %v7232, %v7233
        %v7235 = vand.u32 %v7234, 4294901760
        %7236 = vmatmul.mubr.f32.gmra.mrb[0].mxu0 %v7235
        %v7237 = vpop.f32.mrb[0].mxu0
        %v7238 = vadd.f32 0.0, %v7237
        %v7239 = vpop.f32.mrb[0].mxu0
        %v7240 = vadd.f32 0.0, %v7239
        %7241 = vmatprep.mubr.f32.mxu0 0.0
        %v7242 = vand.u32 %v4526, 4294901760
        %v7243 = vsub.f32 %v4526, %v7242
        %v7244 = vand.u32 %v7243, 4294901760
        %v7245 = vsub.f32 %v7243, %v7244
        %v7246 = vand.u32 %v7245, 4294901760
        %7247 = vmatmul.mubr.f32.gmra.mrb[0].mxu0 %v7246
        %v7248 = vpop.f32.mrb[0].mxu0
        %v7249 = vadd.f32 0.0, %v7248
        %v7250 = vpop.f32.mrb[0].mxu0
        %v7251 = vadd.f32 0.0, %v7250
        %7252 = vmatprep.mubr.f32.mxu0 0.0
        %v7253 = vand.u32 %v4529, 4294901760
        %v7254 = vsub.f32 %v4529, %v7253
        %v7255 = vand.u32 %v7254, 4294901760
        %v7256 = vsub.f32 %v7254, %v7255
        %v7257 = vand.u32 %v7256, 4294901760
        %7258 = vmatmul.mubr.f32.gmra.mrb[0].mxu0 %v7257
        %v7259 = vpop.f32.mrb[0].mxu0
        %v7260 = vadd.f32 0.0, %v7259
        %v7261 = vpop.f32.mrb[0].mxu0
        %v7262 = vadd.f32 0.0, %v7261
        %7263 = vmatprep.mubr.f32.mxu0 0.0
        %v7264 = vand.u32 %v4532, 4294901760
        %v7265 = vsub.f32 %v4532, %v7264
        %v7266 = vand.u32 %v7265, 4294901760
        %v7267 = vsub.f32 %v7265, %v7266
        %v7268 = vand.u32 %v7267, 4294901760
        %7269 = vmatmul.mubr.f32.gmra.mrb[0].mxu0 %v7268
        %v7270 = vpop.f32.mrb[0].mxu0
        %v7271 = vadd.f32 0.0, %v7270
        %v7272 = vpop.f32.mrb[0].mxu0
        %v7273 = vadd.f32 0.0, %v7272
        %7274 = vmatprep.mubr.f32.mxu0 0.0
        %v7275 = vand.u32 %v4535, 4294901760
        %v7276 = vsub.f32 %v4535, %v7275
        %v7277 = vand.u32 %v7276, 4294901760
        %v7278 = vsub.f32 %v7276, %v7277
        %v7279 = vand.u32 %v7278, 4294901760
        %7280 = vmatmul.mubr.f32.gmra.mrb[0].mxu0 %v7279
        %v7281 = vpop.f32.mrb[0].mxu0
        %v7282 = vadd.f32 0.0, %v7281
        %v7283 = vpop.f32.mrb[0].mxu0
        %v7284 = vadd.f32 0.0, %v7283
        %7285 = vmatprep.mubr.f32.mxu0 0.0
        %v7286 = vand.u32 %v4538, 4294901760
        %v7287 = vsub.f32 %v4538, %v7286
        %v7288 = vand.u32 %v7287, 4294901760
        %v7289 = vsub.f32 %v7287, %v7288
        %v7290 = vand.u32 %v7289, 4294901760
        %7291 = vmatmul.mubr.f32.gmra.mrb[0].mxu0 %v7290
        %v7292 = vpop.f32.mrb[0].mxu0
        %v7293 = vadd.f32 0.0, %v7292
        %v7294 = vpop.f32.mrb[0].mxu0
        %v7295 = vadd.f32 0.0, %v7294
        %7296 = vmatprep.mubr.f32.mxu0 0.0
        %v7297 = vand.u32 %v4541, 4294901760
        %v7298 = vsub.f32 %v4541, %v7297
        %v7299 = vand.u32 %v7298, 4294901760
        %v7300 = vsub.f32 %v7298, %v7299
        %v7301 = vand.u32 %v7300, 4294901760
        %7302 = vmatmul.mubr.f32.gmra.mrb[0].mxu0 %v7301
        %v7303 = vpop.f32.mrb[0].mxu0
        %v7304 = vadd.f32 0.0, %v7303
        %v7305 = vpop.f32.mrb[0].mxu0
        %v7306 = vadd.f32 0.0, %v7305
        %7307 = vmatprep.mubr.f32.mxu0 0.0
        %v7308 = vand.u32 %v4544, 4294901760
        %v7309 = vsub.f32 %v4544, %v7308
        %v7310 = vand.u32 %v7309, 4294901760
        %v7311 = vsub.f32 %v7309, %v7310
        %v7312 = vand.u32 %v7311, 4294901760
        %7313 = vmatmul.mubr.f32.gmra.mrb[0].mxu0 %v7312
        %v7314 = vpop.f32.mrb[0].mxu0
        %v7315 = vadd.f32 0.0, %v7314
        %v7316 = vpop.f32.mrb[0].mxu0
        %v7317 = vadd.f32 0.0, %v7316
        %7318 = vmatprep.mubr.f32.mxu0 0.0
        %v7319 = vand.u32 %v4547, 4294901760
        %v7320 = vsub.f32 %v4547, %v7319
        %v7321 = vand.u32 %v7320, 4294901760
        %v7322 = vsub.f32 %v7320, %v7321
        %v7323 = vand.u32 %v7322, 4294901760
        %7324 = vmatmul.mubr.f32.gmra.mrb[0].mxu0 %v7323
        %v7325 = vpop.f32.mrb[0].mxu0
        %v7326 = vadd.f32 0.0, %v7325
        %v7327 = vpop.f32.mrb[0].mxu0
        %v7328 = vadd.f32 0.0, %v7327
        %7329 = vmatprep.mubr.f32.mxu0 0.0
        %v7330 = vand.u32 %v4550, 4294901760
        %v7331 = vsub.f32 %v4550, %v7330
        %v7332 = vand.u32 %v7331, 4294901760
        %v7333 = vsub.f32 %v7331, %v7332
        %v7334 = vand.u32 %v7333, 4294901760
        %7335 = vmatmul.mubr.f32.gmra.mrb[0].mxu0 %v7334
        %v7336 = vpop.f32.mrb[0].mxu0
        %v7337 = vadd.f32 0.0, %v7336
        %v7338 = vpop.f32.mrb[0].mxu0
        %v7339 = vadd.f32 0.0, %v7338
        %7340 = vmatprep.mubr.f32.mxu0 0.0
        %v7341 = vand.u32 %v4553, 4294901760
        %v7342 = vsub.f32 %v4553, %v7341
        %v7343 = vand.u32 %v7342, 4294901760
        %v7344 = vsub.f32 %v7342, %v7343
        %v7345 = vand.u32 %v7344, 4294901760
        %7346 = vmatmul.mubr.f32.gmra.mrb[0].mxu0 %v7345
        %v7347 = vpop.f32.mrb[0].mxu0
        %v7348 = vadd.f32 0.0, %v7347
        %v7349 = vpop.f32.mrb[0].mxu0
        %v7350 = vadd.f32 0.0, %v7349
        %7351 = vmatprep.mubr.f32.mxu0 0.0
        %v7352 = vand.u32 %v4556, 4294901760
        %v7353 = vsub.f32 %v4556, %v7352
        %v7354 = vand.u32 %v7353, 4294901760
        %v7355 = vsub.f32 %v7353, %v7354
        %v7356 = vand.u32 %v7355, 4294901760
        %7357 = vmatmul.mubr.f32.gmra.mrb[0].mxu0 %v7356
        %v7358 = vpop.f32.mrb[0].mxu0
        %v7359 = vadd.f32 0.0, %v7358
        %v7360 = vpop.f32.mrb[0].mxu0
        %v7361 = vadd.f32 0.0, %v7360
        %7362 = vdwg.mxu0
        %v7363 = vand.u32 %v4466, 4294901760
        %v7364 = vsub.f32 %v4466, %v7363
        %v7365 = vand.u32 %v7364, 4294901760
        %v7366 = vsub.f32 %v7364, %v7365
        %v7367 = vand.u32 %v7366, 4294901760
        %7368 = vmatprep.subr.mxu0 %v7367
        %v7369 = vand.u32 %v4465, 4294901760
        %v7370 = vsub.f32 %v4465, %v7369
        %v7371 = vand.u32 %v7370, 4294901760
        %v7372 = vsub.f32 %v7370, %v7371
        %v7373 = vand.u32 %v7372, 4294901760
        %7374 = vmatpush1.msra.mxu0 %v7373
        %v7375 = vand.u32 %v4474, 4294901760
        %v7376 = vsub.f32 %v4474, %v7375
        %v7377 = vand.u32 %v7376, 4294901760
        %v7378 = vsub.f32 %v7376, %v7377
        %v7379 = vand.u32 %v7378, 4294901760
        %7380 = vmatprep.subr.mxu0 %v7379
        %v7381 = vand.u32 %v4473, 4294901760
        %v7382 = vsub.f32 %v4473, %v7381
        %v7383 = vand.u32 %v7382, 4294901760
        %v7384 = vsub.f32 %v7382, %v7383
        %v7385 = vand.u32 %v7384, 4294901760
        %7386 = vmatpush1.msra.mxu0 %v7385
        %v7387 = vand.u32 %v4482, 4294901760
        %v7388 = vsub.f32 %v4482, %v7387
        %v7389 = vand.u32 %v7388, 4294901760
        %v7390 = vsub.f32 %v7388, %v7389
        %v7391 = vand.u32 %v7390, 4294901760
        %7392 = vmatprep.subr.mxu0 %v7391
        %v7393 = vand.u32 %v4481, 4294901760
        %v7394 = vsub.f32 %v4481, %v7393
        %v7395 = vand.u32 %v7394, 4294901760
        %v7396 = vsub.f32 %v7394, %v7395
        %v7397 = vand.u32 %v7396, 4294901760
        %7398 = vmatpush1.msra.mxu0 %v7397
        %v7399 = vand.u32 %v4490, 4294901760
        %v7400 = vsub.f32 %v4490, %v7399
        %v7401 = vand.u32 %v7400, 4294901760
        %v7402 = vsub.f32 %v7400, %v7401
        %v7403 = vand.u32 %v7402, 4294901760
        %7404 = vmatprep.subr.mxu0 %v7403
        %v7405 = vand.u32 %v4489, 4294901760
        %v7406 = vsub.f32 %v4489, %v7405
        %v7407 = vand.u32 %v7406, 4294901760
        %v7408 = vsub.f32 %v7406, %v7407
        %v7409 = vand.u32 %v7408, 4294901760
        %7410 = vmatpush1.msra.mxu0 %v7409
        %7411 = vmatprep.subr.mxu0 0.0
        %7412 = vmatpush1.msra.mxu0 0.0
        %7413 = vmatprep.subr.mxu0 0.0
        %7414 = vmatpush1.msra.mxu0 0.0
        %7415 = vmatprep.subr.mxu0 0.0
        %7416 = vmatpush1.msra.mxu0 0.0
        %7417 = vmatprep.subr.mxu0 0.0
        %7418 = vmatpush1.msra.mxu0 0.0
        %7419 = vmatprep.subr.mxu0 0.0
        %7420 = vmatpush1.msra.mxu0 0.0
        %7421 = vmatprep.subr.mxu0 0.0
        %7422 = vmatpush1.msra.mxu0 0.0
        %7423 = vmatprep.subr.mxu0 0.0
        %7424 = vmatpush1.msra.mxu0 0.0
        %7425 = vmatprep.subr.mxu0 0.0
        %7426 = vmatpush1.msra.mxu0 0.0
        %7427 = vmatprep.subr.mxu0 0.0
        %7428 = vmatpush1.msra.mxu0 0.0
        %7429 = vmatprep.subr.mxu0 0.0
        %7430 = vmatpush1.msra.mxu0 0.0
        %7431 = vmatprep.subr.mxu0 0.0
        %7432 = vmatpush1.msra.mxu0 0.0
        %7433 = vmatprep.subr.mxu0 0.0
        %7434 = vmatpush1.msra.mxu0 0.0
        %7435 = vmatprep.subr.mxu0 0.0
        %7436 = vmatpush1.msra.mxu0 0.0
        %7437 = vmatprep.subr.mxu0 0.0
        %7438 = vmatpush1.msra.mxu0 0.0
        %7439 = vmatprep.subr.mxu0 0.0
        %7440 = vmatpush1.msra.mxu0 0.0
        %7441 = vmatprep.subr.mxu0 0.0
        %7442 = vmatpush1.msra.mxu0 0.0
        %7443 = vmatprep.subr.mxu0 0.0
        %7444 = vmatpush1.msra.mxu0 0.0
        %7445 = vmatprep.subr.mxu0 0.0
        %7446 = vmatpush1.msra.mxu0 0.0
        %7447 = vmatprep.subr.mxu0 0.0
        %7448 = vmatpush1.msra.mxu0 0.0
        %7449 = vmatprep.subr.mxu0 0.0
        %7450 = vmatpush1.msra.mxu0 0.0
        %7451 = vmatprep.subr.mxu0 0.0
        %7452 = vmatpush1.msra.mxu0 0.0
        %7453 = vmatprep.subr.mxu0 0.0
        %7454 = vmatpush1.msra.mxu0 0.0
        %7455 = vmatprep.subr.mxu0 0.0
        %7456 = vmatpush1.msra.mxu0 0.0
        %7457 = vmatprep.subr.mxu0 0.0
        %7458 = vmatpush1.msra.mxu0 0.0
        %7459 = vmatprep.subr.mxu0 0.0
        %7460 = vmatpush1.msra.mxu0 0.0
        %7461 = vmatprep.subr.mxu0 0.0
        %7462 = vmatpush1.msra.mxu0 0.0
        %7463 = vmatprep.subr.mxu0 0.0
        %7464 = vmatpush1.msra.mxu0 0.0
        %7465 = vmatprep.subr.mxu0 0.0
        %7466 = vmatpush1.msra.mxu0 0.0
        %7467 = vmatprep.mubr.f32.mxu0 0.0
        %v7468 = vand.u32 %v4511, 4294901760
        %7469 = vmatmul.mubr.f32.gmra.mrb[0].mxu0 %v7468
        %v7470 = vpop.f32.mrb[0].mxu0
        %v7471 = vadd.f32 %v7194, %v7470
        %v7472 = vpop.f32.mrb[0].mxu0
        %v7473 = vadd.f32 %v7196, %v7472
        %7474 = vmatprep.mubr.f32.mxu0 0.0
        %v7475 = vand.u32 %v4514, 4294901760
        %7476 = vmatmul.mubr.f32.gmra.mrb[0].mxu0 %v7475
        %v7477 = vpop.f32.mrb[0].mxu0
        %v7478 = vadd.f32 %v7205, %v7477
        %v7479 = vpop.f32.mrb[0].mxu0
        %v7480 = vadd.f32 %v7207, %v7479
        %7481 = vmatprep.mubr.f32.mxu0 0.0
        %v7482 = vand.u32 %v4517, 4294901760
        %7483 = vmatmul.mubr.f32.gmra.mrb[0].mxu0 %v7482
        %v7484 = vpop.f32.mrb[0].mxu0
        %v7485 = vadd.f32 %v7216, %v7484
        %v7486 = vpop.f32.mrb[0].mxu0
        %v7487 = vadd.f32 %v7218, %v7486
        %7488 = vmatprep.mubr.f32.mxu0 0.0
        %v7489 = vand.u32 %v4520, 4294901760
        %7490 = vmatmul.mubr.f32.gmra.mrb[0].mxu0 %v7489
        %v7491 = vpop.f32.mrb[0].mxu0
        %v7492 = vadd.f32 %v7227, %v7491
        %v7493 = vpop.f32.mrb[0].mxu0
        %v7494 = vadd.f32 %v7229, %v7493
        %7495 = vmatprep.mubr.f32.mxu0 0.0
        %v7496 = vand.u32 %v4523, 4294901760
        %7497 = vmatmul.mubr.f32.gmra.mrb[0].mxu0 %v7496
        %v7498 = vpop.f32.mrb[0].mxu0
        %v7499 = vadd.f32 %v7238, %v7498
        %v7500 = vpop.f32.mrb[0].mxu0
        %v7501 = vadd.f32 %v7240, %v7500
        %7502 = vmatprep.mubr.f32.mxu0 0.0
        %v7503 = vand.u32 %v4526, 4294901760
        %7504 = vmatmul.mubr.f32.gmra.mrb[0].mxu0 %v7503
        %v7505 = vpop.f32.mrb[0].mxu0
        %v7506 = vadd.f32 %v7249, %v7505
        %v7507 = vpop.f32.mrb[0].mxu0
        %v7508 = vadd.f32 %v7251, %v7507
        %7509 = vmatprep.mubr.f32.mxu0 0.0
        %v7510 = vand.u32 %v4529, 4294901760
        %7511 = vmatmul.mubr.f32.gmra.mrb[0].mxu0 %v7510
        %v7512 = vpop.f32.mrb[0].mxu0
        %v7513 = vadd.f32 %v7260, %v7512
        %v7514 = vpop.f32.mrb[0].mxu0
        %v7515 = vadd.f32 %v7262, %v7514
        %7516 = vmatprep.mubr.f32.mxu0 0.0
        %v7517 = vand.u32 %v4532, 4294901760
        %7518 = vmatmul.mubr.f32.gmra.mrb[0].mxu0 %v7517
        %v7519 = vpop.f32.mrb[0].mxu0
        %v7520 = vadd.f32 %v7271, %v7519
        %v7521 = vpop.f32.mrb[0].mxu0
        %v7522 = vadd.f32 %v7273, %v7521
        %7523 = vmatprep.mubr.f32.mxu0 0.0
        %v7524 = vand.u32 %v4535, 4294901760
        %7525 = vmatmul.mubr.f32.gmra.mrb[0].mxu0 %v7524
        %v7526 = vpop.f32.mrb[0].mxu0
        %v7527 = vadd.f32 %v7282, %v7526
        %v7528 = vpop.f32.mrb[0].mxu0
        %v7529 = vadd.f32 %v7284, %v7528
        %7530 = vmatprep.mubr.f32.mxu0 0.0
        %v7531 = vand.u32 %v4538, 4294901760
        %7532 = vmatmul.mubr.f32.gmra.mrb[0].mxu0 %v7531
        %v7533 = vpop.f32.mrb[0].mxu0
        %v7534 = vadd.f32 %v7293, %v7533
        %v7535 = vpop.f32.mrb[0].mxu0
        %v7536 = vadd.f32 %v7295, %v7535
        %7537 = vmatprep.mubr.f32.mxu0 0.0
        %v7538 = vand.u32 %v4541, 4294901760
        %7539 = vmatmul.mubr.f32.gmra.mrb[0].mxu0 %v7538
        %v7540 = vpop.f32.mrb[0].mxu0
        %v7541 = vadd.f32 %v7304, %v7540
        %v7542 = vpop.f32.mrb[0].mxu0
        %v7543 = vadd.f32 %v7306, %v7542
        %7544 = vmatprep.mubr.f32.mxu0 0.0
        %v7545 = vand.u32 %v4544, 4294901760
        %7546 = vmatmul.mubr.f32.gmra.mrb[0].mxu0 %v7545
        %v7547 = vpop.f32.mrb[0].mxu0
        %v7548 = vadd.f32 %v7315, %v7547
        %v7549 = vpop.f32.mrb[0].mxu0
        %v7550 = vadd.f32 %v7317, %v7549
        %7551 = vmatprep.mubr.f32.mxu0 0.0
        %v7552 = vand.u32 %v4547, 4294901760
        %7553 = vmatmul.mubr.f32.gmra.mrb[0].mxu0 %v7552
        %v7554 = vpop.f32.mrb[0].mxu0
        %v7555 = vadd.f32 %v7326, %v7554
        %v7556 = vpop.f32.mrb[0].mxu0
        %v7557 = vadd.f32 %v7328, %v7556
        %7558 = vmatprep.mubr.f32.mxu0 0.0
        %v7559 = vand.u32 %v4550, 4294901760
        %7560 = vmatmul.mubr.f32.gmra.mrb[0].mxu0 %v7559
        %v7561 = vpop.f32.mrb[0].mxu0
        %v7562 = vadd.f32 %v7337, %v7561
        %v7563 = vpop.f32.mrb[0].mxu0
        %v7564 = vadd.f32 %v7339, %v7563
        %7565 = vmatprep.mubr.f32.mxu0 0.0
        %v7566 = vand.u32 %v4553, 4294901760
        %7567 = vmatmul.mubr.f32.gmra.mrb[0].mxu0 %v7566
        %v7568 = vpop.f32.mrb[0].mxu0
        %v7569 = vadd.f32 %v7348, %v7568
        %v7570 = vpop.f32.mrb[0].mxu0
        %v7571 = vadd.f32 %v7350, %v7570
        %7572 = vmatprep.mubr.f32.mxu0 0.0
        %v7573 = vand.u32 %v4556, 4294901760
        %7574 = vmatmul.mubr.f32.gmra.mrb[0].mxu0 %v7573
        %v7575 = vpop.f32.mrb[0].mxu0
        %v7576 = vadd.f32 %v7359, %v7575
        %v7577 = vpop.f32.mrb[0].mxu0
        %v7578 = vadd.f32 %v7361, %v7577
        %7579 = vdwg.mxu0
        %v7580 = vand.u32 %v4466, 4294901760
        %v7581 = vsub.f32 %v4466, %v7580
        %7582 = vmatprep.subr.mxu0 %v7581
        %v7583 = vand.u32 %v4465, 4294901760
        %v7584 = vsub.f32 %v4465, %v7583
        %7585 = vmatpush1.msra.mxu0 %v7584
        %v7586 = vand.u32 %v4474, 4294901760
        %v7587 = vsub.f32 %v4474, %v7586
        %7588 = vmatprep.subr.mxu0 %v7587
        %v7589 = vand.u32 %v4473, 4294901760
        %v7590 = vsub.f32 %v4473, %v7589
        %7591 = vmatpush1.msra.mxu0 %v7590
        %v7592 = vand.u32 %v4482, 4294901760
        %v7593 = vsub.f32 %v4482, %v7592
        %7594 = vmatprep.subr.mxu0 %v7593
        %v7595 = vand.u32 %v4481, 4294901760
        %v7596 = vsub.f32 %v4481, %v7595
        %7597 = vmatpush1.msra.mxu0 %v7596
        %v7598 = vand.u32 %v4490, 4294901760
        %v7599 = vsub.f32 %v4490, %v7598
        %7600 = vmatprep.subr.mxu0 %v7599
        %v7601 = vand.u32 %v4489, 4294901760
        %v7602 = vsub.f32 %v4489, %v7601
        %7603 = vmatpush1.msra.mxu0 %v7602
        %7604 = vmatprep.subr.mxu0 0.0
        %7605 = vmatpush1.msra.mxu0 0.0
        %7606 = vmatprep.subr.mxu0 0.0
        %7607 = vmatpush1.msra.mxu0 0.0
        %7608 = vmatprep.subr.mxu0 0.0
        %7609 = vmatpush1.msra.mxu0 0.0
        %7610 = vmatprep.subr.mxu0 0.0
        %7611 = vmatpush1.msra.mxu0 0.0
        %7612 = vmatprep.subr.mxu0 0.0
        %7613 = vmatpush1.msra.mxu0 0.0
        %7614 = vmatprep.subr.mxu0 0.0
        %7615 = vmatpush1.msra.mxu0 0.0
        %7616 = vmatprep.subr.mxu0 0.0
        %7617 = vmatpush1.msra.mxu0 0.0
        %7618 = vmatprep.subr.mxu0 0.0
        %7619 = vmatpush1.msra.mxu0 0.0
        %7620 = vmatprep.subr.mxu0 0.0
        %7621 = vmatpush1.msra.mxu0 0.0
        %7622 = vmatprep.subr.mxu0 0.0
        %7623 = vmatpush1.msra.mxu0 0.0
        %7624 = vmatprep.subr.mxu0 0.0
        %7625 = vmatpush1.msra.mxu0 0.0
        %7626 = vmatprep.subr.mxu0 0.0
        %7627 = vmatpush1.msra.mxu0 0.0
        %7628 = vmatprep.subr.mxu0 0.0
        %7629 = vmatpush1.msra.mxu0 0.0
        %7630 = vmatprep.subr.mxu0 0.0
        %7631 = vmatpush1.msra.mxu0 0.0
        %7632 = vmatprep.subr.mxu0 0.0
        %7633 = vmatpush1.msra.mxu0 0.0
        %7634 = vmatprep.subr.mxu0 0.0
        %7635 = vmatpush1.msra.mxu0 0.0
        %7636 = vmatprep.subr.mxu0 0.0
        %7637 = vmatpush1.msra.mxu0 0.0
        %7638 = vmatprep.subr.mxu0 0.0
        %7639 = vmatpush1.msra.mxu0 0.0
        %7640 = vmatprep.subr.mxu0 0.0
        %7641 = vmatpush1.msra.mxu0 0.0
        %7642 = vmatprep.subr.mxu0 0.0
        %7643 = vmatpush1.msra.mxu0 0.0
        %7644 = vmatprep.subr.mxu0 0.0
        %7645 = vmatpush1.msra.mxu0 0.0
        %7646 = vmatprep.subr.mxu0 0.0
        %7647 = vmatpush1.msra.mxu0 0.0
        %7648 = vmatprep.subr.mxu0 0.0
        %7649 = vmatpush1.msra.mxu0 0.0
        %7650 = vmatprep.subr.mxu0 0.0
        %7651 = vmatpush1.msra.mxu0 0.0
        %7652 = vmatprep.subr.mxu0 0.0
        %7653 = vmatpush1.msra.mxu0 0.0
        %7654 = vmatprep.subr.mxu0 0.0
        %7655 = vmatpush1.msra.mxu0 0.0
        %7656 = vmatprep.subr.mxu0 0.0
        %7657 = vmatpush1.msra.mxu0 0.0
        %7658 = vmatprep.subr.mxu0 0.0
        %7659 = vmatpush1.msra.mxu0 0.0
        %7660 = vmatprep.mubr.f32.mxu0 0.0
        %v7661 = vand.u32 %v4511, 4294901760
        %v7662 = vsub.f32 %v4511, %v7661
        %7663 = vmatmul.mubr.f32.gmra.mrb[0].mxu0 %v7662
        %v7664 = vpop.f32.mrb[0].mxu0
        %v7665 = vadd.f32 %v7471, %v7664
        %v7666 = vpop.f32.mrb[0].mxu0
        %v7667 = vadd.f32 %v7473, %v7666
        %7668 = vmatprep.mubr.f32.mxu0 0.0
        %v7669 = vand.u32 %v4514, 4294901760
        %v7670 = vsub.f32 %v4514, %v7669
        %7671 = vmatmul.mubr.f32.gmra.mrb[0].mxu0 %v7670
        %v7672 = vpop.f32.mrb[0].mxu0
        %v7673 = vadd.f32 %v7478, %v7672
        %v7674 = vpop.f32.mrb[0].mxu0
        %v7675 = vadd.f32 %v7480, %v7674
        %7676 = vmatprep.mubr.f32.mxu0 0.0
        %v7677 = vand.u32 %v4517, 4294901760
        %v7678 = vsub.f32 %v4517, %v7677
        %7679 = vmatmul.mubr.f32.gmra.mrb[0].mxu0 %v7678
        %v7680 = vpop.f32.mrb[0].mxu0
        %v7681 = vadd.f32 %v7485, %v7680
        %v7682 = vpop.f32.mrb[0].mxu0
        %v7683 = vadd.f32 %v7487, %v7682
        %7684 = vmatprep.mubr.f32.mxu0 0.0
        %v7685 = vand.u32 %v4520, 4294901760
        %v7686 = vsub.f32 %v4520, %v7685
        %7687 = vmatmul.mubr.f32.gmra.mrb[0].mxu0 %v7686
        %v7688 = vpop.f32.mrb[0].mxu0
        %v7689 = vadd.f32 %v7492, %v7688
        %v7690 = vpop.f32.mrb[0].mxu0
        %v7691 = vadd.f32 %v7494, %v7690
        %7692 = vmatprep.mubr.f32.mxu0 0.0
        %v7693 = vand.u32 %v4523, 4294901760
        %v7694 = vsub.f32 %v4523, %v7693
        %7695 = vmatmul.mubr.f32.gmra.mrb[0].mxu0 %v7694
        %v7696 = vpop.f32.mrb[0].mxu0
        %v7697 = vadd.f32 %v7499, %v7696
        %v7698 = vpop.f32.mrb[0].mxu0
        %v7699 = vadd.f32 %v7501, %v7698
        %7700 = vmatprep.mubr.f32.mxu0 0.0
        %v7701 = vand.u32 %v4526, 4294901760
        %v7702 = vsub.f32 %v4526, %v7701
        %7703 = vmatmul.mubr.f32.gmra.mrb[0].mxu0 %v7702
        %v7704 = vpop.f32.mrb[0].mxu0
        %v7705 = vadd.f32 %v7506, %v7704
        %v7706 = vpop.f32.mrb[0].mxu0
        %v7707 = vadd.f32 %v7508, %v7706
        %7708 = vmatprep.mubr.f32.mxu0 0.0
        %v7709 = vand.u32 %v4529, 4294901760
        %v7710 = vsub.f32 %v4529, %v7709
        %7711 = vmatmul.mubr.f32.gmra.mrb[0].mxu0 %v7710
        %v7712 = vpop.f32.mrb[0].mxu0
        %v7713 = vadd.f32 %v7513, %v7712
        %v7714 = vpop.f32.mrb[0].mxu0
        %v7715 = vadd.f32 %v7515, %v7714
        %7716 = vmatprep.mubr.f32.mxu0 0.0
        %v7717 = vand.u32 %v4532, 4294901760
        %v7718 = vsub.f32 %v4532, %v7717
        %7719 = vmatmul.mubr.f32.gmra.mrb[0].mxu0 %v7718
        %v7720 = vpop.f32.mrb[0].mxu0
        %v7721 = vadd.f32 %v7520, %v7720
        %v7722 = vpop.f32.mrb[0].mxu0
        %v7723 = vadd.f32 %v7522, %v7722
        %7724 = vmatprep.mubr.f32.mxu0 0.0
        %v7725 = vand.u32 %v4535, 4294901760
        %v7726 = vsub.f32 %v4535, %v7725
        %7727 = vmatmul.mubr.f32.gmra.mrb[0].mxu0 %v7726
        %v7728 = vpop.f32.mrb[0].mxu0
        %v7729 = vadd.f32 %v7527, %v7728
        %v7730 = vpop.f32.mrb[0].mxu0
        %v7731 = vadd.f32 %v7529, %v7730
        %7732 = vmatprep.mubr.f32.mxu0 0.0
        %v7733 = vand.u32 %v4538, 4294901760
        %v7734 = vsub.f32 %v4538, %v7733
        %7735 = vmatmul.mubr.f32.gmra.mrb[0].mxu0 %v7734
        %v7736 = vpop.f32.mrb[0].mxu0
        %v7737 = vadd.f32 %v7534, %v7736
        %v7738 = vpop.f32.mrb[0].mxu0
        %v7739 = vadd.f32 %v7536, %v7738
        %7740 = vmatprep.mubr.f32.mxu0 0.0
        %v7741 = vand.u32 %v4541, 4294901760
        %v7742 = vsub.f32 %v4541, %v7741
        %7743 = vmatmul.mubr.f32.gmra.mrb[0].mxu0 %v7742
        %v7744 = vpop.f32.mrb[0].mxu0
        %v7745 = vadd.f32 %v7541, %v7744
        %v7746 = vpop.f32.mrb[0].mxu0
        %v7747 = vadd.f32 %v7543, %v7746
        %7748 = vmatprep.mubr.f32.mxu0 0.0
        %v7749 = vand.u32 %v4544, 4294901760
        %v7750 = vsub.f32 %v4544, %v7749
        %7751 = vmatmul.mubr.f32.gmra.mrb[0].mxu0 %v7750
        %v7752 = vpop.f32.mrb[0].mxu0
        %v7753 = vadd.f32 %v7548, %v7752
        %v7754 = vpop.f32.mrb[0].mxu0
        %v7755 = vadd.f32 %v7550, %v7754
        %7756 = vmatprep.mubr.f32.mxu0 0.0
        %v7757 = vand.u32 %v4547, 4294901760
        %v7758 = vsub.f32 %v4547, %v7757
        %7759 = vmatmul.mubr.f32.gmra.mrb[0].mxu0 %v7758
        %v7760 = vpop.f32.mrb[0].mxu0
        %v7761 = vadd.f32 %v7555, %v7760
        %v7762 = vpop.f32.mrb[0].mxu0
        %v7763 = vadd.f32 %v7557, %v7762
        %7764 = vmatprep.mubr.f32.mxu0 0.0
        %v7765 = vand.u32 %v4550, 4294901760
        %v7766 = vsub.f32 %v4550, %v7765
        %7767 = vmatmul.mubr.f32.gmra.mrb[0].mxu0 %v7766
        %v7768 = vpop.f32.mrb[0].mxu0
        %v7769 = vadd.f32 %v7562, %v7768
        %v7770 = vpop.f32.mrb[0].mxu0
        %v7771 = vadd.f32 %v7564, %v7770
        %7772 = vmatprep.mubr.f32.mxu0 0.0
        %v7773 = vand.u32 %v4553, 4294901760
        %v7774 = vsub.f32 %v4553, %v7773
        %7775 = vmatmul.mubr.f32.gmra.mrb[0].mxu0 %v7774
        %v7776 = vpop.f32.mrb[0].mxu0
        %v7777 = vadd.f32 %v7569, %v7776
        %v7778 = vpop.f32.mrb[0].mxu0
        %v7779 = vadd.f32 %v7571, %v7778
        %7780 = vmatprep.mubr.f32.mxu0 0.0
        %v7781 = vand.u32 %v4556, 4294901760
        %v7782 = vsub.f32 %v4556, %v7781
        %7783 = vmatmul.mubr.f32.gmra.mrb[0].mxu0 %v7782
        %v7784 = vpop.f32.mrb[0].mxu0
        %v7785 = vadd.f32 %v7576, %v7784
        %v7786 = vpop.f32.mrb[0].mxu0
        %v7787 = vadd.f32 %v7578, %v7786
        %7788 = vdwg.mxu0
        %v7789 = vand.u32 %v4466, 4294901760
        %7790 = vmatprep.subr.mxu0 %v7789
        %v7791 = vand.u32 %v4465, 4294901760
        %7792 = vmatpush1.msra.mxu0 %v7791
        %v7793 = vand.u32 %v4474, 4294901760
        %7794 = vmatprep.subr.mxu0 %v7793
        %v7795 = vand.u32 %v4473, 4294901760
        %7796 = vmatpush1.msra.mxu0 %v7795
        %v7797 = vand.u32 %v4482, 4294901760
        %7798 = vmatprep.subr.mxu0 %v7797
        %v7799 = vand.u32 %v4481, 4294901760
        %7800 = vmatpush1.msra.mxu0 %v7799
        %v7801 = vand.u32 %v4490, 4294901760
        %7802 = vmatprep.subr.mxu0 %v7801
        %v7803 = vand.u32 %v4489, 4294901760
        %7804 = vmatpush1.msra.mxu0 %v7803
        %7805 = vmatprep.subr.mxu0 0.0
        %7806 = vmatpush1.msra.mxu0 0.0
        %7807 = vmatprep.subr.mxu0 0.0
        %7808 = vmatpush1.msra.mxu0 0.0
        %7809 = vmatprep.subr.mxu0 0.0
        %7810 = vmatpush1.msra.mxu0 0.0
        %7811 = vmatprep.subr.mxu0 0.0
        %7812 = vmatpush1.msra.mxu0 0.0
        %7813 = vmatprep.subr.mxu0 0.0
        %7814 = vmatpush1.msra.mxu0 0.0
        %7815 = vmatprep.subr.mxu0 0.0
        %7816 = vmatpush1.msra.mxu0 0.0
        %7817 = vmatprep.subr.mxu0 0.0
        %7818 = vmatpush1.msra.mxu0 0.0
        %7819 = vmatprep.subr.mxu0 0.0
        %7820 = vmatpush1.msra.mxu0 0.0
        %7821 = vmatprep.subr.mxu0 0.0
        %7822 = vmatpush1.msra.mxu0 0.0
        %7823 = vmatprep.subr.mxu0 0.0
        %7824 = vmatpush1.msra.mxu0 0.0
        %7825 = vmatprep.subr.mxu0 0.0
        %7826 = vmatpush1.msra.mxu0 0.0
        %7827 = vmatprep.subr.mxu0 0.0
        %7828 = vmatpush1.msra.mxu0 0.0
        %7829 = vmatprep.subr.mxu0 0.0
        %7830 = vmatpush1.msra.mxu0 0.0
        %7831 = vmatprep.subr.mxu0 0.0
        %7832 = vmatpush1.msra.mxu0 0.0
        %7833 = vmatprep.subr.mxu0 0.0
        %7834 = vmatpush1.msra.mxu0 0.0
        %7835 = vmatprep.subr.mxu0 0.0
        %7836 = vmatpush1.msra.mxu0 0.0
        %7837 = vmatprep.subr.mxu0 0.0
        %7838 = vmatpush1.msra.mxu0 0.0
        %7839 = vmatprep.subr.mxu0 0.0
        %7840 = vmatpush1.msra.mxu0 0.0
        %7841 = vmatprep.subr.mxu0 0.0
        %7842 = vmatpush1.msra.mxu0 0.0
        %7843 = vmatprep.subr.mxu0 0.0
        %7844 = vmatpush1.msra.mxu0 0.0
        %7845 = vmatprep.subr.mxu0 0.0
        %7846 = vmatpush1.msra.mxu0 0.0
        %7847 = vmatprep.subr.mxu0 0.0
        %7848 = vmatpush1.msra.mxu0 0.0
        %7849 = vmatprep.subr.mxu0 0.0
        %7850 = vmatpush1.msra.mxu0 0.0
        %7851 = vmatprep.subr.mxu0 0.0
        %7852 = vmatpush1.msra.mxu0 0.0
        %7853 = vmatprep.subr.mxu0 0.0
        %7854 = vmatpush1.msra.mxu0 0.0
        %7855 = vmatprep.subr.mxu0 0.0
        %7856 = vmatpush1.msra.mxu0 0.0
        %7857 = vmatprep.subr.mxu0 0.0
        %7858 = vmatpush1.msra.mxu0 0.0
        %7859 = vmatprep.subr.mxu0 0.0
        %7860 = vmatpush1.msra.mxu0 0.0
        %7861 = vmatprep.mubr.f32.mxu0 0.0
        %v7862 = vand.u32 %v4511, 4294901760
        %v7863 = vsub.f32 %v4511, %v7862
        %v7864 = vand.u32 %v7863, 4294901760
        %7865 = vmatmul.mubr.f32.gmra.mrb[0].mxu0 %v7864
        %v7866 = vpop.f32.mrb[0].mxu0
        %v7867 = vadd.f32 %v7665, %v7866
        %v7868 = vpop.f32.mrb[0].mxu0
        %v7869 = vadd.f32 %v7667, %v7868
        %7870 = vmatprep.mubr.f32.mxu0 0.0
        %v7871 = vand.u32 %v4514, 4294901760
        %v7872 = vsub.f32 %v4514, %v7871
        %v7873 = vand.u32 %v7872, 4294901760
        %7874 = vmatmul.mubr.f32.gmra.mrb[0].mxu0 %v7873
        %v7875 = vpop.f32.mrb[0].mxu0
        %v7876 = vadd.f32 %v7673, %v7875
        %v7877 = vpop.f32.mrb[0].mxu0
        %v7878 = vadd.f32 %v7675, %v7877
        %7879 = vmatprep.mubr.f32.mxu0 0.0
        %v7880 = vand.u32 %v4517, 4294901760
        %v7881 = vsub.f32 %v4517, %v7880
        %v7882 = vand.u32 %v7881, 4294901760
        %7883 = vmatmul.mubr.f32.gmra.mrb[0].mxu0 %v7882
        %v7884 = vpop.f32.mrb[0].mxu0
        %v7885 = vadd.f32 %v7681, %v7884
        %v7886 = vpop.f32.mrb[0].mxu0
        %v7887 = vadd.f32 %v7683, %v7886
        %7888 = vmatprep.mubr.f32.mxu0 0.0
        %v7889 = vand.u32 %v4520, 4294901760
        %v7890 = vsub.f32 %v4520, %v7889
        %v7891 = vand.u32 %v7890, 4294901760
        %7892 = vmatmul.mubr.f32.gmra.mrb[0].mxu0 %v7891
        %v7893 = vpop.f32.mrb[0].mxu0
        %v7894 = vadd.f32 %v7689, %v7893
        %v7895 = vpop.f32.mrb[0].mxu0
        %v7896 = vadd.f32 %v7691, %v7895
        %7897 = vmatprep.mubr.f32.mxu0 0.0
        %v7898 = vand.u32 %v4523, 4294901760
        %v7899 = vsub.f32 %v4523, %v7898
        %v7900 = vand.u32 %v7899, 4294901760
        %7901 = vmatmul.mubr.f32.gmra.mrb[0].mxu0 %v7900
        %v7902 = vpop.f32.mrb[0].mxu0
        %v7903 = vadd.f32 %v7697, %v7902
        %v7904 = vpop.f32.mrb[0].mxu0
        %v7905 = vadd.f32 %v7699, %v7904
        %7906 = vmatprep.mubr.f32.mxu0 0.0
        %v7907 = vand.u32 %v4526, 4294901760
        %v7908 = vsub.f32 %v4526, %v7907
        %v7909 = vand.u32 %v7908, 4294901760
        %7910 = vmatmul.mubr.f32.gmra.mrb[0].mxu0 %v7909
        %v7911 = vpop.f32.mrb[0].mxu0
        %v7912 = vadd.f32 %v7705, %v7911
        %v7913 = vpop.f32.mrb[0].mxu0
        %v7914 = vadd.f32 %v7707, %v7913
        %7915 = vmatprep.mubr.f32.mxu0 0.0
        %v7916 = vand.u32 %v4529, 4294901760
        %v7917 = vsub.f32 %v4529, %v7916
        %v7918 = vand.u32 %v7917, 4294901760
        %7919 = vmatmul.mubr.f32.gmra.mrb[0].mxu0 %v7918
        %v7920 = vpop.f32.mrb[0].mxu0
        %v7921 = vadd.f32 %v7713, %v7920
        %v7922 = vpop.f32.mrb[0].mxu0
        %v7923 = vadd.f32 %v7715, %v7922
        %7924 = vmatprep.mubr.f32.mxu0 0.0
        %v7925 = vand.u32 %v4532, 4294901760
        %v7926 = vsub.f32 %v4532, %v7925
        %v7927 = vand.u32 %v7926, 4294901760
        %7928 = vmatmul.mubr.f32.gmra.mrb[0].mxu0 %v7927
        %v7929 = vpop.f32.mrb[0].mxu0
        %v7930 = vadd.f32 %v7721, %v7929
        %v7931 = vpop.f32.mrb[0].mxu0
        %v7932 = vadd.f32 %v7723, %v7931
        %7933 = vmatprep.mubr.f32.mxu0 0.0
        %v7934 = vand.u32 %v4535, 4294901760
        %v7935 = vsub.f32 %v4535, %v7934
        %v7936 = vand.u32 %v7935, 4294901760
        %7937 = vmatmul.mubr.f32.gmra.mrb[0].mxu0 %v7936
        %v7938 = vpop.f32.mrb[0].mxu0
        %v7939 = vadd.f32 %v7729, %v7938
        %v7940 = vpop.f32.mrb[0].mxu0
        %v7941 = vadd.f32 %v7731, %v7940
        %7942 = vmatprep.mubr.f32.mxu0 0.0
        %v7943 = vand.u32 %v4538, 4294901760
        %v7944 = vsub.f32 %v4538, %v7943
        %v7945 = vand.u32 %v7944, 4294901760
        %7946 = vmatmul.mubr.f32.gmra.mrb[0].mxu0 %v7945
        %v7947 = vpop.f32.mrb[0].mxu0
        %v7948 = vadd.f32 %v7737, %v7947
        %v7949 = vpop.f32.mrb[0].mxu0
        %v7950 = vadd.f32 %v7739, %v7949
        %7951 = vmatprep.mubr.f32.mxu0 0.0
        %v7952 = vand.u32 %v4541, 4294901760
        %v7953 = vsub.f32 %v4541, %v7952
        %v7954 = vand.u32 %v7953, 4294901760
        %7955 = vmatmul.mubr.f32.gmra.mrb[0].mxu0 %v7954
        %v7956 = vpop.f32.mrb[0].mxu0
        %v7957 = vadd.f32 %v7745, %v7956
        %v7958 = vpop.f32.mrb[0].mxu0
        %v7959 = vadd.f32 %v7747, %v7958
        %7960 = vmatprep.mubr.f32.mxu0 0.0
        %v7961 = vand.u32 %v4544, 4294901760
        %v7962 = vsub.f32 %v4544, %v7961
        %v7963 = vand.u32 %v7962, 4294901760
        %7964 = vmatmul.mubr.f32.gmra.mrb[0].mxu0 %v7963
        %v7965 = vpop.f32.mrb[0].mxu0
        %v7966 = vadd.f32 %v7753, %v7965
        %v7967 = vpop.f32.mrb[0].mxu0
        %v7968 = vadd.f32 %v7755, %v7967
        %7969 = vmatprep.mubr.f32.mxu0 0.0
        %v7970 = vand.u32 %v4547, 4294901760
        %v7971 = vsub.f32 %v4547, %v7970
        %v7972 = vand.u32 %v7971, 4294901760
        %7973 = vmatmul.mubr.f32.gmra.mrb[0].mxu0 %v7972
        %v7974 = vpop.f32.mrb[0].mxu0
        %v7975 = vadd.f32 %v7761, %v7974
        %v7976 = vpop.f32.mrb[0].mxu0
        %v7977 = vadd.f32 %v7763, %v7976
        %7978 = vmatprep.mubr.f32.mxu0 0.0
        %v7979 = vand.u32 %v4550, 4294901760
        %v7980 = vsub.f32 %v4550, %v7979
        %v7981 = vand.u32 %v7980, 4294901760
        %7982 = vmatmul.mubr.f32.gmra.mrb[0].mxu0 %v7981
        %v7983 = vpop.f32.mrb[0].mxu0
        %v7984 = vadd.f32 %v7769, %v7983
        %v7985 = vpop.f32.mrb[0].mxu0
        %v7986 = vadd.f32 %v7771, %v7985
        %7987 = vmatprep.mubr.f32.mxu0 0.0
        %v7988 = vand.u32 %v4553, 4294901760
        %v7989 = vsub.f32 %v4553, %v7988
        %v7990 = vand.u32 %v7989, 4294901760
        %7991 = vmatmul.mubr.f32.gmra.mrb[0].mxu0 %v7990
        %v7992 = vpop.f32.mrb[0].mxu0
        %v7993 = vadd.f32 %v7777, %v7992
        %v7994 = vpop.f32.mrb[0].mxu0
        %v7995 = vadd.f32 %v7779, %v7994
        %7996 = vmatprep.mubr.f32.mxu0 0.0
        %v7997 = vand.u32 %v4556, 4294901760
        %v7998 = vsub.f32 %v4556, %v7997
        %v7999 = vand.u32 %v7998, 4294901760
        %8000 = vmatmul.mubr.f32.gmra.mrb[0].mxu0 %v7999
        %v8001 = vpop.f32.mrb[0].mxu0
        %v8002 = vadd.f32 %v7785, %v8001
        %v8003 = vpop.f32.mrb[0].mxu0
        %v8004 = vadd.f32 %v7787, %v8003
        %8005 = vdwg.mxu0
        %v8006 = vand.u32 %v4466, 4294901760
        %v8007 = vsub.f32 %v4466, %v8006
        %v8008 = vand.u32 %v8007, 4294901760
        %8009 = vmatprep.subr.mxu0 %v8008
        %v8010 = vand.u32 %v4465, 4294901760
        %v8011 = vsub.f32 %v4465, %v8010
        %v8012 = vand.u32 %v8011, 4294901760
        %8013 = vmatpush1.msra.mxu0 %v8012
        %v8014 = vand.u32 %v4474, 4294901760
        %v8015 = vsub.f32 %v4474, %v8014
        %v8016 = vand.u32 %v8015, 4294901760
        %8017 = vmatprep.subr.mxu0 %v8016
        %v8018 = vand.u32 %v4473, 4294901760
        %v8019 = vsub.f32 %v4473, %v8018
        %v8020 = vand.u32 %v8019, 4294901760
        %8021 = vmatpush1.msra.mxu0 %v8020
        %v8022 = vand.u32 %v4482, 4294901760
        %v8023 = vsub.f32 %v4482, %v8022
        %v8024 = vand.u32 %v8023, 4294901760
        %8025 = vmatprep.subr.mxu0 %v8024
        %v8026 = vand.u32 %v4481, 4294901760
        %v8027 = vsub.f32 %v4481, %v8026
        %v8028 = vand.u32 %v8027, 4294901760
        %8029 = vmatpush1.msra.mxu0 %v8028
        %v8030 = vand.u32 %v4490, 4294901760
        %v8031 = vsub.f32 %v4490, %v8030
        %v8032 = vand.u32 %v8031, 4294901760
        %8033 = vmatprep.subr.mxu0 %v8032
        %v8034 = vand.u32 %v4489, 4294901760
        %v8035 = vsub.f32 %v4489, %v8034
        %v8036 = vand.u32 %v8035, 4294901760
        %8037 = vmatpush1.msra.mxu0 %v8036
        %8038 = vmatprep.subr.mxu0 0.0
        %8039 = vmatpush1.msra.mxu0 0.0
        %8040 = vmatprep.subr.mxu0 0.0
        %8041 = vmatpush1.msra.mxu0 0.0
        %8042 = vmatprep.subr.mxu0 0.0
        %8043 = vmatpush1.msra.mxu0 0.0
        %8044 = vmatprep.subr.mxu0 0.0
        %8045 = vmatpush1.msra.mxu0 0.0
        %8046 = vmatprep.subr.mxu0 0.0
        %8047 = vmatpush1.msra.mxu0 0.0
        %8048 = vmatprep.subr.mxu0 0.0
        %8049 = vmatpush1.msra.mxu0 0.0
        %8050 = vmatprep.subr.mxu0 0.0
        %8051 = vmatpush1.msra.mxu0 0.0
        %8052 = vmatprep.subr.mxu0 0.0
        %8053 = vmatpush1.msra.mxu0 0.0
        %8054 = vmatprep.subr.mxu0 0.0
        %8055 = vmatpush1.msra.mxu0 0.0
        %8056 = vmatprep.subr.mxu0 0.0
        %8057 = vmatpush1.msra.mxu0 0.0
        %8058 = vmatprep.subr.mxu0 0.0
        %8059 = vmatpush1.msra.mxu0 0.0
        %8060 = vmatprep.subr.mxu0 0.0
        %8061 = vmatpush1.msra.mxu0 0.0
        %8062 = vmatprep.subr.mxu0 0.0
        %8063 = vmatpush1.msra.mxu0 0.0
        %8064 = vmatprep.subr.mxu0 0.0
        %8065 = vmatpush1.msra.mxu0 0.0
        %8066 = vmatprep.subr.mxu0 0.0
        %8067 = vmatpush1.msra.mxu0 0.0
        %8068 = vmatprep.subr.mxu0 0.0
        %8069 = vmatpush1.msra.mxu0 0.0
        %8070 = vmatprep.subr.mxu0 0.0
        %8071 = vmatpush1.msra.mxu0 0.0
        %8072 = vmatprep.subr.mxu0 0.0
        %8073 = vmatpush1.msra.mxu0 0.0
        %8074 = vmatprep.subr.mxu0 0.0
        %8075 = vmatpush1.msra.mxu0 0.0
        %8076 = vmatprep.subr.mxu0 0.0
        %8077 = vmatpush1.msra.mxu0 0.0
        %8078 = vmatprep.subr.mxu0 0.0
        %8079 = vmatpush1.msra.mxu0 0.0
        %8080 = vmatprep.subr.mxu0 0.0
        %8081 = vmatpush1.msra.mxu0 0.0
        %8082 = vmatprep.subr.mxu0 0.0
        %8083 = vmatpush1.msra.mxu0 0.0
        %8084 = vmatprep.subr.mxu0 0.0
        %8085 = vmatpush1.msra.mxu0 0.0
        %8086 = vmatprep.subr.mxu0 0.0
        %8087 = vmatpush1.msra.mxu0 0.0
        %8088 = vmatprep.subr.mxu0 0.0
        %8089 = vmatpush1.msra.mxu0 0.0
        %8090 = vmatprep.subr.mxu0 0.0
        %8091 = vmatpush1.msra.mxu0 0.0
        %8092 = vmatprep.subr.mxu0 0.0
        %8093 = vmatpush1.msra.mxu0 0.0
        %8094 = vmatprep.mubr.f32.mxu0 0.0
        %v8095 = vand.u32 %v4511, 4294901760
        %8096 = vmatmul.mubr.f32.gmra.mrb[0].mxu0 %v8095
        %v8097 = vpop.f32.mrb[0].mxu0
        %v8098 = vadd.f32 %v7867, %v8097
        %v8099 = vpop.f32.mrb[0].mxu0
        %v8100 = vadd.f32 %v7869, %v8099
        %8101 = vmatprep.mubr.f32.mxu0 0.0
        %v8102 = vand.u32 %v4514, 4294901760
        %8103 = vmatmul.mubr.f32.gmra.mrb[0].mxu0 %v8102
        %v8104 = vpop.f32.mrb[0].mxu0
        %v8105 = vadd.f32 %v7876, %v8104
        %v8106 = vpop.f32.mrb[0].mxu0
        %v8107 = vadd.f32 %v7878, %v8106
        %8108 = vmatprep.mubr.f32.mxu0 0.0
        %v8109 = vand.u32 %v4517, 4294901760
        %8110 = vmatmul.mubr.f32.gmra.mrb[0].mxu0 %v8109
        %v8111 = vpop.f32.mrb[0].mxu0
        %v8112 = vadd.f32 %v7885, %v8111
        %v8113 = vpop.f32.mrb[0].mxu0
        %v8114 = vadd.f32 %v7887, %v8113
        %8115 = vmatprep.mubr.f32.mxu0 0.0
        %v8116 = vand.u32 %v4520, 4294901760
        %8117 = vmatmul.mubr.f32.gmra.mrb[0].mxu0 %v8116
        %v8118 = vpop.f32.mrb[0].mxu0
        %v8119 = vadd.f32 %v7894, %v8118
        %v8120 = vpop.f32.mrb[0].mxu0
        %v8121 = vadd.f32 %v7896, %v8120
        %8122 = vmatprep.mubr.f32.mxu0 0.0
        %v8123 = vand.u32 %v4523, 4294901760
        %8124 = vmatmul.mubr.f32.gmra.mrb[0].mxu0 %v8123
        %v8125 = vpop.f32.mrb[0].mxu0
        %v8126 = vadd.f32 %v7903, %v8125
        %v8127 = vpop.f32.mrb[0].mxu0
        %v8128 = vadd.f32 %v7905, %v8127
        %8129 = vmatprep.mubr.f32.mxu0 0.0
        %v8130 = vand.u32 %v4526, 4294901760
        %8131 = vmatmul.mubr.f32.gmra.mrb[0].mxu0 %v8130
        %v8132 = vpop.f32.mrb[0].mxu0
        %v8133 = vadd.f32 %v7912, %v8132
        %v8134 = vpop.f32.mrb[0].mxu0
        %v8135 = vadd.f32 %v7914, %v8134
        %8136 = vmatprep.mubr.f32.mxu0 0.0
        %v8137 = vand.u32 %v4529, 4294901760
        %8138 = vmatmul.mubr.f32.gmra.mrb[0].mxu0 %v8137
        %v8139 = vpop.f32.mrb[0].mxu0
        %v8140 = vadd.f32 %v7921, %v8139
        %v8141 = vpop.f32.mrb[0].mxu0
        %v8142 = vadd.f32 %v7923, %v8141
        %8143 = vmatprep.mubr.f32.mxu0 0.0
        %v8144 = vand.u32 %v4532, 4294901760
        %8145 = vmatmul.mubr.f32.gmra.mrb[0].mxu0 %v8144
        %v8146 = vpop.f32.mrb[0].mxu0
        %v8147 = vadd.f32 %v7930, %v8146
        %v8148 = vpop.f32.mrb[0].mxu0
        %v8149 = vadd.f32 %v7932, %v8148
        %8150 = vmatprep.mubr.f32.mxu0 0.0
        %v8151 = vand.u32 %v4535, 4294901760
        %8152 = vmatmul.mubr.f32.gmra.mrb[0].mxu0 %v8151
        %v8153 = vpop.f32.mrb[0].mxu0
        %v8154 = vadd.f32 %v7939, %v8153
        %v8155 = vpop.f32.mrb[0].mxu0
        %v8156 = vadd.f32 %v7941, %v8155
        %8157 = vmatprep.mubr.f32.mxu0 0.0
        %v8158 = vand.u32 %v4538, 4294901760
        %8159 = vmatmul.mubr.f32.gmra.mrb[0].mxu0 %v8158
        %v8160 = vpop.f32.mrb[0].mxu0
        %v8161 = vadd.f32 %v7948, %v8160
        %v8162 = vpop.f32.mrb[0].mxu0
        %v8163 = vadd.f32 %v7950, %v8162
        %8164 = vmatprep.mubr.f32.mxu0 0.0
        %v8165 = vand.u32 %v4541, 4294901760
        %8166 = vmatmul.mubr.f32.gmra.mrb[0].mxu0 %v8165
        %v8167 = vpop.f32.mrb[0].mxu0
        %v8168 = vadd.f32 %v7957, %v8167
        %v8169 = vpop.f32.mrb[0].mxu0
        %v8170 = vadd.f32 %v7959, %v8169
        %8171 = vmatprep.mubr.f32.mxu0 0.0
        %v8172 = vand.u32 %v4544, 4294901760
        %8173 = vmatmul.mubr.f32.gmra.mrb[0].mxu0 %v8172
        %v8174 = vpop.f32.mrb[0].mxu0
        %v8175 = vadd.f32 %v7966, %v8174
        %v8176 = vpop.f32.mrb[0].mxu0
        %v8177 = vadd.f32 %v7968, %v8176
        %8178 = vmatprep.mubr.f32.mxu0 0.0
        %v8179 = vand.u32 %v4547, 4294901760
        %8180 = vmatmul.mubr.f32.gmra.mrb[0].mxu0 %v8179
        %v8181 = vpop.f32.mrb[0].mxu0
        %v8182 = vadd.f32 %v7975, %v8181
        %v8183 = vpop.f32.mrb[0].mxu0
        %v8184 = vadd.f32 %v7977, %v8183
        %8185 = vmatprep.mubr.f32.mxu0 0.0
        %v8186 = vand.u32 %v4550, 4294901760
        %8187 = vmatmul.mubr.f32.gmra.mrb[0].mxu0 %v8186
        %v8188 = vpop.f32.mrb[0].mxu0
        %v8189 = vadd.f32 %v7984, %v8188
        %v8190 = vpop.f32.mrb[0].mxu0
        %v8191 = vadd.f32 %v7986, %v8190
        %8192 = vmatprep.mubr.f32.mxu0 0.0
        %v8193 = vand.u32 %v4553, 4294901760
        %8194 = vmatmul.mubr.f32.gmra.mrb[0].mxu0 %v8193
        %v8195 = vpop.f32.mrb[0].mxu0
        %v8196 = vadd.f32 %v7993, %v8195
        %v8197 = vpop.f32.mrb[0].mxu0
        %v8198 = vadd.f32 %v7995, %v8197
        %8199 = vmatprep.mubr.f32.mxu0 0.0
        %v8200 = vand.u32 %v4556, 4294901760
        %8201 = vmatmul.mubr.f32.gmra.mrb[0].mxu0 %v8200
        %v8202 = vpop.f32.mrb[0].mxu0
        %v8203 = vadd.f32 %v8002, %v8202
        %v8204 = vpop.f32.mrb[0].mxu0
        %v8205 = vadd.f32 %v8004, %v8204
        %8206 = vdwg.mxu0
        %v8207 = vand.u32 %v4466, 4294901760
        %8208 = vmatprep.subr.mxu0 %v8207
        %v8209 = vand.u32 %v4465, 4294901760
        %8210 = vmatpush1.msra.mxu0 %v8209
        %v8211 = vand.u32 %v4474, 4294901760
        %8212 = vmatprep.subr.mxu0 %v8211
        %v8213 = vand.u32 %v4473, 4294901760
        %8214 = vmatpush1.msra.mxu0 %v8213
        %v8215 = vand.u32 %v4482, 4294901760
        %8216 = vmatprep.subr.mxu0 %v8215
        %v8217 = vand.u32 %v4481, 4294901760
        %8218 = vmatpush1.msra.mxu0 %v8217
        %v8219 = vand.u32 %v4490, 4294901760
        %8220 = vmatprep.subr.mxu0 %v8219
        %v8221 = vand.u32 %v4489, 4294901760
        %8222 = vmatpush1.msra.mxu0 %v8221
        %8223 = vmatprep.subr.mxu0 0.0
        %8224 = vmatpush1.msra.mxu0 0.0
        %8225 = vmatprep.subr.mxu0 0.0
        %8226 = vmatpush1.msra.mxu0 0.0
        %8227 = vmatprep.subr.mxu0 0.0
        %8228 = vmatpush1.msra.mxu0 0.0
        %8229 = vmatprep.subr.mxu0 0.0
        %8230 = vmatpush1.msra.mxu0 0.0
        %8231 = vmatprep.subr.mxu0 0.0
        %8232 = vmatpush1.msra.mxu0 0.0
        %8233 = vmatprep.subr.mxu0 0.0
        %8234 = vmatpush1.msra.mxu0 0.0
        %8235 = vmatprep.subr.mxu0 0.0
        %8236 = vmatpush1.msra.mxu0 0.0
        %8237 = vmatprep.subr.mxu0 0.0
        %8238 = vmatpush1.msra.mxu0 0.0
        %8239 = vmatprep.subr.mxu0 0.0
        %8240 = vmatpush1.msra.mxu0 0.0
        %8241 = vmatprep.subr.mxu0 0.0
        %8242 = vmatpush1.msra.mxu0 0.0
        %8243 = vmatprep.subr.mxu0 0.0
        %8244 = vmatpush1.msra.mxu0 0.0
        %8245 = vmatprep.subr.mxu0 0.0
        %8246 = vmatpush1.msra.mxu0 0.0
        %8247 = vmatprep.subr.mxu0 0.0
        %8248 = vmatpush1.msra.mxu0 0.0
        %8249 = vmatprep.subr.mxu0 0.0
        %8250 = vmatpush1.msra.mxu0 0.0
        %8251 = vmatprep.subr.mxu0 0.0
        %8252 = vmatpush1.msra.mxu0 0.0
        %8253 = vmatprep.subr.mxu0 0.0
        %8254 = vmatpush1.msra.mxu0 0.0
        %8255 = vmatprep.subr.mxu0 0.0
        %8256 = vmatpush1.msra.mxu0 0.0
        %8257 = vmatprep.subr.mxu0 0.0
        %8258 = vmatpush1.msra.mxu0 0.0
        %8259 = vmatprep.subr.mxu0 0.0
        %8260 = vmatpush1.msra.mxu0 0.0
        %8261 = vmatprep.subr.mxu0 0.0
        %8262 = vmatpush1.msra.mxu0 0.0
        %8263 = vmatprep.subr.mxu0 0.0
        %8264 = vmatpush1.msra.mxu0 0.0
        %8265 = vmatprep.subr.mxu0 0.0
        %8266 = vmatpush1.msra.mxu0 0.0
        %8267 = vmatprep.subr.mxu0 0.0
        %8268 = vmatpush1.msra.mxu0 0.0
        %8269 = vmatprep.subr.mxu0 0.0
        %8270 = vmatpush1.msra.mxu0 0.0
        %8271 = vmatprep.subr.mxu0 0.0
        %8272 = vmatpush1.msra.mxu0 0.0
        %8273 = vmatprep.subr.mxu0 0.0
        %8274 = vmatpush1.msra.mxu0 0.0
        %8275 = vmatprep.subr.mxu0 0.0
        %8276 = vmatpush1.msra.mxu0 0.0
        %8277 = vmatprep.subr.mxu0 0.0
        %8278 = vmatpush1.msra.mxu0 0.0
        %8279 = vmatprep.mubr.f32.mxu0 0.0
        %v8280 = vand.u32 %v4511, 4294901760
        %8281 = vmatmul.mubr.f32.gmra.mrb[0].mxu0 %v8280
        %v8282 = vpop.f32.mrb[0].mxu0
        %v8283 = vadd.f32 %v8098, %v8282
        %v8284 = vpop.f32.mrb[0].mxu0
        %v8285 = vadd.f32 %v8100, %v8284
        %8286 = vmatprep.mubr.f32.mxu0 0.0
        %v8287 = vand.u32 %v4514, 4294901760
        %8288 = vmatmul.mubr.f32.gmra.mrb[0].mxu0 %v8287
        %v8289 = vpop.f32.mrb[0].mxu0
        %v8290 = vadd.f32 %v8105, %v8289
        %v8291 = vpop.f32.mrb[0].mxu0
        %v8292 = vadd.f32 %v8107, %v8291
        %8293 = vmatprep.mubr.f32.mxu0 0.0
        %v8294 = vand.u32 %v4517, 4294901760
        %8295 = vmatmul.mubr.f32.gmra.mrb[0].mxu0 %v8294
        %v8296 = vpop.f32.mrb[0].mxu0
        %v8297 = vadd.f32 %v8112, %v8296
        %v8298 = vpop.f32.mrb[0].mxu0
        %v8299 = vadd.f32 %v8114, %v8298
        %8300 = vmatprep.mubr.f32.mxu0 0.0
        %v8301 = vand.u32 %v4520, 4294901760
        %8302 = vmatmul.mubr.f32.gmra.mrb[0].mxu0 %v8301
        %v8303 = vpop.f32.mrb[0].mxu0
        %v8304 = vadd.f32 %v8119, %v8303
        %v8305 = vpop.f32.mrb[0].mxu0
        %v8306 = vadd.f32 %v8121, %v8305
        %8307 = vmatprep.mubr.f32.mxu0 0.0
        %v8308 = vand.u32 %v4523, 4294901760
        %8309 = vmatmul.mubr.f32.gmra.mrb[0].mxu0 %v8308
        %v8310 = vpop.f32.mrb[0].mxu0
        %v8311 = vadd.f32 %v8126, %v8310
        %v8312 = vpop.f32.mrb[0].mxu0
        %v8313 = vadd.f32 %v8128, %v8312
        %8314 = vmatprep.mubr.f32.mxu0 0.0
        %v8315 = vand.u32 %v4526, 4294901760
        %8316 = vmatmul.mubr.f32.gmra.mrb[0].mxu0 %v8315
        %v8317 = vpop.f32.mrb[0].mxu0
        %v8318 = vadd.f32 %v8133, %v8317
        %v8319 = vpop.f32.mrb[0].mxu0
        %v8320 = vadd.f32 %v8135, %v8319
        %8321 = vmatprep.mubr.f32.mxu0 0.0
        %v8322 = vand.u32 %v4529, 4294901760
        %8323 = vmatmul.mubr.f32.gmra.mrb[0].mxu0 %v8322
        %v8324 = vpop.f32.mrb[0].mxu0
        %v8325 = vadd.f32 %v8140, %v8324
        %v8326 = vpop.f32.mrb[0].mxu0
        %v8327 = vadd.f32 %v8142, %v8326
        %8328 = vmatprep.mubr.f32.mxu0 0.0
        %v8329 = vand.u32 %v4532, 4294901760
        %8330 = vmatmul.mubr.f32.gmra.mrb[0].mxu0 %v8329
        %v8331 = vpop.f32.mrb[0].mxu0
        %v8332 = vadd.f32 %v8147, %v8331
        %v8333 = vpop.f32.mrb[0].mxu0
        %v8334 = vadd.f32 %v8149, %v8333
        %8335 = vmatprep.mubr.f32.mxu0 0.0
        %v8336 = vand.u32 %v4535, 4294901760
        %8337 = vmatmul.mubr.f32.gmra.mrb[0].mxu0 %v8336
        %v8338 = vpop.f32.mrb[0].mxu0
        %v8339 = vadd.f32 %v8154, %v8338
        %v8340 = vpop.f32.mrb[0].mxu0
        %v8341 = vadd.f32 %v8156, %v8340
        %8342 = vmatprep.mubr.f32.mxu0 0.0
        %v8343 = vand.u32 %v4538, 4294901760
        %8344 = vmatmul.mubr.f32.gmra.mrb[0].mxu0 %v8343
        %v8345 = vpop.f32.mrb[0].mxu0
        %v8346 = vadd.f32 %v8161, %v8345
        %v8347 = vpop.f32.mrb[0].mxu0
        %v8348 = vadd.f32 %v8163, %v8347
        %8349 = vmatprep.mubr.f32.mxu0 0.0
        %v8350 = vand.u32 %v4541, 4294901760
        %8351 = vmatmul.mubr.f32.gmra.mrb[0].mxu0 %v8350
        %v8352 = vpop.f32.mrb[0].mxu0
        %v8353 = vadd.f32 %v8168, %v8352
        %v8354 = vpop.f32.mrb[0].mxu0
        %v8355 = vadd.f32 %v8170, %v8354
        %8356 = vmatprep.mubr.f32.mxu0 0.0
        %v8357 = vand.u32 %v4544, 4294901760
        %8358 = vmatmul.mubr.f32.gmra.mrb[0].mxu0 %v8357
        %v8359 = vpop.f32.mrb[0].mxu0
        %v8360 = vadd.f32 %v8175, %v8359
        %v8361 = vpop.f32.mrb[0].mxu0
        %v8362 = vadd.f32 %v8177, %v8361
        %8363 = vmatprep.mubr.f32.mxu0 0.0
        %v8364 = vand.u32 %v4547, 4294901760
        %8365 = vmatmul.mubr.f32.gmra.mrb[0].mxu0 %v8364
        %v8366 = vpop.f32.mrb[0].mxu0
        %v8367 = vadd.f32 %v8182, %v8366
        %v8368 = vpop.f32.mrb[0].mxu0
        %v8369 = vadd.f32 %v8184, %v8368
        %8370 = vmatprep.mubr.f32.mxu0 0.0
        %v8371 = vand.u32 %v4550, 4294901760
        %8372 = vmatmul.mubr.f32.gmra.mrb[0].mxu0 %v8371
        %v8373 = vpop.f32.mrb[0].mxu0
        %v8374 = vadd.f32 %v8189, %v8373
        %v8375 = vpop.f32.mrb[0].mxu0
        %v8376 = vadd.f32 %v8191, %v8375
        %8377 = vmatprep.mubr.f32.mxu0 0.0
        %v8378 = vand.u32 %v4553, 4294901760
        %8379 = vmatmul.mubr.f32.gmra.mrb[0].mxu0 %v8378
        %v8380 = vpop.f32.mrb[0].mxu0
        %v8381 = vadd.f32 %v8196, %v8380
        %v8382 = vpop.f32.mrb[0].mxu0
        %v8383 = vadd.f32 %v8198, %v8382
        %8384 = vmatprep.mubr.f32.mxu0 0.0
        %v8385 = vand.u32 %v4556, 4294901760
        %8386 = vmatmul.mubr.f32.gmra.mrb[0].mxu0 %v8385
        %v8387 = vpop.f32.mrb[0].mxu0
        %v8388 = vadd.f32 %v8203, %v8387
        %v8389 = vpop.f32.mrb[0].mxu0
        %v8390 = vadd.f32 %v8205, %v8389
        %8391 = vdwg.mxu0
        %v8392 = vand.u32 %v4468, 4294901760
        %8393 = vmatprep.subr.mxu0 %v8392
        %v8394 = vand.u32 %v4467, 4294901760
        %8395 = vmatpush1.msra.mxu0 %v8394
        %v8396 = vand.u32 %v4476, 4294901760
        %8397 = vmatprep.subr.mxu0 %v8396
        %v8398 = vand.u32 %v4475, 4294901760
        %8399 = vmatpush1.msra.mxu0 %v8398
        %v8400 = vand.u32 %v4484, 4294901760
        %8401 = vmatprep.subr.mxu0 %v8400
        %v8402 = vand.u32 %v4483, 4294901760
        %8403 = vmatpush1.msra.mxu0 %v8402
        %v8404 = vand.u32 %v4492, 4294901760
        %8405 = vmatprep.subr.mxu0 %v8404
        %v8406 = vand.u32 %v4491, 4294901760
        %8407 = vmatpush1.msra.mxu0 %v8406
        %8408 = vmatprep.subr.mxu0 0.0
        %8409 = vmatpush1.msra.mxu0 0.0
        %8410 = vmatprep.subr.mxu0 0.0
        %8411 = vmatpush1.msra.mxu0 0.0
        %8412 = vmatprep.subr.mxu0 0.0
        %8413 = vmatpush1.msra.mxu0 0.0
        %8414 = vmatprep.subr.mxu0 0.0
        %8415 = vmatpush1.msra.mxu0 0.0
        %8416 = vmatprep.subr.mxu0 0.0
        %8417 = vmatpush1.msra.mxu0 0.0
        %8418 = vmatprep.subr.mxu0 0.0
        %8419 = vmatpush1.msra.mxu0 0.0
        %8420 = vmatprep.subr.mxu0 0.0
        %8421 = vmatpush1.msra.mxu0 0.0
        %8422 = vmatprep.subr.mxu0 0.0
        %8423 = vmatpush1.msra.mxu0 0.0
        %8424 = vmatprep.subr.mxu0 0.0
        %8425 = vmatpush1.msra.mxu0 0.0
        %8426 = vmatprep.subr.mxu0 0.0
        %8427 = vmatpush1.msra.mxu0 0.0
        %8428 = vmatprep.subr.mxu0 0.0
        %8429 = vmatpush1.msra.mxu0 0.0
        %8430 = vmatprep.subr.mxu0 0.0
        %8431 = vmatpush1.msra.mxu0 0.0
        %8432 = vmatprep.subr.mxu0 0.0
        %8433 = vmatpush1.msra.mxu0 0.0
        %8434 = vmatprep.subr.mxu0 0.0
        %8435 = vmatpush1.msra.mxu0 0.0
        %8436 = vmatprep.subr.mxu0 0.0
        %8437 = vmatpush1.msra.mxu0 0.0
        %8438 = vmatprep.subr.mxu0 0.0
        %8439 = vmatpush1.msra.mxu0 0.0
        %8440 = vmatprep.subr.mxu0 0.0
        %8441 = vmatpush1.msra.mxu0 0.0
        %8442 = vmatprep.subr.mxu0 0.0
        %8443 = vmatpush1.msra.mxu0 0.0
        %8444 = vmatprep.subr.mxu0 0.0
        %8445 = vmatpush1.msra.mxu0 0.0
        %8446 = vmatprep.subr.mxu0 0.0
        %8447 = vmatpush1.msra.mxu0 0.0
        %8448 = vmatprep.subr.mxu0 0.0
        %8449 = vmatpush1.msra.mxu0 0.0
        %8450 = vmatprep.subr.mxu0 0.0
        %8451 = vmatpush1.msra.mxu0 0.0
        %8452 = vmatprep.subr.mxu0 0.0
        %8453 = vmatpush1.msra.mxu0 0.0
        %8454 = vmatprep.subr.mxu0 0.0
        %8455 = vmatpush1.msra.mxu0 0.0
        %8456 = vmatprep.subr.mxu0 0.0
        %8457 = vmatpush1.msra.mxu0 0.0
        %8458 = vmatprep.subr.mxu0 0.0
        %8459 = vmatpush1.msra.mxu0 0.0
        %8460 = vmatprep.subr.mxu0 0.0
        %8461 = vmatpush1.msra.mxu0 0.0
        %8462 = vmatprep.subr.mxu0 0.0
        %8463 = vmatpush1.msra.mxu0 0.0
        %8464 = vmatprep.mubr.f32.mxu0 0.0
        %v8465 = vand.u32 %v4511, 4294901760
        %v8466 = vsub.f32 %v4511, %v8465
        %v8467 = vand.u32 %v8466, 4294901760
        %v8468 = vsub.f32 %v8466, %v8467
        %v8469 = vand.u32 %v8468, 4294901760
        %8470 = vmatmul.mubr.f32.gmra.mrb[0].mxu0 %v8469
        %v8471 = vpop.f32.mrb[0].mxu0
        %v8472 = vadd.f32 0.0, %v8471
        %v8473 = vpop.f32.mrb[0].mxu0
        %v8474 = vadd.f32 0.0, %v8473
        %8475 = vmatprep.mubr.f32.mxu0 0.0
        %v8476 = vand.u32 %v4514, 4294901760
        %v8477 = vsub.f32 %v4514, %v8476
        %v8478 = vand.u32 %v8477, 4294901760
        %v8479 = vsub.f32 %v8477, %v8478
        %v8480 = vand.u32 %v8479, 4294901760
        %8481 = vmatmul.mubr.f32.gmra.mrb[0].mxu0 %v8480
        %v8482 = vpop.f32.mrb[0].mxu0
        %v8483 = vadd.f32 0.0, %v8482
        %v8484 = vpop.f32.mrb[0].mxu0
        %v8485 = vadd.f32 0.0, %v8484
        %8486 = vmatprep.mubr.f32.mxu0 0.0
        %v8487 = vand.u32 %v4517, 4294901760
        %v8488 = vsub.f32 %v4517, %v8487
        %v8489 = vand.u32 %v8488, 4294901760
        %v8490 = vsub.f32 %v8488, %v8489
        %v8491 = vand.u32 %v8490, 4294901760
        %8492 = vmatmul.mubr.f32.gmra.mrb[0].mxu0 %v8491
        %v8493 = vpop.f32.mrb[0].mxu0
        %v8494 = vadd.f32 0.0, %v8493
        %v8495 = vpop.f32.mrb[0].mxu0
        %v8496 = vadd.f32 0.0, %v8495
        %8497 = vmatprep.mubr.f32.mxu0 0.0
        %v8498 = vand.u32 %v4520, 4294901760
        %v8499 = vsub.f32 %v4520, %v8498
        %v8500 = vand.u32 %v8499, 4294901760
        %v8501 = vsub.f32 %v8499, %v8500
        %v8502 = vand.u32 %v8501, 4294901760
        %8503 = vmatmul.mubr.f32.gmra.mrb[0].mxu0 %v8502
        %v8504 = vpop.f32.mrb[0].mxu0
        %v8505 = vadd.f32 0.0, %v8504
        %v8506 = vpop.f32.mrb[0].mxu0
        %v8507 = vadd.f32 0.0, %v8506
        %8508 = vmatprep.mubr.f32.mxu0 0.0
        %v8509 = vand.u32 %v4523, 4294901760
        %v8510 = vsub.f32 %v4523, %v8509
        %v8511 = vand.u32 %v8510, 4294901760
        %v8512 = vsub.f32 %v8510, %v8511
        %v8513 = vand.u32 %v8512, 4294901760
        %8514 = vmatmul.mubr.f32.gmra.mrb[0].mxu0 %v8513
        %v8515 = vpop.f32.mrb[0].mxu0
        %v8516 = vadd.f32 0.0, %v8515
        %v8517 = vpop.f32.mrb[0].mxu0
        %v8518 = vadd.f32 0.0, %v8517
        %8519 = vmatprep.mubr.f32.mxu0 0.0
        %v8520 = vand.u32 %v4526, 4294901760
        %v8521 = vsub.f32 %v4526, %v8520
        %v8522 = vand.u32 %v8521, 4294901760
        %v8523 = vsub.f32 %v8521, %v8522
        %v8524 = vand.u32 %v8523, 4294901760
        %8525 = vmatmul.mubr.f32.gmra.mrb[0].mxu0 %v8524
        %v8526 = vpop.f32.mrb[0].mxu0
        %v8527 = vadd.f32 0.0, %v8526
        %v8528 = vpop.f32.mrb[0].mxu0
        %v8529 = vadd.f32 0.0, %v8528
        %8530 = vmatprep.mubr.f32.mxu0 0.0
        %v8531 = vand.u32 %v4529, 4294901760
        %v8532 = vsub.f32 %v4529, %v8531
        %v8533 = vand.u32 %v8532, 4294901760
        %v8534 = vsub.f32 %v8532, %v8533
        %v8535 = vand.u32 %v8534, 4294901760
        %8536 = vmatmul.mubr.f32.gmra.mrb[0].mxu0 %v8535
        %v8537 = vpop.f32.mrb[0].mxu0
        %v8538 = vadd.f32 0.0, %v8537
        %v8539 = vpop.f32.mrb[0].mxu0
        %v8540 = vadd.f32 0.0, %v8539
        %8541 = vmatprep.mubr.f32.mxu0 0.0
        %v8542 = vand.u32 %v4532, 4294901760
        %v8543 = vsub.f32 %v4532, %v8542
        %v8544 = vand.u32 %v8543, 4294901760
        %v8545 = vsub.f32 %v8543, %v8544
        %v8546 = vand.u32 %v8545, 4294901760
        %8547 = vmatmul.mubr.f32.gmra.mrb[0].mxu0 %v8546
        %v8548 = vpop.f32.mrb[0].mxu0
        %v8549 = vadd.f32 0.0, %v8548
        %v8550 = vpop.f32.mrb[0].mxu0
        %v8551 = vadd.f32 0.0, %v8550
        %8552 = vmatprep.mubr.f32.mxu0 0.0
        %v8553 = vand.u32 %v4535, 4294901760
        %v8554 = vsub.f32 %v4535, %v8553
        %v8555 = vand.u32 %v8554, 4294901760
        %v8556 = vsub.f32 %v8554, %v8555
        %v8557 = vand.u32 %v8556, 4294901760
        %8558 = vmatmul.mubr.f32.gmra.mrb[0].mxu0 %v8557
        %v8559 = vpop.f32.mrb[0].mxu0
        %v8560 = vadd.f32 0.0, %v8559
        %v8561 = vpop.f32.mrb[0].mxu0
        %v8562 = vadd.f32 0.0, %v8561
        %8563 = vmatprep.mubr.f32.mxu0 0.0
        %v8564 = vand.u32 %v4538, 4294901760
        %v8565 = vsub.f32 %v4538, %v8564
        %v8566 = vand.u32 %v8565, 4294901760
        %v8567 = vsub.f32 %v8565, %v8566
        %v8568 = vand.u32 %v8567, 4294901760
        %8569 = vmatmul.mubr.f32.gmra.mrb[0].mxu0 %v8568
        %v8570 = vpop.f32.mrb[0].mxu0
        %v8571 = vadd.f32 0.0, %v8570
        %v8572 = vpop.f32.mrb[0].mxu0
        %v8573 = vadd.f32 0.0, %v8572
        %8574 = vmatprep.mubr.f32.mxu0 0.0
        %v8575 = vand.u32 %v4541, 4294901760
        %v8576 = vsub.f32 %v4541, %v8575
        %v8577 = vand.u32 %v8576, 4294901760
        %v8578 = vsub.f32 %v8576, %v8577
        %v8579 = vand.u32 %v8578, 4294901760
        %8580 = vmatmul.mubr.f32.gmra.mrb[0].mxu0 %v8579
        %v8581 = vpop.f32.mrb[0].mxu0
        %v8582 = vadd.f32 0.0, %v8581
        %v8583 = vpop.f32.mrb[0].mxu0
        %v8584 = vadd.f32 0.0, %v8583
        %8585 = vmatprep.mubr.f32.mxu0 0.0
        %v8586 = vand.u32 %v4544, 4294901760
        %v8587 = vsub.f32 %v4544, %v8586
        %v8588 = vand.u32 %v8587, 4294901760
        %v8589 = vsub.f32 %v8587, %v8588
        %v8590 = vand.u32 %v8589, 4294901760
        %8591 = vmatmul.mubr.f32.gmra.mrb[0].mxu0 %v8590
        %v8592 = vpop.f32.mrb[0].mxu0
        %v8593 = vadd.f32 0.0, %v8592
        %v8594 = vpop.f32.mrb[0].mxu0
        %v8595 = vadd.f32 0.0, %v8594
        %8596 = vmatprep.mubr.f32.mxu0 0.0
        %v8597 = vand.u32 %v4547, 4294901760
        %v8598 = vsub.f32 %v4547, %v8597
        %v8599 = vand.u32 %v8598, 4294901760
        %v8600 = vsub.f32 %v8598, %v8599
        %v8601 = vand.u32 %v8600, 4294901760
        %8602 = vmatmul.mubr.f32.gmra.mrb[0].mxu0 %v8601
        %v8603 = vpop.f32.mrb[0].mxu0
        %v8604 = vadd.f32 0.0, %v8603
        %v8605 = vpop.f32.mrb[0].mxu0
        %v8606 = vadd.f32 0.0, %v8605
        %8607 = vmatprep.mubr.f32.mxu0 0.0
        %v8608 = vand.u32 %v4550, 4294901760
        %v8609 = vsub.f32 %v4550, %v8608
        %v8610 = vand.u32 %v8609, 4294901760
        %v8611 = vsub.f32 %v8609, %v8610
        %v8612 = vand.u32 %v8611, 4294901760
        %8613 = vmatmul.mubr.f32.gmra.mrb[0].mxu0 %v8612
        %v8614 = vpop.f32.mrb[0].mxu0
        %v8615 = vadd.f32 0.0, %v8614
        %v8616 = vpop.f32.mrb[0].mxu0
        %v8617 = vadd.f32 0.0, %v8616
        %8618 = vmatprep.mubr.f32.mxu0 0.0
        %v8619 = vand.u32 %v4553, 4294901760
        %v8620 = vsub.f32 %v4553, %v8619
        %v8621 = vand.u32 %v8620, 4294901760
        %v8622 = vsub.f32 %v8620, %v8621
        %v8623 = vand.u32 %v8622, 4294901760
        %8624 = vmatmul.mubr.f32.gmra.mrb[0].mxu0 %v8623
        %v8625 = vpop.f32.mrb[0].mxu0
        %v8626 = vadd.f32 0.0, %v8625
        %v8627 = vpop.f32.mrb[0].mxu0
        %v8628 = vadd.f32 0.0, %v8627
        %8629 = vmatprep.mubr.f32.mxu0 0.0
        %v8630 = vand.u32 %v4556, 4294901760
        %v8631 = vsub.f32 %v4556, %v8630
        %v8632 = vand.u32 %v8631, 4294901760
        %v8633 = vsub.f32 %v8631, %v8632
        %v8634 = vand.u32 %v8633, 4294901760
        %8635 = vmatmul.mubr.f32.gmra.mrb[0].mxu0 %v8634
        %v8636 = vpop.f32.mrb[0].mxu0
        %v8637 = vadd.f32 0.0, %v8636
        %v8638 = vpop.f32.mrb[0].mxu0
        %v8639 = vadd.f32 0.0, %v8638
        %8640 = vdwg.mxu0
        %v8641 = vand.u32 %v4468, 4294901760
        %v8642 = vsub.f32 %v4468, %v8641
        %v8643 = vand.u32 %v8642, 4294901760
        %v8644 = vsub.f32 %v8642, %v8643
        %v8645 = vand.u32 %v8644, 4294901760
        %8646 = vmatprep.subr.mxu0 %v8645
        %v8647 = vand.u32 %v4467, 4294901760
        %v8648 = vsub.f32 %v4467, %v8647
        %v8649 = vand.u32 %v8648, 4294901760
        %v8650 = vsub.f32 %v8648, %v8649
        %v8651 = vand.u32 %v8650, 4294901760
        %8652 = vmatpush1.msra.mxu0 %v8651
        %v8653 = vand.u32 %v4476, 4294901760
        %v8654 = vsub.f32 %v4476, %v8653
        %v8655 = vand.u32 %v8654, 4294901760
        %v8656 = vsub.f32 %v8654, %v8655
        %v8657 = vand.u32 %v8656, 4294901760
        %8658 = vmatprep.subr.mxu0 %v8657
        %v8659 = vand.u32 %v4475, 4294901760
        %v8660 = vsub.f32 %v4475, %v8659
        %v8661 = vand.u32 %v8660, 4294901760
        %v8662 = vsub.f32 %v8660, %v8661
        %v8663 = vand.u32 %v8662, 4294901760
        %8664 = vmatpush1.msra.mxu0 %v8663
        %v8665 = vand.u32 %v4484, 4294901760
        %v8666 = vsub.f32 %v4484, %v8665
        %v8667 = vand.u32 %v8666, 4294901760
        %v8668 = vsub.f32 %v8666, %v8667
        %v8669 = vand.u32 %v8668, 4294901760
        %8670 = vmatprep.subr.mxu0 %v8669
        %v8671 = vand.u32 %v4483, 4294901760
        %v8672 = vsub.f32 %v4483, %v8671
        %v8673 = vand.u32 %v8672, 4294901760
        %v8674 = vsub.f32 %v8672, %v8673
        %v8675 = vand.u32 %v8674, 4294901760
        %8676 = vmatpush1.msra.mxu0 %v8675
        %v8677 = vand.u32 %v4492, 4294901760
        %v8678 = vsub.f32 %v4492, %v8677
        %v8679 = vand.u32 %v8678, 4294901760
        %v8680 = vsub.f32 %v8678, %v8679
        %v8681 = vand.u32 %v8680, 4294901760
        %8682 = vmatprep.subr.mxu0 %v8681
        %v8683 = vand.u32 %v4491, 4294901760
        %v8684 = vsub.f32 %v4491, %v8683
        %v8685 = vand.u32 %v8684, 4294901760
        %v8686 = vsub.f32 %v8684, %v8685
        %v8687 = vand.u32 %v8686, 4294901760
        %8688 = vmatpush1.msra.mxu0 %v8687
        %8689 = vmatprep.subr.mxu0 0.0
        %8690 = vmatpush1.msra.mxu0 0.0
        %8691 = vmatprep.subr.mxu0 0.0
        %8692 = vmatpush1.msra.mxu0 0.0
        %8693 = vmatprep.subr.mxu0 0.0
        %8694 = vmatpush1.msra.mxu0 0.0
        %8695 = vmatprep.subr.mxu0 0.0
        %8696 = vmatpush1.msra.mxu0 0.0
        %8697 = vmatprep.subr.mxu0 0.0
        %8698 = vmatpush1.msra.mxu0 0.0
        %8699 = vmatprep.subr.mxu0 0.0
        %8700 = vmatpush1.msra.mxu0 0.0
        %8701 = vmatprep.subr.mxu0 0.0
        %8702 = vmatpush1.msra.mxu0 0.0
        %8703 = vmatprep.subr.mxu0 0.0
        %8704 = vmatpush1.msra.mxu0 0.0
        %8705 = vmatprep.subr.mxu0 0.0
        %8706 = vmatpush1.msra.mxu0 0.0
        %8707 = vmatprep.subr.mxu0 0.0
        %8708 = vmatpush1.msra.mxu0 0.0
        %8709 = vmatprep.subr.mxu0 0.0
        %8710 = vmatpush1.msra.mxu0 0.0
        %8711 = vmatprep.subr.mxu0 0.0
        %8712 = vmatpush1.msra.mxu0 0.0
        %8713 = vmatprep.subr.mxu0 0.0
        %8714 = vmatpush1.msra.mxu0 0.0
        %8715 = vmatprep.subr.mxu0 0.0
        %8716 = vmatpush1.msra.mxu0 0.0
        %8717 = vmatprep.subr.mxu0 0.0
        %8718 = vmatpush1.msra.mxu0 0.0
        %8719 = vmatprep.subr.mxu0 0.0
        %8720 = vmatpush1.msra.mxu0 0.0
        %8721 = vmatprep.subr.mxu0 0.0
        %8722 = vmatpush1.msra.mxu0 0.0
        %8723 = vmatprep.subr.mxu0 0.0
        %8724 = vmatpush1.msra.mxu0 0.0
        %8725 = vmatprep.subr.mxu0 0.0
        %8726 = vmatpush1.msra.mxu0 0.0
        %8727 = vmatprep.subr.mxu0 0.0
        %8728 = vmatpush1.msra.mxu0 0.0
        %8729 = vmatprep.subr.mxu0 0.0
        %8730 = vmatpush1.msra.mxu0 0.0
        %8731 = vmatprep.subr.mxu0 0.0
        %8732 = vmatpush1.msra.mxu0 0.0
        %8733 = vmatprep.subr.mxu0 0.0
        %8734 = vmatpush1.msra.mxu0 0.0
        %8735 = vmatprep.subr.mxu0 0.0
        %8736 = vmatpush1.msra.mxu0 0.0
        %8737 = vmatprep.subr.mxu0 0.0
        %8738 = vmatpush1.msra.mxu0 0.0
        %8739 = vmatprep.subr.mxu0 0.0
        %8740 = vmatpush1.msra.mxu0 0.0
        %8741 = vmatprep.subr.mxu0 0.0
        %8742 = vmatpush1.msra.mxu0 0.0
        %8743 = vmatprep.subr.mxu0 0.0
        %8744 = vmatpush1.msra.mxu0 0.0
        %8745 = vmatprep.mubr.f32.mxu0 0.0
        %v8746 = vand.u32 %v4511, 4294901760
        %8747 = vmatmul.mubr.f32.gmra.mrb[0].mxu0 %v8746
        %v8748 = vpop.f32.mrb[0].mxu0
        %v8749 = vadd.f32 %v8472, %v8748
        %v8750 = vpop.f32.mrb[0].mxu0
        %v8751 = vadd.f32 %v8474, %v8750
        %8752 = vmatprep.mubr.f32.mxu0 0.0
        %v8753 = vand.u32 %v4514, 4294901760
        %8754 = vmatmul.mubr.f32.gmra.mrb[0].mxu0 %v8753
        %v8755 = vpop.f32.mrb[0].mxu0
        %v8756 = vadd.f32 %v8483, %v8755
        %v8757 = vpop.f32.mrb[0].mxu0
        %v8758 = vadd.f32 %v8485, %v8757
        %8759 = vmatprep.mubr.f32.mxu0 0.0
        %v8760 = vand.u32 %v4517, 4294901760
        %8761 = vmatmul.mubr.f32.gmra.mrb[0].mxu0 %v8760
        %v8762 = vpop.f32.mrb[0].mxu0
        %v8763 = vadd.f32 %v8494, %v8762
        %v8764 = vpop.f32.mrb[0].mxu0
        %v8765 = vadd.f32 %v8496, %v8764
        %8766 = vmatprep.mubr.f32.mxu0 0.0
        %v8767 = vand.u32 %v4520, 4294901760
        %8768 = vmatmul.mubr.f32.gmra.mrb[0].mxu0 %v8767
        %v8769 = vpop.f32.mrb[0].mxu0
        %v8770 = vadd.f32 %v8505, %v8769
        %v8771 = vpop.f32.mrb[0].mxu0
        %v8772 = vadd.f32 %v8507, %v8771
        %8773 = vmatprep.mubr.f32.mxu0 0.0
        %v8774 = vand.u32 %v4523, 4294901760
        %8775 = vmatmul.mubr.f32.gmra.mrb[0].mxu0 %v8774
        %v8776 = vpop.f32.mrb[0].mxu0
        %v8777 = vadd.f32 %v8516, %v8776
        %v8778 = vpop.f32.mrb[0].mxu0
        %v8779 = vadd.f32 %v8518, %v8778
        %8780 = vmatprep.mubr.f32.mxu0 0.0
        %v8781 = vand.u32 %v4526, 4294901760
        %8782 = vmatmul.mubr.f32.gmra.mrb[0].mxu0 %v8781
        %v8783 = vpop.f32.mrb[0].mxu0
        %v8784 = vadd.f32 %v8527, %v8783
        %v8785 = vpop.f32.mrb[0].mxu0
        %v8786 = vadd.f32 %v8529, %v8785
        %8787 = vmatprep.mubr.f32.mxu0 0.0
        %v8788 = vand.u32 %v4529, 4294901760
        %8789 = vmatmul.mubr.f32.gmra.mrb[0].mxu0 %v8788
        %v8790 = vpop.f32.mrb[0].mxu0
        %v8791 = vadd.f32 %v8538, %v8790
        %v8792 = vpop.f32.mrb[0].mxu0
        %v8793 = vadd.f32 %v8540, %v8792
        %8794 = vmatprep.mubr.f32.mxu0 0.0
        %v8795 = vand.u32 %v4532, 4294901760
        %8796 = vmatmul.mubr.f32.gmra.mrb[0].mxu0 %v8795
        %v8797 = vpop.f32.mrb[0].mxu0
        %v8798 = vadd.f32 %v8549, %v8797
        %v8799 = vpop.f32.mrb[0].mxu0
        %v8800 = vadd.f32 %v8551, %v8799
        %8801 = vmatprep.mubr.f32.mxu0 0.0
        %v8802 = vand.u32 %v4535, 4294901760
        %8803 = vmatmul.mubr.f32.gmra.mrb[0].mxu0 %v8802
        %v8804 = vpop.f32.mrb[0].mxu0
        %v8805 = vadd.f32 %v8560, %v8804
        %v8806 = vpop.f32.mrb[0].mxu0
        %v8807 = vadd.f32 %v8562, %v8806
        %8808 = vmatprep.mubr.f32.mxu0 0.0
        %v8809 = vand.u32 %v4538, 4294901760
        %8810 = vmatmul.mubr.f32.gmra.mrb[0].mxu0 %v8809
        %v8811 = vpop.f32.mrb[0].mxu0
        %v8812 = vadd.f32 %v8571, %v8811
        %v8813 = vpop.f32.mrb[0].mxu0
        %v8814 = vadd.f32 %v8573, %v8813
        %8815 = vmatprep.mubr.f32.mxu0 0.0
        %v8816 = vand.u32 %v4541, 4294901760
        %8817 = vmatmul.mubr.f32.gmra.mrb[0].mxu0 %v8816
        %v8818 = vpop.f32.mrb[0].mxu0
        %v8819 = vadd.f32 %v8582, %v8818
        %v8820 = vpop.f32.mrb[0].mxu0
        %v8821 = vadd.f32 %v8584, %v8820
        %8822 = vmatprep.mubr.f32.mxu0 0.0
        %v8823 = vand.u32 %v4544, 4294901760
        %8824 = vmatmul.mubr.f32.gmra.mrb[0].mxu0 %v8823
        %v8825 = vpop.f32.mrb[0].mxu0
        %v8826 = vadd.f32 %v8593, %v8825
        %v8827 = vpop.f32.mrb[0].mxu0
        %v8828 = vadd.f32 %v8595, %v8827
        %8829 = vmatprep.mubr.f32.mxu0 0.0
        %v8830 = vand.u32 %v4547, 4294901760
        %8831 = vmatmul.mubr.f32.gmra.mrb[0].mxu0 %v8830
        %v8832 = vpop.f32.mrb[0].mxu0
        %v8833 = vadd.f32 %v8604, %v8832
        %v8834 = vpop.f32.mrb[0].mxu0
        %v8835 = vadd.f32 %v8606, %v8834
        %8836 = vmatprep.mubr.f32.mxu0 0.0
        %v8837 = vand.u32 %v4550, 4294901760
        %8838 = vmatmul.mubr.f32.gmra.mrb[0].mxu0 %v8837
        %v8839 = vpop.f32.mrb[0].mxu0
        %v8840 = vadd.f32 %v8615, %v8839
        %v8841 = vpop.f32.mrb[0].mxu0
        %v8842 = vadd.f32 %v8617, %v8841
        %8843 = vmatprep.mubr.f32.mxu0 0.0
        %v8844 = vand.u32 %v4553, 4294901760
        %8845 = vmatmul.mubr.f32.gmra.mrb[0].mxu0 %v8844
        %v8846 = vpop.f32.mrb[0].mxu0
        %v8847 = vadd.f32 %v8626, %v8846
        %v8848 = vpop.f32.mrb[0].mxu0
        %v8849 = vadd.f32 %v8628, %v8848
        %8850 = vmatprep.mubr.f32.mxu0 0.0
        %v8851 = vand.u32 %v4556, 4294901760
        %8852 = vmatmul.mubr.f32.gmra.mrb[0].mxu0 %v8851
        %v8853 = vpop.f32.mrb[0].mxu0
        %v8854 = vadd.f32 %v8637, %v8853
        %v8855 = vpop.f32.mrb[0].mxu0
        %v8856 = vadd.f32 %v8639, %v8855
        %8857 = vdwg.mxu0
        %v8858 = vand.u32 %v4468, 4294901760
        %v8859 = vsub.f32 %v4468, %v8858
        %8860 = vmatprep.subr.mxu0 %v8859
        %v8861 = vand.u32 %v4467, 4294901760
        %v8862 = vsub.f32 %v4467, %v8861
        %8863 = vmatpush1.msra.mxu0 %v8862
        %v8864 = vand.u32 %v4476, 4294901760
        %v8865 = vsub.f32 %v4476, %v8864
        %8866 = vmatprep.subr.mxu0 %v8865
        %v8867 = vand.u32 %v4475, 4294901760
        %v8868 = vsub.f32 %v4475, %v8867
        %8869 = vmatpush1.msra.mxu0 %v8868
        %v8870 = vand.u32 %v4484, 4294901760
        %v8871 = vsub.f32 %v4484, %v8870
        %8872 = vmatprep.subr.mxu0 %v8871
        %v8873 = vand.u32 %v4483, 4294901760
        %v8874 = vsub.f32 %v4483, %v8873
        %8875 = vmatpush1.msra.mxu0 %v8874
        %v8876 = vand.u32 %v4492, 4294901760
        %v8877 = vsub.f32 %v4492, %v8876
        %8878 = vmatprep.subr.mxu0 %v8877
        %v8879 = vand.u32 %v4491, 4294901760
        %v8880 = vsub.f32 %v4491, %v8879
        %8881 = vmatpush1.msra.mxu0 %v8880
        %8882 = vmatprep.subr.mxu0 0.0
        %8883 = vmatpush1.msra.mxu0 0.0
        %8884 = vmatprep.subr.mxu0 0.0
        %8885 = vmatpush1.msra.mxu0 0.0
        %8886 = vmatprep.subr.mxu0 0.0
        %8887 = vmatpush1.msra.mxu0 0.0
        %8888 = vmatprep.subr.mxu0 0.0
        %8889 = vmatpush1.msra.mxu0 0.0
        %8890 = vmatprep.subr.mxu0 0.0
        %8891 = vmatpush1.msra.mxu0 0.0
        %8892 = vmatprep.subr.mxu0 0.0
        %8893 = vmatpush1.msra.mxu0 0.0
        %8894 = vmatprep.subr.mxu0 0.0
        %8895 = vmatpush1.msra.mxu0 0.0
        %8896 = vmatprep.subr.mxu0 0.0
        %8897 = vmatpush1.msra.mxu0 0.0
        %8898 = vmatprep.subr.mxu0 0.0
        %8899 = vmatpush1.msra.mxu0 0.0
        %8900 = vmatprep.subr.mxu0 0.0
        %8901 = vmatpush1.msra.mxu0 0.0
        %8902 = vmatprep.subr.mxu0 0.0
        %8903 = vmatpush1.msra.mxu0 0.0
        %8904 = vmatprep.subr.mxu0 0.0
        %8905 = vmatpush1.msra.mxu0 0.0
        %8906 = vmatprep.subr.mxu0 0.0
        %8907 = vmatpush1.msra.mxu0 0.0
        %8908 = vmatprep.subr.mxu0 0.0
        %8909 = vmatpush1.msra.mxu0 0.0
        %8910 = vmatprep.subr.mxu0 0.0
        %8911 = vmatpush1.msra.mxu0 0.0
        %8912 = vmatprep.subr.mxu0 0.0
        %8913 = vmatpush1.msra.mxu0 0.0
        %8914 = vmatprep.subr.mxu0 0.0
        %8915 = vmatpush1.msra.mxu0 0.0
        %8916 = vmatprep.subr.mxu0 0.0
        %8917 = vmatpush1.msra.mxu0 0.0
        %8918 = vmatprep.subr.mxu0 0.0
        %8919 = vmatpush1.msra.mxu0 0.0
        %8920 = vmatprep.subr.mxu0 0.0
        %8921 = vmatpush1.msra.mxu0 0.0
        %8922 = vmatprep.subr.mxu0 0.0
        %8923 = vmatpush1.msra.mxu0 0.0
        %8924 = vmatprep.subr.mxu0 0.0
        %8925 = vmatpush1.msra.mxu0 0.0
        %8926 = vmatprep.subr.mxu0 0.0
        %8927 = vmatpush1.msra.mxu0 0.0
        %8928 = vmatprep.subr.mxu0 0.0
        %8929 = vmatpush1.msra.mxu0 0.0
        %8930 = vmatprep.subr.mxu0 0.0
        %8931 = vmatpush1.msra.mxu0 0.0
        %8932 = vmatprep.subr.mxu0 0.0
        %8933 = vmatpush1.msra.mxu0 0.0
        %8934 = vmatprep.subr.mxu0 0.0
        %8935 = vmatpush1.msra.mxu0 0.0
        %8936 = vmatprep.subr.mxu0 0.0
        %8937 = vmatpush1.msra.mxu0 0.0
        %8938 = vmatprep.mubr.f32.mxu0 0.0
        %v8939 = vand.u32 %v4511, 4294901760
        %v8940 = vsub.f32 %v4511, %v8939
        %8941 = vmatmul.mubr.f32.gmra.mrb[0].mxu0 %v8940
        %v8942 = vpop.f32.mrb[0].mxu0
        %v8943 = vadd.f32 %v8749, %v8942
        %v8944 = vpop.f32.mrb[0].mxu0
        %v8945 = vadd.f32 %v8751, %v8944
        %8946 = vmatprep.mubr.f32.mxu0 0.0
        %v8947 = vand.u32 %v4514, 4294901760
        %v8948 = vsub.f32 %v4514, %v8947
        %8949 = vmatmul.mubr.f32.gmra.mrb[0].mxu0 %v8948
        %v8950 = vpop.f32.mrb[0].mxu0
        %v8951 = vadd.f32 %v8756, %v8950
        %v8952 = vpop.f32.mrb[0].mxu0
        %v8953 = vadd.f32 %v8758, %v8952
        %8954 = vmatprep.mubr.f32.mxu0 0.0
        %v8955 = vand.u32 %v4517, 4294901760
        %v8956 = vsub.f32 %v4517, %v8955
        %8957 = vmatmul.mubr.f32.gmra.mrb[0].mxu0 %v8956
        %v8958 = vpop.f32.mrb[0].mxu0
        %v8959 = vadd.f32 %v8763, %v8958
        %v8960 = vpop.f32.mrb[0].mxu0
        %v8961 = vadd.f32 %v8765, %v8960
        %8962 = vmatprep.mubr.f32.mxu0 0.0
        %v8963 = vand.u32 %v4520, 4294901760
        %v8964 = vsub.f32 %v4520, %v8963
        %8965 = vmatmul.mubr.f32.gmra.mrb[0].mxu0 %v8964
        %v8966 = vpop.f32.mrb[0].mxu0
        %v8967 = vadd.f32 %v8770, %v8966
        %v8968 = vpop.f32.mrb[0].mxu0
        %v8969 = vadd.f32 %v8772, %v8968
        %8970 = vmatprep.mubr.f32.mxu0 0.0
        %v8971 = vand.u32 %v4523, 4294901760
        %v8972 = vsub.f32 %v4523, %v8971
        %8973 = vmatmul.mubr.f32.gmra.mrb[0].mxu0 %v8972
        %v8974 = vpop.f32.mrb[0].mxu0
        %v8975 = vadd.f32 %v8777, %v8974
        %v8976 = vpop.f32.mrb[0].mxu0
        %v8977 = vadd.f32 %v8779, %v8976
        %8978 = vmatprep.mubr.f32.mxu0 0.0
        %v8979 = vand.u32 %v4526, 4294901760
        %v8980 = vsub.f32 %v4526, %v8979
        %8981 = vmatmul.mubr.f32.gmra.mrb[0].mxu0 %v8980
        %v8982 = vpop.f32.mrb[0].mxu0
        %v8983 = vadd.f32 %v8784, %v8982
        %v8984 = vpop.f32.mrb[0].mxu0
        %v8985 = vadd.f32 %v8786, %v8984
        %8986 = vmatprep.mubr.f32.mxu0 0.0
        %v8987 = vand.u32 %v4529, 4294901760
        %v8988 = vsub.f32 %v4529, %v8987
        %8989 = vmatmul.mubr.f32.gmra.mrb[0].mxu0 %v8988
        %v8990 = vpop.f32.mrb[0].mxu0
        %v8991 = vadd.f32 %v8791, %v8990
        %v8992 = vpop.f32.mrb[0].mxu0
        %v8993 = vadd.f32 %v8793, %v8992
        %8994 = vmatprep.mubr.f32.mxu0 0.0
        %v8995 = vand.u32 %v4532, 4294901760
        %v8996 = vsub.f32 %v4532, %v8995
        %8997 = vmatmul.mubr.f32.gmra.mrb[0].mxu0 %v8996
        %v8998 = vpop.f32.mrb[0].mxu0
        %v8999 = vadd.f32 %v8798, %v8998
        %v9000 = vpop.f32.mrb[0].mxu0
        %v9001 = vadd.f32 %v8800, %v9000
        %9002 = vmatprep.mubr.f32.mxu0 0.0
        %v9003 = vand.u32 %v4535, 4294901760
        %v9004 = vsub.f32 %v4535, %v9003
        %9005 = vmatmul.mubr.f32.gmra.mrb[0].mxu0 %v9004
        %v9006 = vpop.f32.mrb[0].mxu0
        %v9007 = vadd.f32 %v8805, %v9006
        %v9008 = vpop.f32.mrb[0].mxu0
        %v9009 = vadd.f32 %v8807, %v9008
        %9010 = vmatprep.mubr.f32.mxu0 0.0
        %v9011 = vand.u32 %v4538, 4294901760
        %v9012 = vsub.f32 %v4538, %v9011
        %9013 = vmatmul.mubr.f32.gmra.mrb[0].mxu0 %v9012
        %v9014 = vpop.f32.mrb[0].mxu0
        %v9015 = vadd.f32 %v8812, %v9014
        %v9016 = vpop.f32.mrb[0].mxu0
        %v9017 = vadd.f32 %v8814, %v9016
        %9018 = vmatprep.mubr.f32.mxu0 0.0
        %v9019 = vand.u32 %v4541, 4294901760
        %v9020 = vsub.f32 %v4541, %v9019
        %9021 = vmatmul.mubr.f32.gmra.mrb[0].mxu0 %v9020
        %v9022 = vpop.f32.mrb[0].mxu0
        %v9023 = vadd.f32 %v8819, %v9022
        %v9024 = vpop.f32.mrb[0].mxu0
        %v9025 = vadd.f32 %v8821, %v9024
        %9026 = vmatprep.mubr.f32.mxu0 0.0
        %v9027 = vand.u32 %v4544, 4294901760
        %v9028 = vsub.f32 %v4544, %v9027
        %9029 = vmatmul.mubr.f32.gmra.mrb[0].mxu0 %v9028
        %v9030 = vpop.f32.mrb[0].mxu0
        %v9031 = vadd.f32 %v8826, %v9030
        %v9032 = vpop.f32.mrb[0].mxu0
        %v9033 = vadd.f32 %v8828, %v9032
        %9034 = vmatprep.mubr.f32.mxu0 0.0
        %v9035 = vand.u32 %v4547, 4294901760
        %v9036 = vsub.f32 %v4547, %v9035
        %9037 = vmatmul.mubr.f32.gmra.mrb[0].mxu0 %v9036
        %v9038 = vpop.f32.mrb[0].mxu0
        %v9039 = vadd.f32 %v8833, %v9038
        %v9040 = vpop.f32.mrb[0].mxu0
        %v9041 = vadd.f32 %v8835, %v9040
        %9042 = vmatprep.mubr.f32.mxu0 0.0
        %v9043 = vand.u32 %v4550, 4294901760
        %v9044 = vsub.f32 %v4550, %v9043
        %9045 = vmatmul.mubr.f32.gmra.mrb[0].mxu0 %v9044
        %v9046 = vpop.f32.mrb[0].mxu0
        %v9047 = vadd.f32 %v8840, %v9046
        %v9048 = vpop.f32.mrb[0].mxu0
        %v9049 = vadd.f32 %v8842, %v9048
        %9050 = vmatprep.mubr.f32.mxu0 0.0
        %v9051 = vand.u32 %v4553, 4294901760
        %v9052 = vsub.f32 %v4553, %v9051
        %9053 = vmatmul.mubr.f32.gmra.mrb[0].mxu0 %v9052
        %v9054 = vpop.f32.mrb[0].mxu0
        %v9055 = vadd.f32 %v8847, %v9054
        %v9056 = vpop.f32.mrb[0].mxu0
        %v9057 = vadd.f32 %v8849, %v9056
        %9058 = vmatprep.mubr.f32.mxu0 0.0
        %v9059 = vand.u32 %v4556, 4294901760
        %v9060 = vsub.f32 %v4556, %v9059
        %9061 = vmatmul.mubr.f32.gmra.mrb[0].mxu0 %v9060
        %v9062 = vpop.f32.mrb[0].mxu0
        %v9063 = vadd.f32 %v8854, %v9062
        %v9064 = vpop.f32.mrb[0].mxu0
        %v9065 = vadd.f32 %v8856, %v9064
        %9066 = vdwg.mxu0
        %v9067 = vand.u32 %v4468, 4294901760
        %9068 = vmatprep.subr.mxu0 %v9067
        %v9069 = vand.u32 %v4467, 4294901760
        %9070 = vmatpush1.msra.mxu0 %v9069
        %v9071 = vand.u32 %v4476, 4294901760
        %9072 = vmatprep.subr.mxu0 %v9071
        %v9073 = vand.u32 %v4475, 4294901760
        %9074 = vmatpush1.msra.mxu0 %v9073
        %v9075 = vand.u32 %v4484, 4294901760
        %9076 = vmatprep.subr.mxu0 %v9075
        %v9077 = vand.u32 %v4483, 4294901760
        %9078 = vmatpush1.msra.mxu0 %v9077
        %v9079 = vand.u32 %v4492, 4294901760
        %9080 = vmatprep.subr.mxu0 %v9079
        %v9081 = vand.u32 %v4491, 4294901760
        %9082 = vmatpush1.msra.mxu0 %v9081
        %9083 = vmatprep.subr.mxu0 0.0
        %9084 = vmatpush1.msra.mxu0 0.0
        %9085 = vmatprep.subr.mxu0 0.0
        %9086 = vmatpush1.msra.mxu0 0.0
        %9087 = vmatprep.subr.mxu0 0.0
        %9088 = vmatpush1.msra.mxu0 0.0
        %9089 = vmatprep.subr.mxu0 0.0
        %9090 = vmatpush1.msra.mxu0 0.0
        %9091 = vmatprep.subr.mxu0 0.0
        %9092 = vmatpush1.msra.mxu0 0.0
        %9093 = vmatprep.subr.mxu0 0.0
        %9094 = vmatpush1.msra.mxu0 0.0
        %9095 = vmatprep.subr.mxu0 0.0
        %9096 = vmatpush1.msra.mxu0 0.0
        %9097 = vmatprep.subr.mxu0 0.0
        %9098 = vmatpush1.msra.mxu0 0.0
        %9099 = vmatprep.subr.mxu0 0.0
        %9100 = vmatpush1.msra.mxu0 0.0
        %9101 = vmatprep.subr.mxu0 0.0
        %9102 = vmatpush1.msra.mxu0 0.0
        %9103 = vmatprep.subr.mxu0 0.0
        %9104 = vmatpush1.msra.mxu0 0.0
        %9105 = vmatprep.subr.mxu0 0.0
        %9106 = vmatpush1.msra.mxu0 0.0
        %9107 = vmatprep.subr.mxu0 0.0
        %9108 = vmatpush1.msra.mxu0 0.0
        %9109 = vmatprep.subr.mxu0 0.0
        %9110 = vmatpush1.msra.mxu0 0.0
        %9111 = vmatprep.subr.mxu0 0.0
        %9112 = vmatpush1.msra.mxu0 0.0
        %9113 = vmatprep.subr.mxu0 0.0
        %9114 = vmatpush1.msra.mxu0 0.0
        %9115 = vmatprep.subr.mxu0 0.0
        %9116 = vmatpush1.msra.mxu0 0.0
        %9117 = vmatprep.subr.mxu0 0.0
        %9118 = vmatpush1.msra.mxu0 0.0
        %9119 = vmatprep.subr.mxu0 0.0
        %9120 = vmatpush1.msra.mxu0 0.0
        %9121 = vmatprep.subr.mxu0 0.0
        %9122 = vmatpush1.msra.mxu0 0.0
        %9123 = vmatprep.subr.mxu0 0.0
        %9124 = vmatpush1.msra.mxu0 0.0
        %9125 = vmatprep.subr.mxu0 0.0
        %9126 = vmatpush1.msra.mxu0 0.0
        %9127 = vmatprep.subr.mxu0 0.0
        %9128 = vmatpush1.msra.mxu0 0.0
        %9129 = vmatprep.subr.mxu0 0.0
        %9130 = vmatpush1.msra.mxu0 0.0
        %9131 = vmatprep.subr.mxu0 0.0
        %9132 = vmatpush1.msra.mxu0 0.0
        %9133 = vmatprep.subr.mxu0 0.0
        %9134 = vmatpush1.msra.mxu0 0.0
        %9135 = vmatprep.subr.mxu0 0.0
        %9136 = vmatpush1.msra.mxu0 0.0
        %9137 = vmatprep.subr.mxu0 0.0
        %9138 = vmatpush1.msra.mxu0 0.0
        %9139 = vmatprep.mubr.f32.mxu0 0.0
        %v9140 = vand.u32 %v4511, 4294901760
        %v9141 = vsub.f32 %v4511, %v9140
        %v9142 = vand.u32 %v9141, 4294901760
        %9143 = vmatmul.mubr.f32.gmra.mrb[0].mxu0 %v9142
        %v9144 = vpop.f32.mrb[0].mxu0
        %v9145 = vadd.f32 %v8943, %v9144
        %v9146 = vpop.f32.mrb[0].mxu0
        %v9147 = vadd.f32 %v8945, %v9146
        %9148 = vmatprep.mubr.f32.mxu0 0.0
        %v9149 = vand.u32 %v4514, 4294901760
        %v9150 = vsub.f32 %v4514, %v9149
        %v9151 = vand.u32 %v9150, 4294901760
        %9152 = vmatmul.mubr.f32.gmra.mrb[0].mxu0 %v9151
        %v9153 = vpop.f32.mrb[0].mxu0
        %v9154 = vadd.f32 %v8951, %v9153
        %v9155 = vpop.f32.mrb[0].mxu0
        %v9156 = vadd.f32 %v8953, %v9155
        %9157 = vmatprep.mubr.f32.mxu0 0.0
        %v9158 = vand.u32 %v4517, 4294901760
        %v9159 = vsub.f32 %v4517, %v9158
        %v9160 = vand.u32 %v9159, 4294901760
        %9161 = vmatmul.mubr.f32.gmra.mrb[0].mxu0 %v9160
        %v9162 = vpop.f32.mrb[0].mxu0
        %v9163 = vadd.f32 %v8959, %v9162
        %v9164 = vpop.f32.mrb[0].mxu0
        %v9165 = vadd.f32 %v8961, %v9164
        %9166 = vmatprep.mubr.f32.mxu0 0.0
        %v9167 = vand.u32 %v4520, 4294901760
        %v9168 = vsub.f32 %v4520, %v9167
        %v9169 = vand.u32 %v9168, 4294901760
        %9170 = vmatmul.mubr.f32.gmra.mrb[0].mxu0 %v9169
        %v9171 = vpop.f32.mrb[0].mxu0
        %v9172 = vadd.f32 %v8967, %v9171
        %v9173 = vpop.f32.mrb[0].mxu0
        %v9174 = vadd.f32 %v8969, %v9173
        %9175 = vmatprep.mubr.f32.mxu0 0.0
        %v9176 = vand.u32 %v4523, 4294901760
        %v9177 = vsub.f32 %v4523, %v9176
        %v9178 = vand.u32 %v9177, 4294901760
        %9179 = vmatmul.mubr.f32.gmra.mrb[0].mxu0 %v9178
        %v9180 = vpop.f32.mrb[0].mxu0
        %v9181 = vadd.f32 %v8975, %v9180
        %v9182 = vpop.f32.mrb[0].mxu0
        %v9183 = vadd.f32 %v8977, %v9182
        %9184 = vmatprep.mubr.f32.mxu0 0.0
        %v9185 = vand.u32 %v4526, 4294901760
        %v9186 = vsub.f32 %v4526, %v9185
        %v9187 = vand.u32 %v9186, 4294901760
        %9188 = vmatmul.mubr.f32.gmra.mrb[0].mxu0 %v9187
        %v9189 = vpop.f32.mrb[0].mxu0
        %v9190 = vadd.f32 %v8983, %v9189
        %v9191 = vpop.f32.mrb[0].mxu0
        %v9192 = vadd.f32 %v8985, %v9191
        %9193 = vmatprep.mubr.f32.mxu0 0.0
        %v9194 = vand.u32 %v4529, 4294901760
        %v9195 = vsub.f32 %v4529, %v9194
        %v9196 = vand.u32 %v9195, 4294901760
        %9197 = vmatmul.mubr.f32.gmra.mrb[0].mxu0 %v9196
        %v9198 = vpop.f32.mrb[0].mxu0
        %v9199 = vadd.f32 %v8991, %v9198
        %v9200 = vpop.f32.mrb[0].mxu0
        %v9201 = vadd.f32 %v8993, %v9200
        %9202 = vmatprep.mubr.f32.mxu0 0.0
        %v9203 = vand.u32 %v4532, 4294901760
        %v9204 = vsub.f32 %v4532, %v9203
        %v9205 = vand.u32 %v9204, 4294901760
        %9206 = vmatmul.mubr.f32.gmra.mrb[0].mxu0 %v9205
        %v9207 = vpop.f32.mrb[0].mxu0
        %v9208 = vadd.f32 %v8999, %v9207
        %v9209 = vpop.f32.mrb[0].mxu0
        %v9210 = vadd.f32 %v9001, %v9209
        %9211 = vmatprep.mubr.f32.mxu0 0.0
        %v9212 = vand.u32 %v4535, 4294901760
        %v9213 = vsub.f32 %v4535, %v9212
        %v9214 = vand.u32 %v9213, 4294901760
        %9215 = vmatmul.mubr.f32.gmra.mrb[0].mxu0 %v9214
        %v9216 = vpop.f32.mrb[0].mxu0
        %v9217 = vadd.f32 %v9007, %v9216
        %v9218 = vpop.f32.mrb[0].mxu0
        %v9219 = vadd.f32 %v9009, %v9218
        %9220 = vmatprep.mubr.f32.mxu0 0.0
        %v9221 = vand.u32 %v4538, 4294901760
        %v9222 = vsub.f32 %v4538, %v9221
        %v9223 = vand.u32 %v9222, 4294901760
        %9224 = vmatmul.mubr.f32.gmra.mrb[0].mxu0 %v9223
        %v9225 = vpop.f32.mrb[0].mxu0
        %v9226 = vadd.f32 %v9015, %v9225
        %v9227 = vpop.f32.mrb[0].mxu0
        %v9228 = vadd.f32 %v9017, %v9227
        %9229 = vmatprep.mubr.f32.mxu0 0.0
        %v9230 = vand.u32 %v4541, 4294901760
        %v9231 = vsub.f32 %v4541, %v9230
        %v9232 = vand.u32 %v9231, 4294901760
        %9233 = vmatmul.mubr.f32.gmra.mrb[0].mxu0 %v9232
        %v9234 = vpop.f32.mrb[0].mxu0
        %v9235 = vadd.f32 %v9023, %v9234
        %v9236 = vpop.f32.mrb[0].mxu0
        %v9237 = vadd.f32 %v9025, %v9236
        %9238 = vmatprep.mubr.f32.mxu0 0.0
        %v9239 = vand.u32 %v4544, 4294901760
        %v9240 = vsub.f32 %v4544, %v9239
        %v9241 = vand.u32 %v9240, 4294901760
        %9242 = vmatmul.mubr.f32.gmra.mrb[0].mxu0 %v9241
        %v9243 = vpop.f32.mrb[0].mxu0
        %v9244 = vadd.f32 %v9031, %v9243
        %v9245 = vpop.f32.mrb[0].mxu0
        %v9246 = vadd.f32 %v9033, %v9245
        %9247 = vmatprep.mubr.f32.mxu0 0.0
        %v9248 = vand.u32 %v4547, 4294901760
        %v9249 = vsub.f32 %v4547, %v9248
        %v9250 = vand.u32 %v9249, 4294901760
        %9251 = vmatmul.mubr.f32.gmra.mrb[0].mxu0 %v9250
        %v9252 = vpop.f32.mrb[0].mxu0
        %v9253 = vadd.f32 %v9039, %v9252
        %v9254 = vpop.f32.mrb[0].mxu0
        %v9255 = vadd.f32 %v9041, %v9254
        %9256 = vmatprep.mubr.f32.mxu0 0.0
        %v9257 = vand.u32 %v4550, 4294901760
        %v9258 = vsub.f32 %v4550, %v9257
        %v9259 = vand.u32 %v9258, 4294901760
        %9260 = vmatmul.mubr.f32.gmra.mrb[0].mxu0 %v9259
        %v9261 = vpop.f32.mrb[0].mxu0
        %v9262 = vadd.f32 %v9047, %v9261
        %v9263 = vpop.f32.mrb[0].mxu0
        %v9264 = vadd.f32 %v9049, %v9263
        %9265 = vmatprep.mubr.f32.mxu0 0.0
        %v9266 = vand.u32 %v4553, 4294901760
        %v9267 = vsub.f32 %v4553, %v9266
        %v9268 = vand.u32 %v9267, 4294901760
        %9269 = vmatmul.mubr.f32.gmra.mrb[0].mxu0 %v9268
        %v9270 = vpop.f32.mrb[0].mxu0
        %v9271 = vadd.f32 %v9055, %v9270
        %v9272 = vpop.f32.mrb[0].mxu0
        %v9273 = vadd.f32 %v9057, %v9272
        %9274 = vmatprep.mubr.f32.mxu0 0.0
        %v9275 = vand.u32 %v4556, 4294901760
        %v9276 = vsub.f32 %v4556, %v9275
        %v9277 = vand.u32 %v9276, 4294901760
        %9278 = vmatmul.mubr.f32.gmra.mrb[0].mxu0 %v9277
        %v9279 = vpop.f32.mrb[0].mxu0
        %v9280 = vadd.f32 %v9063, %v9279
        %v9281 = vpop.f32.mrb[0].mxu0
        %v9282 = vadd.f32 %v9065, %v9281
        %9283 = vdwg.mxu0
        %v9284 = vand.u32 %v4468, 4294901760
        %v9285 = vsub.f32 %v4468, %v9284
        %v9286 = vand.u32 %v9285, 4294901760
        %9287 = vmatprep.subr.mxu0 %v9286
        %v9288 = vand.u32 %v4467, 4294901760
        %v9289 = vsub.f32 %v4467, %v9288
        %v9290 = vand.u32 %v9289, 4294901760
        %9291 = vmatpush1.msra.mxu0 %v9290
        %v9292 = vand.u32 %v4476, 4294901760
        %v9293 = vsub.f32 %v4476, %v9292
        %v9294 = vand.u32 %v9293, 4294901760
        %9295 = vmatprep.subr.mxu0 %v9294
        %v9296 = vand.u32 %v4475, 4294901760
        %v9297 = vsub.f32 %v4475, %v9296
        %v9298 = vand.u32 %v9297, 4294901760
        %9299 = vmatpush1.msra.mxu0 %v9298
        %v9300 = vand.u32 %v4484, 4294901760
        %v9301 = vsub.f32 %v4484, %v9300
        %v9302 = vand.u32 %v9301, 4294901760
        %9303 = vmatprep.subr.mxu0 %v9302
        %v9304 = vand.u32 %v4483, 4294901760
        %v9305 = vsub.f32 %v4483, %v9304
        %v9306 = vand.u32 %v9305, 4294901760
        %9307 = vmatpush1.msra.mxu0 %v9306
        %v9308 = vand.u32 %v4492, 4294901760
        %v9309 = vsub.f32 %v4492, %v9308
        %v9310 = vand.u32 %v9309, 4294901760
        %9311 = vmatprep.subr.mxu0 %v9310
        %v9312 = vand.u32 %v4491, 4294901760
        %v9313 = vsub.f32 %v4491, %v9312
        %v9314 = vand.u32 %v9313, 4294901760
        %9315 = vmatpush1.msra.mxu0 %v9314
        %9316 = vmatprep.subr.mxu0 0.0
        %9317 = vmatpush1.msra.mxu0 0.0
        %9318 = vmatprep.subr.mxu0 0.0
        %9319 = vmatpush1.msra.mxu0 0.0
        %9320 = vmatprep.subr.mxu0 0.0
        %9321 = vmatpush1.msra.mxu0 0.0
        %9322 = vmatprep.subr.mxu0 0.0
        %9323 = vmatpush1.msra.mxu0 0.0
        %9324 = vmatprep.subr.mxu0 0.0
        %9325 = vmatpush1.msra.mxu0 0.0
        %9326 = vmatprep.subr.mxu0 0.0
        %9327 = vmatpush1.msra.mxu0 0.0
        %9328 = vmatprep.subr.mxu0 0.0
        %9329 = vmatpush1.msra.mxu0 0.0
        %9330 = vmatprep.subr.mxu0 0.0
        %9331 = vmatpush1.msra.mxu0 0.0
        %9332 = vmatprep.subr.mxu0 0.0
        %9333 = vmatpush1.msra.mxu0 0.0
        %9334 = vmatprep.subr.mxu0 0.0
        %9335 = vmatpush1.msra.mxu0 0.0
        %9336 = vmatprep.subr.mxu0 0.0
        %9337 = vmatpush1.msra.mxu0 0.0
        %9338 = vmatprep.subr.mxu0 0.0
        %9339 = vmatpush1.msra.mxu0 0.0
        %9340 = vmatprep.subr.mxu0 0.0
        %9341 = vmatpush1.msra.mxu0 0.0
        %9342 = vmatprep.subr.mxu0 0.0
        %9343 = vmatpush1.msra.mxu0 0.0
        %9344 = vmatprep.subr.mxu0 0.0
        %9345 = vmatpush1.msra.mxu0 0.0
        %9346 = vmatprep.subr.mxu0 0.0
        %9347 = vmatpush1.msra.mxu0 0.0
        %9348 = vmatprep.subr.mxu0 0.0
        %9349 = vmatpush1.msra.mxu0 0.0
        %9350 = vmatprep.subr.mxu0 0.0
        %9351 = vmatpush1.msra.mxu0 0.0
        %9352 = vmatprep.subr.mxu0 0.0
        %9353 = vmatpush1.msra.mxu0 0.0
        %9354 = vmatprep.subr.mxu0 0.0
        %9355 = vmatpush1.msra.mxu0 0.0
        %9356 = vmatprep.subr.mxu0 0.0
        %9357 = vmatpush1.msra.mxu0 0.0
        %9358 = vmatprep.subr.mxu0 0.0
        %9359 = vmatpush1.msra.mxu0 0.0
        %9360 = vmatprep.subr.mxu0 0.0
        %9361 = vmatpush1.msra.mxu0 0.0
        %9362 = vmatprep.subr.mxu0 0.0
        %9363 = vmatpush1.msra.mxu0 0.0
        %9364 = vmatprep.subr.mxu0 0.0
        %9365 = vmatpush1.msra.mxu0 0.0
        %9366 = vmatprep.subr.mxu0 0.0
        %9367 = vmatpush1.msra.mxu0 0.0
        %9368 = vmatprep.subr.mxu0 0.0
        %9369 = vmatpush1.msra.mxu0 0.0
        %9370 = vmatprep.subr.mxu0 0.0
        %9371 = vmatpush1.msra.mxu0 0.0
        %9372 = vmatprep.mubr.f32.mxu0 0.0
        %v9373 = vand.u32 %v4511, 4294901760
        %9374 = vmatmul.mubr.f32.gmra.mrb[0].mxu0 %v9373
        %v9375 = vpop.f32.mrb[0].mxu0
        %v9376 = vadd.f32 %v9145, %v9375
        %v9377 = vpop.f32.mrb[0].mxu0
        %v9378 = vadd.f32 %v9147, %v9377
        %9379 = vmatprep.mubr.f32.mxu0 0.0
        %v9380 = vand.u32 %v4514, 4294901760
        %9381 = vmatmul.mubr.f32.gmra.mrb[0].mxu0 %v9380
        %v9382 = vpop.f32.mrb[0].mxu0
        %v9383 = vadd.f32 %v9154, %v9382
        %v9384 = vpop.f32.mrb[0].mxu0
        %v9385 = vadd.f32 %v9156, %v9384
        %9386 = vmatprep.mubr.f32.mxu0 0.0
        %v9387 = vand.u32 %v4517, 4294901760
        %9388 = vmatmul.mubr.f32.gmra.mrb[0].mxu0 %v9387
        %v9389 = vpop.f32.mrb[0].mxu0
        %v9390 = vadd.f32 %v9163, %v9389
        %v9391 = vpop.f32.mrb[0].mxu0
        %v9392 = vadd.f32 %v9165, %v9391
        %9393 = vmatprep.mubr.f32.mxu0 0.0
        %v9394 = vand.u32 %v4520, 4294901760
        %9395 = vmatmul.mubr.f32.gmra.mrb[0].mxu0 %v9394
        %v9396 = vpop.f32.mrb[0].mxu0
        %v9397 = vadd.f32 %v9172, %v9396
        %v9398 = vpop.f32.mrb[0].mxu0
        %v9399 = vadd.f32 %v9174, %v9398
        %9400 = vmatprep.mubr.f32.mxu0 0.0
        %v9401 = vand.u32 %v4523, 4294901760
        %9402 = vmatmul.mubr.f32.gmra.mrb[0].mxu0 %v9401
        %v9403 = vpop.f32.mrb[0].mxu0
        %v9404 = vadd.f32 %v9181, %v9403
        %v9405 = vpop.f32.mrb[0].mxu0
        %v9406 = vadd.f32 %v9183, %v9405
        %9407 = vmatprep.mubr.f32.mxu0 0.0
        %v9408 = vand.u32 %v4526, 4294901760
        %9409 = vmatmul.mubr.f32.gmra.mrb[0].mxu0 %v9408
        %v9410 = vpop.f32.mrb[0].mxu0
        %v9411 = vadd.f32 %v9190, %v9410
        %v9412 = vpop.f32.mrb[0].mxu0
        %v9413 = vadd.f32 %v9192, %v9412
        %9414 = vmatprep.mubr.f32.mxu0 0.0
        %v9415 = vand.u32 %v4529, 4294901760
        %9416 = vmatmul.mubr.f32.gmra.mrb[0].mxu0 %v9415
        %v9417 = vpop.f32.mrb[0].mxu0
        %v9418 = vadd.f32 %v9199, %v9417
        %v9419 = vpop.f32.mrb[0].mxu0
        %v9420 = vadd.f32 %v9201, %v9419
        %9421 = vmatprep.mubr.f32.mxu0 0.0
        %v9422 = vand.u32 %v4532, 4294901760
        %9423 = vmatmul.mubr.f32.gmra.mrb[0].mxu0 %v9422
        %v9424 = vpop.f32.mrb[0].mxu0
        %v9425 = vadd.f32 %v9208, %v9424
        %v9426 = vpop.f32.mrb[0].mxu0
        %v9427 = vadd.f32 %v9210, %v9426
        %9428 = vmatprep.mubr.f32.mxu0 0.0
        %v9429 = vand.u32 %v4535, 4294901760
        %9430 = vmatmul.mubr.f32.gmra.mrb[0].mxu0 %v9429
        %v9431 = vpop.f32.mrb[0].mxu0
        %v9432 = vadd.f32 %v9217, %v9431
        %v9433 = vpop.f32.mrb[0].mxu0
        %v9434 = vadd.f32 %v9219, %v9433
        %9435 = vmatprep.mubr.f32.mxu0 0.0
        %v9436 = vand.u32 %v4538, 4294901760
        %9437 = vmatmul.mubr.f32.gmra.mrb[0].mxu0 %v9436
        %v9438 = vpop.f32.mrb[0].mxu0
        %v9439 = vadd.f32 %v9226, %v9438
        %v9440 = vpop.f32.mrb[0].mxu0
        %v9441 = vadd.f32 %v9228, %v9440
        %9442 = vmatprep.mubr.f32.mxu0 0.0
        %v9443 = vand.u32 %v4541, 4294901760
        %9444 = vmatmul.mubr.f32.gmra.mrb[0].mxu0 %v9443
        %v9445 = vpop.f32.mrb[0].mxu0
        %v9446 = vadd.f32 %v9235, %v9445
        %v9447 = vpop.f32.mrb[0].mxu0
        %v9448 = vadd.f32 %v9237, %v9447
        %9449 = vmatprep.mubr.f32.mxu0 0.0
        %v9450 = vand.u32 %v4544, 4294901760
        %9451 = vmatmul.mubr.f32.gmra.mrb[0].mxu0 %v9450
        %v9452 = vpop.f32.mrb[0].mxu0
        %v9453 = vadd.f32 %v9244, %v9452
        %v9454 = vpop.f32.mrb[0].mxu0
        %v9455 = vadd.f32 %v9246, %v9454
        %9456 = vmatprep.mubr.f32.mxu0 0.0
        %v9457 = vand.u32 %v4547, 4294901760
        %9458 = vmatmul.mubr.f32.gmra.mrb[0].mxu0 %v9457
        %v9459 = vpop.f32.mrb[0].mxu0
        %v9460 = vadd.f32 %v9253, %v9459
        %v9461 = vpop.f32.mrb[0].mxu0
        %v9462 = vadd.f32 %v9255, %v9461
        %9463 = vmatprep.mubr.f32.mxu0 0.0
        %v9464 = vand.u32 %v4550, 4294901760
        %9465 = vmatmul.mubr.f32.gmra.mrb[0].mxu0 %v9464
        %v9466 = vpop.f32.mrb[0].mxu0
        %v9467 = vadd.f32 %v9262, %v9466
        %v9468 = vpop.f32.mrb[0].mxu0
        %v9469 = vadd.f32 %v9264, %v9468
        %9470 = vmatprep.mubr.f32.mxu0 0.0
        %v9471 = vand.u32 %v4553, 4294901760
        %9472 = vmatmul.mubr.f32.gmra.mrb[0].mxu0 %v9471
        %v9473 = vpop.f32.mrb[0].mxu0
        %v9474 = vadd.f32 %v9271, %v9473
        %v9475 = vpop.f32.mrb[0].mxu0
        %v9476 = vadd.f32 %v9273, %v9475
        %9477 = vmatprep.mubr.f32.mxu0 0.0
        %v9478 = vand.u32 %v4556, 4294901760
        %9479 = vmatmul.mubr.f32.gmra.mrb[0].mxu0 %v9478
        %v9480 = vpop.f32.mrb[0].mxu0
        %v9481 = vadd.f32 %v9280, %v9480
        %v9482 = vpop.f32.mrb[0].mxu0
        %v9483 = vadd.f32 %v9282, %v9482
        %9484 = vdwg.mxu0
        %v9485 = vand.u32 %v4468, 4294901760
        %9486 = vmatprep.subr.mxu0 %v9485
        %v9487 = vand.u32 %v4467, 4294901760
        %9488 = vmatpush1.msra.mxu0 %v9487
        %v9489 = vand.u32 %v4476, 4294901760
        %9490 = vmatprep.subr.mxu0 %v9489
        %v9491 = vand.u32 %v4475, 4294901760
        %9492 = vmatpush1.msra.mxu0 %v9491
        %v9493 = vand.u32 %v4484, 4294901760
        %9494 = vmatprep.subr.mxu0 %v9493
        %v9495 = vand.u32 %v4483, 4294901760
        %9496 = vmatpush1.msra.mxu0 %v9495
        %v9497 = vand.u32 %v4492, 4294901760
        %9498 = vmatprep.subr.mxu0 %v9497
        %v9499 = vand.u32 %v4491, 4294901760
        %9500 = vmatpush1.msra.mxu0 %v9499
        %9501 = vmatprep.subr.mxu0 0.0
        %9502 = vmatpush1.msra.mxu0 0.0
        %9503 = vmatprep.subr.mxu0 0.0
        %9504 = vmatpush1.msra.mxu0 0.0
        %9505 = vmatprep.subr.mxu0 0.0
        %9506 = vmatpush1.msra.mxu0 0.0
        %9507 = vmatprep.subr.mxu0 0.0
        %9508 = vmatpush1.msra.mxu0 0.0
        %9509 = vmatprep.subr.mxu0 0.0
        %9510 = vmatpush1.msra.mxu0 0.0
        %9511 = vmatprep.subr.mxu0 0.0
        %9512 = vmatpush1.msra.mxu0 0.0
        %9513 = vmatprep.subr.mxu0 0.0
        %9514 = vmatpush1.msra.mxu0 0.0
        %9515 = vmatprep.subr.mxu0 0.0
        %9516 = vmatpush1.msra.mxu0 0.0
        %9517 = vmatprep.subr.mxu0 0.0
        %9518 = vmatpush1.msra.mxu0 0.0
        %9519 = vmatprep.subr.mxu0 0.0
        %9520 = vmatpush1.msra.mxu0 0.0
        %9521 = vmatprep.subr.mxu0 0.0
        %9522 = vmatpush1.msra.mxu0 0.0
        %9523 = vmatprep.subr.mxu0 0.0
        %9524 = vmatpush1.msra.mxu0 0.0
        %9525 = vmatprep.subr.mxu0 0.0
        %9526 = vmatpush1.msra.mxu0 0.0
        %9527 = vmatprep.subr.mxu0 0.0
        %9528 = vmatpush1.msra.mxu0 0.0
        %9529 = vmatprep.subr.mxu0 0.0
        %9530 = vmatpush1.msra.mxu0 0.0
        %9531 = vmatprep.subr.mxu0 0.0
        %9532 = vmatpush1.msra.mxu0 0.0
        %9533 = vmatprep.subr.mxu0 0.0
        %9534 = vmatpush1.msra.mxu0 0.0
        %9535 = vmatprep.subr.mxu0 0.0
        %9536 = vmatpush1.msra.mxu0 0.0
        %9537 = vmatprep.subr.mxu0 0.0
        %9538 = vmatpush1.msra.mxu0 0.0
        %9539 = vmatprep.subr.mxu0 0.0
        %9540 = vmatpush1.msra.mxu0 0.0
        %9541 = vmatprep.subr.mxu0 0.0
        %9542 = vmatpush1.msra.mxu0 0.0
        %9543 = vmatprep.subr.mxu0 0.0
        %9544 = vmatpush1.msra.mxu0 0.0
        %9545 = vmatprep.subr.mxu0 0.0
        %9546 = vmatpush1.msra.mxu0 0.0
        %9547 = vmatprep.subr.mxu0 0.0
        %9548 = vmatpush1.msra.mxu0 0.0
        %9549 = vmatprep.subr.mxu0 0.0
        %9550 = vmatpush1.msra.mxu0 0.0
        %9551 = vmatprep.subr.mxu0 0.0
        %9552 = vmatpush1.msra.mxu0 0.0
        %9553 = vmatprep.subr.mxu0 0.0
        %9554 = vmatpush1.msra.mxu0 0.0
        %9555 = vmatprep.subr.mxu0 0.0
        %9556 = vmatpush1.msra.mxu0 0.0
        %9557 = vmatprep.mubr.f32.mxu0 0.0
        %v9558 = vand.u32 %v4511, 4294901760
        %9559 = vmatmul.mubr.f32.gmra.mrb[0].mxu0 %v9558
        %v9560 = vpop.f32.mrb[0].mxu0
        %v9561 = vadd.f32 %v9376, %v9560
        %v9562 = vpop.f32.mrb[0].mxu0
        %v9563 = vadd.f32 %v9378, %v9562
        %9564 = vmatprep.mubr.f32.mxu0 0.0
        %v9565 = vand.u32 %v4514, 4294901760
        %9566 = vmatmul.mubr.f32.gmra.mrb[0].mxu0 %v9565
        %v9567 = vpop.f32.mrb[0].mxu0
        %v9568 = vadd.f32 %v9383, %v9567
        %v9569 = vpop.f32.mrb[0].mxu0
        %v9570 = vadd.f32 %v9385, %v9569
        %9571 = vmatprep.mubr.f32.mxu0 0.0
        %v9572 = vand.u32 %v4517, 4294901760
        %9573 = vmatmul.mubr.f32.gmra.mrb[0].mxu0 %v9572
        %v9574 = vpop.f32.mrb[0].mxu0
        %v9575 = vadd.f32 %v9390, %v9574
        %v9576 = vpop.f32.mrb[0].mxu0
        %v9577 = vadd.f32 %v9392, %v9576
        %9578 = vmatprep.mubr.f32.mxu0 0.0
        %v9579 = vand.u32 %v4520, 4294901760
        %9580 = vmatmul.mubr.f32.gmra.mrb[0].mxu0 %v9579
        %v9581 = vpop.f32.mrb[0].mxu0
        %v9582 = vadd.f32 %v9397, %v9581
        %v9583 = vpop.f32.mrb[0].mxu0
        %v9584 = vadd.f32 %v9399, %v9583
        %9585 = vmatprep.mubr.f32.mxu0 0.0
        %v9586 = vand.u32 %v4523, 4294901760
        %9587 = vmatmul.mubr.f32.gmra.mrb[0].mxu0 %v9586
        %v9588 = vpop.f32.mrb[0].mxu0
        %v9589 = vadd.f32 %v9404, %v9588
        %v9590 = vpop.f32.mrb[0].mxu0
        %v9591 = vadd.f32 %v9406, %v9590
        %9592 = vmatprep.mubr.f32.mxu0 0.0
        %v9593 = vand.u32 %v4526, 4294901760
        %9594 = vmatmul.mubr.f32.gmra.mrb[0].mxu0 %v9593
        %v9595 = vpop.f32.mrb[0].mxu0
        %v9596 = vadd.f32 %v9411, %v9595
        %v9597 = vpop.f32.mrb[0].mxu0
        %v9598 = vadd.f32 %v9413, %v9597
        %9599 = vmatprep.mubr.f32.mxu0 0.0
        %v9600 = vand.u32 %v4529, 4294901760
        %9601 = vmatmul.mubr.f32.gmra.mrb[0].mxu0 %v9600
        %v9602 = vpop.f32.mrb[0].mxu0
        %v9603 = vadd.f32 %v9418, %v9602
        %v9604 = vpop.f32.mrb[0].mxu0
        %v9605 = vadd.f32 %v9420, %v9604
        %9606 = vmatprep.mubr.f32.mxu0 0.0
        %v9607 = vand.u32 %v4532, 4294901760
        %9608 = vmatmul.mubr.f32.gmra.mrb[0].mxu0 %v9607
        %v9609 = vpop.f32.mrb[0].mxu0
        %v9610 = vadd.f32 %v9425, %v9609
        %v9611 = vpop.f32.mrb[0].mxu0
        %v9612 = vadd.f32 %v9427, %v9611
        %9613 = vmatprep.mubr.f32.mxu0 0.0
        %v9614 = vand.u32 %v4535, 4294901760
        %9615 = vmatmul.mubr.f32.gmra.mrb[0].mxu0 %v9614
        %v9616 = vpop.f32.mrb[0].mxu0
        %v9617 = vadd.f32 %v9432, %v9616
        %v9618 = vpop.f32.mrb[0].mxu0
        %v9619 = vadd.f32 %v9434, %v9618
        %9620 = vmatprep.mubr.f32.mxu0 0.0
        %v9621 = vand.u32 %v4538, 4294901760
        %9622 = vmatmul.mubr.f32.gmra.mrb[0].mxu0 %v9621
        %v9623 = vpop.f32.mrb[0].mxu0
        %v9624 = vadd.f32 %v9439, %v9623
        %v9625 = vpop.f32.mrb[0].mxu0
        %v9626 = vadd.f32 %v9441, %v9625
        %9627 = vmatprep.mubr.f32.mxu0 0.0
        %v9628 = vand.u32 %v4541, 4294901760
        %9629 = vmatmul.mubr.f32.gmra.mrb[0].mxu0 %v9628
        %v9630 = vpop.f32.mrb[0].mxu0
        %v9631 = vadd.f32 %v9446, %v9630
        %v9632 = vpop.f32.mrb[0].mxu0
        %v9633 = vadd.f32 %v9448, %v9632
        %9634 = vmatprep.mubr.f32.mxu0 0.0
        %v9635 = vand.u32 %v4544, 4294901760
        %9636 = vmatmul.mubr.f32.gmra.mrb[0].mxu0 %v9635
        %v9637 = vpop.f32.mrb[0].mxu0
        %v9638 = vadd.f32 %v9453, %v9637
        %v9639 = vpop.f32.mrb[0].mxu0
        %v9640 = vadd.f32 %v9455, %v9639
        %9641 = vmatprep.mubr.f32.mxu0 0.0
        %v9642 = vand.u32 %v4547, 4294901760
        %9643 = vmatmul.mubr.f32.gmra.mrb[0].mxu0 %v9642
        %v9644 = vpop.f32.mrb[0].mxu0
        %v9645 = vadd.f32 %v9460, %v9644
        %v9646 = vpop.f32.mrb[0].mxu0
        %v9647 = vadd.f32 %v9462, %v9646
        %9648 = vmatprep.mubr.f32.mxu0 0.0
        %v9649 = vand.u32 %v4550, 4294901760
        %9650 = vmatmul.mubr.f32.gmra.mrb[0].mxu0 %v9649
        %v9651 = vpop.f32.mrb[0].mxu0
        %v9652 = vadd.f32 %v9467, %v9651
        %v9653 = vpop.f32.mrb[0].mxu0
        %v9654 = vadd.f32 %v9469, %v9653
        %9655 = vmatprep.mubr.f32.mxu0 0.0
        %v9656 = vand.u32 %v4553, 4294901760
        %9657 = vmatmul.mubr.f32.gmra.mrb[0].mxu0 %v9656
        %v9658 = vpop.f32.mrb[0].mxu0
        %v9659 = vadd.f32 %v9474, %v9658
        %v9660 = vpop.f32.mrb[0].mxu0
        %v9661 = vadd.f32 %v9476, %v9660
        %9662 = vmatprep.mubr.f32.mxu0 0.0
        %v9663 = vand.u32 %v4556, 4294901760
        %9664 = vmatmul.mubr.f32.gmra.mrb[0].mxu0 %v9663
        %v9665 = vpop.f32.mrb[0].mxu0
        %v9666 = vadd.f32 %v9481, %v9665
        %v9667 = vpop.f32.mrb[0].mxu0
        %v9668 = vadd.f32 %v9483, %v9667
        %9669 = vdwg.mxu0
        %9670 = vst [vmem:[%s275] sm:$0xff] %v5727
        %9671 = vst [vmem:[%s275 + $0x8] sm:$0xff] %v5729
        %9672 = vst [vmem:[%s275 + $0x10] sm:$0xff] %v7005
        %9673 = vst [vmem:[%s275 + $0x18] sm:$0xff] %v7007
        %9674 = vst [vmem:[%s275 + $0x20] sm:$0xff] %v8283
        %9675 = vst [vmem:[%s275 + $0x28] sm:$0xff] %v8285
        %9676 = vst [vmem:[%s275 + $0x30] sm:$0xff] %v9561
        %9677 = vst [vmem:[%s275 + $0x38] sm:$0xff] %v9563
        %9678 = vst [vmem:[%s275 + $0x40] sm:$0xff] %v5734
        %9679 = vst [vmem:[%s275 + $0x48] sm:$0xff] %v5736
        %9680 = vst [vmem:[%s275 + $0x50] sm:$0xff] %v7012
        %9681 = vst [vmem:[%s275 + $0x58] sm:$0xff] %v7014
        %9682 = vst [vmem:[%s275 + $0x60] sm:$0xff] %v8290
        %9683 = vst [vmem:[%s275 + $0x68] sm:$0xff] %v8292
        %9684 = vst [vmem:[%s275 + $0x70] sm:$0xff] %v9568
        %9685 = vst [vmem:[%s275 + $0x78] sm:$0xff] %v9570
        %9686 = vst [vmem:[%s275 + $0x80] sm:$0xff] %v5741
        %9687 = vst [vmem:[%s275 + $0x88] sm:$0xff] %v5743
        %9688 = vst [vmem:[%s275 + $0x90] sm:$0xff] %v7019
        %9689 = vst [vmem:[%s275 + $0x98] sm:$0xff] %v7021
        %9690 = vst [vmem:[%s275 + $0xa0] sm:$0xff] %v8297
        %9691 = vst [vmem:[%s275 + $0xa8] sm:$0xff] %v8299
        %9692 = vst [vmem:[%s275 + $0xb0] sm:$0xff] %v9575
        %9693 = vst [vmem:[%s275 + $0xb8] sm:$0xff] %v9577
        %9694 = vst [vmem:[%s275 + $0xc0] sm:$0xff] %v5748
        %9695 = vst [vmem:[%s275 + $0xc8] sm:$0xff] %v5750
        %9696 = vst [vmem:[%s275 + $0xd0] sm:$0xff] %v7026
        %9697 = vst [vmem:[%s275 + $0xd8] sm:$0xff] %v7028
        %9698 = vst [vmem:[%s275 + $0xe0] sm:$0xff] %v8304
        %9699 = vst [vmem:[%s275 + $0xe8] sm:$0xff] %v8306
        %9700 = vst [vmem:[%s275 + $0xf0] sm:$0xff] %v9582
        %9701 = vst [vmem:[%s275 + $0xf8] sm:$0xff] %v9584
        %9702 = vst [vmem:[%s275 + $0x100] sm:$0xff] %v5755
        %9703 = vst [vmem:[%s275 + $0x108] sm:$0xff] %v5757
        %9704 = vst [vmem:[%s275 + $0x110] sm:$0xff] %v7033
        %9705 = vst [vmem:[%s275 + $0x118] sm:$0xff] %v7035
        %9706 = vst [vmem:[%s275 + $0x120] sm:$0xff] %v8311
        %9707 = vst [vmem:[%s275 + $0x128] sm:$0xff] %v8313
        %9708 = vst [vmem:[%s275 + $0x130] sm:$0xff] %v9589
        %9709 = vst [vmem:[%s275 + $0x138] sm:$0xff] %v9591
        %9710 = vst [vmem:[%s275 + $0x140] sm:$0xff] %v5762
        %9711 = vst [vmem:[%s275 + $0x148] sm:$0xff] %v5764
        %9712 = vst [vmem:[%s275 + $0x150] sm:$0xff] %v7040
        %9713 = vst [vmem:[%s275 + $0x158] sm:$0xff] %v7042
        %9714 = vst [vmem:[%s275 + $0x160] sm:$0xff] %v8318
        %9715 = vst [vmem:[%s275 + $0x168] sm:$0xff] %v8320
        %9716 = vst [vmem:[%s275 + $0x170] sm:$0xff] %v9596
        %9717 = vst [vmem:[%s275 + $0x178] sm:$0xff] %v9598
        %9718 = vst [vmem:[%s275 + $0x180] sm:$0xff] %v5769
        %9719 = vst [vmem:[%s275 + $0x188] sm:$0xff] %v5771
        %9720 = vst [vmem:[%s275 + $0x190] sm:$0xff] %v7047
        %9721 = vst [vmem:[%s275 + $0x198] sm:$0xff] %v7049
        %9722 = vst [vmem:[%s275 + $0x1a0] sm:$0xff] %v8325
        %9723 = vst [vmem:[%s275 + $0x1a8] sm:$0xff] %v8327
        %9724 = vst [vmem:[%s275 + $0x1b0] sm:$0xff] %v9603
        %9725 = vst [vmem:[%s275 + $0x1b8] sm:$0xff] %v9605
        %9726 = vst [vmem:[%s275 + $0x1c0] sm:$0xff] %v5776
        %9727 = vst [vmem:[%s275 + $0x1c8] sm:$0xff] %v5778
        %9728 = vst [vmem:[%s275 + $0x1d0] sm:$0xff] %v7054
        %9729 = vst [vmem:[%s275 + $0x1d8] sm:$0xff] %v7056
        %9730 = vst [vmem:[%s275 + $0x1e0] sm:$0xff] %v8332
        %9731 = vst [vmem:[%s275 + $0x1e8] sm:$0xff] %v8334
        %9732 = vst [vmem:[%s275 + $0x1f0] sm:$0xff] %v9610
        %9733 = vst [vmem:[%s275 + $0x1f8] sm:$0xff] %v9612
        %9734 = vst [vmem:[%s275 + $0x200] sm:$0xff] %v5783
        %9735 = vst [vmem:[%s275 + $0x208] sm:$0xff] %v5785
        %9736 = vst [vmem:[%s275 + $0x210] sm:$0xff] %v7061
        %9737 = vst [vmem:[%s275 + $0x218] sm:$0xff] %v7063
        %9738 = vst [vmem:[%s275 + $0x220] sm:$0xff] %v8339
        %9739 = vst [vmem:[%s275 + $0x228] sm:$0xff] %v8341
        %9740 = vst [vmem:[%s275 + $0x230] sm:$0xff] %v9617
        %9741 = vst [vmem:[%s275 + $0x238] sm:$0xff] %v9619
        %9742 = vst [vmem:[%s275 + $0x240] sm:$0xff] %v5790
        %9743 = vst [vmem:[%s275 + $0x248] sm:$0xff] %v5792
        %9744 = vst [vmem:[%s275 + $0x250] sm:$0xff] %v7068
        %9745 = vst [vmem:[%s275 + $0x258] sm:$0xff] %v7070
        %9746 = vst [vmem:[%s275 + $0x260] sm:$0xff] %v8346
        %9747 = vst [vmem:[%s275 + $0x268] sm:$0xff] %v8348
        %9748 = vst [vmem:[%s275 + $0x270] sm:$0xff] %v9624
        %9749 = vst [vmem:[%s275 + $0x278] sm:$0xff] %v9626
        %9750 = vst [vmem:[%s275 + $0x280] sm:$0xff] %v5797
        %9751 = vst [vmem:[%s275 + $0x288] sm:$0xff] %v5799
        %9752 = vst [vmem:[%s275 + $0x290] sm:$0xff] %v7075
        %9753 = vst [vmem:[%s275 + $0x298] sm:$0xff] %v7077
        %9754 = vst [vmem:[%s275 + $0x2a0] sm:$0xff] %v8353
        %9755 = vst [vmem:[%s275 + $0x2a8] sm:$0xff] %v8355
        %9756 = vst [vmem:[%s275 + $0x2b0] sm:$0xff] %v9631
        %9757 = vst [vmem:[%s275 + $0x2b8] sm:$0xff] %v9633
        %9758 = vst [vmem:[%s275 + $0x2c0] sm:$0xff] %v5804
        %9759 = vst [vmem:[%s275 + $0x2c8] sm:$0xff] %v5806
        %9760 = vst [vmem:[%s275 + $0x2d0] sm:$0xff] %v7082
        %9761 = vst [vmem:[%s275 + $0x2d8] sm:$0xff] %v7084
        %9762 = vst [vmem:[%s275 + $0x2e0] sm:$0xff] %v8360
        %9763 = vst [vmem:[%s275 + $0x2e8] sm:$0xff] %v8362
        %9764 = vst [vmem:[%s275 + $0x2f0] sm:$0xff] %v9638
        %9765 = vst [vmem:[%s275 + $0x2f8] sm:$0xff] %v9640
        %9766 = vst [vmem:[%s275 + $0x300] sm:$0xff] %v5811
        %9767 = vst [vmem:[%s275 + $0x308] sm:$0xff] %v5813
        %9768 = vst [vmem:[%s275 + $0x310] sm:$0xff] %v7089
        %9769 = vst [vmem:[%s275 + $0x318] sm:$0xff] %v7091
        %9770 = vst [vmem:[%s275 + $0x320] sm:$0xff] %v8367
        %9771 = vst [vmem:[%s275 + $0x328] sm:$0xff] %v8369
        %9772 = vst [vmem:[%s275 + $0x330] sm:$0xff] %v9645
        %9773 = vst [vmem:[%s275 + $0x338] sm:$0xff] %v9647
        %9774 = vst [vmem:[%s275 + $0x340] sm:$0xff] %v5818
        %9775 = vst [vmem:[%s275 + $0x348] sm:$0xff] %v5820
        %9776 = vst [vmem:[%s275 + $0x350] sm:$0xff] %v7096
        %9777 = vst [vmem:[%s275 + $0x358] sm:$0xff] %v7098
        %9778 = vst [vmem:[%s275 + $0x360] sm:$0xff] %v8374
        %9779 = vst [vmem:[%s275 + $0x368] sm:$0xff] %v8376
        %9780 = vst [vmem:[%s275 + $0x370] sm:$0xff] %v9652
        %9781 = vst [vmem:[%s275 + $0x378] sm:$0xff] %v9654
        %9782 = vst [vmem:[%s275 + $0x380] sm:$0xff] %v5825
        %9783 = vst [vmem:[%s275 + $0x388] sm:$0xff] %v5827
        %9784 = vst [vmem:[%s275 + $0x390] sm:$0xff] %v7103
        %9785 = vst [vmem:[%s275 + $0x398] sm:$0xff] %v7105
        %9786 = vst [vmem:[%s275 + $0x3a0] sm:$0xff] %v8381
        %9787 = vst [vmem:[%s275 + $0x3a8] sm:$0xff] %v8383
        %9788 = vst [vmem:[%s275 + $0x3b0] sm:$0xff] %v9659
        %9789 = vst [vmem:[%s275 + $0x3b8] sm:$0xff] %v9661
        %9790 = vst [vmem:[%s275 + $0x3c0] sm:$0xff] %v5832
        %9791 = vst [vmem:[%s275 + $0x3c8] sm:$0xff] %v5834
        %9792 = vst [vmem:[%s275 + $0x3d0] sm:$0xff] %v7110
        %9793 = vst [vmem:[%s275 + $0x3d8] sm:$0xff] %v7112
        %9794 = vst [vmem:[%s275 + $0x3e0] sm:$0xff] %v8388
        %9795 = vst [vmem:[%s275 + $0x3e8] sm:$0xff] %v8390
        %9796 = vst [vmem:[%s275 + $0x3f0] sm:$0xff] %v9666
        %9797 = vst [vmem:[%s275 + $0x3f8] sm:$0xff] %v9668
        %s9798 = sand.u32 %s132, 1
        %s9799 = scalar_lea.sflag [#allocation5], %s9798
        %s9800 = sand.u32 %s132, 1
        %s9801 = smul.addr %s9800, 1024
        %s9802 = scalar_lea.vmem [#allocation6], %s9801
        // Predicated region
        $region79: #{tpu_custom_call.1} parent=69 // pred_check
          %p9803 = pneg %p142
        $region80: #{tpu_custom_call.1} parent=69 // pred_check_branch
          %9805 = sbr.rel (%p9803) target = $region82
        $region81: #{tpu_custom_call.1} parent=69 // pred_region
          %s9806 = smul.u32 16, %s23
          %s9807 = smul.u32 8, %s24
          %s9809 = ssub.s32 16384, 16384
          %9810 = vsyncadd %s9799, %s9809
          %s9811 = smul.addr %s9806, 16
          %s9812 = sadd.s32 %s9807, %s9811
          %s9813 = smul.addr %s9812, 128
          %s9814 = scalar_lea.hbm %s4, %s9813
          %s9815 = sshll.u32 %s9802, 4
          %s9816 = int_to_ptr.vmem [resolvable:$true] %s9815
          %9821 = dma.vmem_to_hbm [thread:$0]  %s9816, 16384, %s9814, %s9799, 1024, 2048, 64
        $region82: #{tpu_custom_call.1} parent=69 // pred_fallthru
          _
      $region70: #{tpu_custom_call.1} parent=5 // pred_fallthru
        _
      %p9822 = scmp.le.s32.totalorder 2, %s14
      // Predicated region
      $region83: #{tpu_custom_call.1} parent=5 // pred_check
        %p9823 = pneg %p9822
      $region84: #{tpu_custom_call.1} parent=5 // pred_check_branch
        %9825 = sbr.rel (%p9823) target = $region86
      $region85: #{tpu_custom_call.1} parent=5 // pred_region
        %s9826 = ssub.s32 %s14, 2
        // Predicated region
        $region87: #{tpu_custom_call.1} parent=85 // pred_check
          %p9827 = pneg %p148
        $region88: #{tpu_custom_call.1} parent=85 // pred_check_branch
          %9829 = sbr.rel (%p9827) target = $region90
        $region89: #{tpu_custom_call.1} parent=85 // pred_region
          %s9830 = sand.u32 %s133, 1
          %s9831 = scalar_lea.sflag [#allocation5], %s9830
          %s9832 = sand.u32 %s133, 1
          %s9833 = smul.addr %s9832, 1024
          %s9834 = scalar_lea.vmem [#allocation6], %s9833
          %9835 = dma.done %s9831, 16384
        $region90: #{tpu_custom_call.1} parent=85 // pred_fallthru
          _
      $region86: #{tpu_custom_call.1} parent=5 // pred_fallthru
        _
    $region6: #{tpu_custom_call.1} parent=1 // loop_footer
      %s18 = sadd.s32 1, %s14
    $region7: #{tpu_custom_call.1} parent=1 // loop_footer_branch
      %13 = sbr.rel target = $region3
    $region8: #{tpu_custom_call.1} parent=1 // loop_exit
      _
    %9836 = vsyncpa [#allocation4], 1
    %s9837 = scalar_lea.sflag [#allocation4], 1
    %9838 = vsyncpa %s9837, 1
    %9839 = vsyncpa [#allocation5], 1
    %s9840 = scalar_lea.sflag [#allocation5], 1
    %9841 = vsyncpa %s9840, 1

</llo_original>
